<compile_context>
chip_gen: v7x
topology: tpu7x:2x2x1
jax: 0.10.0
libtpu: 0.0.40
codegen_flags: <defaults>
</compile_context>

<pallas_src>
import jax
import jax.numpy as jnp
from jax.experimental import pallas as pl
from jax.experimental.pallas import tpu as pltpu

IMAGE_SIZE = 16          # ToyData.IMAGE_SIZE
IN_CHANNELS = 1
OUT_CHANNELS = 36
KERNEL = 3
NUM_CLASSES = 2

H = IMAGE_SIZE
HO = IMAGE_SIZE - KERNEL + 1          # 14 valid output rows/cols
P_VALID = HO * HO                     # 196 valid conv positions
P_FULL = H * H                        # 256 (padded positions, lane friendly)
N_CONV = OUT_CHANNELS * P_FULL        # 9216 = 72 * 128 (lane dense)

MAX_BATCH_TILE = 128                  # images per grid step (multiple of 8)


def _round_up(x, m):
    return ((x + m - 1) // m) * m


def _convnet_kernel(x_ref, wbig_ref, bbig_ref, poolfc_ref, bfc_ref, out_ref):
    # Conv as one lane-dense MXU matmul: [Bt, 256](bf16) @ [256, 9216](bf16) -> f32.
    h = jnp.dot(x_ref[...], wbig_ref[...], preferred_element_type=jnp.float32)
    # Bias (zero at invalid/padded positions) + ReLU on the VPU.
    h = jnp.maximum(h + bbig_ref[...], 0.0)
    # Fused GlobalAvgPool + classifier: [Bt, 9216] @ [9216, 2] (f32) + bias.
    logits = jnp.dot(h, poolfc_ref[...],
                     preferred_element_type=jnp.float32) + bfc_ref[...]
    # Row softmax (max-stabilized) over the 2 classes.
    m = jnp.max(logits, axis=-1, keepdims=True)
    e = jnp.exp(logits - m)
    out_ref[...] = e / jnp.sum(e, axis=-1, keepdims=True)


def init_params(key):
    k1, k2, k3, k4 = jax.random.split(key, 4)
    # PyTorch conv weight layout: [out_c, in_c, kh, kw] = [36, 1, 3, 3]
    wconv = jax.random.normal(k1, (OUT_CHANNELS, IN_CHANNELS, KERNEL, KERNEL),
                              dtype=jnp.float32) * 0.1
    bconv = jax.random.normal(k2, (OUT_CHANNELS,), dtype=jnp.float32) * 0.1
    # PyTorch linear weight layout: [out_features, in_features] = [2, 36]
    wfc = jax.random.normal(k3, (NUM_CLASSES, OUT_CHANNELS), dtype=jnp.float32) * 0.1
    bfc = jax.random.normal(k4, (NUM_CLASSES,), dtype=jnp.float32) * 0.1
    return wconv, bconv, wfc, bfc


def _build_constants(params):
    """Fold conv weights into a [256, 36*256] matrix + masked bias, and fold
    the global-average-pool and the FC layer into one [36*256, 2] matrix."""
    wconv, bconv, wfc, bfc = params
    w = wconv.reshape(OUT_CHANNELS, KERNEL, KERNEL).astype(jnp.float32)

    ii, jj = jnp.meshgrid(jnp.arange(HO), jnp.arange(HO), indexing="ij")  # [14,14]
    wbig = jnp.zeros((P_FULL, OUT_CHANNELS, H, H), jnp.float32)
    for ki in range(KERNEL):
        for kj in range(KERNEL):
            rows = (ii + ki) * H + (jj + kj)                              # [14,14]
            onehot = jax.nn.one_hot(rows, P_FULL, dtype=jnp.float32)      # [14,14,256]
            contrib = jnp.einsum("ijr,o->roij", onehot, w[:, ki, kj])     # [256,36,14,14]
            contrib = jnp.pad(contrib, ((0, 0), (0, 0), (0, H - HO), (0, H - HO)))
            wbig = wbig + contrib
    wbig = wbig.reshape(P_FULL, N_CONV).astype(jnp.bfloat16)              # [256, 9216]

    # 1 at valid conv output positions (i < 14 and j < 14), 0 at padded ones.
    valid = ((jnp.arange(H)[:, None] < HO) & (jnp.arange(H)[None, :] < HO))
    valid = valid.reshape(P_FULL).astype(jnp.float32)                     # [256]

    # Conv bias, zeroed at padded positions:  col = o*256 + p.
    bbig = (bconv.astype(jnp.float32)[:, None] * valid[None, :]).reshape(1, N_CONV)

    # Fused pool+FC:  poolfc[o*256 + p, c] = valid[p] * wfc[c, o] / 196.
    wfcT = wfc.astype(jnp.float32).T                                      # [36, 2]
    poolfc = (wfcT[:, None, :] * valid[None, :, None]).reshape(N_CONV, NUM_CLASSES)
    poolfc = poolfc * jnp.float32(1.0 / P_VALID)                          # [9216, 2]

    bfc_row = bfc.astype(jnp.float32).reshape(1, NUM_CLASSES)             # [1, 2]
    return wbig, bbig, poolfc, bfc_row


def convnet_forward(x, params):
    """x: [B, IMAGE_SIZE, IMAGE_SIZE] (or [B, 256]) -> softmax probs [B, NUM_CLASSES]."""
    wbig, bbig, poolfc, bfc_row = _build_constants(params)

    B = x.shape[0]
    x_flat = x.reshape(B, P_FULL).astype(jnp.float32)

    # Batch tile: multiple of 8 sublanes, capped at MAX_BATCH_TILE images/step.
    if B <= MAX_BATCH_TILE:
        bt = _round_up(max(B, 1), 8)
    else:
        bt = MAX_BATCH_TILE
    b_pad = _round_up(B, bt)
    if b_pad != B:
        x_flat = jnp.pad(x_flat, ((0, b_pad - B), (0, 0)))
    x_bf16 = x_flat.astype(jnp.bfloat16)

    grid = (b_pad // bt,)
    cost = pl.CostEstimate(
        flops=2 * b_pad * (P_FULL * N_CONV + N_CONV * NUM_CLASSES),
        transcendentals=b_pad * NUM_CLASSES,
        bytes_accessed=(x_bf16.size * 2 + wbig.size * 2 + bbig.size * 4
                        + poolfc.size * 4 + bfc_row.size * 4
                        + b_pad * NUM_CLASSES * 4),
    )

    out = pl.pallas_call(
        _convnet_kernel,
        out_shape=jax.ShapeDtypeStruct((b_pad, NUM_CLASSES), jnp.float32),
        grid=grid,
        in_specs=[
            pl.BlockSpec((bt, P_FULL), lambda i: (i, 0)),                 # x tile (pipelined)
            pl.BlockSpec((P_FULL, N_CONV), lambda i: (0, 0)),             # conv matrix (resident)
            pl.BlockSpec((1, N_CONV), lambda i: (0, 0)),                  # conv bias (resident)
            pl.BlockSpec((N_CONV, NUM_CLASSES), lambda i: (0, 0)),        # pool+fc matrix (resident)
            pl.BlockSpec((1, NUM_CLASSES), lambda i: (0, 0)),             # fc bias (resident)
        ],
        out_specs=pl.BlockSpec((bt, NUM_CLASSES), lambda i: (i, 0)),
        compiler_params=pltpu.CompilerParams(
            dimension_semantics=("parallel",),
            vmem_limit_bytes=32 * 1024 * 1024,
        ),
        cost_estimate=cost,
    )(x_bf16, wbig, bbig, poolfc, bfc_row)
    return out[:B]


def _reference_forward(x, params):
    """Pure-JAX f32 reference matching the PyTorch module."""
    wconv, bconv, wfc, bfc = params
    B = x.shape[0]
    xi = x.reshape(B, IMAGE_SIZE, IMAGE_SIZE).astype(jnp.float32)
    w = wconv.reshape(OUT_CHANNELS, KERNEL * KERNEL)
    patches = jnp.stack(
        [xi[:, i:i + HO, j:j + HO] for i in range(KERNEL) for j in range(KERNEL)],
        axis=-1)                                                          # [B,14,14,9]
    conv = jnp.einsum("bhwt,ot->bohw", patches, w) + bconv[None, :, None, None]
    conv = jnp.maximum(conv, 0.0)
    pooled = conv.mean(axis=(2, 3))                                       # [B,36]
    logits = pooled @ wfc.T + bfc[None, :]
    return jax.nn.softmax(logits, axis=-1)


if __name__ == "__main__":
    key = jax.random.PRNGKey(0)
    kx, kp = jax.random.split(key)
    B = 2
    x = jax.random.normal(kx, (B, IMAGE_SIZE, IMAGE_SIZE), dtype=jnp.float32)
    params = init_params(kp)

    out = convnet_forward(x, params)
    out = jax.block_until_ready(out)
    assert out.shape == (B, NUM_CLASSES)
    assert bool(jnp.all(jnp.isfinite(out)))
    # softmax rows sum to 1
    assert bool(jnp.allclose(jnp.sum(out, axis=1), 1.0, atol=1e-5))
    # matches the f32 reference (bf16 conv operands -> loose tolerance)
    ref = _reference_forward(x, params)
    assert bool(jnp.allclose(out, ref, atol=1e-2))
    print("KERNEL_OK")
</pallas_src>

<mosaic_0001>
module attributes {stable_mosaic.version = 11 : i64} {
  func.func @_convnet_kernel(%arg0: i32, %arg1: memref<8x256xbf16, #tpu.memory_space<vmem>>, %arg2: memref<256x9216xbf16, #tpu.memory_space<vmem>>, %arg3: memref<1x9216xf32, #tpu.memory_space<vmem>>, %arg4: memref<9216x2xf32, #tpu.memory_space<vmem>>, %arg5: memref<1x2xf32, #tpu.memory_space<vmem>>, %arg6: memref<8x2xf32, #tpu.memory_space<vmem>>) attributes {dimension_semantics = [#tpu.dimension_semantics<parallel>], iteration_bounds = array<i64: 1>, scalar_prefetch = 0 : i64, scratch_operands = 0 : i64, tpu.core_type = #tpu.core_type<tc>, window_params = [{transform_indices = @transform_0, window_bounds = array<i64: 8, 256>}, {pipeline_mode = #tpu.pipeline_mode<synchronous>, transform_indices = @transform_1, window_bounds = array<i64: 256, 9216>}, {pipeline_mode = #tpu.pipeline_mode<synchronous>, transform_indices = @transform_2, window_bounds = array<i64: 1, 9216>}, {pipeline_mode = #tpu.pipeline_mode<synchronous>, transform_indices = @transform_3, window_bounds = array<i64: 9216, 2>}, {pipeline_mode = #tpu.pipeline_mode<synchronous>, transform_indices = @transform_4, window_bounds = array<i64: 1, 2>}, {transform_indices = @transform_5, window_bounds = array<i64: 8, 2>}]} {
    %c0 = arith.constant 0 : index
    %c0_0 = arith.constant 0 : index
    %0 = vector.load %arg1[%c0, %c0_0] : memref<8x256xbf16, #tpu.memory_space<vmem>>, vector<8x256xbf16>
    %c0_1 = arith.constant 0 : index
    %c0_2 = arith.constant 0 : index
    %1 = vector.load %arg2[%c0_1, %c0_2] : memref<256x9216xbf16, #tpu.memory_space<vmem>>, vector<256x9216xbf16>
    %cst = arith.constant dense<0.000000e+00> : vector<8x9216xf32>
    %2 = tpu.matmul %0, %1, %cst {dimension_numbers = #tpu.dot_dimension_numbers<[1], [0], [0], [1], [0, 0, 1, 1], [], []>} : vector<8x256xbf16>, vector<256x9216xbf16>, vector<8x9216xf32> -> vector<8x9216xf32>
    %c0_3 = arith.constant 0 : index
    %c0_4 = arith.constant 0 : index
    %3 = vector.load %arg3[%c0_3, %c0_4] : memref<1x9216xf32, #tpu.memory_space<vmem>>, vector<1x9216xf32>
    %4 = vector.broadcast %3 : vector<1x9216xf32> to vector<8x9216xf32>
    %5 = arith.addf %2, %4 : vector<8x9216xf32>
    %cst_5 = arith.constant 0.000000e+00 : f32
    %6 = vector.broadcast %cst_5 : f32 to vector<8x9216xf32>
    %7 = arith.maximumf %5, %6 : vector<8x9216xf32>
    %c0_6 = arith.constant 0 : index
    %c0_7 = arith.constant 0 : index
    %8 = vector.load %arg4[%c0_6, %c0_7] : memref<9216x2xf32, #tpu.memory_space<vmem>>, vector<9216x2xf32>
    %cst_8 = arith.constant dense<0.000000e+00> : vector<8x2xf32>
    %9 = tpu.matmul %7, %8, %cst_8 {dimension_numbers = #tpu.dot_dimension_numbers<[1], [0], [0], [1], [0, 0, 1, 1], [], []>} : vector<8x9216xf32>, vector<9216x2xf32>, vector<8x2xf32> -> vector<8x2xf32>
    %c0_9 = arith.constant 0 : index
    %c0_10 = arith.constant 0 : index
    %10 = vector.load %arg5[%c0_9, %c0_10] : memref<1x2xf32, #tpu.memory_space<vmem>>, vector<1x2xf32>
    %11 = vector.broadcast %10 : vector<1x2xf32> to vector<8x2xf32>
    %12 = arith.addf %9, %11 : vector<8x2xf32>
    %cst_11 = arith.constant dense<0xFF800000> : vector<8xf32>
    %13 = vector.multi_reduction <maximumf>, %12, %cst_11 [1] : vector<8x2xf32> to vector<8xf32>
    %14 = vector.shape_cast %13 : vector<8xf32> to vector<8x1xf32>
    %15 = vector.broadcast %14 : vector<8x1xf32> to vector<8x2xf32>
    %16 = arith.subf %12, %15 : vector<8x2xf32>
    %17 = math.exp %16 : vector<8x2xf32>
    %cst_12 = arith.constant dense<0.000000e+00> : vector<8xf32>
    %18 = vector.multi_reduction <add>, %17, %cst_12 [1] : vector<8x2xf32> to vector<8xf32>
    %19 = vector.shape_cast %18 : vector<8xf32> to vector<8x1xf32>
    %20 = vector.broadcast %19 : vector<8x1xf32> to vector<8x2xf32>
    %21 = arith.divf %17, %20 : vector<8x2xf32>
    %c0_13 = arith.constant 0 : index
    %c0_14 = arith.constant 0 : index
    %22 = vector.load %arg6[%c0_13, %c0_14] : memref<8x2xf32, #tpu.memory_space<vmem>>, vector<8x2xf32>
    tpu.vector_store %arg6[%c0_13, %c0_14], %21 {strides = array<i32>} : memref<8x2xf32, #tpu.memory_space<vmem>>, vector<8x2xf32>,
    return
  }
  func.func @transform_0(%arg0: i32) -> (i32, i32) {
    %c0_i32 = arith.constant 0 : i32
    %c0_i32_0 = arith.constant 0 : i32
    return %arg0, %c0_i32 : i32, i32
  }
  func.func @transform_1(%arg0: i32) -> (i32, i32) {
    %c0_i32 = arith.constant 0 : i32
    %c0_i32_0 = arith.constant 0 : i32
    %c0_i32_1 = arith.constant 0 : i32
    return %c0_i32, %c0_i32_0 : i32, i32
  }
  func.func @transform_2(%arg0: i32) -> (i32, i32) {
    %c0_i32 = arith.constant 0 : i32
    %c0_i32_0 = arith.constant 0 : i32
    %c0_i32_1 = arith.constant 0 : i32
    return %c0_i32, %c0_i32_0 : i32, i32
  }
  func.func @transform_3(%arg0: i32) -> (i32, i32) {
    %c0_i32 = arith.constant 0 : i32
    %c0_i32_0 = arith.constant 0 : i32
    %c0_i32_1 = arith.constant 0 : i32
    return %c0_i32, %c0_i32_0 : i32, i32
  }
  func.func @transform_4(%arg0: i32) -> (i32, i32) {
    %c0_i32 = arith.constant 0 : i32
    %c0_i32_0 = arith.constant 0 : i32
    %c0_i32_1 = arith.constant 0 : i32
    return %c0_i32, %c0_i32_0 : i32, i32
  }
  func.func @transform_5(%arg0: i32) -> (i32, i32) {
    %c0_i32 = arith.constant 0 : i32
    %c0_i32_0 = arith.constant 0 : i32
    return %arg0, %c0_i32 : i32, i32
  }
}

</mosaic_0001>

<llo_original>
// kernel: tpu_custom_call.1
$region0: #{tpu_custom_call.1}
  #allocation0 [shape = 'u32[]', space=smem, size = 0x4, offset = 0x4, fixed_abs, tag = 'smem constant byte address 0x4 - core index']
  #allocation1 [shape = 'u32[144,128]{1,0:T(1,128)}', space=vmem, size = 0x12000, scoped, tag = 'internal scratch']
  %s0 = inlined_call_operand.vmem [shape: bf16[8,256], index: 0, kind: input, shape index: {}]
  %s1 = inlined_call_operand.vmem [shape: bf16[256,9216], index: 1, kind: input, shape index: {}]
  %s2 = inlined_call_operand.vmem [shape: f32[1,9216], index: 2, kind: input, shape index: {}]
  %s3 = inlined_call_operand.vmem [shape: f32[9216,2], index: 3, kind: input, shape index: {}]
  %s4 = inlined_call_operand.vmem [shape: f32[1,2], index: 4, kind: input, shape index: {}]
  %s5 = inlined_call_operand.vmem [shape: f32[8,2], index: 5, kind: output, shape index: {}]
  %s6 = sld [smem:[#allocation0]]
  $region30: #{tpu_custom_call.1} parent=0
    _
  %s8 = ssub.s32 1, %s6
  %s9 = scalar_select 0, %s8, %s6
  // Predicated region
  $region2: #{tpu_custom_call.1} parent=0 // pred_check
    _
  $region3: #{tpu_custom_call.1} parent=0 // pred_check_branch
    %11 = sbr.rel (0) target = $region5
  $region4: #{tpu_custom_call.1} parent=0 // pred_region
    _
  $region5: #{tpu_custom_call.1} parent=0 // pred_fallthru
    _
  // Predicated region
  $region6: #{tpu_custom_call.1} parent=0 // pred_check
    _
  $region7: #{tpu_custom_call.1} parent=0 // pred_check_branch
    %13 = sbr.rel (0) target = $region9
  $region8: #{tpu_custom_call.1} parent=0 // pred_region
    _
  $region9: #{tpu_custom_call.1} parent=0 // pred_fallthru
    _
  // Predicated region
  $region10: #{tpu_custom_call.1} parent=0 // pred_check
    _
  $region11: #{tpu_custom_call.1} parent=0 // pred_check_branch
    %15 = sbr.rel (0) target = $region13
  $region12: #{tpu_custom_call.1} parent=0 // pred_region
    _
  $region13: #{tpu_custom_call.1} parent=0 // pred_fallthru
    _
  // Predicated region
  $region14: #{tpu_custom_call.1} parent=0 // pred_check
    _
  $region15: #{tpu_custom_call.1} parent=0 // pred_check_branch
    %17 = sbr.rel (0) target = $region17
  $region16: #{tpu_custom_call.1} parent=0 // pred_region
    _
  $region17: #{tpu_custom_call.1} parent=0 // pred_fallthru
    _
  // Predicated region
  $region18: #{tpu_custom_call.1} parent=0 // pred_check
    _
  $region19: #{tpu_custom_call.1} parent=0 // pred_check_branch
    %19 = sbr.rel (0) target = $region21
  $region20: #{tpu_custom_call.1} parent=0 // pred_region
    _
  $region21: #{tpu_custom_call.1} parent=0 // pred_fallthru
    _
  %v20 = vld [vmem:[%s0] sm:$0xff]
  %v21 = vld [vmem:[%s1] sm:$0xff]
  %v22 = vld [vmem:[%s1 + $0x8] sm:$0xff]
  %v23 = vld [vmem:[%s1 + $0x10] sm:$0xff]
  %v24 = vld [vmem:[%s1 + $0x18] sm:$0xff]
  %v25 = vld [vmem:[%s1 + $0x20] sm:$0xff]
  %v26 = vld [vmem:[%s1 + $0x28] sm:$0xff]
  %v27 = vld [vmem:[%s1 + $0x30] sm:$0xff]
  %v28 = vld [vmem:[%s1 + $0x38] sm:$0xff]
  %v29 = vld [vmem:[%s1 + $0x40] sm:$0xff]
  %v30 = vld [vmem:[%s1 + $0x48] sm:$0xff]
  %v31 = vld [vmem:[%s1 + $0x50] sm:$0xff]
  %v32 = vld [vmem:[%s1 + $0x58] sm:$0xff]
  %v33 = vld [vmem:[%s1 + $0x60] sm:$0xff]
  %v34 = vld [vmem:[%s1 + $0x68] sm:$0xff]
  %v35 = vld [vmem:[%s1 + $0x70] sm:$0xff]
  %v36 = vld [vmem:[%s1 + $0x78] sm:$0xff]
  %v37 = vld [vmem:[%s1 + $0x80] sm:$0xff]
  %v38 = vld [vmem:[%s1 + $0x88] sm:$0xff]
  %v39 = vld [vmem:[%s1 + $0x90] sm:$0xff]
  %v40 = vld [vmem:[%s1 + $0x98] sm:$0xff]
  %v41 = vld [vmem:[%s1 + $0xa0] sm:$0xff]
  %v42 = vld [vmem:[%s1 + $0xa8] sm:$0xff]
  %v43 = vld [vmem:[%s1 + $0xb0] sm:$0xff]
  %v44 = vld [vmem:[%s1 + $0xb8] sm:$0xff]
  %v45 = vld [vmem:[%s1 + $0xc0] sm:$0xff]
  %v46 = vld [vmem:[%s1 + $0xc8] sm:$0xff]
  %v47 = vld [vmem:[%s1 + $0xd0] sm:$0xff]
  %v48 = vld [vmem:[%s1 + $0xd8] sm:$0xff]
  %v49 = vld [vmem:[%s1 + $0xe0] sm:$0xff]
  %v50 = vld [vmem:[%s1 + $0xe8] sm:$0xff]
  %v51 = vld [vmem:[%s1 + $0xf0] sm:$0xff]
  %v52 = vld [vmem:[%s1 + $0xf8] sm:$0xff]
  %v53 = vld [vmem:[%s1 + $0x100] sm:$0xff]
  %v54 = vld [vmem:[%s1 + $0x108] sm:$0xff]
  %v55 = vld [vmem:[%s1 + $0x110] sm:$0xff]
  %v56 = vld [vmem:[%s1 + $0x118] sm:$0xff]
  %v57 = vld [vmem:[%s1 + $0x120] sm:$0xff]
  %v58 = vld [vmem:[%s1 + $0x128] sm:$0xff]
  %v59 = vld [vmem:[%s1 + $0x130] sm:$0xff]
  %v60 = vld [vmem:[%s1 + $0x138] sm:$0xff]
  %v61 = vld [vmem:[%s1 + $0x140] sm:$0xff]
  %v62 = vld [vmem:[%s1 + $0x148] sm:$0xff]
  %v63 = vld [vmem:[%s1 + $0x150] sm:$0xff]
  %v64 = vld [vmem:[%s1 + $0x158] sm:$0xff]
  %v65 = vld [vmem:[%s1 + $0x160] sm:$0xff]
  %v66 = vld [vmem:[%s1 + $0x168] sm:$0xff]
  %v67 = vld [vmem:[%s1 + $0x170] sm:$0xff]
  %v68 = vld [vmem:[%s1 + $0x178] sm:$0xff]
  %v69 = vld [vmem:[%s1 + $0x180] sm:$0xff]
  %v70 = vld [vmem:[%s1 + $0x188] sm:$0xff]
  %v71 = vld [vmem:[%s1 + $0x190] sm:$0xff]
  %v72 = vld [vmem:[%s1 + $0x198] sm:$0xff]
  %v73 = vld [vmem:[%s1 + $0x1a0] sm:$0xff]
  %v74 = vld [vmem:[%s1 + $0x1a8] sm:$0xff]
  %v75 = vld [vmem:[%s1 + $0x1b0] sm:$0xff]
  %v76 = vld [vmem:[%s1 + $0x1b8] sm:$0xff]
  %v77 = vld [vmem:[%s1 + $0x1c0] sm:$0xff]
  %v78 = vld [vmem:[%s1 + $0x1c8] sm:$0xff]
  %v79 = vld [vmem:[%s1 + $0x1d0] sm:$0xff]
  %v80 = vld [vmem:[%s1 + $0x1d8] sm:$0xff]
  %v81 = vld [vmem:[%s1 + $0x1e0] sm:$0xff]
  %v82 = vld [vmem:[%s1 + $0x1e8] sm:$0xff]
  %v83 = vld [vmem:[%s1 + $0x1f0] sm:$0xff]
  %v84 = vld [vmem:[%s1 + $0x1f8] sm:$0xff]
  %v85 = vld [vmem:[%s1 + $0x200] sm:$0xff]
  %v86 = vld [vmem:[%s1 + $0x208] sm:$0xff]
  %v87 = vld [vmem:[%s1 + $0x210] sm:$0xff]
  %v88 = vld [vmem:[%s1 + $0x218] sm:$0xff]
  %v89 = vld [vmem:[%s1 + $0x220] sm:$0xff]
  %v90 = vld [vmem:[%s1 + $0x228] sm:$0xff]
  %v91 = vld [vmem:[%s1 + $0x230] sm:$0xff]
  %v92 = vld [vmem:[%s1 + $0x238] sm:$0xff]
  %v93 = vld [vmem:[%s1 + $0x240] sm:$0xff]
  %v94 = vld [vmem:[%s1 + $0x248] sm:$0xff]
  %v95 = vld [vmem:[%s1 + $0x250] sm:$0xff]
  %v96 = vld [vmem:[%s1 + $0x258] sm:$0xff]
  %v97 = vld [vmem:[%s1 + $0x260] sm:$0xff]
  %v98 = vld [vmem:[%s1 + $0x268] sm:$0xff]
  %v99 = vld [vmem:[%s1 + $0x270] sm:$0xff]
  %v100 = vld [vmem:[%s1 + $0x278] sm:$0xff]
  %v101 = vld [vmem:[%s1 + $0x280] sm:$0xff]
  %v102 = vld [vmem:[%s1 + $0x288] sm:$0xff]
  %v103 = vld [vmem:[%s1 + $0x290] sm:$0xff]
  %v104 = vld [vmem:[%s1 + $0x298] sm:$0xff]
  %v105 = vld [vmem:[%s1 + $0x2a0] sm:$0xff]
  %v106 = vld [vmem:[%s1 + $0x2a8] sm:$0xff]
  %v107 = vld [vmem:[%s1 + $0x2b0] sm:$0xff]
  %v108 = vld [vmem:[%s1 + $0x2b8] sm:$0xff]
  %v109 = vld [vmem:[%s1 + $0x2c0] sm:$0xff]
  %v110 = vld [vmem:[%s1 + $0x2c8] sm:$0xff]
  %v111 = vld [vmem:[%s1 + $0x2d0] sm:$0xff]
  %v112 = vld [vmem:[%s1 + $0x2d8] sm:$0xff]
  %v113 = vld [vmem:[%s1 + $0x2e0] sm:$0xff]
  %v114 = vld [vmem:[%s1 + $0x2e8] sm:$0xff]
  %v115 = vld [vmem:[%s1 + $0x2f0] sm:$0xff]
  %v116 = vld [vmem:[%s1 + $0x2f8] sm:$0xff]
  %v117 = vld [vmem:[%s1 + $0x300] sm:$0xff]
  %v118 = vld [vmem:[%s1 + $0x308] sm:$0xff]
  %v119 = vld [vmem:[%s1 + $0x310] sm:$0xff]
  %v120 = vld [vmem:[%s1 + $0x318] sm:$0xff]
  %v121 = vld [vmem:[%s1 + $0x320] sm:$0xff]
  %v122 = vld [vmem:[%s1 + $0x328] sm:$0xff]
  %v123 = vld [vmem:[%s1 + $0x330] sm:$0xff]
  %v124 = vld [vmem:[%s1 + $0x338] sm:$0xff]
  %v125 = vld [vmem:[%s1 + $0x340] sm:$0xff]
  %v126 = vld [vmem:[%s1 + $0x348] sm:$0xff]
  %v127 = vld [vmem:[%s1 + $0x350] sm:$0xff]
  %v128 = vld [vmem:[%s1 + $0x358] sm:$0xff]
  %v129 = vld [vmem:[%s1 + $0x360] sm:$0xff]
  %v130 = vld [vmem:[%s1 + $0x368] sm:$0xff]
  %v131 = vld [vmem:[%s1 + $0x370] sm:$0xff]
  %v132 = vld [vmem:[%s1 + $0x378] sm:$0xff]
  %v133 = vld [vmem:[%s1 + $0x380] sm:$0xff]
  %v134 = vld [vmem:[%s1 + $0x388] sm:$0xff]
  %v135 = vld [vmem:[%s1 + $0x390] sm:$0xff]
  %v136 = vld [vmem:[%s1 + $0x398] sm:$0xff]
  %v137 = vld [vmem:[%s1 + $0x3a0] sm:$0xff]
  %v138 = vld [vmem:[%s1 + $0x3a8] sm:$0xff]
  %v139 = vld [vmem:[%s1 + $0x3b0] sm:$0xff]
  %v140 = vld [vmem:[%s1 + $0x3b8] sm:$0xff]
  %v141 = vld [vmem:[%s1 + $0x3c0] sm:$0xff]
  %v142 = vld [vmem:[%s1 + $0x3c8] sm:$0xff]
  %v143 = vld [vmem:[%s1 + $0x3d0] sm:$0xff]
  %v144 = vld [vmem:[%s1 + $0x3d8] sm:$0xff]
  %v145 = vld [vmem:[%s1 + $0x3e0] sm:$0xff]
  %v146 = vld [vmem:[%s1 + $0x3e8] sm:$0xff]
  %v147 = vld [vmem:[%s1 + $0x3f0] sm:$0xff]
  %v148 = vld [vmem:[%s1 + $0x3f8] sm:$0xff]
  %v149 = vld [vmem:[%s1 + $0x400] sm:$0xff]
  %v150 = vld [vmem:[%s1 + $0x408] sm:$0xff]
  %v151 = vld [vmem:[%s1 + $0x410] sm:$0xff]
  %v152 = vld [vmem:[%s1 + $0x418] sm:$0xff]
  %v153 = vld [vmem:[%s1 + $0x420] sm:$0xff]
  %v154 = vld [vmem:[%s1 + $0x428] sm:$0xff]
  %v155 = vld [vmem:[%s1 + $0x430] sm:$0xff]
  %v156 = vld [vmem:[%s1 + $0x438] sm:$0xff]
  %v157 = vld [vmem:[%s1 + $0x440] sm:$0xff]
  %v158 = vld [vmem:[%s1 + $0x448] sm:$0xff]
  %v159 = vld [vmem:[%s1 + $0x450] sm:$0xff]
  %v160 = vld [vmem:[%s1 + $0x458] sm:$0xff]
  %v161 = vld [vmem:[%s1 + $0x460] sm:$0xff]
  %v162 = vld [vmem:[%s1 + $0x468] sm:$0xff]
  %v163 = vld [vmem:[%s1 + $0x470] sm:$0xff]
  %v164 = vld [vmem:[%s1 + $0x478] sm:$0xff]
  %v165 = vld [vmem:[%s1 + $0x480] sm:$0xff]
  %v166 = vld [vmem:[%s1 + $0x488] sm:$0xff]
  %v167 = vld [vmem:[%s1 + $0x490] sm:$0xff]
  %v168 = vld [vmem:[%s1 + $0x498] sm:$0xff]
  %v169 = vld [vmem:[%s1 + $0x4a0] sm:$0xff]
  %v170 = vld [vmem:[%s1 + $0x4a8] sm:$0xff]
  %v171 = vld [vmem:[%s1 + $0x4b0] sm:$0xff]
  %v172 = vld [vmem:[%s1 + $0x4b8] sm:$0xff]
  %v173 = vld [vmem:[%s1 + $0x4c0] sm:$0xff]
  %v174 = vld [vmem:[%s1 + $0x4c8] sm:$0xff]
  %v175 = vld [vmem:[%s1 + $0x4d0] sm:$0xff]
  %v176 = vld [vmem:[%s1 + $0x4d8] sm:$0xff]
  %v177 = vld [vmem:[%s1 + $0x4e0] sm:$0xff]
  %v178 = vld [vmem:[%s1 + $0x4e8] sm:$0xff]
  %v179 = vld [vmem:[%s1 + $0x4f0] sm:$0xff]
  %v180 = vld [vmem:[%s1 + $0x4f8] sm:$0xff]
  %v181 = vld [vmem:[%s1 + $0x500] sm:$0xff]
  %v182 = vld [vmem:[%s1 + $0x508] sm:$0xff]
  %v183 = vld [vmem:[%s1 + $0x510] sm:$0xff]
  %v184 = vld [vmem:[%s1 + $0x518] sm:$0xff]
  %v185 = vld [vmem:[%s1 + $0x520] sm:$0xff]
  %v186 = vld [vmem:[%s1 + $0x528] sm:$0xff]
  %v187 = vld [vmem:[%s1 + $0x530] sm:$0xff]
  %v188 = vld [vmem:[%s1 + $0x538] sm:$0xff]
  %v189 = vld [vmem:[%s1 + $0x540] sm:$0xff]
  %v190 = vld [vmem:[%s1 + $0x548] sm:$0xff]
  %v191 = vld [vmem:[%s1 + $0x550] sm:$0xff]
  %v192 = vld [vmem:[%s1 + $0x558] sm:$0xff]
  %v193 = vld [vmem:[%s1 + $0x560] sm:$0xff]
  %v194 = vld [vmem:[%s1 + $0x568] sm:$0xff]
  %v195 = vld [vmem:[%s1 + $0x570] sm:$0xff]
  %v196 = vld [vmem:[%s1 + $0x578] sm:$0xff]
  %v197 = vld [vmem:[%s1 + $0x580] sm:$0xff]
  %v198 = vld [vmem:[%s1 + $0x588] sm:$0xff]
  %v199 = vld [vmem:[%s1 + $0x590] sm:$0xff]
  %v200 = vld [vmem:[%s1 + $0x598] sm:$0xff]
  %v201 = vld [vmem:[%s1 + $0x5a0] sm:$0xff]
  %v202 = vld [vmem:[%s1 + $0x5a8] sm:$0xff]
  %v203 = vld [vmem:[%s1 + $0x5b0] sm:$0xff]
  %v204 = vld [vmem:[%s1 + $0x5b8] sm:$0xff]
  %v205 = vld [vmem:[%s1 + $0x5c0] sm:$0xff]
  %v206 = vld [vmem:[%s1 + $0x5c8] sm:$0xff]
  %v207 = vld [vmem:[%s1 + $0x5d0] sm:$0xff]
  %v208 = vld [vmem:[%s1 + $0x5d8] sm:$0xff]
  %v209 = vld [vmem:[%s1 + $0x5e0] sm:$0xff]
  %v210 = vld [vmem:[%s1 + $0x5e8] sm:$0xff]
  %v211 = vld [vmem:[%s1 + $0x5f0] sm:$0xff]
  %v212 = vld [vmem:[%s1 + $0x5f8] sm:$0xff]
  %v213 = vld [vmem:[%s1 + $0x600] sm:$0xff]
  %v214 = vld [vmem:[%s1 + $0x608] sm:$0xff]
  %v215 = vld [vmem:[%s1 + $0x610] sm:$0xff]
  %v216 = vld [vmem:[%s1 + $0x618] sm:$0xff]
  %v217 = vld [vmem:[%s1 + $0x620] sm:$0xff]
  %v218 = vld [vmem:[%s1 + $0x628] sm:$0xff]
  %v219 = vld [vmem:[%s1 + $0x630] sm:$0xff]
  %v220 = vld [vmem:[%s1 + $0x638] sm:$0xff]
  %v221 = vld [vmem:[%s1 + $0x640] sm:$0xff]
  %v222 = vld [vmem:[%s1 + $0x648] sm:$0xff]
  %v223 = vld [vmem:[%s1 + $0x650] sm:$0xff]
  %v224 = vld [vmem:[%s1 + $0x658] sm:$0xff]
  %v225 = vld [vmem:[%s1 + $0x660] sm:$0xff]
  %v226 = vld [vmem:[%s1 + $0x668] sm:$0xff]
  %v227 = vld [vmem:[%s1 + $0x670] sm:$0xff]
  %v228 = vld [vmem:[%s1 + $0x678] sm:$0xff]
  %v229 = vld [vmem:[%s1 + $0x680] sm:$0xff]
  %v230 = vld [vmem:[%s1 + $0x688] sm:$0xff]
  %v231 = vld [vmem:[%s1 + $0x690] sm:$0xff]
  %v232 = vld [vmem:[%s1 + $0x698] sm:$0xff]
  %v233 = vld [vmem:[%s1 + $0x6a0] sm:$0xff]
  %v234 = vld [vmem:[%s1 + $0x6a8] sm:$0xff]
  %v235 = vld [vmem:[%s1 + $0x6b0] sm:$0xff]
  %v236 = vld [vmem:[%s1 + $0x6b8] sm:$0xff]
  %v237 = vld [vmem:[%s1 + $0x6c0] sm:$0xff]
  %v238 = vld [vmem:[%s1 + $0x6c8] sm:$0xff]
  %v239 = vld [vmem:[%s1 + $0x6d0] sm:$0xff]
  %v240 = vld [vmem:[%s1 + $0x6d8] sm:$0xff]
  %v241 = vld [vmem:[%s1 + $0x6e0] sm:$0xff]
  %v242 = vld [vmem:[%s1 + $0x6e8] sm:$0xff]
  %v243 = vld [vmem:[%s1 + $0x6f0] sm:$0xff]
  %v244 = vld [vmem:[%s1 + $0x6f8] sm:$0xff]
  %v245 = vld [vmem:[%s1 + $0x700] sm:$0xff]
  %v246 = vld [vmem:[%s1 + $0x708] sm:$0xff]
  %v247 = vld [vmem:[%s1 + $0x710] sm:$0xff]
  %v248 = vld [vmem:[%s1 + $0x718] sm:$0xff]
  %v249 = vld [vmem:[%s1 + $0x720] sm:$0xff]
  %v250 = vld [vmem:[%s1 + $0x728] sm:$0xff]
  %v251 = vld [vmem:[%s1 + $0x730] sm:$0xff]
  %v252 = vld [vmem:[%s1 + $0x738] sm:$0xff]
  %v253 = vld [vmem:[%s1 + $0x740] sm:$0xff]
  %v254 = vld [vmem:[%s1 + $0x748] sm:$0xff]
  %v255 = vld [vmem:[%s1 + $0x750] sm:$0xff]
  %v256 = vld [vmem:[%s1 + $0x758] sm:$0xff]
  %v257 = vld [vmem:[%s1 + $0x760] sm:$0xff]
  %v258 = vld [vmem:[%s1 + $0x768] sm:$0xff]
  %v259 = vld [vmem:[%s1 + $0x770] sm:$0xff]
  %v260 = vld [vmem:[%s1 + $0x778] sm:$0xff]
  %v261 = vld [vmem:[%s1 + $0x780] sm:$0xff]
  %v262 = vld [vmem:[%s1 + $0x788] sm:$0xff]
  %v263 = vld [vmem:[%s1 + $0x790] sm:$0xff]
  %v264 = vld [vmem:[%s1 + $0x798] sm:$0xff]
  %v265 = vld [vmem:[%s1 + $0x7a0] sm:$0xff]
  %v266 = vld [vmem:[%s1 + $0x7a8] sm:$0xff]
  %v267 = vld [vmem:[%s1 + $0x7b0] sm:$0xff]
  %v268 = vld [vmem:[%s1 + $0x7b8] sm:$0xff]
  %v269 = vld [vmem:[%s1 + $0x7c0] sm:$0xff]
  %v270 = vld [vmem:[%s1 + $0x7c8] sm:$0xff]
  %v271 = vld [vmem:[%s1 + $0x7d0] sm:$0xff]
  %v272 = vld [vmem:[%s1 + $0x7d8] sm:$0xff]
  %v273 = vld [vmem:[%s1 + $0x7e0] sm:$0xff]
  %v274 = vld [vmem:[%s1 + $0x7e8] sm:$0xff]
  %v275 = vld [vmem:[%s1 + $0x7f0] sm:$0xff]
  %v276 = vld [vmem:[%s1 + $0x7f8] sm:$0xff]
  %v277 = vld [vmem:[%s1 + $0x800] sm:$0xff]
  %v278 = vld [vmem:[%s1 + $0x808] sm:$0xff]
  %v279 = vld [vmem:[%s1 + $0x810] sm:$0xff]
  %v280 = vld [vmem:[%s1 + $0x818] sm:$0xff]
  %v281 = vld [vmem:[%s1 + $0x820] sm:$0xff]
  %v282 = vld [vmem:[%s1 + $0x828] sm:$0xff]
  %v283 = vld [vmem:[%s1 + $0x830] sm:$0xff]
  %v284 = vld [vmem:[%s1 + $0x838] sm:$0xff]
  %v285 = vld [vmem:[%s1 + $0x840] sm:$0xff]
  %v286 = vld [vmem:[%s1 + $0x848] sm:$0xff]
  %v287 = vld [vmem:[%s1 + $0x850] sm:$0xff]
  %v288 = vld [vmem:[%s1 + $0x858] sm:$0xff]
  %v289 = vld [vmem:[%s1 + $0x860] sm:$0xff]
  %v290 = vld [vmem:[%s1 + $0x868] sm:$0xff]
  %v291 = vld [vmem:[%s1 + $0x870] sm:$0xff]
  %v292 = vld [vmem:[%s1 + $0x878] sm:$0xff]
  %v293 = vld [vmem:[%s1 + $0x880] sm:$0xff]
  %v294 = vld [vmem:[%s1 + $0x888] sm:$0xff]
  %v295 = vld [vmem:[%s1 + $0x890] sm:$0xff]
  %v296 = vld [vmem:[%s1 + $0x898] sm:$0xff]
  %v297 = vld [vmem:[%s1 + $0x8a0] sm:$0xff]
  %v298 = vld [vmem:[%s1 + $0x8a8] sm:$0xff]
  %v299 = vld [vmem:[%s1 + $0x8b0] sm:$0xff]
  %v300 = vld [vmem:[%s1 + $0x8b8] sm:$0xff]
  %v301 = vld [vmem:[%s1 + $0x8c0] sm:$0xff]
  %v302 = vld [vmem:[%s1 + $0x8c8] sm:$0xff]
  %v303 = vld [vmem:[%s1 + $0x8d0] sm:$0xff]
  %v304 = vld [vmem:[%s1 + $0x8d8] sm:$0xff]
  %v305 = vld [vmem:[%s1 + $0x8e0] sm:$0xff]
  %v306 = vld [vmem:[%s1 + $0x8e8] sm:$0xff]
  %v307 = vld [vmem:[%s1 + $0x8f0] sm:$0xff]
  %v308 = vld [vmem:[%s1 + $0x8f8] sm:$0xff]
  %v309 = vld [vmem:[%s1 + $0x900] sm:$0xff]
  %v310 = vld [vmem:[%s1 + $0x908] sm:$0xff]
  %v311 = vld [vmem:[%s1 + $0x910] sm:$0xff]
  %v312 = vld [vmem:[%s1 + $0x918] sm:$0xff]
  %v313 = vld [vmem:[%s1 + $0x920] sm:$0xff]
  %v314 = vld [vmem:[%s1 + $0x928] sm:$0xff]
  %v315 = vld [vmem:[%s1 + $0x930] sm:$0xff]
  %v316 = vld [vmem:[%s1 + $0x938] sm:$0xff]
  %v317 = vld [vmem:[%s1 + $0x940] sm:$0xff]
  %v318 = vld [vmem:[%s1 + $0x948] sm:$0xff]
  %v319 = vld [vmem:[%s1 + $0x950] sm:$0xff]
  %v320 = vld [vmem:[%s1 + $0x958] sm:$0xff]
  %v321 = vld [vmem:[%s1 + $0x960] sm:$0xff]
  %v322 = vld [vmem:[%s1 + $0x968] sm:$0xff]
  %v323 = vld [vmem:[%s1 + $0x970] sm:$0xff]
  %v324 = vld [vmem:[%s1 + $0x978] sm:$0xff]
  %v325 = vld [vmem:[%s1 + $0x980] sm:$0xff]
  %v326 = vld [vmem:[%s1 + $0x988] sm:$0xff]
  %v327 = vld [vmem:[%s1 + $0x990] sm:$0xff]
  %v328 = vld [vmem:[%s1 + $0x998] sm:$0xff]
  %v329 = vld [vmem:[%s1 + $0x9a0] sm:$0xff]
  %v330 = vld [vmem:[%s1 + $0x9a8] sm:$0xff]
  %v331 = vld [vmem:[%s1 + $0x9b0] sm:$0xff]
  %v332 = vld [vmem:[%s1 + $0x9b8] sm:$0xff]
  %v333 = vld [vmem:[%s1 + $0x9c0] sm:$0xff]
  %v334 = vld [vmem:[%s1 + $0x9c8] sm:$0xff]
  %v335 = vld [vmem:[%s1 + $0x9d0] sm:$0xff]
  %v336 = vld [vmem:[%s1 + $0x9d8] sm:$0xff]
  %v337 = vld [vmem:[%s1 + $0x9e0] sm:$0xff]
  %v338 = vld [vmem:[%s1 + $0x9e8] sm:$0xff]
  %v339 = vld [vmem:[%s1 + $0x9f0] sm:$0xff]
  %v340 = vld [vmem:[%s1 + $0x9f8] sm:$0xff]
  %v341 = vld [vmem:[%s1 + $0xa00] sm:$0xff]
  %v342 = vld [vmem:[%s1 + $0xa08] sm:$0xff]
  %v343 = vld [vmem:[%s1 + $0xa10] sm:$0xff]
  %v344 = vld [vmem:[%s1 + $0xa18] sm:$0xff]
  %v345 = vld [vmem:[%s1 + $0xa20] sm:$0xff]
  %v346 = vld [vmem:[%s1 + $0xa28] sm:$0xff]
  %v347 = vld [vmem:[%s1 + $0xa30] sm:$0xff]
  %v348 = vld [vmem:[%s1 + $0xa38] sm:$0xff]
  %v349 = vld [vmem:[%s1 + $0xa40] sm:$0xff]
  %v350 = vld [vmem:[%s1 + $0xa48] sm:$0xff]
  %v351 = vld [vmem:[%s1 + $0xa50] sm:$0xff]
  %v352 = vld [vmem:[%s1 + $0xa58] sm:$0xff]
  %v353 = vld [vmem:[%s1 + $0xa60] sm:$0xff]
  %v354 = vld [vmem:[%s1 + $0xa68] sm:$0xff]
  %v355 = vld [vmem:[%s1 + $0xa70] sm:$0xff]
  %v356 = vld [vmem:[%s1 + $0xa78] sm:$0xff]
  %v357 = vld [vmem:[%s1 + $0xa80] sm:$0xff]
  %v358 = vld [vmem:[%s1 + $0xa88] sm:$0xff]
  %v359 = vld [vmem:[%s1 + $0xa90] sm:$0xff]
  %v360 = vld [vmem:[%s1 + $0xa98] sm:$0xff]
  %v361 = vld [vmem:[%s1 + $0xaa0] sm:$0xff]
  %v362 = vld [vmem:[%s1 + $0xaa8] sm:$0xff]
  %v363 = vld [vmem:[%s1 + $0xab0] sm:$0xff]
  %v364 = vld [vmem:[%s1 + $0xab8] sm:$0xff]
  %v365 = vld [vmem:[%s1 + $0xac0] sm:$0xff]
  %v366 = vld [vmem:[%s1 + $0xac8] sm:$0xff]
  %v367 = vld [vmem:[%s1 + $0xad0] sm:$0xff]
  %v368 = vld [vmem:[%s1 + $0xad8] sm:$0xff]
  %v369 = vld [vmem:[%s1 + $0xae0] sm:$0xff]
  %v370 = vld [vmem:[%s1 + $0xae8] sm:$0xff]
  %v371 = vld [vmem:[%s1 + $0xaf0] sm:$0xff]
  %v372 = vld [vmem:[%s1 + $0xaf8] sm:$0xff]
  %v373 = vld [vmem:[%s1 + $0xb00] sm:$0xff]
  %v374 = vld [vmem:[%s1 + $0xb08] sm:$0xff]
  %v375 = vld [vmem:[%s1 + $0xb10] sm:$0xff]
  %v376 = vld [vmem:[%s1 + $0xb18] sm:$0xff]
  %v377 = vld [vmem:[%s1 + $0xb20] sm:$0xff]
  %v378 = vld [vmem:[%s1 + $0xb28] sm:$0xff]
  %v379 = vld [vmem:[%s1 + $0xb30] sm:$0xff]
  %v380 = vld [vmem:[%s1 + $0xb38] sm:$0xff]
  %v381 = vld [vmem:[%s1 + $0xb40] sm:$0xff]
  %v382 = vld [vmem:[%s1 + $0xb48] sm:$0xff]
  %v383 = vld [vmem:[%s1 + $0xb50] sm:$0xff]
  %v384 = vld [vmem:[%s1 + $0xb58] sm:$0xff]
  %v385 = vld [vmem:[%s1 + $0xb60] sm:$0xff]
  %v386 = vld [vmem:[%s1 + $0xb68] sm:$0xff]
  %v387 = vld [vmem:[%s1 + $0xb70] sm:$0xff]
  %v388 = vld [vmem:[%s1 + $0xb78] sm:$0xff]
  %v389 = vld [vmem:[%s1 + $0xb80] sm:$0xff]
  %v390 = vld [vmem:[%s1 + $0xb88] sm:$0xff]
  %v391 = vld [vmem:[%s1 + $0xb90] sm:$0xff]
  %v392 = vld [vmem:[%s1 + $0xb98] sm:$0xff]
  %v393 = vld [vmem:[%s1 + $0xba0] sm:$0xff]
  %v394 = vld [vmem:[%s1 + $0xba8] sm:$0xff]
  %v395 = vld [vmem:[%s1 + $0xbb0] sm:$0xff]
  %v396 = vld [vmem:[%s1 + $0xbb8] sm:$0xff]
  %v397 = vld [vmem:[%s1 + $0xbc0] sm:$0xff]
  %v398 = vld [vmem:[%s1 + $0xbc8] sm:$0xff]
  %v399 = vld [vmem:[%s1 + $0xbd0] sm:$0xff]
  %v400 = vld [vmem:[%s1 + $0xbd8] sm:$0xff]
  %v401 = vld [vmem:[%s1 + $0xbe0] sm:$0xff]
  %v402 = vld [vmem:[%s1 + $0xbe8] sm:$0xff]
  %v403 = vld [vmem:[%s1 + $0xbf0] sm:$0xff]
  %v404 = vld [vmem:[%s1 + $0xbf8] sm:$0xff]
  %v405 = vld [vmem:[%s1 + $0xc00] sm:$0xff]
  %v406 = vld [vmem:[%s1 + $0xc08] sm:$0xff]
  %v407 = vld [vmem:[%s1 + $0xc10] sm:$0xff]
  %v408 = vld [vmem:[%s1 + $0xc18] sm:$0xff]
  %v409 = vld [vmem:[%s1 + $0xc20] sm:$0xff]
  %v410 = vld [vmem:[%s1 + $0xc28] sm:$0xff]
  %v411 = vld [vmem:[%s1 + $0xc30] sm:$0xff]
  %v412 = vld [vmem:[%s1 + $0xc38] sm:$0xff]
  %v413 = vld [vmem:[%s1 + $0xc40] sm:$0xff]
  %v414 = vld [vmem:[%s1 + $0xc48] sm:$0xff]
  %v415 = vld [vmem:[%s1 + $0xc50] sm:$0xff]
  %v416 = vld [vmem:[%s1 + $0xc58] sm:$0xff]
  %v417 = vld [vmem:[%s1 + $0xc60] sm:$0xff]
  %v418 = vld [vmem:[%s1 + $0xc68] sm:$0xff]
  %v419 = vld [vmem:[%s1 + $0xc70] sm:$0xff]
  %v420 = vld [vmem:[%s1 + $0xc78] sm:$0xff]
  %v421 = vld [vmem:[%s1 + $0xc80] sm:$0xff]
  %v422 = vld [vmem:[%s1 + $0xc88] sm:$0xff]
  %v423 = vld [vmem:[%s1 + $0xc90] sm:$0xff]
  %v424 = vld [vmem:[%s1 + $0xc98] sm:$0xff]
  %v425 = vld [vmem:[%s1 + $0xca0] sm:$0xff]
  %v426 = vld [vmem:[%s1 + $0xca8] sm:$0xff]
  %v427 = vld [vmem:[%s1 + $0xcb0] sm:$0xff]
  %v428 = vld [vmem:[%s1 + $0xcb8] sm:$0xff]
  %v429 = vld [vmem:[%s1 + $0xcc0] sm:$0xff]
  %v430 = vld [vmem:[%s1 + $0xcc8] sm:$0xff]
  %v431 = vld [vmem:[%s1 + $0xcd0] sm:$0xff]
  %v432 = vld [vmem:[%s1 + $0xcd8] sm:$0xff]
  %v433 = vld [vmem:[%s1 + $0xce0] sm:$0xff]
  %v434 = vld [vmem:[%s1 + $0xce8] sm:$0xff]
  %v435 = vld [vmem:[%s1 + $0xcf0] sm:$0xff]
  %v436 = vld [vmem:[%s1 + $0xcf8] sm:$0xff]
  %v437 = vld [vmem:[%s1 + $0xd00] sm:$0xff]
  %v438 = vld [vmem:[%s1 + $0xd08] sm:$0xff]
  %v439 = vld [vmem:[%s1 + $0xd10] sm:$0xff]
  %v440 = vld [vmem:[%s1 + $0xd18] sm:$0xff]
  %v441 = vld [vmem:[%s1 + $0xd20] sm:$0xff]
  %v442 = vld [vmem:[%s1 + $0xd28] sm:$0xff]
  %v443 = vld [vmem:[%s1 + $0xd30] sm:$0xff]
  %v444 = vld [vmem:[%s1 + $0xd38] sm:$0xff]
  %v445 = vld [vmem:[%s1 + $0xd40] sm:$0xff]
  %v446 = vld [vmem:[%s1 + $0xd48] sm:$0xff]
  %v447 = vld [vmem:[%s1 + $0xd50] sm:$0xff]
  %v448 = vld [vmem:[%s1 + $0xd58] sm:$0xff]
  %v449 = vld [vmem:[%s1 + $0xd60] sm:$0xff]
  %v450 = vld [vmem:[%s1 + $0xd68] sm:$0xff]
  %v451 = vld [vmem:[%s1 + $0xd70] sm:$0xff]
  %v452 = vld [vmem:[%s1 + $0xd78] sm:$0xff]
  %v453 = vld [vmem:[%s1 + $0xd80] sm:$0xff]
  %v454 = vld [vmem:[%s1 + $0xd88] sm:$0xff]
  %v455 = vld [vmem:[%s1 + $0xd90] sm:$0xff]
  %v456 = vld [vmem:[%s1 + $0xd98] sm:$0xff]
  %v457 = vld [vmem:[%s1 + $0xda0] sm:$0xff]
  %v458 = vld [vmem:[%s1 + $0xda8] sm:$0xff]
  %v459 = vld [vmem:[%s1 + $0xdb0] sm:$0xff]
  %v460 = vld [vmem:[%s1 + $0xdb8] sm:$0xff]
  %v461 = vld [vmem:[%s1 + $0xdc0] sm:$0xff]
  %v462 = vld [vmem:[%s1 + $0xdc8] sm:$0xff]
  %v463 = vld [vmem:[%s1 + $0xdd0] sm:$0xff]
  %v464 = vld [vmem:[%s1 + $0xdd8] sm:$0xff]
  %v465 = vld [vmem:[%s1 + $0xde0] sm:$0xff]
  %v466 = vld [vmem:[%s1 + $0xde8] sm:$0xff]
  %v467 = vld [vmem:[%s1 + $0xdf0] sm:$0xff]
  %v468 = vld [vmem:[%s1 + $0xdf8] sm:$0xff]
  %v469 = vld [vmem:[%s1 + $0xe00] sm:$0xff]
  %v470 = vld [vmem:[%s1 + $0xe08] sm:$0xff]
  %v471 = vld [vmem:[%s1 + $0xe10] sm:$0xff]
  %v472 = vld [vmem:[%s1 + $0xe18] sm:$0xff]
  %v473 = vld [vmem:[%s1 + $0xe20] sm:$0xff]
  %v474 = vld [vmem:[%s1 + $0xe28] sm:$0xff]
  %v475 = vld [vmem:[%s1 + $0xe30] sm:$0xff]
  %v476 = vld [vmem:[%s1 + $0xe38] sm:$0xff]
  %v477 = vld [vmem:[%s1 + $0xe40] sm:$0xff]
  %v478 = vld [vmem:[%s1 + $0xe48] sm:$0xff]
  %v479 = vld [vmem:[%s1 + $0xe50] sm:$0xff]
  %v480 = vld [vmem:[%s1 + $0xe58] sm:$0xff]
  %v481 = vld [vmem:[%s1 + $0xe60] sm:$0xff]
  %v482 = vld [vmem:[%s1 + $0xe68] sm:$0xff]
  %v483 = vld [vmem:[%s1 + $0xe70] sm:$0xff]
  %v484 = vld [vmem:[%s1 + $0xe78] sm:$0xff]
  %v485 = vld [vmem:[%s1 + $0xe80] sm:$0xff]
  %v486 = vld [vmem:[%s1 + $0xe88] sm:$0xff]
  %v487 = vld [vmem:[%s1 + $0xe90] sm:$0xff]
  %v488 = vld [vmem:[%s1 + $0xe98] sm:$0xff]
  %v489 = vld [vmem:[%s1 + $0xea0] sm:$0xff]
  %v490 = vld [vmem:[%s1 + $0xea8] sm:$0xff]
  %v491 = vld [vmem:[%s1 + $0xeb0] sm:$0xff]
  %v492 = vld [vmem:[%s1 + $0xeb8] sm:$0xff]
  %v493 = vld [vmem:[%s1 + $0xec0] sm:$0xff]
  %v494 = vld [vmem:[%s1 + $0xec8] sm:$0xff]
  %v495 = vld [vmem:[%s1 + $0xed0] sm:$0xff]
  %v496 = vld [vmem:[%s1 + $0xed8] sm:$0xff]
  %v497 = vld [vmem:[%s1 + $0xee0] sm:$0xff]
  %v498 = vld [vmem:[%s1 + $0xee8] sm:$0xff]
  %v499 = vld [vmem:[%s1 + $0xef0] sm:$0xff]
  %v500 = vld [vmem:[%s1 + $0xef8] sm:$0xff]
  %v501 = vld [vmem:[%s1 + $0xf00] sm:$0xff]
  %v502 = vld [vmem:[%s1 + $0xf08] sm:$0xff]
  %v503 = vld [vmem:[%s1 + $0xf10] sm:$0xff]
  %v504 = vld [vmem:[%s1 + $0xf18] sm:$0xff]
  %v505 = vld [vmem:[%s1 + $0xf20] sm:$0xff]
  %v506 = vld [vmem:[%s1 + $0xf28] sm:$0xff]
  %v507 = vld [vmem:[%s1 + $0xf30] sm:$0xff]
  %v508 = vld [vmem:[%s1 + $0xf38] sm:$0xff]
  %v509 = vld [vmem:[%s1 + $0xf40] sm:$0xff]
  %v510 = vld [vmem:[%s1 + $0xf48] sm:$0xff]
  %v511 = vld [vmem:[%s1 + $0xf50] sm:$0xff]
  %v512 = vld [vmem:[%s1 + $0xf58] sm:$0xff]
  %v513 = vld [vmem:[%s1 + $0xf60] sm:$0xff]
  %v514 = vld [vmem:[%s1 + $0xf68] sm:$0xff]
  %v515 = vld [vmem:[%s1 + $0xf70] sm:$0xff]
  %v516 = vld [vmem:[%s1 + $0xf78] sm:$0xff]
  %v517 = vld [vmem:[%s1 + $0xf80] sm:$0xff]
  %v518 = vld [vmem:[%s1 + $0xf88] sm:$0xff]
  %v519 = vld [vmem:[%s1 + $0xf90] sm:$0xff]
  %v520 = vld [vmem:[%s1 + $0xf98] sm:$0xff]
  %v521 = vld [vmem:[%s1 + $0xfa0] sm:$0xff]
  %v522 = vld [vmem:[%s1 + $0xfa8] sm:$0xff]
  %v523 = vld [vmem:[%s1 + $0xfb0] sm:$0xff]
  %v524 = vld [vmem:[%s1 + $0xfb8] sm:$0xff]
  %v525 = vld [vmem:[%s1 + $0xfc0] sm:$0xff]
  %v526 = vld [vmem:[%s1 + $0xfc8] sm:$0xff]
  %v527 = vld [vmem:[%s1 + $0xfd0] sm:$0xff]
  %v528 = vld [vmem:[%s1 + $0xfd8] sm:$0xff]
  %v529 = vld [vmem:[%s1 + $0xfe0] sm:$0xff]
  %v530 = vld [vmem:[%s1 + $0xfe8] sm:$0xff]
  %v531 = vld [vmem:[%s1 + $0xff0] sm:$0xff]
  %v532 = vld [vmem:[%s1 + $0xff8] sm:$0xff]
  %v533 = vld [vmem:[%s1 + $0x1000] sm:$0xff]
  %v534 = vld [vmem:[%s1 + $0x1008] sm:$0xff]
  %v535 = vld [vmem:[%s1 + $0x1010] sm:$0xff]
  %v536 = vld [vmem:[%s1 + $0x1018] sm:$0xff]
  %v537 = vld [vmem:[%s1 + $0x1020] sm:$0xff]
  %v538 = vld [vmem:[%s1 + $0x1028] sm:$0xff]
  %v539 = vld [vmem:[%s1 + $0x1030] sm:$0xff]
  %v540 = vld [vmem:[%s1 + $0x1038] sm:$0xff]
  %v541 = vld [vmem:[%s1 + $0x1040] sm:$0xff]
  %v542 = vld [vmem:[%s1 + $0x1048] sm:$0xff]
  %v543 = vld [vmem:[%s1 + $0x1050] sm:$0xff]
  %v544 = vld [vmem:[%s1 + $0x1058] sm:$0xff]
  %v545 = vld [vmem:[%s1 + $0x1060] sm:$0xff]
  %v546 = vld [vmem:[%s1 + $0x1068] sm:$0xff]
  %v547 = vld [vmem:[%s1 + $0x1070] sm:$0xff]
  %v548 = vld [vmem:[%s1 + $0x1078] sm:$0xff]
  %v549 = vld [vmem:[%s1 + $0x1080] sm:$0xff]
  %v550 = vld [vmem:[%s1 + $0x1088] sm:$0xff]
  %v551 = vld [vmem:[%s1 + $0x1090] sm:$0xff]
  %v552 = vld [vmem:[%s1 + $0x1098] sm:$0xff]
  %v553 = vld [vmem:[%s1 + $0x10a0] sm:$0xff]
  %v554 = vld [vmem:[%s1 + $0x10a8] sm:$0xff]
  %v555 = vld [vmem:[%s1 + $0x10b0] sm:$0xff]
  %v556 = vld [vmem:[%s1 + $0x10b8] sm:$0xff]
  %v557 = vld [vmem:[%s1 + $0x10c0] sm:$0xff]
  %v558 = vld [vmem:[%s1 + $0x10c8] sm:$0xff]
  %v559 = vld [vmem:[%s1 + $0x10d0] sm:$0xff]
  %v560 = vld [vmem:[%s1 + $0x10d8] sm:$0xff]
  %v561 = vld [vmem:[%s1 + $0x10e0] sm:$0xff]
  %v562 = vld [vmem:[%s1 + $0x10e8] sm:$0xff]
  %v563 = vld [vmem:[%s1 + $0x10f0] sm:$0xff]
  %v564 = vld [vmem:[%s1 + $0x10f8] sm:$0xff]
  %v565 = vld [vmem:[%s1 + $0x1100] sm:$0xff]
  %v566 = vld [vmem:[%s1 + $0x1108] sm:$0xff]
  %v567 = vld [vmem:[%s1 + $0x1110] sm:$0xff]
  %v568 = vld [vmem:[%s1 + $0x1118] sm:$0xff]
  %v569 = vld [vmem:[%s1 + $0x1120] sm:$0xff]
  %v570 = vld [vmem:[%s1 + $0x1128] sm:$0xff]
  %v571 = vld [vmem:[%s1 + $0x1130] sm:$0xff]
  %v572 = vld [vmem:[%s1 + $0x1138] sm:$0xff]
  %v573 = vld [vmem:[%s1 + $0x1140] sm:$0xff]
  %v574 = vld [vmem:[%s1 + $0x1148] sm:$0xff]
  %v575 = vld [vmem:[%s1 + $0x1150] sm:$0xff]
  %v576 = vld [vmem:[%s1 + $0x1158] sm:$0xff]
  %v577 = vld [vmem:[%s1 + $0x1160] sm:$0xff]
  %v578 = vld [vmem:[%s1 + $0x1168] sm:$0xff]
  %v579 = vld [vmem:[%s1 + $0x1170] sm:$0xff]
  %v580 = vld [vmem:[%s1 + $0x1178] sm:$0xff]
  %v581 = vld [vmem:[%s1 + $0x1180] sm:$0xff]
  %v582 = vld [vmem:[%s1 + $0x1188] sm:$0xff]
  %v583 = vld [vmem:[%s1 + $0x1190] sm:$0xff]
  %v584 = vld [vmem:[%s1 + $0x1198] sm:$0xff]
  %v585 = vld [vmem:[%s1 + $0x11a0] sm:$0xff]
  %v586 = vld [vmem:[%s1 + $0x11a8] sm:$0xff]
  %v587 = vld [vmem:[%s1 + $0x11b0] sm:$0xff]
  %v588 = vld [vmem:[%s1 + $0x11b8] sm:$0xff]
  %v589 = vld [vmem:[%s1 + $0x11c0] sm:$0xff]
  %v590 = vld [vmem:[%s1 + $0x11c8] sm:$0xff]
  %v591 = vld [vmem:[%s1 + $0x11d0] sm:$0xff]
  %v592 = vld [vmem:[%s1 + $0x11d8] sm:$0xff]
  %v593 = vld [vmem:[%s1 + $0x11e0] sm:$0xff]
  %v594 = vld [vmem:[%s1 + $0x11e8] sm:$0xff]
  %v595 = vld [vmem:[%s1 + $0x11f0] sm:$0xff]
  %v596 = vld [vmem:[%s1 + $0x11f8] sm:$0xff]
  %v597 = vld [vmem:[%s1 + $0x1200] sm:$0xff]
  %v598 = vld [vmem:[%s1 + $0x1208] sm:$0xff]
  %v599 = vld [vmem:[%s1 + $0x1210] sm:$0xff]
  %v600 = vld [vmem:[%s1 + $0x1218] sm:$0xff]
  %v601 = vld [vmem:[%s1 + $0x1220] sm:$0xff]
  %v602 = vld [vmem:[%s1 + $0x1228] sm:$0xff]
  %v603 = vld [vmem:[%s1 + $0x1230] sm:$0xff]
  %v604 = vld [vmem:[%s1 + $0x1238] sm:$0xff]
  %v605 = vld [vmem:[%s1 + $0x1240] sm:$0xff]
  %v606 = vld [vmem:[%s1 + $0x1248] sm:$0xff]
  %v607 = vld [vmem:[%s1 + $0x1250] sm:$0xff]
  %v608 = vld [vmem:[%s1 + $0x1258] sm:$0xff]
  %v609 = vld [vmem:[%s1 + $0x1260] sm:$0xff]
  %v610 = vld [vmem:[%s1 + $0x1268] sm:$0xff]
  %v611 = vld [vmem:[%s1 + $0x1270] sm:$0xff]
  %v612 = vld [vmem:[%s1 + $0x1278] sm:$0xff]
  %v613 = vld [vmem:[%s1 + $0x1280] sm:$0xff]
  %v614 = vld [vmem:[%s1 + $0x1288] sm:$0xff]
  %v615 = vld [vmem:[%s1 + $0x1290] sm:$0xff]
  %v616 = vld [vmem:[%s1 + $0x1298] sm:$0xff]
  %v617 = vld [vmem:[%s1 + $0x12a0] sm:$0xff]
  %v618 = vld [vmem:[%s1 + $0x12a8] sm:$0xff]
  %v619 = vld [vmem:[%s1 + $0x12b0] sm:$0xff]
  %v620 = vld [vmem:[%s1 + $0x12b8] sm:$0xff]
  %v621 = vld [vmem:[%s1 + $0x12c0] sm:$0xff]
  %v622 = vld [vmem:[%s1 + $0x12c8] sm:$0xff]
  %v623 = vld [vmem:[%s1 + $0x12d0] sm:$0xff]
  %v624 = vld [vmem:[%s1 + $0x12d8] sm:$0xff]
  %v625 = vld [vmem:[%s1 + $0x12e0] sm:$0xff]
  %v626 = vld [vmem:[%s1 + $0x12e8] sm:$0xff]
  %v627 = vld [vmem:[%s1 + $0x12f0] sm:$0xff]
  %v628 = vld [vmem:[%s1 + $0x12f8] sm:$0xff]
  %v629 = vld [vmem:[%s1 + $0x1300] sm:$0xff]
  %v630 = vld [vmem:[%s1 + $0x1308] sm:$0xff]
  %v631 = vld [vmem:[%s1 + $0x1310] sm:$0xff]
  %v632 = vld [vmem:[%s1 + $0x1318] sm:$0xff]
  %v633 = vld [vmem:[%s1 + $0x1320] sm:$0xff]
  %v634 = vld [vmem:[%s1 + $0x1328] sm:$0xff]
  %v635 = vld [vmem:[%s1 + $0x1330] sm:$0xff]
  %v636 = vld [vmem:[%s1 + $0x1338] sm:$0xff]
  %v637 = vld [vmem:[%s1 + $0x1340] sm:$0xff]
  %v638 = vld [vmem:[%s1 + $0x1348] sm:$0xff]
  %v639 = vld [vmem:[%s1 + $0x1350] sm:$0xff]
  %v640 = vld [vmem:[%s1 + $0x1358] sm:$0xff]
  %v641 = vld [vmem:[%s1 + $0x1360] sm:$0xff]
  %v642 = vld [vmem:[%s1 + $0x1368] sm:$0xff]
  %v643 = vld [vmem:[%s1 + $0x1370] sm:$0xff]
  %v644 = vld [vmem:[%s1 + $0x1378] sm:$0xff]
  %v645 = vld [vmem:[%s1 + $0x1380] sm:$0xff]
  %v646 = vld [vmem:[%s1 + $0x1388] sm:$0xff]
  %v647 = vld [vmem:[%s1 + $0x1390] sm:$0xff]
  %v648 = vld [vmem:[%s1 + $0x1398] sm:$0xff]
  %v649 = vld [vmem:[%s1 + $0x13a0] sm:$0xff]
  %v650 = vld [vmem:[%s1 + $0x13a8] sm:$0xff]
  %v651 = vld [vmem:[%s1 + $0x13b0] sm:$0xff]
  %v652 = vld [vmem:[%s1 + $0x13b8] sm:$0xff]
  %v653 = vld [vmem:[%s1 + $0x13c0] sm:$0xff]
  %v654 = vld [vmem:[%s1 + $0x13c8] sm:$0xff]
  %v655 = vld [vmem:[%s1 + $0x13d0] sm:$0xff]
  %v656 = vld [vmem:[%s1 + $0x13d8] sm:$0xff]
  %v657 = vld [vmem:[%s1 + $0x13e0] sm:$0xff]
  %v658 = vld [vmem:[%s1 + $0x13e8] sm:$0xff]
  %v659 = vld [vmem:[%s1 + $0x13f0] sm:$0xff]
  %v660 = vld [vmem:[%s1 + $0x13f8] sm:$0xff]
  %v661 = vld [vmem:[%s1 + $0x1400] sm:$0xff]
  %v662 = vld [vmem:[%s1 + $0x1408] sm:$0xff]
  %v663 = vld [vmem:[%s1 + $0x1410] sm:$0xff]
  %v664 = vld [vmem:[%s1 + $0x1418] sm:$0xff]
  %v665 = vld [vmem:[%s1 + $0x1420] sm:$0xff]
  %v666 = vld [vmem:[%s1 + $0x1428] sm:$0xff]
  %v667 = vld [vmem:[%s1 + $0x1430] sm:$0xff]
  %v668 = vld [vmem:[%s1 + $0x1438] sm:$0xff]
  %v669 = vld [vmem:[%s1 + $0x1440] sm:$0xff]
  %v670 = vld [vmem:[%s1 + $0x1448] sm:$0xff]
  %v671 = vld [vmem:[%s1 + $0x1450] sm:$0xff]
  %v672 = vld [vmem:[%s1 + $0x1458] sm:$0xff]
  %v673 = vld [vmem:[%s1 + $0x1460] sm:$0xff]
  %v674 = vld [vmem:[%s1 + $0x1468] sm:$0xff]
  %v675 = vld [vmem:[%s1 + $0x1470] sm:$0xff]
  %v676 = vld [vmem:[%s1 + $0x1478] sm:$0xff]
  %v677 = vld [vmem:[%s1 + $0x1480] sm:$0xff]
  %v678 = vld [vmem:[%s1 + $0x1488] sm:$0xff]
  %v679 = vld [vmem:[%s1 + $0x1490] sm:$0xff]
  %v680 = vld [vmem:[%s1 + $0x1498] sm:$0xff]
  %v681 = vld [vmem:[%s1 + $0x14a0] sm:$0xff]
  %v682 = vld [vmem:[%s1 + $0x14a8] sm:$0xff]
  %v683 = vld [vmem:[%s1 + $0x14b0] sm:$0xff]
  %v684 = vld [vmem:[%s1 + $0x14b8] sm:$0xff]
  %v685 = vld [vmem:[%s1 + $0x14c0] sm:$0xff]
  %v686 = vld [vmem:[%s1 + $0x14c8] sm:$0xff]
  %v687 = vld [vmem:[%s1 + $0x14d0] sm:$0xff]
  %v688 = vld [vmem:[%s1 + $0x14d8] sm:$0xff]
  %v689 = vld [vmem:[%s1 + $0x14e0] sm:$0xff]
  %v690 = vld [vmem:[%s1 + $0x14e8] sm:$0xff]
  %v691 = vld [vmem:[%s1 + $0x14f0] sm:$0xff]
  %v692 = vld [vmem:[%s1 + $0x14f8] sm:$0xff]
  %v693 = vld [vmem:[%s1 + $0x1500] sm:$0xff]
  %v694 = vld [vmem:[%s1 + $0x1508] sm:$0xff]
  %v695 = vld [vmem:[%s1 + $0x1510] sm:$0xff]
  %v696 = vld [vmem:[%s1 + $0x1518] sm:$0xff]
  %v697 = vld [vmem:[%s1 + $0x1520] sm:$0xff]
  %v698 = vld [vmem:[%s1 + $0x1528] sm:$0xff]
  %v699 = vld [vmem:[%s1 + $0x1530] sm:$0xff]
  %v700 = vld [vmem:[%s1 + $0x1538] sm:$0xff]
  %v701 = vld [vmem:[%s1 + $0x1540] sm:$0xff]
  %v702 = vld [vmem:[%s1 + $0x1548] sm:$0xff]
  %v703 = vld [vmem:[%s1 + $0x1550] sm:$0xff]
  %v704 = vld [vmem:[%s1 + $0x1558] sm:$0xff]
  %v705 = vld [vmem:[%s1 + $0x1560] sm:$0xff]
  %v706 = vld [vmem:[%s1 + $0x1568] sm:$0xff]
  %v707 = vld [vmem:[%s1 + $0x1570] sm:$0xff]
  %v708 = vld [vmem:[%s1 + $0x1578] sm:$0xff]
  %v709 = vld [vmem:[%s1 + $0x1580] sm:$0xff]
  %v710 = vld [vmem:[%s1 + $0x1588] sm:$0xff]
  %v711 = vld [vmem:[%s1 + $0x1590] sm:$0xff]
  %v712 = vld [vmem:[%s1 + $0x1598] sm:$0xff]
  %v713 = vld [vmem:[%s1 + $0x15a0] sm:$0xff]
  %v714 = vld [vmem:[%s1 + $0x15a8] sm:$0xff]
  %v715 = vld [vmem:[%s1 + $0x15b0] sm:$0xff]
  %v716 = vld [vmem:[%s1 + $0x15b8] sm:$0xff]
  %v717 = vld [vmem:[%s1 + $0x15c0] sm:$0xff]
  %v718 = vld [vmem:[%s1 + $0x15c8] sm:$0xff]
  %v719 = vld [vmem:[%s1 + $0x15d0] sm:$0xff]
  %v720 = vld [vmem:[%s1 + $0x15d8] sm:$0xff]
  %v721 = vld [vmem:[%s1 + $0x15e0] sm:$0xff]
  %v722 = vld [vmem:[%s1 + $0x15e8] sm:$0xff]
  %v723 = vld [vmem:[%s1 + $0x15f0] sm:$0xff]
  %v724 = vld [vmem:[%s1 + $0x15f8] sm:$0xff]
  %v725 = vld [vmem:[%s1 + $0x1600] sm:$0xff]
  %v726 = vld [vmem:[%s1 + $0x1608] sm:$0xff]
  %v727 = vld [vmem:[%s1 + $0x1610] sm:$0xff]
  %v728 = vld [vmem:[%s1 + $0x1618] sm:$0xff]
  %v729 = vld [vmem:[%s1 + $0x1620] sm:$0xff]
  %v730 = vld [vmem:[%s1 + $0x1628] sm:$0xff]
  %v731 = vld [vmem:[%s1 + $0x1630] sm:$0xff]
  %v732 = vld [vmem:[%s1 + $0x1638] sm:$0xff]
  %v733 = vld [vmem:[%s1 + $0x1640] sm:$0xff]
  %v734 = vld [vmem:[%s1 + $0x1648] sm:$0xff]
  %v735 = vld [vmem:[%s1 + $0x1650] sm:$0xff]
  %v736 = vld [vmem:[%s1 + $0x1658] sm:$0xff]
  %v737 = vld [vmem:[%s1 + $0x1660] sm:$0xff]
  %v738 = vld [vmem:[%s1 + $0x1668] sm:$0xff]
  %v739 = vld [vmem:[%s1 + $0x1670] sm:$0xff]
  %v740 = vld [vmem:[%s1 + $0x1678] sm:$0xff]
  %v741 = vld [vmem:[%s1 + $0x1680] sm:$0xff]
  %v742 = vld [vmem:[%s1 + $0x1688] sm:$0xff]
  %v743 = vld [vmem:[%s1 + $0x1690] sm:$0xff]
  %v744 = vld [vmem:[%s1 + $0x1698] sm:$0xff]
  %v745 = vld [vmem:[%s1 + $0x16a0] sm:$0xff]
  %v746 = vld [vmem:[%s1 + $0x16a8] sm:$0xff]
  %v747 = vld [vmem:[%s1 + $0x16b0] sm:$0xff]
  %v748 = vld [vmem:[%s1 + $0x16b8] sm:$0xff]
  %v749 = vld [vmem:[%s1 + $0x16c0] sm:$0xff]
  %v750 = vld [vmem:[%s1 + $0x16c8] sm:$0xff]
  %v751 = vld [vmem:[%s1 + $0x16d0] sm:$0xff]
  %v752 = vld [vmem:[%s1 + $0x16d8] sm:$0xff]
  %v753 = vld [vmem:[%s1 + $0x16e0] sm:$0xff]
  %v754 = vld [vmem:[%s1 + $0x16e8] sm:$0xff]
  %v755 = vld [vmem:[%s1 + $0x16f0] sm:$0xff]
  %v756 = vld [vmem:[%s1 + $0x16f8] sm:$0xff]
  %v757 = vld [vmem:[%s1 + $0x1700] sm:$0xff]
  %v758 = vld [vmem:[%s1 + $0x1708] sm:$0xff]
  %v759 = vld [vmem:[%s1 + $0x1710] sm:$0xff]
  %v760 = vld [vmem:[%s1 + $0x1718] sm:$0xff]
  %v761 = vld [vmem:[%s1 + $0x1720] sm:$0xff]
  %v762 = vld [vmem:[%s1 + $0x1728] sm:$0xff]
  %v763 = vld [vmem:[%s1 + $0x1730] sm:$0xff]
  %v764 = vld [vmem:[%s1 + $0x1738] sm:$0xff]
  %v765 = vld [vmem:[%s1 + $0x1740] sm:$0xff]
  %v766 = vld [vmem:[%s1 + $0x1748] sm:$0xff]
  %v767 = vld [vmem:[%s1 + $0x1750] sm:$0xff]
  %v768 = vld [vmem:[%s1 + $0x1758] sm:$0xff]
  %v769 = vld [vmem:[%s1 + $0x1760] sm:$0xff]
  %v770 = vld [vmem:[%s1 + $0x1768] sm:$0xff]
  %v771 = vld [vmem:[%s1 + $0x1770] sm:$0xff]
  %v772 = vld [vmem:[%s1 + $0x1778] sm:$0xff]
  %v773 = vld [vmem:[%s1 + $0x1780] sm:$0xff]
  %v774 = vld [vmem:[%s1 + $0x1788] sm:$0xff]
  %v775 = vld [vmem:[%s1 + $0x1790] sm:$0xff]
  %v776 = vld [vmem:[%s1 + $0x1798] sm:$0xff]
  %v777 = vld [vmem:[%s1 + $0x17a0] sm:$0xff]
  %v778 = vld [vmem:[%s1 + $0x17a8] sm:$0xff]
  %v779 = vld [vmem:[%s1 + $0x17b0] sm:$0xff]
  %v780 = vld [vmem:[%s1 + $0x17b8] sm:$0xff]
  %v781 = vld [vmem:[%s1 + $0x17c0] sm:$0xff]
  %v782 = vld [vmem:[%s1 + $0x17c8] sm:$0xff]
  %v783 = vld [vmem:[%s1 + $0x17d0] sm:$0xff]
  %v784 = vld [vmem:[%s1 + $0x17d8] sm:$0xff]
  %v785 = vld [vmem:[%s1 + $0x17e0] sm:$0xff]
  %v786 = vld [vmem:[%s1 + $0x17e8] sm:$0xff]
  %v787 = vld [vmem:[%s1 + $0x17f0] sm:$0xff]
  %v788 = vld [vmem:[%s1 + $0x17f8] sm:$0xff]
  %v789 = vld [vmem:[%s1 + $0x1800] sm:$0xff]
  %v790 = vld [vmem:[%s1 + $0x1808] sm:$0xff]
  %v791 = vld [vmem:[%s1 + $0x1810] sm:$0xff]
  %v792 = vld [vmem:[%s1 + $0x1818] sm:$0xff]
  %v793 = vld [vmem:[%s1 + $0x1820] sm:$0xff]
  %v794 = vld [vmem:[%s1 + $0x1828] sm:$0xff]
  %v795 = vld [vmem:[%s1 + $0x1830] sm:$0xff]
  %v796 = vld [vmem:[%s1 + $0x1838] sm:$0xff]
  %v797 = vld [vmem:[%s1 + $0x1840] sm:$0xff]
  %v798 = vld [vmem:[%s1 + $0x1848] sm:$0xff]
  %v799 = vld [vmem:[%s1 + $0x1850] sm:$0xff]
  %v800 = vld [vmem:[%s1 + $0x1858] sm:$0xff]
  %v801 = vld [vmem:[%s1 + $0x1860] sm:$0xff]
  %v802 = vld [vmem:[%s1 + $0x1868] sm:$0xff]
  %v803 = vld [vmem:[%s1 + $0x1870] sm:$0xff]
  %v804 = vld [vmem:[%s1 + $0x1878] sm:$0xff]
  %v805 = vld [vmem:[%s1 + $0x1880] sm:$0xff]
  %v806 = vld [vmem:[%s1 + $0x1888] sm:$0xff]
  %v807 = vld [vmem:[%s1 + $0x1890] sm:$0xff]
  %v808 = vld [vmem:[%s1 + $0x1898] sm:$0xff]
  %v809 = vld [vmem:[%s1 + $0x18a0] sm:$0xff]
  %v810 = vld [vmem:[%s1 + $0x18a8] sm:$0xff]
  %v811 = vld [vmem:[%s1 + $0x18b0] sm:$0xff]
  %v812 = vld [vmem:[%s1 + $0x18b8] sm:$0xff]
  %v813 = vld [vmem:[%s1 + $0x18c0] sm:$0xff]
  %v814 = vld [vmem:[%s1 + $0x18c8] sm:$0xff]
  %v815 = vld [vmem:[%s1 + $0x18d0] sm:$0xff]
  %v816 = vld [vmem:[%s1 + $0x18d8] sm:$0xff]
  %v817 = vld [vmem:[%s1 + $0x18e0] sm:$0xff]
  %v818 = vld [vmem:[%s1 + $0x18e8] sm:$0xff]
  %v819 = vld [vmem:[%s1 + $0x18f0] sm:$0xff]
  %v820 = vld [vmem:[%s1 + $0x18f8] sm:$0xff]
  %v821 = vld [vmem:[%s1 + $0x1900] sm:$0xff]
  %v822 = vld [vmem:[%s1 + $0x1908] sm:$0xff]
  %v823 = vld [vmem:[%s1 + $0x1910] sm:$0xff]
  %v824 = vld [vmem:[%s1 + $0x1918] sm:$0xff]
  %v825 = vld [vmem:[%s1 + $0x1920] sm:$0xff]
  %v826 = vld [vmem:[%s1 + $0x1928] sm:$0xff]
  %v827 = vld [vmem:[%s1 + $0x1930] sm:$0xff]
  %v828 = vld [vmem:[%s1 + $0x1938] sm:$0xff]
  %v829 = vld [vmem:[%s1 + $0x1940] sm:$0xff]
  %v830 = vld [vmem:[%s1 + $0x1948] sm:$0xff]
  %v831 = vld [vmem:[%s1 + $0x1950] sm:$0xff]
  %v832 = vld [vmem:[%s1 + $0x1958] sm:$0xff]
  %v833 = vld [vmem:[%s1 + $0x1960] sm:$0xff]
  %v834 = vld [vmem:[%s1 + $0x1968] sm:$0xff]
  %v835 = vld [vmem:[%s1 + $0x1970] sm:$0xff]
  %v836 = vld [vmem:[%s1 + $0x1978] sm:$0xff]
  %v837 = vld [vmem:[%s1 + $0x1980] sm:$0xff]
  %v838 = vld [vmem:[%s1 + $0x1988] sm:$0xff]
  %v839 = vld [vmem:[%s1 + $0x1990] sm:$0xff]
  %v840 = vld [vmem:[%s1 + $0x1998] sm:$0xff]
  %v841 = vld [vmem:[%s1 + $0x19a0] sm:$0xff]
  %v842 = vld [vmem:[%s1 + $0x19a8] sm:$0xff]
  %v843 = vld [vmem:[%s1 + $0x19b0] sm:$0xff]
  %v844 = vld [vmem:[%s1 + $0x19b8] sm:$0xff]
  %v845 = vld [vmem:[%s1 + $0x19c0] sm:$0xff]
  %v846 = vld [vmem:[%s1 + $0x19c8] sm:$0xff]
  %v847 = vld [vmem:[%s1 + $0x19d0] sm:$0xff]
  %v848 = vld [vmem:[%s1 + $0x19d8] sm:$0xff]
  %v849 = vld [vmem:[%s1 + $0x19e0] sm:$0xff]
  %v850 = vld [vmem:[%s1 + $0x19e8] sm:$0xff]
  %v851 = vld [vmem:[%s1 + $0x19f0] sm:$0xff]
  %v852 = vld [vmem:[%s1 + $0x19f8] sm:$0xff]
  %v853 = vld [vmem:[%s1 + $0x1a00] sm:$0xff]
  %v854 = vld [vmem:[%s1 + $0x1a08] sm:$0xff]
  %v855 = vld [vmem:[%s1 + $0x1a10] sm:$0xff]
  %v856 = vld [vmem:[%s1 + $0x1a18] sm:$0xff]
  %v857 = vld [vmem:[%s1 + $0x1a20] sm:$0xff]
  %v858 = vld [vmem:[%s1 + $0x1a28] sm:$0xff]
  %v859 = vld [vmem:[%s1 + $0x1a30] sm:$0xff]
  %v860 = vld [vmem:[%s1 + $0x1a38] sm:$0xff]
  %v861 = vld [vmem:[%s1 + $0x1a40] sm:$0xff]
  %v862 = vld [vmem:[%s1 + $0x1a48] sm:$0xff]
  %v863 = vld [vmem:[%s1 + $0x1a50] sm:$0xff]
  %v864 = vld [vmem:[%s1 + $0x1a58] sm:$0xff]
  %v865 = vld [vmem:[%s1 + $0x1a60] sm:$0xff]
  %v866 = vld [vmem:[%s1 + $0x1a68] sm:$0xff]
  %v867 = vld [vmem:[%s1 + $0x1a70] sm:$0xff]
  %v868 = vld [vmem:[%s1 + $0x1a78] sm:$0xff]
  %v869 = vld [vmem:[%s1 + $0x1a80] sm:$0xff]
  %v870 = vld [vmem:[%s1 + $0x1a88] sm:$0xff]
  %v871 = vld [vmem:[%s1 + $0x1a90] sm:$0xff]
  %v872 = vld [vmem:[%s1 + $0x1a98] sm:$0xff]
  %v873 = vld [vmem:[%s1 + $0x1aa0] sm:$0xff]
  %v874 = vld [vmem:[%s1 + $0x1aa8] sm:$0xff]
  %v875 = vld [vmem:[%s1 + $0x1ab0] sm:$0xff]
  %v876 = vld [vmem:[%s1 + $0x1ab8] sm:$0xff]
  %v877 = vld [vmem:[%s1 + $0x1ac0] sm:$0xff]
  %v878 = vld [vmem:[%s1 + $0x1ac8] sm:$0xff]
  %v879 = vld [vmem:[%s1 + $0x1ad0] sm:$0xff]
  %v880 = vld [vmem:[%s1 + $0x1ad8] sm:$0xff]
  %v881 = vld [vmem:[%s1 + $0x1ae0] sm:$0xff]
  %v882 = vld [vmem:[%s1 + $0x1ae8] sm:$0xff]
  %v883 = vld [vmem:[%s1 + $0x1af0] sm:$0xff]
  %v884 = vld [vmem:[%s1 + $0x1af8] sm:$0xff]
  %v885 = vld [vmem:[%s1 + $0x1b00] sm:$0xff]
  %v886 = vld [vmem:[%s1 + $0x1b08] sm:$0xff]
  %v887 = vld [vmem:[%s1 + $0x1b10] sm:$0xff]
  %v888 = vld [vmem:[%s1 + $0x1b18] sm:$0xff]
  %v889 = vld [vmem:[%s1 + $0x1b20] sm:$0xff]
  %v890 = vld [vmem:[%s1 + $0x1b28] sm:$0xff]
  %v891 = vld [vmem:[%s1 + $0x1b30] sm:$0xff]
  %v892 = vld [vmem:[%s1 + $0x1b38] sm:$0xff]
  %v893 = vld [vmem:[%s1 + $0x1b40] sm:$0xff]
  %v894 = vld [vmem:[%s1 + $0x1b48] sm:$0xff]
  %v895 = vld [vmem:[%s1 + $0x1b50] sm:$0xff]
  %v896 = vld [vmem:[%s1 + $0x1b58] sm:$0xff]
  %v897 = vld [vmem:[%s1 + $0x1b60] sm:$0xff]
  %v898 = vld [vmem:[%s1 + $0x1b68] sm:$0xff]
  %v899 = vld [vmem:[%s1 + $0x1b70] sm:$0xff]
  %v900 = vld [vmem:[%s1 + $0x1b78] sm:$0xff]
  %v901 = vld [vmem:[%s1 + $0x1b80] sm:$0xff]
  %v902 = vld [vmem:[%s1 + $0x1b88] sm:$0xff]
  %v903 = vld [vmem:[%s1 + $0x1b90] sm:$0xff]
  %v904 = vld [vmem:[%s1 + $0x1b98] sm:$0xff]
  %v905 = vld [vmem:[%s1 + $0x1ba0] sm:$0xff]
  %v906 = vld [vmem:[%s1 + $0x1ba8] sm:$0xff]
  %v907 = vld [vmem:[%s1 + $0x1bb0] sm:$0xff]
  %v908 = vld [vmem:[%s1 + $0x1bb8] sm:$0xff]
  %v909 = vld [vmem:[%s1 + $0x1bc0] sm:$0xff]
  %v910 = vld [vmem:[%s1 + $0x1bc8] sm:$0xff]
  %v911 = vld [vmem:[%s1 + $0x1bd0] sm:$0xff]
  %v912 = vld [vmem:[%s1 + $0x1bd8] sm:$0xff]
  %v913 = vld [vmem:[%s1 + $0x1be0] sm:$0xff]
  %v914 = vld [vmem:[%s1 + $0x1be8] sm:$0xff]
  %v915 = vld [vmem:[%s1 + $0x1bf0] sm:$0xff]
  %v916 = vld [vmem:[%s1 + $0x1bf8] sm:$0xff]
  %v917 = vld [vmem:[%s1 + $0x1c00] sm:$0xff]
  %v918 = vld [vmem:[%s1 + $0x1c08] sm:$0xff]
  %v919 = vld [vmem:[%s1 + $0x1c10] sm:$0xff]
  %v920 = vld [vmem:[%s1 + $0x1c18] sm:$0xff]
  %v921 = vld [vmem:[%s1 + $0x1c20] sm:$0xff]
  %v922 = vld [vmem:[%s1 + $0x1c28] sm:$0xff]
  %v923 = vld [vmem:[%s1 + $0x1c30] sm:$0xff]
  %v924 = vld [vmem:[%s1 + $0x1c38] sm:$0xff]
  %v925 = vld [vmem:[%s1 + $0x1c40] sm:$0xff]
  %v926 = vld [vmem:[%s1 + $0x1c48] sm:$0xff]
  %v927 = vld [vmem:[%s1 + $0x1c50] sm:$0xff]
  %v928 = vld [vmem:[%s1 + $0x1c58] sm:$0xff]
  %v929 = vld [vmem:[%s1 + $0x1c60] sm:$0xff]
  %v930 = vld [vmem:[%s1 + $0x1c68] sm:$0xff]
  %v931 = vld [vmem:[%s1 + $0x1c70] sm:$0xff]
  %v932 = vld [vmem:[%s1 + $0x1c78] sm:$0xff]
  %v933 = vld [vmem:[%s1 + $0x1c80] sm:$0xff]
  %v934 = vld [vmem:[%s1 + $0x1c88] sm:$0xff]
  %v935 = vld [vmem:[%s1 + $0x1c90] sm:$0xff]
  %v936 = vld [vmem:[%s1 + $0x1c98] sm:$0xff]
  %v937 = vld [vmem:[%s1 + $0x1ca0] sm:$0xff]
  %v938 = vld [vmem:[%s1 + $0x1ca8] sm:$0xff]
  %v939 = vld [vmem:[%s1 + $0x1cb0] sm:$0xff]
  %v940 = vld [vmem:[%s1 + $0x1cb8] sm:$0xff]
  %v941 = vld [vmem:[%s1 + $0x1cc0] sm:$0xff]
  %v942 = vld [vmem:[%s1 + $0x1cc8] sm:$0xff]
  %v943 = vld [vmem:[%s1 + $0x1cd0] sm:$0xff]
  %v944 = vld [vmem:[%s1 + $0x1cd8] sm:$0xff]
  %v945 = vld [vmem:[%s1 + $0x1ce0] sm:$0xff]
  %v946 = vld [vmem:[%s1 + $0x1ce8] sm:$0xff]
  %v947 = vld [vmem:[%s1 + $0x1cf0] sm:$0xff]
  %v948 = vld [vmem:[%s1 + $0x1cf8] sm:$0xff]
  %v949 = vld [vmem:[%s1 + $0x1d00] sm:$0xff]
  %v950 = vld [vmem:[%s1 + $0x1d08] sm:$0xff]
  %v951 = vld [vmem:[%s1 + $0x1d10] sm:$0xff]
  %v952 = vld [vmem:[%s1 + $0x1d18] sm:$0xff]
  %v953 = vld [vmem:[%s1 + $0x1d20] sm:$0xff]
  %v954 = vld [vmem:[%s1 + $0x1d28] sm:$0xff]
  %v955 = vld [vmem:[%s1 + $0x1d30] sm:$0xff]
  %v956 = vld [vmem:[%s1 + $0x1d38] sm:$0xff]
  %v957 = vld [vmem:[%s1 + $0x1d40] sm:$0xff]
  %v958 = vld [vmem:[%s1 + $0x1d48] sm:$0xff]
  %v959 = vld [vmem:[%s1 + $0x1d50] sm:$0xff]
  %v960 = vld [vmem:[%s1 + $0x1d58] sm:$0xff]
  %v961 = vld [vmem:[%s1 + $0x1d60] sm:$0xff]
  %v962 = vld [vmem:[%s1 + $0x1d68] sm:$0xff]
  %v963 = vld [vmem:[%s1 + $0x1d70] sm:$0xff]
  %v964 = vld [vmem:[%s1 + $0x1d78] sm:$0xff]
  %v965 = vld [vmem:[%s1 + $0x1d80] sm:$0xff]
  %v966 = vld [vmem:[%s1 + $0x1d88] sm:$0xff]
  %v967 = vld [vmem:[%s1 + $0x1d90] sm:$0xff]
  %v968 = vld [vmem:[%s1 + $0x1d98] sm:$0xff]
  %v969 = vld [vmem:[%s1 + $0x1da0] sm:$0xff]
  %v970 = vld [vmem:[%s1 + $0x1da8] sm:$0xff]
  %v971 = vld [vmem:[%s1 + $0x1db0] sm:$0xff]
  %v972 = vld [vmem:[%s1 + $0x1db8] sm:$0xff]
  %v973 = vld [vmem:[%s1 + $0x1dc0] sm:$0xff]
  %v974 = vld [vmem:[%s1 + $0x1dc8] sm:$0xff]
  %v975 = vld [vmem:[%s1 + $0x1dd0] sm:$0xff]
  %v976 = vld [vmem:[%s1 + $0x1dd8] sm:$0xff]
  %v977 = vld [vmem:[%s1 + $0x1de0] sm:$0xff]
  %v978 = vld [vmem:[%s1 + $0x1de8] sm:$0xff]
  %v979 = vld [vmem:[%s1 + $0x1df0] sm:$0xff]
  %v980 = vld [vmem:[%s1 + $0x1df8] sm:$0xff]
  %v981 = vld [vmem:[%s1 + $0x1e00] sm:$0xff]
  %v982 = vld [vmem:[%s1 + $0x1e08] sm:$0xff]
  %v983 = vld [vmem:[%s1 + $0x1e10] sm:$0xff]
  %v984 = vld [vmem:[%s1 + $0x1e18] sm:$0xff]
  %v985 = vld [vmem:[%s1 + $0x1e20] sm:$0xff]
  %v986 = vld [vmem:[%s1 + $0x1e28] sm:$0xff]
  %v987 = vld [vmem:[%s1 + $0x1e30] sm:$0xff]
  %v988 = vld [vmem:[%s1 + $0x1e38] sm:$0xff]
  %v989 = vld [vmem:[%s1 + $0x1e40] sm:$0xff]
  %v990 = vld [vmem:[%s1 + $0x1e48] sm:$0xff]
  %v991 = vld [vmem:[%s1 + $0x1e50] sm:$0xff]
  %v992 = vld [vmem:[%s1 + $0x1e58] sm:$0xff]
  %v993 = vld [vmem:[%s1 + $0x1e60] sm:$0xff]
  %v994 = vld [vmem:[%s1 + $0x1e68] sm:$0xff]
  %v995 = vld [vmem:[%s1 + $0x1e70] sm:$0xff]
  %v996 = vld [vmem:[%s1 + $0x1e78] sm:$0xff]
  %v997 = vld [vmem:[%s1 + $0x1e80] sm:$0xff]
  %v998 = vld [vmem:[%s1 + $0x1e88] sm:$0xff]
  %v999 = vld [vmem:[%s1 + $0x1e90] sm:$0xff]
  %v1000 = vld [vmem:[%s1 + $0x1e98] sm:$0xff]
  %v1001 = vld [vmem:[%s1 + $0x1ea0] sm:$0xff]
  %v1002 = vld [vmem:[%s1 + $0x1ea8] sm:$0xff]
  %v1003 = vld [vmem:[%s1 + $0x1eb0] sm:$0xff]
  %v1004 = vld [vmem:[%s1 + $0x1eb8] sm:$0xff]
  %v1005 = vld [vmem:[%s1 + $0x1ec0] sm:$0xff]
  %v1006 = vld [vmem:[%s1 + $0x1ec8] sm:$0xff]
  %v1007 = vld [vmem:[%s1 + $0x1ed0] sm:$0xff]
  %v1008 = vld [vmem:[%s1 + $0x1ed8] sm:$0xff]
  %v1009 = vld [vmem:[%s1 + $0x1ee0] sm:$0xff]
  %v1010 = vld [vmem:[%s1 + $0x1ee8] sm:$0xff]
  %v1011 = vld [vmem:[%s1 + $0x1ef0] sm:$0xff]
  %v1012 = vld [vmem:[%s1 + $0x1ef8] sm:$0xff]
  %v1013 = vld [vmem:[%s1 + $0x1f00] sm:$0xff]
  %v1014 = vld [vmem:[%s1 + $0x1f08] sm:$0xff]
  %v1015 = vld [vmem:[%s1 + $0x1f10] sm:$0xff]
  %v1016 = vld [vmem:[%s1 + $0x1f18] sm:$0xff]
  %v1017 = vld [vmem:[%s1 + $0x1f20] sm:$0xff]
  %v1018 = vld [vmem:[%s1 + $0x1f28] sm:$0xff]
  %v1019 = vld [vmem:[%s1 + $0x1f30] sm:$0xff]
  %v1020 = vld [vmem:[%s1 + $0x1f38] sm:$0xff]
  %v1021 = vld [vmem:[%s1 + $0x1f40] sm:$0xff]
  %v1022 = vld [vmem:[%s1 + $0x1f48] sm:$0xff]
  %v1023 = vld [vmem:[%s1 + $0x1f50] sm:$0xff]
  %v1024 = vld [vmem:[%s1 + $0x1f58] sm:$0xff]
  %v1025 = vld [vmem:[%s1 + $0x1f60] sm:$0xff]
  %v1026 = vld [vmem:[%s1 + $0x1f68] sm:$0xff]
  %v1027 = vld [vmem:[%s1 + $0x1f70] sm:$0xff]
  %v1028 = vld [vmem:[%s1 + $0x1f78] sm:$0xff]
  %v1029 = vld [vmem:[%s1 + $0x1f80] sm:$0xff]
  %v1030 = vld [vmem:[%s1 + $0x1f88] sm:$0xff]
  %v1031 = vld [vmem:[%s1 + $0x1f90] sm:$0xff]
  %v1032 = vld [vmem:[%s1 + $0x1f98] sm:$0xff]
  %v1033 = vld [vmem:[%s1 + $0x1fa0] sm:$0xff]
  %v1034 = vld [vmem:[%s1 + $0x1fa8] sm:$0xff]
  %v1035 = vld [vmem:[%s1 + $0x1fb0] sm:$0xff]
  %v1036 = vld [vmem:[%s1 + $0x1fb8] sm:$0xff]
  %v1037 = vld [vmem:[%s1 + $0x1fc0] sm:$0xff]
  %v1038 = vld [vmem:[%s1 + $0x1fc8] sm:$0xff]
  %v1039 = vld [vmem:[%s1 + $0x1fd0] sm:$0xff]
  %v1040 = vld [vmem:[%s1 + $0x1fd8] sm:$0xff]
  %v1041 = vld [vmem:[%s1 + $0x1fe0] sm:$0xff]
  %v1042 = vld [vmem:[%s1 + $0x1fe8] sm:$0xff]
  %v1043 = vld [vmem:[%s1 + $0x1ff0] sm:$0xff]
  %v1044 = vld [vmem:[%s1 + $0x1ff8] sm:$0xff]
  %v1045 = vld [vmem:[%s1 + $0x2000] sm:$0xff]
  %v1046 = vld [vmem:[%s1 + $0x2008] sm:$0xff]
  %v1047 = vld [vmem:[%s1 + $0x2010] sm:$0xff]
  %v1048 = vld [vmem:[%s1 + $0x2018] sm:$0xff]
  %v1049 = vld [vmem:[%s1 + $0x2020] sm:$0xff]
  %v1050 = vld [vmem:[%s1 + $0x2028] sm:$0xff]
  %v1051 = vld [vmem:[%s1 + $0x2030] sm:$0xff]
  %v1052 = vld [vmem:[%s1 + $0x2038] sm:$0xff]
  %v1053 = vld [vmem:[%s1 + $0x2040] sm:$0xff]
  %v1054 = vld [vmem:[%s1 + $0x2048] sm:$0xff]
  %v1055 = vld [vmem:[%s1 + $0x2050] sm:$0xff]
  %v1056 = vld [vmem:[%s1 + $0x2058] sm:$0xff]
  %v1057 = vld [vmem:[%s1 + $0x2060] sm:$0xff]
  %v1058 = vld [vmem:[%s1 + $0x2068] sm:$0xff]
  %v1059 = vld [vmem:[%s1 + $0x2070] sm:$0xff]
  %v1060 = vld [vmem:[%s1 + $0x2078] sm:$0xff]
  %v1061 = vld [vmem:[%s1 + $0x2080] sm:$0xff]
  %v1062 = vld [vmem:[%s1 + $0x2088] sm:$0xff]
  %v1063 = vld [vmem:[%s1 + $0x2090] sm:$0xff]
  %v1064 = vld [vmem:[%s1 + $0x2098] sm:$0xff]
  %v1065 = vld [vmem:[%s1 + $0x20a0] sm:$0xff]
  %v1066 = vld [vmem:[%s1 + $0x20a8] sm:$0xff]
  %v1067 = vld [vmem:[%s1 + $0x20b0] sm:$0xff]
  %v1068 = vld [vmem:[%s1 + $0x20b8] sm:$0xff]
  %v1069 = vld [vmem:[%s1 + $0x20c0] sm:$0xff]
  %v1070 = vld [vmem:[%s1 + $0x20c8] sm:$0xff]
  %v1071 = vld [vmem:[%s1 + $0x20d0] sm:$0xff]
  %v1072 = vld [vmem:[%s1 + $0x20d8] sm:$0xff]
  %v1073 = vld [vmem:[%s1 + $0x20e0] sm:$0xff]
  %v1074 = vld [vmem:[%s1 + $0x20e8] sm:$0xff]
  %v1075 = vld [vmem:[%s1 + $0x20f0] sm:$0xff]
  %v1076 = vld [vmem:[%s1 + $0x20f8] sm:$0xff]
  %v1077 = vld [vmem:[%s1 + $0x2100] sm:$0xff]
  %v1078 = vld [vmem:[%s1 + $0x2108] sm:$0xff]
  %v1079 = vld [vmem:[%s1 + $0x2110] sm:$0xff]
  %v1080 = vld [vmem:[%s1 + $0x2118] sm:$0xff]
  %v1081 = vld [vmem:[%s1 + $0x2120] sm:$0xff]
  %v1082 = vld [vmem:[%s1 + $0x2128] sm:$0xff]
  %v1083 = vld [vmem:[%s1 + $0x2130] sm:$0xff]
  %v1084 = vld [vmem:[%s1 + $0x2138] sm:$0xff]
  %v1085 = vld [vmem:[%s1 + $0x2140] sm:$0xff]
  %v1086 = vld [vmem:[%s1 + $0x2148] sm:$0xff]
  %v1087 = vld [vmem:[%s1 + $0x2150] sm:$0xff]
  %v1088 = vld [vmem:[%s1 + $0x2158] sm:$0xff]
  %v1089 = vld [vmem:[%s1 + $0x2160] sm:$0xff]
  %v1090 = vld [vmem:[%s1 + $0x2168] sm:$0xff]
  %v1091 = vld [vmem:[%s1 + $0x2170] sm:$0xff]
  %v1092 = vld [vmem:[%s1 + $0x2178] sm:$0xff]
  %v1093 = vld [vmem:[%s1 + $0x2180] sm:$0xff]
  %v1094 = vld [vmem:[%s1 + $0x2188] sm:$0xff]
  %v1095 = vld [vmem:[%s1 + $0x2190] sm:$0xff]
  %v1096 = vld [vmem:[%s1 + $0x2198] sm:$0xff]
  %v1097 = vld [vmem:[%s1 + $0x21a0] sm:$0xff]
  %v1098 = vld [vmem:[%s1 + $0x21a8] sm:$0xff]
  %v1099 = vld [vmem:[%s1 + $0x21b0] sm:$0xff]
  %v1100 = vld [vmem:[%s1 + $0x21b8] sm:$0xff]
  %v1101 = vld [vmem:[%s1 + $0x21c0] sm:$0xff]
  %v1102 = vld [vmem:[%s1 + $0x21c8] sm:$0xff]
  %v1103 = vld [vmem:[%s1 + $0x21d0] sm:$0xff]
  %v1104 = vld [vmem:[%s1 + $0x21d8] sm:$0xff]
  %v1105 = vld [vmem:[%s1 + $0x21e0] sm:$0xff]
  %v1106 = vld [vmem:[%s1 + $0x21e8] sm:$0xff]
  %v1107 = vld [vmem:[%s1 + $0x21f0] sm:$0xff]
  %v1108 = vld [vmem:[%s1 + $0x21f8] sm:$0xff]
  %v1109 = vld [vmem:[%s1 + $0x2200] sm:$0xff]
  %v1110 = vld [vmem:[%s1 + $0x2208] sm:$0xff]
  %v1111 = vld [vmem:[%s1 + $0x2210] sm:$0xff]
  %v1112 = vld [vmem:[%s1 + $0x2218] sm:$0xff]
  %v1113 = vld [vmem:[%s1 + $0x2220] sm:$0xff]
  %v1114 = vld [vmem:[%s1 + $0x2228] sm:$0xff]
  %v1115 = vld [vmem:[%s1 + $0x2230] sm:$0xff]
  %v1116 = vld [vmem:[%s1 + $0x2238] sm:$0xff]
  %v1117 = vld [vmem:[%s1 + $0x2240] sm:$0xff]
  %v1118 = vld [vmem:[%s1 + $0x2248] sm:$0xff]
  %v1119 = vld [vmem:[%s1 + $0x2250] sm:$0xff]
  %v1120 = vld [vmem:[%s1 + $0x2258] sm:$0xff]
  %v1121 = vld [vmem:[%s1 + $0x2260] sm:$0xff]
  %v1122 = vld [vmem:[%s1 + $0x2268] sm:$0xff]
  %v1123 = vld [vmem:[%s1 + $0x2270] sm:$0xff]
  %v1124 = vld [vmem:[%s1 + $0x2278] sm:$0xff]
  %v1125 = vld [vmem:[%s1 + $0x2280] sm:$0xff]
  %v1126 = vld [vmem:[%s1 + $0x2288] sm:$0xff]
  %v1127 = vld [vmem:[%s1 + $0x2290] sm:$0xff]
  %v1128 = vld [vmem:[%s1 + $0x2298] sm:$0xff]
  %v1129 = vld [vmem:[%s1 + $0x22a0] sm:$0xff]
  %v1130 = vld [vmem:[%s1 + $0x22a8] sm:$0xff]
  %v1131 = vld [vmem:[%s1 + $0x22b0] sm:$0xff]
  %v1132 = vld [vmem:[%s1 + $0x22b8] sm:$0xff]
  %v1133 = vld [vmem:[%s1 + $0x22c0] sm:$0xff]
  %v1134 = vld [vmem:[%s1 + $0x22c8] sm:$0xff]
  %v1135 = vld [vmem:[%s1 + $0x22d0] sm:$0xff]
  %v1136 = vld [vmem:[%s1 + $0x22d8] sm:$0xff]
  %v1137 = vld [vmem:[%s1 + $0x22e0] sm:$0xff]
  %v1138 = vld [vmem:[%s1 + $0x22e8] sm:$0xff]
  %v1139 = vld [vmem:[%s1 + $0x22f0] sm:$0xff]
  %v1140 = vld [vmem:[%s1 + $0x22f8] sm:$0xff]
  %v1141 = vld [vmem:[%s1 + $0x2300] sm:$0xff]
  %v1142 = vld [vmem:[%s1 + $0x2308] sm:$0xff]
  %v1143 = vld [vmem:[%s1 + $0x2310] sm:$0xff]
  %v1144 = vld [vmem:[%s1 + $0x2318] sm:$0xff]
  %v1145 = vld [vmem:[%s1 + $0x2320] sm:$0xff]
  %v1146 = vld [vmem:[%s1 + $0x2328] sm:$0xff]
  %v1147 = vld [vmem:[%s1 + $0x2330] sm:$0xff]
  %v1148 = vld [vmem:[%s1 + $0x2338] sm:$0xff]
  %v1149 = vld [vmem:[%s1 + $0x2340] sm:$0xff]
  %v1150 = vld [vmem:[%s1 + $0x2348] sm:$0xff]
  %v1151 = vld [vmem:[%s1 + $0x2350] sm:$0xff]
  %v1152 = vld [vmem:[%s1 + $0x2358] sm:$0xff]
  %v1153 = vld [vmem:[%s1 + $0x2360] sm:$0xff]
  %v1154 = vld [vmem:[%s1 + $0x2368] sm:$0xff]
  %v1155 = vld [vmem:[%s1 + $0x2370] sm:$0xff]
  %v1156 = vld [vmem:[%s1 + $0x2378] sm:$0xff]
  %v1157 = vld [vmem:[%s1 + $0x2380] sm:$0xff]
  %v1158 = vld [vmem:[%s1 + $0x2388] sm:$0xff]
  %v1159 = vld [vmem:[%s1 + $0x2390] sm:$0xff]
  %v1160 = vld [vmem:[%s1 + $0x2398] sm:$0xff]
  %v1161 = vld [vmem:[%s1 + $0x23a0] sm:$0xff]
  %v1162 = vld [vmem:[%s1 + $0x23a8] sm:$0xff]
  %v1163 = vld [vmem:[%s1 + $0x23b0] sm:$0xff]
  %v1164 = vld [vmem:[%s1 + $0x23b8] sm:$0xff]
  %v1165 = vld [vmem:[%s1 + $0x23c0] sm:$0xff]
  %v1166 = vld [vmem:[%s1 + $0x23c8] sm:$0xff]
  %v1167 = vld [vmem:[%s1 + $0x23d0] sm:$0xff]
  %v1168 = vld [vmem:[%s1 + $0x23d8] sm:$0xff]
  %v1169 = vld [vmem:[%s1 + $0x23e0] sm:$0xff]
  %v1170 = vld [vmem:[%s1 + $0x23e8] sm:$0xff]
  %v1171 = vld [vmem:[%s1 + $0x23f0] sm:$0xff]
  %v1172 = vld [vmem:[%s1 + $0x23f8] sm:$0xff]
  %v1173 = vld [vmem:[%s2] sm:$0xff]
  %v1174 = vld [vmem:[%s2 + $0x8] sm:$0xff]
  %v1175 = vld [vmem:[%s2 + $0x10] sm:$0xff]
  %v1176 = vld [vmem:[%s2 + $0x18] sm:$0xff]
  %v1177 = vld [vmem:[%s2 + $0x20] sm:$0xff]
  %v1178 = vld [vmem:[%s2 + $0x28] sm:$0xff]
  %v1179 = vld [vmem:[%s2 + $0x30] sm:$0xff]
  %v1180 = vld [vmem:[%s2 + $0x38] sm:$0xff]
  %v1181 = vld [vmem:[%s2 + $0x40] sm:$0xff]
  %v1191 = vlaneseq
  %v1192 = vshrl.u32 %v1191, 7
  %v1193 = vsub.s32 0, %v1192
  %v1194 = vrot.slane %v1173, %v1193
  %v1195 = vlaneseq
  %v1196 = vshrl.u32 %v1195, 7
  %v1197 = vsub.s32 1, %v1196
  %v1198 = vrot.slane %v1173, %v1197
  %v1199 = vlaneseq
  %v1200 = vshrl.u32 %v1199, 7
  %v1201 = vsub.s32 2, %v1200
  %v1202 = vrot.slane %v1173, %v1201
  %v1203 = vlaneseq
  %v1204 = vshrl.u32 %v1203, 7
  %v1205 = vsub.s32 3, %v1204
  %v1206 = vrot.slane %v1173, %v1205
  %v1207 = vlaneseq
  %v1208 = vshrl.u32 %v1207, 7
  %v1209 = vsub.s32 4, %v1208
  %v1210 = vrot.slane %v1173, %v1209
  %v1211 = vlaneseq
  %v1212 = vshrl.u32 %v1211, 7
  %v1213 = vsub.s32 5, %v1212
  %v1214 = vrot.slane %v1173, %v1213
  %v1215 = vlaneseq
  %v1216 = vshrl.u32 %v1215, 7
  %v1217 = vsub.s32 6, %v1216
  %v1218 = vrot.slane %v1173, %v1217
  %v1219 = vlaneseq
  %v1220 = vshrl.u32 %v1219, 7
  %v1221 = vsub.s32 7, %v1220
  %v1222 = vrot.slane %v1173, %v1221
  %v1223 = vlaneseq
  %v1224 = vshrl.u32 %v1223, 7
  %v1225 = vsub.s32 0, %v1224
  %v1226 = vrot.slane %v1174, %v1225
  %v1227 = vlaneseq
  %v1228 = vshrl.u32 %v1227, 7
  %v1229 = vsub.s32 1, %v1228
  %v1230 = vrot.slane %v1174, %v1229
  %v1231 = vlaneseq
  %v1232 = vshrl.u32 %v1231, 7
  %v1233 = vsub.s32 2, %v1232
  %v1234 = vrot.slane %v1174, %v1233
  %v1235 = vlaneseq
  %v1236 = vshrl.u32 %v1235, 7
  %v1237 = vsub.s32 3, %v1236
  %v1238 = vrot.slane %v1174, %v1237
  %v1239 = vlaneseq
  %v1240 = vshrl.u32 %v1239, 7
  %v1241 = vsub.s32 4, %v1240
  %v1242 = vrot.slane %v1174, %v1241
  %v1243 = vlaneseq
  %v1244 = vshrl.u32 %v1243, 7
  %v1245 = vsub.s32 5, %v1244
  %v1246 = vrot.slane %v1174, %v1245
  %v1247 = vlaneseq
  %v1248 = vshrl.u32 %v1247, 7
  %v1249 = vsub.s32 6, %v1248
  %v1250 = vrot.slane %v1174, %v1249
  %v1251 = vlaneseq
  %v1252 = vshrl.u32 %v1251, 7
  %v1253 = vsub.s32 7, %v1252
  %v1254 = vrot.slane %v1174, %v1253
  %v1255 = vlaneseq
  %v1256 = vshrl.u32 %v1255, 7
  %v1257 = vsub.s32 0, %v1256
  %v1258 = vrot.slane %v1175, %v1257
  %v1259 = vlaneseq
  %v1260 = vshrl.u32 %v1259, 7
  %v1261 = vsub.s32 1, %v1260
  %v1262 = vrot.slane %v1175, %v1261
  %v1263 = vlaneseq
  %v1264 = vshrl.u32 %v1263, 7
  %v1265 = vsub.s32 2, %v1264
  %v1266 = vrot.slane %v1175, %v1265
  %v1267 = vlaneseq
  %v1268 = vshrl.u32 %v1267, 7
  %v1269 = vsub.s32 3, %v1268
  %v1270 = vrot.slane %v1175, %v1269
  %v1271 = vlaneseq
  %v1272 = vshrl.u32 %v1271, 7
  %v1273 = vsub.s32 4, %v1272
  %v1274 = vrot.slane %v1175, %v1273
  %v1275 = vlaneseq
  %v1276 = vshrl.u32 %v1275, 7
  %v1277 = vsub.s32 5, %v1276
  %v1278 = vrot.slane %v1175, %v1277
  %v1279 = vlaneseq
  %v1280 = vshrl.u32 %v1279, 7
  %v1281 = vsub.s32 6, %v1280
  %v1282 = vrot.slane %v1175, %v1281
  %v1283 = vlaneseq
  %v1284 = vshrl.u32 %v1283, 7
  %v1285 = vsub.s32 7, %v1284
  %v1286 = vrot.slane %v1175, %v1285
  %v1287 = vlaneseq
  %v1288 = vshrl.u32 %v1287, 7
  %v1289 = vsub.s32 0, %v1288
  %v1290 = vrot.slane %v1176, %v1289
  %v1291 = vlaneseq
  %v1292 = vshrl.u32 %v1291, 7
  %v1293 = vsub.s32 1, %v1292
  %v1294 = vrot.slane %v1176, %v1293
  %v1295 = vlaneseq
  %v1296 = vshrl.u32 %v1295, 7
  %v1297 = vsub.s32 2, %v1296
  %v1298 = vrot.slane %v1176, %v1297
  %v1299 = vlaneseq
  %v1300 = vshrl.u32 %v1299, 7
  %v1301 = vsub.s32 3, %v1300
  %v1302 = vrot.slane %v1176, %v1301
  %v1303 = vlaneseq
  %v1304 = vshrl.u32 %v1303, 7
  %v1305 = vsub.s32 4, %v1304
  %v1306 = vrot.slane %v1176, %v1305
  %v1307 = vlaneseq
  %v1308 = vshrl.u32 %v1307, 7
  %v1309 = vsub.s32 5, %v1308
  %v1310 = vrot.slane %v1176, %v1309
  %v1311 = vlaneseq
  %v1312 = vshrl.u32 %v1311, 7
  %v1313 = vsub.s32 6, %v1312
  %v1314 = vrot.slane %v1176, %v1313
  %v1315 = vlaneseq
  %v1316 = vshrl.u32 %v1315, 7
  %v1317 = vsub.s32 7, %v1316
  %v1318 = vrot.slane %v1176, %v1317
  %v1319 = vlaneseq
  %v1320 = vshrl.u32 %v1319, 7
  %v1321 = vsub.s32 0, %v1320
  %v1322 = vrot.slane %v1177, %v1321
  %v1323 = vlaneseq
  %v1324 = vshrl.u32 %v1323, 7
  %v1325 = vsub.s32 1, %v1324
  %v1326 = vrot.slane %v1177, %v1325
  %v1327 = vlaneseq
  %v1328 = vshrl.u32 %v1327, 7
  %v1329 = vsub.s32 2, %v1328
  %v1330 = vrot.slane %v1177, %v1329
  %v1331 = vlaneseq
  %v1332 = vshrl.u32 %v1331, 7
  %v1333 = vsub.s32 3, %v1332
  %v1334 = vrot.slane %v1177, %v1333
  %v1335 = vlaneseq
  %v1336 = vshrl.u32 %v1335, 7
  %v1337 = vsub.s32 4, %v1336
  %v1338 = vrot.slane %v1177, %v1337
  %v1339 = vlaneseq
  %v1340 = vshrl.u32 %v1339, 7
  %v1341 = vsub.s32 5, %v1340
  %v1342 = vrot.slane %v1177, %v1341
  %v1343 = vlaneseq
  %v1344 = vshrl.u32 %v1343, 7
  %v1345 = vsub.s32 6, %v1344
  %v1346 = vrot.slane %v1177, %v1345
  %v1347 = vlaneseq
  %v1348 = vshrl.u32 %v1347, 7
  %v1349 = vsub.s32 7, %v1348
  %v1350 = vrot.slane %v1177, %v1349
  %v1351 = vlaneseq
  %v1352 = vshrl.u32 %v1351, 7
  %v1353 = vsub.s32 0, %v1352
  %v1354 = vrot.slane %v1178, %v1353
  %v1355 = vlaneseq
  %v1356 = vshrl.u32 %v1355, 7
  %v1357 = vsub.s32 1, %v1356
  %v1358 = vrot.slane %v1178, %v1357
  %v1359 = vlaneseq
  %v1360 = vshrl.u32 %v1359, 7
  %v1361 = vsub.s32 2, %v1360
  %v1362 = vrot.slane %v1178, %v1361
  %v1363 = vlaneseq
  %v1364 = vshrl.u32 %v1363, 7
  %v1365 = vsub.s32 3, %v1364
  %v1366 = vrot.slane %v1178, %v1365
  %v1367 = vlaneseq
  %v1368 = vshrl.u32 %v1367, 7
  %v1369 = vsub.s32 4, %v1368
  %v1370 = vrot.slane %v1178, %v1369
  %v1371 = vlaneseq
  %v1372 = vshrl.u32 %v1371, 7
  %v1373 = vsub.s32 5, %v1372
  %v1374 = vrot.slane %v1178, %v1373
  %v1375 = vlaneseq
  %v1376 = vshrl.u32 %v1375, 7
  %v1377 = vsub.s32 6, %v1376
  %v1378 = vrot.slane %v1178, %v1377
  %v1379 = vlaneseq
  %v1380 = vshrl.u32 %v1379, 7
  %v1381 = vsub.s32 7, %v1380
  %v1382 = vrot.slane %v1178, %v1381
  %v1383 = vlaneseq
  %v1384 = vshrl.u32 %v1383, 7
  %v1385 = vsub.s32 0, %v1384
  %v1386 = vrot.slane %v1179, %v1385
  %v1387 = vlaneseq
  %v1388 = vshrl.u32 %v1387, 7
  %v1389 = vsub.s32 1, %v1388
  %v1390 = vrot.slane %v1179, %v1389
  %v1391 = vlaneseq
  %v1392 = vshrl.u32 %v1391, 7
  %v1393 = vsub.s32 2, %v1392
  %v1394 = vrot.slane %v1179, %v1393
  %v1395 = vlaneseq
  %v1396 = vshrl.u32 %v1395, 7
  %v1397 = vsub.s32 3, %v1396
  %v1398 = vrot.slane %v1179, %v1397
  %v1399 = vlaneseq
  %v1400 = vshrl.u32 %v1399, 7
  %v1401 = vsub.s32 4, %v1400
  %v1402 = vrot.slane %v1179, %v1401
  %v1403 = vlaneseq
  %v1404 = vshrl.u32 %v1403, 7
  %v1405 = vsub.s32 5, %v1404
  %v1406 = vrot.slane %v1179, %v1405
  %v1407 = vlaneseq
  %v1408 = vshrl.u32 %v1407, 7
  %v1409 = vsub.s32 6, %v1408
  %v1410 = vrot.slane %v1179, %v1409
  %v1411 = vlaneseq
  %v1412 = vshrl.u32 %v1411, 7
  %v1413 = vsub.s32 7, %v1412
  %v1414 = vrot.slane %v1179, %v1413
  %v1415 = vlaneseq
  %v1416 = vshrl.u32 %v1415, 7
  %v1417 = vsub.s32 0, %v1416
  %v1418 = vrot.slane %v1180, %v1417
  %v1419 = vlaneseq
  %v1420 = vshrl.u32 %v1419, 7
  %v1421 = vsub.s32 1, %v1420
  %v1422 = vrot.slane %v1180, %v1421
  %v1423 = vlaneseq
  %v1424 = vshrl.u32 %v1423, 7
  %v1425 = vsub.s32 2, %v1424
  %v1426 = vrot.slane %v1180, %v1425
  %v1427 = vlaneseq
  %v1428 = vshrl.u32 %v1427, 7
  %v1429 = vsub.s32 3, %v1428
  %v1430 = vrot.slane %v1180, %v1429
  %v1431 = vlaneseq
  %v1432 = vshrl.u32 %v1431, 7
  %v1433 = vsub.s32 4, %v1432
  %v1434 = vrot.slane %v1180, %v1433
  %v1435 = vlaneseq
  %v1436 = vshrl.u32 %v1435, 7
  %v1437 = vsub.s32 5, %v1436
  %v1438 = vrot.slane %v1180, %v1437
  %v1439 = vlaneseq
  %v1440 = vshrl.u32 %v1439, 7
  %v1441 = vsub.s32 6, %v1440
  %v1442 = vrot.slane %v1180, %v1441
  %v1443 = vlaneseq
  %v1444 = vshrl.u32 %v1443, 7
  %v1445 = vsub.s32 7, %v1444
  %v1446 = vrot.slane %v1180, %v1445
  %v1447 = vlaneseq
  %v1448 = vshrl.u32 %v1447, 7
  %v1449 = vsub.s32 0, %v1448
  %v1450 = vrot.slane %v1181, %v1449
  %v1451 = vlaneseq
  %v1452 = vshrl.u32 %v1451, 7
  %v1453 = vsub.s32 1, %v1452
  %v1454 = vrot.slane %v1181, %v1453
  %v1455 = vlaneseq
  %v1456 = vshrl.u32 %v1455, 7
  %v1457 = vsub.s32 2, %v1456
  %v1458 = vrot.slane %v1181, %v1457
  %v1459 = vlaneseq
  %v1460 = vshrl.u32 %v1459, 7
  %v1461 = vsub.s32 3, %v1460
  %v1462 = vrot.slane %v1181, %v1461
  %v1463 = vlaneseq
  %v1464 = vshrl.u32 %v1463, 7
  %v1465 = vsub.s32 4, %v1464
  %v1466 = vrot.slane %v1181, %v1465
  %v1467 = vlaneseq
  %v1468 = vshrl.u32 %v1467, 7
  %v1469 = vsub.s32 5, %v1468
  %v1470 = vrot.slane %v1181, %v1469
  %v1471 = vlaneseq
  %v1472 = vshrl.u32 %v1471, 7
  %v1473 = vsub.s32 6, %v1472
  %v1474 = vrot.slane %v1181, %v1473
  %v1475 = vlaneseq
  %v1476 = vshrl.u32 %v1475, 7
  %v1477 = vsub.s32 7, %v1476
  %v1478 = vrot.slane %v1181, %v1477
  %v1552 = vunpack.c.l.b16 %v20
  %v1553 = vunpack.c.h.b16 %v20
  %v1554 = vpack.c.b16 %v1552, %v1552
  %v1555 = vpack.c.b16 %v1553, %v1553
  %v2710 = vunpack.c.l.b16 %v21
  %v2711 = vunpack.c.h.b16 %v21
  %v2712 = vunpack.c.l.b16 %v22
  %v2713 = vunpack.c.h.b16 %v22
  %v2714 = vunpack.c.l.b16 %v23
  %v2715 = vunpack.c.h.b16 %v23
  %v2716 = vunpack.c.l.b16 %v24
  %v2717 = vunpack.c.h.b16 %v24
  %v2718 = vunpack.c.l.b16 %v25
  %v2719 = vunpack.c.h.b16 %v25
  %v2720 = vunpack.c.l.b16 %v26
  %v2721 = vunpack.c.h.b16 %v26
  %v2722 = vunpack.c.l.b16 %v27
  %v2723 = vunpack.c.h.b16 %v27
  %v2724 = vunpack.c.l.b16 %v28
  %v2725 = vunpack.c.h.b16 %v28
  %v2726 = vunpack.c.l.b16 %v29
  %v2727 = vunpack.c.h.b16 %v29
  %v2728 = vunpack.c.l.b16 %v30
  %v2729 = vunpack.c.h.b16 %v30
  %v2730 = vunpack.c.l.b16 %v31
  %v2731 = vunpack.c.h.b16 %v31
  %v2732 = vunpack.c.l.b16 %v32
  %v2733 = vunpack.c.h.b16 %v32
  %v2734 = vunpack.c.l.b16 %v33
  %v2735 = vunpack.c.h.b16 %v33
  %v2736 = vunpack.c.l.b16 %v34
  %v2737 = vunpack.c.h.b16 %v34
  %v2738 = vunpack.c.l.b16 %v35
  %v2739 = vunpack.c.h.b16 %v35
  %v2740 = vunpack.c.l.b16 %v36
  %v2741 = vunpack.c.h.b16 %v36
  %v2742 = vunpack.c.l.b16 %v37
  %v2743 = vunpack.c.h.b16 %v37
  %v2744 = vunpack.c.l.b16 %v38
  %v2745 = vunpack.c.h.b16 %v38
  %v2746 = vunpack.c.l.b16 %v39
  %v2747 = vunpack.c.h.b16 %v39
  %v2748 = vunpack.c.l.b16 %v40
  %v2749 = vunpack.c.h.b16 %v40
  %v2750 = vunpack.c.l.b16 %v41
  %v2751 = vunpack.c.h.b16 %v41
  %v2752 = vunpack.c.l.b16 %v42
  %v2753 = vunpack.c.h.b16 %v42
  %v2754 = vunpack.c.l.b16 %v43
  %v2755 = vunpack.c.h.b16 %v43
  %v2756 = vunpack.c.l.b16 %v44
  %v2757 = vunpack.c.h.b16 %v44
  %v2758 = vunpack.c.l.b16 %v45
  %v2759 = vunpack.c.h.b16 %v45
  %v2760 = vunpack.c.l.b16 %v46
  %v2761 = vunpack.c.h.b16 %v46
  %v2762 = vunpack.c.l.b16 %v47
  %v2763 = vunpack.c.h.b16 %v47
  %v2764 = vunpack.c.l.b16 %v48
  %v2765 = vunpack.c.h.b16 %v48
  %v2766 = vunpack.c.l.b16 %v49
  %v2767 = vunpack.c.h.b16 %v49
  %v2768 = vunpack.c.l.b16 %v50
  %v2769 = vunpack.c.h.b16 %v50
  %v2770 = vunpack.c.l.b16 %v51
  %v2771 = vunpack.c.h.b16 %v51
  %v2772 = vunpack.c.l.b16 %v52
  %v2773 = vunpack.c.h.b16 %v52
  %v2774 = vunpack.c.l.b16 %v53
  %v2775 = vunpack.c.h.b16 %v53
  %v2776 = vunpack.c.l.b16 %v54
  %v2777 = vunpack.c.h.b16 %v54
  %v2778 = vunpack.c.l.b16 %v55
  %v2779 = vunpack.c.h.b16 %v55
  %v2780 = vunpack.c.l.b16 %v56
  %v2781 = vunpack.c.h.b16 %v56
  %v2782 = vunpack.c.l.b16 %v57
  %v2783 = vunpack.c.h.b16 %v57
  %v2784 = vunpack.c.l.b16 %v58
  %v2785 = vunpack.c.h.b16 %v58
  %v2786 = vunpack.c.l.b16 %v59
  %v2787 = vunpack.c.h.b16 %v59
  %v2788 = vunpack.c.l.b16 %v60
  %v2789 = vunpack.c.h.b16 %v60
  %v2790 = vunpack.c.l.b16 %v61
  %v2791 = vunpack.c.h.b16 %v61
  %v2792 = vunpack.c.l.b16 %v62
  %v2793 = vunpack.c.h.b16 %v62
  %v2794 = vunpack.c.l.b16 %v63
  %v2795 = vunpack.c.h.b16 %v63
  %v2796 = vunpack.c.l.b16 %v64
  %v2797 = vunpack.c.h.b16 %v64
  %v2798 = vunpack.c.l.b16 %v65
  %v2799 = vunpack.c.h.b16 %v65
  %v2800 = vunpack.c.l.b16 %v66
  %v2801 = vunpack.c.h.b16 %v66
  %v2802 = vunpack.c.l.b16 %v67
  %v2803 = vunpack.c.h.b16 %v67
  %v2804 = vunpack.c.l.b16 %v68
  %v2805 = vunpack.c.h.b16 %v68
  %v2806 = vunpack.c.l.b16 %v69
  %v2807 = vunpack.c.h.b16 %v69
  %v2808 = vunpack.c.l.b16 %v70
  %v2809 = vunpack.c.h.b16 %v70
  %v2810 = vunpack.c.l.b16 %v71
  %v2811 = vunpack.c.h.b16 %v71
  %v2812 = vunpack.c.l.b16 %v72
  %v2813 = vunpack.c.h.b16 %v72
  %v2814 = vunpack.c.l.b16 %v73
  %v2815 = vunpack.c.h.b16 %v73
  %v2816 = vunpack.c.l.b16 %v74
  %v2817 = vunpack.c.h.b16 %v74
  %v2818 = vunpack.c.l.b16 %v75
  %v2819 = vunpack.c.h.b16 %v75
  %v2820 = vunpack.c.l.b16 %v76
  %v2821 = vunpack.c.h.b16 %v76
  %v2822 = vunpack.c.l.b16 %v77
  %v2823 = vunpack.c.h.b16 %v77
  %v2824 = vunpack.c.l.b16 %v78
  %v2825 = vunpack.c.h.b16 %v78
  %v2826 = vunpack.c.l.b16 %v79
  %v2827 = vunpack.c.h.b16 %v79
  %v2828 = vunpack.c.l.b16 %v80
  %v2829 = vunpack.c.h.b16 %v80
  %v2830 = vunpack.c.l.b16 %v81
  %v2831 = vunpack.c.h.b16 %v81
  %v2832 = vunpack.c.l.b16 %v82
  %v2833 = vunpack.c.h.b16 %v82
  %v2834 = vunpack.c.l.b16 %v83
  %v2835 = vunpack.c.h.b16 %v83
  %v2836 = vunpack.c.l.b16 %v84
  %v2837 = vunpack.c.h.b16 %v84
  %v2838 = vunpack.c.l.b16 %v85
  %v2839 = vunpack.c.h.b16 %v85
  %v2840 = vunpack.c.l.b16 %v86
  %v2841 = vunpack.c.h.b16 %v86
  %v2842 = vunpack.c.l.b16 %v87
  %v2843 = vunpack.c.h.b16 %v87
  %v2844 = vunpack.c.l.b16 %v88
  %v2845 = vunpack.c.h.b16 %v88
  %v2846 = vunpack.c.l.b16 %v89
  %v2847 = vunpack.c.h.b16 %v89
  %v2848 = vunpack.c.l.b16 %v90
  %v2849 = vunpack.c.h.b16 %v90
  %v2850 = vunpack.c.l.b16 %v91
  %v2851 = vunpack.c.h.b16 %v91
  %v2852 = vunpack.c.l.b16 %v92
  %v2853 = vunpack.c.h.b16 %v92
  %v2854 = vunpack.c.l.b16 %v93
  %v2855 = vunpack.c.h.b16 %v93
  %v2856 = vunpack.c.l.b16 %v94
  %v2857 = vunpack.c.h.b16 %v94
  %v2858 = vunpack.c.l.b16 %v95
  %v2859 = vunpack.c.h.b16 %v95
  %v2860 = vunpack.c.l.b16 %v96
  %v2861 = vunpack.c.h.b16 %v96
  %v2862 = vunpack.c.l.b16 %v97
  %v2863 = vunpack.c.h.b16 %v97
  %v2864 = vunpack.c.l.b16 %v98
  %v2865 = vunpack.c.h.b16 %v98
  %v2866 = vunpack.c.l.b16 %v99
  %v2867 = vunpack.c.h.b16 %v99
  %v2868 = vunpack.c.l.b16 %v100
  %v2869 = vunpack.c.h.b16 %v100
  %v2870 = vunpack.c.l.b16 %v101
  %v2871 = vunpack.c.h.b16 %v101
  %v2872 = vunpack.c.l.b16 %v102
  %v2873 = vunpack.c.h.b16 %v102
  %v2874 = vunpack.c.l.b16 %v103
  %v2875 = vunpack.c.h.b16 %v103
  %v2876 = vunpack.c.l.b16 %v104
  %v2877 = vunpack.c.h.b16 %v104
  %v2878 = vunpack.c.l.b16 %v105
  %v2879 = vunpack.c.h.b16 %v105
  %v2880 = vunpack.c.l.b16 %v106
  %v2881 = vunpack.c.h.b16 %v106
  %v2882 = vunpack.c.l.b16 %v107
  %v2883 = vunpack.c.h.b16 %v107
  %v2884 = vunpack.c.l.b16 %v108
  %v2885 = vunpack.c.h.b16 %v108
  %v2886 = vunpack.c.l.b16 %v109
  %v2887 = vunpack.c.h.b16 %v109
  %v2888 = vunpack.c.l.b16 %v110
  %v2889 = vunpack.c.h.b16 %v110
  %v2890 = vunpack.c.l.b16 %v111
  %v2891 = vunpack.c.h.b16 %v111
  %v2892 = vunpack.c.l.b16 %v112
  %v2893 = vunpack.c.h.b16 %v112
  %v2894 = vunpack.c.l.b16 %v113
  %v2895 = vunpack.c.h.b16 %v113
  %v2896 = vunpack.c.l.b16 %v114
  %v2897 = vunpack.c.h.b16 %v114
  %v2898 = vunpack.c.l.b16 %v115
  %v2899 = vunpack.c.h.b16 %v115
  %v2900 = vunpack.c.l.b16 %v116
  %v2901 = vunpack.c.h.b16 %v116
  %v2902 = vunpack.c.l.b16 %v117
  %v2903 = vunpack.c.h.b16 %v117
  %v2904 = vunpack.c.l.b16 %v118
  %v2905 = vunpack.c.h.b16 %v118
  %v2906 = vunpack.c.l.b16 %v119
  %v2907 = vunpack.c.h.b16 %v119
  %v2908 = vunpack.c.l.b16 %v120
  %v2909 = vunpack.c.h.b16 %v120
  %v2910 = vunpack.c.l.b16 %v121
  %v2911 = vunpack.c.h.b16 %v121
  %v2912 = vunpack.c.l.b16 %v122
  %v2913 = vunpack.c.h.b16 %v122
  %v2914 = vunpack.c.l.b16 %v123
  %v2915 = vunpack.c.h.b16 %v123
  %v2916 = vunpack.c.l.b16 %v124
  %v2917 = vunpack.c.h.b16 %v124
  %v2918 = vunpack.c.l.b16 %v125
  %v2919 = vunpack.c.h.b16 %v125
  %v2920 = vunpack.c.l.b16 %v126
  %v2921 = vunpack.c.h.b16 %v126
  %v2922 = vunpack.c.l.b16 %v127
  %v2923 = vunpack.c.h.b16 %v127
  %v2924 = vunpack.c.l.b16 %v128
  %v2925 = vunpack.c.h.b16 %v128
  %v2926 = vunpack.c.l.b16 %v129
  %v2927 = vunpack.c.h.b16 %v129
  %v2928 = vunpack.c.l.b16 %v130
  %v2929 = vunpack.c.h.b16 %v130
  %v2930 = vunpack.c.l.b16 %v131
  %v2931 = vunpack.c.h.b16 %v131
  %v2932 = vunpack.c.l.b16 %v132
  %v2933 = vunpack.c.h.b16 %v132
  %v2934 = vunpack.c.l.b16 %v133
  %v2935 = vunpack.c.h.b16 %v133
  %v2936 = vunpack.c.l.b16 %v134
  %v2937 = vunpack.c.h.b16 %v134
  %v2938 = vunpack.c.l.b16 %v135
  %v2939 = vunpack.c.h.b16 %v135
  %v2940 = vunpack.c.l.b16 %v136
  %v2941 = vunpack.c.h.b16 %v136
  %v2942 = vunpack.c.l.b16 %v137
  %v2943 = vunpack.c.h.b16 %v137
  %v2944 = vunpack.c.l.b16 %v138
  %v2945 = vunpack.c.h.b16 %v138
  %v2946 = vunpack.c.l.b16 %v139
  %v2947 = vunpack.c.h.b16 %v139
  %v2948 = vunpack.c.l.b16 %v140
  %v2949 = vunpack.c.h.b16 %v140
  %v2950 = vunpack.c.l.b16 %v141
  %v2951 = vunpack.c.h.b16 %v141
  %v2952 = vunpack.c.l.b16 %v142
  %v2953 = vunpack.c.h.b16 %v142
  %v2954 = vunpack.c.l.b16 %v143
  %v2955 = vunpack.c.h.b16 %v143
  %v2956 = vunpack.c.l.b16 %v144
  %v2957 = vunpack.c.h.b16 %v144
  %v2958 = vunpack.c.l.b16 %v145
  %v2959 = vunpack.c.h.b16 %v145
  %v2960 = vunpack.c.l.b16 %v146
  %v2961 = vunpack.c.h.b16 %v146
  %v2962 = vunpack.c.l.b16 %v147
  %v2963 = vunpack.c.h.b16 %v147
  %v2964 = vunpack.c.l.b16 %v148
  %v2965 = vunpack.c.h.b16 %v148
  %v2966 = vunpack.c.l.b16 %v149
  %v2967 = vunpack.c.h.b16 %v149
  %v2968 = vunpack.c.l.b16 %v150
  %v2969 = vunpack.c.h.b16 %v150
  %v2970 = vunpack.c.l.b16 %v151
  %v2971 = vunpack.c.h.b16 %v151
  %v2972 = vunpack.c.l.b16 %v152
  %v2973 = vunpack.c.h.b16 %v152
  %v2974 = vunpack.c.l.b16 %v153
  %v2975 = vunpack.c.h.b16 %v153
  %v2976 = vunpack.c.l.b16 %v154
  %v2977 = vunpack.c.h.b16 %v154
  %v2978 = vunpack.c.l.b16 %v155
  %v2979 = vunpack.c.h.b16 %v155
  %v2980 = vunpack.c.l.b16 %v156
  %v2981 = vunpack.c.h.b16 %v156
  %v2982 = vunpack.c.l.b16 %v157
  %v2983 = vunpack.c.h.b16 %v157
  %v2984 = vunpack.c.l.b16 %v158
  %v2985 = vunpack.c.h.b16 %v158
  %v2986 = vunpack.c.l.b16 %v159
  %v2987 = vunpack.c.h.b16 %v159
  %v2988 = vunpack.c.l.b16 %v160
  %v2989 = vunpack.c.h.b16 %v160
  %v2990 = vunpack.c.l.b16 %v161
  %v2991 = vunpack.c.h.b16 %v161
  %v2992 = vunpack.c.l.b16 %v162
  %v2993 = vunpack.c.h.b16 %v162
  %v2994 = vunpack.c.l.b16 %v163
  %v2995 = vunpack.c.h.b16 %v163
  %v2996 = vunpack.c.l.b16 %v164
  %v2997 = vunpack.c.h.b16 %v164
  %v2998 = vunpack.c.l.b16 %v165
  %v2999 = vunpack.c.h.b16 %v165
  %v3000 = vunpack.c.l.b16 %v166
  %v3001 = vunpack.c.h.b16 %v166
  %v3002 = vunpack.c.l.b16 %v167
  %v3003 = vunpack.c.h.b16 %v167
  %v3004 = vunpack.c.l.b16 %v168
  %v3005 = vunpack.c.h.b16 %v168
  %v3006 = vunpack.c.l.b16 %v169
  %v3007 = vunpack.c.h.b16 %v169
  %v3008 = vunpack.c.l.b16 %v170
  %v3009 = vunpack.c.h.b16 %v170
  %v3010 = vunpack.c.l.b16 %v171
  %v3011 = vunpack.c.h.b16 %v171
  %v3012 = vunpack.c.l.b16 %v172
  %v3013 = vunpack.c.h.b16 %v172
  %v3014 = vunpack.c.l.b16 %v173
  %v3015 = vunpack.c.h.b16 %v173
  %v3016 = vunpack.c.l.b16 %v174
  %v3017 = vunpack.c.h.b16 %v174
  %v3018 = vunpack.c.l.b16 %v175
  %v3019 = vunpack.c.h.b16 %v175
  %v3020 = vunpack.c.l.b16 %v176
  %v3021 = vunpack.c.h.b16 %v176
  %v3022 = vunpack.c.l.b16 %v177
  %v3023 = vunpack.c.h.b16 %v177
  %v3024 = vunpack.c.l.b16 %v178
  %v3025 = vunpack.c.h.b16 %v178
  %v3026 = vunpack.c.l.b16 %v179
  %v3027 = vunpack.c.h.b16 %v179
  %v3028 = vunpack.c.l.b16 %v180
  %v3029 = vunpack.c.h.b16 %v180
  %v3030 = vunpack.c.l.b16 %v181
  %v3031 = vunpack.c.h.b16 %v181
  %v3032 = vunpack.c.l.b16 %v182
  %v3033 = vunpack.c.h.b16 %v182
  %v3034 = vunpack.c.l.b16 %v183
  %v3035 = vunpack.c.h.b16 %v183
  %v3036 = vunpack.c.l.b16 %v184
  %v3037 = vunpack.c.h.b16 %v184
  %v3038 = vunpack.c.l.b16 %v185
  %v3039 = vunpack.c.h.b16 %v185
  %v3040 = vunpack.c.l.b16 %v186
  %v3041 = vunpack.c.h.b16 %v186
  %v3042 = vunpack.c.l.b16 %v187
  %v3043 = vunpack.c.h.b16 %v187
  %v3044 = vunpack.c.l.b16 %v188
  %v3045 = vunpack.c.h.b16 %v188
  %v3046 = vunpack.c.l.b16 %v189
  %v3047 = vunpack.c.h.b16 %v189
  %v3048 = vunpack.c.l.b16 %v190
  %v3049 = vunpack.c.h.b16 %v190
  %v3050 = vunpack.c.l.b16 %v191
  %v3051 = vunpack.c.h.b16 %v191
  %v3052 = vunpack.c.l.b16 %v192
  %v3053 = vunpack.c.h.b16 %v192
  %v3054 = vunpack.c.l.b16 %v193
  %v3055 = vunpack.c.h.b16 %v193
  %v3056 = vunpack.c.l.b16 %v194
  %v3057 = vunpack.c.h.b16 %v194
  %v3058 = vunpack.c.l.b16 %v195
  %v3059 = vunpack.c.h.b16 %v195
  %v3060 = vunpack.c.l.b16 %v196
  %v3061 = vunpack.c.h.b16 %v196
  %v3062 = vunpack.c.l.b16 %v197
  %v3063 = vunpack.c.h.b16 %v197
  %v3064 = vunpack.c.l.b16 %v198
  %v3065 = vunpack.c.h.b16 %v198
  %v3066 = vunpack.c.l.b16 %v199
  %v3067 = vunpack.c.h.b16 %v199
  %v3068 = vunpack.c.l.b16 %v200
  %v3069 = vunpack.c.h.b16 %v200
  %v3070 = vunpack.c.l.b16 %v201
  %v3071 = vunpack.c.h.b16 %v201
  %v3072 = vunpack.c.l.b16 %v202
  %v3073 = vunpack.c.h.b16 %v202
  %v3074 = vunpack.c.l.b16 %v203
  %v3075 = vunpack.c.h.b16 %v203
  %v3076 = vunpack.c.l.b16 %v204
  %v3077 = vunpack.c.h.b16 %v204
  %v3078 = vunpack.c.l.b16 %v205
  %v3079 = vunpack.c.h.b16 %v205
  %v3080 = vunpack.c.l.b16 %v206
  %v3081 = vunpack.c.h.b16 %v206
  %v3082 = vunpack.c.l.b16 %v207
  %v3083 = vunpack.c.h.b16 %v207
  %v3084 = vunpack.c.l.b16 %v208
  %v3085 = vunpack.c.h.b16 %v208
  %v3086 = vunpack.c.l.b16 %v209
  %v3087 = vunpack.c.h.b16 %v209
  %v3088 = vunpack.c.l.b16 %v210
  %v3089 = vunpack.c.h.b16 %v210
  %v3090 = vunpack.c.l.b16 %v211
  %v3091 = vunpack.c.h.b16 %v211
  %v3092 = vunpack.c.l.b16 %v212
  %v3093 = vunpack.c.h.b16 %v212
  %v3094 = vunpack.c.l.b16 %v213
  %v3095 = vunpack.c.h.b16 %v213
  %v3096 = vunpack.c.l.b16 %v214
  %v3097 = vunpack.c.h.b16 %v214
  %v3098 = vunpack.c.l.b16 %v215
  %v3099 = vunpack.c.h.b16 %v215
  %v3100 = vunpack.c.l.b16 %v216
  %v3101 = vunpack.c.h.b16 %v216
  %v3102 = vunpack.c.l.b16 %v217
  %v3103 = vunpack.c.h.b16 %v217
  %v3104 = vunpack.c.l.b16 %v218
  %v3105 = vunpack.c.h.b16 %v218
  %v3106 = vunpack.c.l.b16 %v219
  %v3107 = vunpack.c.h.b16 %v219
  %v3108 = vunpack.c.l.b16 %v220
  %v3109 = vunpack.c.h.b16 %v220
  %v3110 = vunpack.c.l.b16 %v221
  %v3111 = vunpack.c.h.b16 %v221
  %v3112 = vunpack.c.l.b16 %v222
  %v3113 = vunpack.c.h.b16 %v222
  %v3114 = vunpack.c.l.b16 %v223
  %v3115 = vunpack.c.h.b16 %v223
  %v3116 = vunpack.c.l.b16 %v224
  %v3117 = vunpack.c.h.b16 %v224
  %v3118 = vunpack.c.l.b16 %v225
  %v3119 = vunpack.c.h.b16 %v225
  %v3120 = vunpack.c.l.b16 %v226
  %v3121 = vunpack.c.h.b16 %v226
  %v3122 = vunpack.c.l.b16 %v227
  %v3123 = vunpack.c.h.b16 %v227
  %v3124 = vunpack.c.l.b16 %v228
  %v3125 = vunpack.c.h.b16 %v228
  %v3126 = vunpack.c.l.b16 %v229
  %v3127 = vunpack.c.h.b16 %v229
  %v3128 = vunpack.c.l.b16 %v230
  %v3129 = vunpack.c.h.b16 %v230
  %v3130 = vunpack.c.l.b16 %v231
  %v3131 = vunpack.c.h.b16 %v231
  %v3132 = vunpack.c.l.b16 %v232
  %v3133 = vunpack.c.h.b16 %v232
  %v3134 = vunpack.c.l.b16 %v233
  %v3135 = vunpack.c.h.b16 %v233
  %v3136 = vunpack.c.l.b16 %v234
  %v3137 = vunpack.c.h.b16 %v234
  %v3138 = vunpack.c.l.b16 %v235
  %v3139 = vunpack.c.h.b16 %v235
  %v3140 = vunpack.c.l.b16 %v236
  %v3141 = vunpack.c.h.b16 %v236
  %v3142 = vunpack.c.l.b16 %v237
  %v3143 = vunpack.c.h.b16 %v237
  %v3144 = vunpack.c.l.b16 %v238
  %v3145 = vunpack.c.h.b16 %v238
  %v3146 = vunpack.c.l.b16 %v239
  %v3147 = vunpack.c.h.b16 %v239
  %v3148 = vunpack.c.l.b16 %v240
  %v3149 = vunpack.c.h.b16 %v240
  %v3150 = vunpack.c.l.b16 %v241
  %v3151 = vunpack.c.h.b16 %v241
  %v3152 = vunpack.c.l.b16 %v242
  %v3153 = vunpack.c.h.b16 %v242
  %v3154 = vunpack.c.l.b16 %v243
  %v3155 = vunpack.c.h.b16 %v243
  %v3156 = vunpack.c.l.b16 %v244
  %v3157 = vunpack.c.h.b16 %v244
  %v3158 = vunpack.c.l.b16 %v245
  %v3159 = vunpack.c.h.b16 %v245
  %v3160 = vunpack.c.l.b16 %v246
  %v3161 = vunpack.c.h.b16 %v246
  %v3162 = vunpack.c.l.b16 %v247
  %v3163 = vunpack.c.h.b16 %v247
  %v3164 = vunpack.c.l.b16 %v248
  %v3165 = vunpack.c.h.b16 %v248
  %v3166 = vunpack.c.l.b16 %v249
  %v3167 = vunpack.c.h.b16 %v249
  %v3168 = vunpack.c.l.b16 %v250
  %v3169 = vunpack.c.h.b16 %v250
  %v3170 = vunpack.c.l.b16 %v251
  %v3171 = vunpack.c.h.b16 %v251
  %v3172 = vunpack.c.l.b16 %v252
  %v3173 = vunpack.c.h.b16 %v252
  %v3174 = vunpack.c.l.b16 %v253
  %v3175 = vunpack.c.h.b16 %v253
  %v3176 = vunpack.c.l.b16 %v254
  %v3177 = vunpack.c.h.b16 %v254
  %v3178 = vunpack.c.l.b16 %v255
  %v3179 = vunpack.c.h.b16 %v255
  %v3180 = vunpack.c.l.b16 %v256
  %v3181 = vunpack.c.h.b16 %v256
  %v3182 = vunpack.c.l.b16 %v257
  %v3183 = vunpack.c.h.b16 %v257
  %v3184 = vunpack.c.l.b16 %v258
  %v3185 = vunpack.c.h.b16 %v258
  %v3186 = vunpack.c.l.b16 %v259
  %v3187 = vunpack.c.h.b16 %v259
  %v3188 = vunpack.c.l.b16 %v260
  %v3189 = vunpack.c.h.b16 %v260
  %v3190 = vunpack.c.l.b16 %v261
  %v3191 = vunpack.c.h.b16 %v261
  %v3192 = vunpack.c.l.b16 %v262
  %v3193 = vunpack.c.h.b16 %v262
  %v3194 = vunpack.c.l.b16 %v263
  %v3195 = vunpack.c.h.b16 %v263
  %v3196 = vunpack.c.l.b16 %v264
  %v3197 = vunpack.c.h.b16 %v264
  %v3198 = vunpack.c.l.b16 %v265
  %v3199 = vunpack.c.h.b16 %v265
  %v3200 = vunpack.c.l.b16 %v266
  %v3201 = vunpack.c.h.b16 %v266
  %v3202 = vunpack.c.l.b16 %v267
  %v3203 = vunpack.c.h.b16 %v267
  %v3204 = vunpack.c.l.b16 %v268
  %v3205 = vunpack.c.h.b16 %v268
  %v3206 = vunpack.c.l.b16 %v269
  %v3207 = vunpack.c.h.b16 %v269
  %v3208 = vunpack.c.l.b16 %v270
  %v3209 = vunpack.c.h.b16 %v270
  %v3210 = vunpack.c.l.b16 %v271
  %v3211 = vunpack.c.h.b16 %v271
  %v3212 = vunpack.c.l.b16 %v272
  %v3213 = vunpack.c.h.b16 %v272
  %v3214 = vunpack.c.l.b16 %v273
  %v3215 = vunpack.c.h.b16 %v273
  %v3216 = vunpack.c.l.b16 %v274
  %v3217 = vunpack.c.h.b16 %v274
  %v3218 = vunpack.c.l.b16 %v275
  %v3219 = vunpack.c.h.b16 %v275
  %v3220 = vunpack.c.l.b16 %v276
  %v3221 = vunpack.c.h.b16 %v276
  %v3222 = vunpack.c.l.b16 %v277
  %v3223 = vunpack.c.h.b16 %v277
  %v3224 = vunpack.c.l.b16 %v278
  %v3225 = vunpack.c.h.b16 %v278
  %v3226 = vunpack.c.l.b16 %v279
  %v3227 = vunpack.c.h.b16 %v279
  %v3228 = vunpack.c.l.b16 %v280
  %v3229 = vunpack.c.h.b16 %v280
  %v3230 = vunpack.c.l.b16 %v281
  %v3231 = vunpack.c.h.b16 %v281
  %v3232 = vunpack.c.l.b16 %v282
  %v3233 = vunpack.c.h.b16 %v282
  %v3234 = vunpack.c.l.b16 %v283
  %v3235 = vunpack.c.h.b16 %v283
  %v3236 = vunpack.c.l.b16 %v284
  %v3237 = vunpack.c.h.b16 %v284
  %v3238 = vunpack.c.l.b16 %v285
  %v3239 = vunpack.c.h.b16 %v285
  %v3240 = vunpack.c.l.b16 %v286
  %v3241 = vunpack.c.h.b16 %v286
  %v3242 = vunpack.c.l.b16 %v287
  %v3243 = vunpack.c.h.b16 %v287
  %v3244 = vunpack.c.l.b16 %v288
  %v3245 = vunpack.c.h.b16 %v288
  %v3246 = vunpack.c.l.b16 %v289
  %v3247 = vunpack.c.h.b16 %v289
  %v3248 = vunpack.c.l.b16 %v290
  %v3249 = vunpack.c.h.b16 %v290
  %v3250 = vunpack.c.l.b16 %v291
  %v3251 = vunpack.c.h.b16 %v291
  %v3252 = vunpack.c.l.b16 %v292
  %v3253 = vunpack.c.h.b16 %v292
  %v3254 = vunpack.c.l.b16 %v293
  %v3255 = vunpack.c.h.b16 %v293
  %v3256 = vunpack.c.l.b16 %v294
  %v3257 = vunpack.c.h.b16 %v294
  %v3258 = vunpack.c.l.b16 %v295
  %v3259 = vunpack.c.h.b16 %v295
  %v3260 = vunpack.c.l.b16 %v296
  %v3261 = vunpack.c.h.b16 %v296
  %v3262 = vunpack.c.l.b16 %v297
  %v3263 = vunpack.c.h.b16 %v297
  %v3264 = vunpack.c.l.b16 %v298
  %v3265 = vunpack.c.h.b16 %v298
  %v3266 = vunpack.c.l.b16 %v299
  %v3267 = vunpack.c.h.b16 %v299
  %v3268 = vunpack.c.l.b16 %v300
  %v3269 = vunpack.c.h.b16 %v300
  %v3270 = vunpack.c.l.b16 %v301
  %v3271 = vunpack.c.h.b16 %v301
  %v3272 = vunpack.c.l.b16 %v302
  %v3273 = vunpack.c.h.b16 %v302
  %v3274 = vunpack.c.l.b16 %v303
  %v3275 = vunpack.c.h.b16 %v303
  %v3276 = vunpack.c.l.b16 %v304
  %v3277 = vunpack.c.h.b16 %v304
  %v3278 = vunpack.c.l.b16 %v305
  %v3279 = vunpack.c.h.b16 %v305
  %v3280 = vunpack.c.l.b16 %v306
  %v3281 = vunpack.c.h.b16 %v306
  %v3282 = vunpack.c.l.b16 %v307
  %v3283 = vunpack.c.h.b16 %v307
  %v3284 = vunpack.c.l.b16 %v308
  %v3285 = vunpack.c.h.b16 %v308
  %v3286 = vunpack.c.l.b16 %v309
  %v3287 = vunpack.c.h.b16 %v309
  %v3288 = vunpack.c.l.b16 %v310
  %v3289 = vunpack.c.h.b16 %v310
  %v3290 = vunpack.c.l.b16 %v311
  %v3291 = vunpack.c.h.b16 %v311
  %v3292 = vunpack.c.l.b16 %v312
  %v3293 = vunpack.c.h.b16 %v312
  %v3294 = vunpack.c.l.b16 %v313
  %v3295 = vunpack.c.h.b16 %v313
  %v3296 = vunpack.c.l.b16 %v314
  %v3297 = vunpack.c.h.b16 %v314
  %v3298 = vunpack.c.l.b16 %v315
  %v3299 = vunpack.c.h.b16 %v315
  %v3300 = vunpack.c.l.b16 %v316
  %v3301 = vunpack.c.h.b16 %v316
  %v3302 = vunpack.c.l.b16 %v317
  %v3303 = vunpack.c.h.b16 %v317
  %v3304 = vunpack.c.l.b16 %v318
  %v3305 = vunpack.c.h.b16 %v318
  %v3306 = vunpack.c.l.b16 %v319
  %v3307 = vunpack.c.h.b16 %v319
  %v3308 = vunpack.c.l.b16 %v320
  %v3309 = vunpack.c.h.b16 %v320
  %v3310 = vunpack.c.l.b16 %v321
  %v3311 = vunpack.c.h.b16 %v321
  %v3312 = vunpack.c.l.b16 %v322
  %v3313 = vunpack.c.h.b16 %v322
  %v3314 = vunpack.c.l.b16 %v323
  %v3315 = vunpack.c.h.b16 %v323
  %v3316 = vunpack.c.l.b16 %v324
  %v3317 = vunpack.c.h.b16 %v324
  %v3318 = vunpack.c.l.b16 %v325
  %v3319 = vunpack.c.h.b16 %v325
  %v3320 = vunpack.c.l.b16 %v326
  %v3321 = vunpack.c.h.b16 %v326
  %v3322 = vunpack.c.l.b16 %v327
  %v3323 = vunpack.c.h.b16 %v327
  %v3324 = vunpack.c.l.b16 %v328
  %v3325 = vunpack.c.h.b16 %v328
  %v3326 = vunpack.c.l.b16 %v329
  %v3327 = vunpack.c.h.b16 %v329
  %v3328 = vunpack.c.l.b16 %v330
  %v3329 = vunpack.c.h.b16 %v330
  %v3330 = vunpack.c.l.b16 %v331
  %v3331 = vunpack.c.h.b16 %v331
  %v3332 = vunpack.c.l.b16 %v332
  %v3333 = vunpack.c.h.b16 %v332
  %v3334 = vunpack.c.l.b16 %v333
  %v3335 = vunpack.c.h.b16 %v333
  %v3336 = vunpack.c.l.b16 %v334
  %v3337 = vunpack.c.h.b16 %v334
  %v3338 = vunpack.c.l.b16 %v335
  %v3339 = vunpack.c.h.b16 %v335
  %v3340 = vunpack.c.l.b16 %v336
  %v3341 = vunpack.c.h.b16 %v336
  %v3342 = vunpack.c.l.b16 %v337
  %v3343 = vunpack.c.h.b16 %v337
  %v3344 = vunpack.c.l.b16 %v338
  %v3345 = vunpack.c.h.b16 %v338
  %v3346 = vunpack.c.l.b16 %v339
  %v3347 = vunpack.c.h.b16 %v339
  %v3348 = vunpack.c.l.b16 %v340
  %v3349 = vunpack.c.h.b16 %v340
  %v3350 = vunpack.c.l.b16 %v341
  %v3351 = vunpack.c.h.b16 %v341
  %v3352 = vunpack.c.l.b16 %v342
  %v3353 = vunpack.c.h.b16 %v342
  %v3354 = vunpack.c.l.b16 %v343
  %v3355 = vunpack.c.h.b16 %v343
  %v3356 = vunpack.c.l.b16 %v344
  %v3357 = vunpack.c.h.b16 %v344
  %v3358 = vunpack.c.l.b16 %v345
  %v3359 = vunpack.c.h.b16 %v345
  %v3360 = vunpack.c.l.b16 %v346
  %v3361 = vunpack.c.h.b16 %v346
  %v3362 = vunpack.c.l.b16 %v347
  %v3363 = vunpack.c.h.b16 %v347
  %v3364 = vunpack.c.l.b16 %v348
  %v3365 = vunpack.c.h.b16 %v348
  %v3366 = vunpack.c.l.b16 %v349
  %v3367 = vunpack.c.h.b16 %v349
  %v3368 = vunpack.c.l.b16 %v350
  %v3369 = vunpack.c.h.b16 %v350
  %v3370 = vunpack.c.l.b16 %v351
  %v3371 = vunpack.c.h.b16 %v351
  %v3372 = vunpack.c.l.b16 %v352
  %v3373 = vunpack.c.h.b16 %v352
  %v3374 = vunpack.c.l.b16 %v353
  %v3375 = vunpack.c.h.b16 %v353
  %v3376 = vunpack.c.l.b16 %v354
  %v3377 = vunpack.c.h.b16 %v354
  %v3378 = vunpack.c.l.b16 %v355
  %v3379 = vunpack.c.h.b16 %v355
  %v3380 = vunpack.c.l.b16 %v356
  %v3381 = vunpack.c.h.b16 %v356
  %v3382 = vunpack.c.l.b16 %v357
  %v3383 = vunpack.c.h.b16 %v357
  %v3384 = vunpack.c.l.b16 %v358
  %v3385 = vunpack.c.h.b16 %v358
  %v3386 = vunpack.c.l.b16 %v359
  %v3387 = vunpack.c.h.b16 %v359
  %v3388 = vunpack.c.l.b16 %v360
  %v3389 = vunpack.c.h.b16 %v360
  %v3390 = vunpack.c.l.b16 %v361
  %v3391 = vunpack.c.h.b16 %v361
  %v3392 = vunpack.c.l.b16 %v362
  %v3393 = vunpack.c.h.b16 %v362
  %v3394 = vunpack.c.l.b16 %v363
  %v3395 = vunpack.c.h.b16 %v363
  %v3396 = vunpack.c.l.b16 %v364
  %v3397 = vunpack.c.h.b16 %v364
  %v3398 = vunpack.c.l.b16 %v365
  %v3399 = vunpack.c.h.b16 %v365
  %v3400 = vunpack.c.l.b16 %v366
  %v3401 = vunpack.c.h.b16 %v366
  %v3402 = vunpack.c.l.b16 %v367
  %v3403 = vunpack.c.h.b16 %v367
  %v3404 = vunpack.c.l.b16 %v368
  %v3405 = vunpack.c.h.b16 %v368
  %v3406 = vunpack.c.l.b16 %v369
  %v3407 = vunpack.c.h.b16 %v369
  %v3408 = vunpack.c.l.b16 %v370
  %v3409 = vunpack.c.h.b16 %v370
  %v3410 = vunpack.c.l.b16 %v371
  %v3411 = vunpack.c.h.b16 %v371
  %v3412 = vunpack.c.l.b16 %v372
  %v3413 = vunpack.c.h.b16 %v372
  %v3414 = vunpack.c.l.b16 %v373
  %v3415 = vunpack.c.h.b16 %v373
  %v3416 = vunpack.c.l.b16 %v374
  %v3417 = vunpack.c.h.b16 %v374
  %v3418 = vunpack.c.l.b16 %v375
  %v3419 = vunpack.c.h.b16 %v375
  %v3420 = vunpack.c.l.b16 %v376
  %v3421 = vunpack.c.h.b16 %v376
  %v3422 = vunpack.c.l.b16 %v377
  %v3423 = vunpack.c.h.b16 %v377
  %v3424 = vunpack.c.l.b16 %v378
  %v3425 = vunpack.c.h.b16 %v378
  %v3426 = vunpack.c.l.b16 %v379
  %v3427 = vunpack.c.h.b16 %v379
  %v3428 = vunpack.c.l.b16 %v380
  %v3429 = vunpack.c.h.b16 %v380
  %v3430 = vunpack.c.l.b16 %v381
  %v3431 = vunpack.c.h.b16 %v381
  %v3432 = vunpack.c.l.b16 %v382
  %v3433 = vunpack.c.h.b16 %v382
  %v3434 = vunpack.c.l.b16 %v383
  %v3435 = vunpack.c.h.b16 %v383
  %v3436 = vunpack.c.l.b16 %v384
  %v3437 = vunpack.c.h.b16 %v384
  %v3438 = vunpack.c.l.b16 %v385
  %v3439 = vunpack.c.h.b16 %v385
  %v3440 = vunpack.c.l.b16 %v386
  %v3441 = vunpack.c.h.b16 %v386
  %v3442 = vunpack.c.l.b16 %v387
  %v3443 = vunpack.c.h.b16 %v387
  %v3444 = vunpack.c.l.b16 %v388
  %v3445 = vunpack.c.h.b16 %v388
  %v3446 = vunpack.c.l.b16 %v389
  %v3447 = vunpack.c.h.b16 %v389
  %v3448 = vunpack.c.l.b16 %v390
  %v3449 = vunpack.c.h.b16 %v390
  %v3450 = vunpack.c.l.b16 %v391
  %v3451 = vunpack.c.h.b16 %v391
  %v3452 = vunpack.c.l.b16 %v392
  %v3453 = vunpack.c.h.b16 %v392
  %v3454 = vunpack.c.l.b16 %v393
  %v3455 = vunpack.c.h.b16 %v393
  %v3456 = vunpack.c.l.b16 %v394
  %v3457 = vunpack.c.h.b16 %v394
  %v3458 = vunpack.c.l.b16 %v395
  %v3459 = vunpack.c.h.b16 %v395
  %v3460 = vunpack.c.l.b16 %v396
  %v3461 = vunpack.c.h.b16 %v396
  %v3462 = vunpack.c.l.b16 %v397
  %v3463 = vunpack.c.h.b16 %v397
  %v3464 = vunpack.c.l.b16 %v398
  %v3465 = vunpack.c.h.b16 %v398
  %v3466 = vunpack.c.l.b16 %v399
  %v3467 = vunpack.c.h.b16 %v399
  %v3468 = vunpack.c.l.b16 %v400
  %v3469 = vunpack.c.h.b16 %v400
  %v3470 = vunpack.c.l.b16 %v401
  %v3471 = vunpack.c.h.b16 %v401
  %v3472 = vunpack.c.l.b16 %v402
  %v3473 = vunpack.c.h.b16 %v402
  %v3474 = vunpack.c.l.b16 %v403
  %v3475 = vunpack.c.h.b16 %v403
  %v3476 = vunpack.c.l.b16 %v404
  %v3477 = vunpack.c.h.b16 %v404
  %v3478 = vunpack.c.l.b16 %v405
  %v3479 = vunpack.c.h.b16 %v405
  %v3480 = vunpack.c.l.b16 %v406
  %v3481 = vunpack.c.h.b16 %v406
  %v3482 = vunpack.c.l.b16 %v407
  %v3483 = vunpack.c.h.b16 %v407
  %v3484 = vunpack.c.l.b16 %v408
  %v3485 = vunpack.c.h.b16 %v408
  %v3486 = vunpack.c.l.b16 %v409
  %v3487 = vunpack.c.h.b16 %v409
  %v3488 = vunpack.c.l.b16 %v410
  %v3489 = vunpack.c.h.b16 %v410
  %v3490 = vunpack.c.l.b16 %v411
  %v3491 = vunpack.c.h.b16 %v411
  %v3492 = vunpack.c.l.b16 %v412
  %v3493 = vunpack.c.h.b16 %v412
  %v3494 = vunpack.c.l.b16 %v413
  %v3495 = vunpack.c.h.b16 %v413
  %v3496 = vunpack.c.l.b16 %v414
  %v3497 = vunpack.c.h.b16 %v414
  %v3498 = vunpack.c.l.b16 %v415
  %v3499 = vunpack.c.h.b16 %v415
  %v3500 = vunpack.c.l.b16 %v416
  %v3501 = vunpack.c.h.b16 %v416
  %v3502 = vunpack.c.l.b16 %v417
  %v3503 = vunpack.c.h.b16 %v417
  %v3504 = vunpack.c.l.b16 %v418
  %v3505 = vunpack.c.h.b16 %v418
  %v3506 = vunpack.c.l.b16 %v419
  %v3507 = vunpack.c.h.b16 %v419
  %v3508 = vunpack.c.l.b16 %v420
  %v3509 = vunpack.c.h.b16 %v420
  %v3510 = vunpack.c.l.b16 %v421
  %v3511 = vunpack.c.h.b16 %v421
  %v3512 = vunpack.c.l.b16 %v422
  %v3513 = vunpack.c.h.b16 %v422
  %v3514 = vunpack.c.l.b16 %v423
  %v3515 = vunpack.c.h.b16 %v423
  %v3516 = vunpack.c.l.b16 %v424
  %v3517 = vunpack.c.h.b16 %v424
  %v3518 = vunpack.c.l.b16 %v425
  %v3519 = vunpack.c.h.b16 %v425
  %v3520 = vunpack.c.l.b16 %v426
  %v3521 = vunpack.c.h.b16 %v426
  %v3522 = vunpack.c.l.b16 %v427
  %v3523 = vunpack.c.h.b16 %v427
  %v3524 = vunpack.c.l.b16 %v428
  %v3525 = vunpack.c.h.b16 %v428
  %v3526 = vunpack.c.l.b16 %v429
  %v3527 = vunpack.c.h.b16 %v429
  %v3528 = vunpack.c.l.b16 %v430
  %v3529 = vunpack.c.h.b16 %v430
  %v3530 = vunpack.c.l.b16 %v431
  %v3531 = vunpack.c.h.b16 %v431
  %v3532 = vunpack.c.l.b16 %v432
  %v3533 = vunpack.c.h.b16 %v432
  %v3534 = vunpack.c.l.b16 %v433
  %v3535 = vunpack.c.h.b16 %v433
  %v3536 = vunpack.c.l.b16 %v434
  %v3537 = vunpack.c.h.b16 %v434
  %v3538 = vunpack.c.l.b16 %v435
  %v3539 = vunpack.c.h.b16 %v435
  %v3540 = vunpack.c.l.b16 %v436
  %v3541 = vunpack.c.h.b16 %v436
  %v3542 = vunpack.c.l.b16 %v437
  %v3543 = vunpack.c.h.b16 %v437
  %v3544 = vunpack.c.l.b16 %v438
  %v3545 = vunpack.c.h.b16 %v438
  %v3546 = vunpack.c.l.b16 %v439
  %v3547 = vunpack.c.h.b16 %v439
  %v3548 = vunpack.c.l.b16 %v440
  %v3549 = vunpack.c.h.b16 %v440
  %v3550 = vunpack.c.l.b16 %v441
  %v3551 = vunpack.c.h.b16 %v441
  %v3552 = vunpack.c.l.b16 %v442
  %v3553 = vunpack.c.h.b16 %v442
  %v3554 = vunpack.c.l.b16 %v443
  %v3555 = vunpack.c.h.b16 %v443
  %v3556 = vunpack.c.l.b16 %v444
  %v3557 = vunpack.c.h.b16 %v444
  %v3558 = vunpack.c.l.b16 %v445
  %v3559 = vunpack.c.h.b16 %v445
  %v3560 = vunpack.c.l.b16 %v446
  %v3561 = vunpack.c.h.b16 %v446
  %v3562 = vunpack.c.l.b16 %v447
  %v3563 = vunpack.c.h.b16 %v447
  %v3564 = vunpack.c.l.b16 %v448
  %v3565 = vunpack.c.h.b16 %v448
  %v3566 = vunpack.c.l.b16 %v449
  %v3567 = vunpack.c.h.b16 %v449
  %v3568 = vunpack.c.l.b16 %v450
  %v3569 = vunpack.c.h.b16 %v450
  %v3570 = vunpack.c.l.b16 %v451
  %v3571 = vunpack.c.h.b16 %v451
  %v3572 = vunpack.c.l.b16 %v452
  %v3573 = vunpack.c.h.b16 %v452
  %v3574 = vunpack.c.l.b16 %v453
  %v3575 = vunpack.c.h.b16 %v453
  %v3576 = vunpack.c.l.b16 %v454
  %v3577 = vunpack.c.h.b16 %v454
  %v3578 = vunpack.c.l.b16 %v455
  %v3579 = vunpack.c.h.b16 %v455
  %v3580 = vunpack.c.l.b16 %v456
  %v3581 = vunpack.c.h.b16 %v456
  %v3582 = vunpack.c.l.b16 %v457
  %v3583 = vunpack.c.h.b16 %v457
  %v3584 = vunpack.c.l.b16 %v458
  %v3585 = vunpack.c.h.b16 %v458
  %v3586 = vunpack.c.l.b16 %v459
  %v3587 = vunpack.c.h.b16 %v459
  %v3588 = vunpack.c.l.b16 %v460
  %v3589 = vunpack.c.h.b16 %v460
  %v3590 = vunpack.c.l.b16 %v461
  %v3591 = vunpack.c.h.b16 %v461
  %v3592 = vunpack.c.l.b16 %v462
  %v3593 = vunpack.c.h.b16 %v462
  %v3594 = vunpack.c.l.b16 %v463
  %v3595 = vunpack.c.h.b16 %v463
  %v3596 = vunpack.c.l.b16 %v464
  %v3597 = vunpack.c.h.b16 %v464
  %v3598 = vunpack.c.l.b16 %v465
  %v3599 = vunpack.c.h.b16 %v465
  %v3600 = vunpack.c.l.b16 %v466
  %v3601 = vunpack.c.h.b16 %v466
  %v3602 = vunpack.c.l.b16 %v467
  %v3603 = vunpack.c.h.b16 %v467
  %v3604 = vunpack.c.l.b16 %v468
  %v3605 = vunpack.c.h.b16 %v468
  %v3606 = vunpack.c.l.b16 %v469
  %v3607 = vunpack.c.h.b16 %v469
  %v3608 = vunpack.c.l.b16 %v470
  %v3609 = vunpack.c.h.b16 %v470
  %v3610 = vunpack.c.l.b16 %v471
  %v3611 = vunpack.c.h.b16 %v471
  %v3612 = vunpack.c.l.b16 %v472
  %v3613 = vunpack.c.h.b16 %v472
  %v3614 = vunpack.c.l.b16 %v473
  %v3615 = vunpack.c.h.b16 %v473
  %v3616 = vunpack.c.l.b16 %v474
  %v3617 = vunpack.c.h.b16 %v474
  %v3618 = vunpack.c.l.b16 %v475
  %v3619 = vunpack.c.h.b16 %v475
  %v3620 = vunpack.c.l.b16 %v476
  %v3621 = vunpack.c.h.b16 %v476
  %v3622 = vunpack.c.l.b16 %v477
  %v3623 = vunpack.c.h.b16 %v477
  %v3624 = vunpack.c.l.b16 %v478
  %v3625 = vunpack.c.h.b16 %v478
  %v3626 = vunpack.c.l.b16 %v479
  %v3627 = vunpack.c.h.b16 %v479
  %v3628 = vunpack.c.l.b16 %v480
  %v3629 = vunpack.c.h.b16 %v480
  %v3630 = vunpack.c.l.b16 %v481
  %v3631 = vunpack.c.h.b16 %v481
  %v3632 = vunpack.c.l.b16 %v482
  %v3633 = vunpack.c.h.b16 %v482
  %v3634 = vunpack.c.l.b16 %v483
  %v3635 = vunpack.c.h.b16 %v483
  %v3636 = vunpack.c.l.b16 %v484
  %v3637 = vunpack.c.h.b16 %v484
  %v3638 = vunpack.c.l.b16 %v485
  %v3639 = vunpack.c.h.b16 %v485
  %v3640 = vunpack.c.l.b16 %v486
  %v3641 = vunpack.c.h.b16 %v486
  %v3642 = vunpack.c.l.b16 %v487
  %v3643 = vunpack.c.h.b16 %v487
  %v3644 = vunpack.c.l.b16 %v488
  %v3645 = vunpack.c.h.b16 %v488
  %v3646 = vunpack.c.l.b16 %v489
  %v3647 = vunpack.c.h.b16 %v489
  %v3648 = vunpack.c.l.b16 %v490
  %v3649 = vunpack.c.h.b16 %v490
  %v3650 = vunpack.c.l.b16 %v491
  %v3651 = vunpack.c.h.b16 %v491
  %v3652 = vunpack.c.l.b16 %v492
  %v3653 = vunpack.c.h.b16 %v492
  %v3654 = vunpack.c.l.b16 %v493
  %v3655 = vunpack.c.h.b16 %v493
  %v3656 = vunpack.c.l.b16 %v494
  %v3657 = vunpack.c.h.b16 %v494
  %v3658 = vunpack.c.l.b16 %v495
  %v3659 = vunpack.c.h.b16 %v495
  %v3660 = vunpack.c.l.b16 %v496
  %v3661 = vunpack.c.h.b16 %v496
  %v3662 = vunpack.c.l.b16 %v497
  %v3663 = vunpack.c.h.b16 %v497
  %v3664 = vunpack.c.l.b16 %v498
  %v3665 = vunpack.c.h.b16 %v498
  %v3666 = vunpack.c.l.b16 %v499
  %v3667 = vunpack.c.h.b16 %v499
  %v3668 = vunpack.c.l.b16 %v500
  %v3669 = vunpack.c.h.b16 %v500
  %v3670 = vunpack.c.l.b16 %v501
  %v3671 = vunpack.c.h.b16 %v501
  %v3672 = vunpack.c.l.b16 %v502
  %v3673 = vunpack.c.h.b16 %v502
  %v3674 = vunpack.c.l.b16 %v503
  %v3675 = vunpack.c.h.b16 %v503
  %v3676 = vunpack.c.l.b16 %v504
  %v3677 = vunpack.c.h.b16 %v504
  %v3678 = vunpack.c.l.b16 %v505
  %v3679 = vunpack.c.h.b16 %v505
  %v3680 = vunpack.c.l.b16 %v506
  %v3681 = vunpack.c.h.b16 %v506
  %v3682 = vunpack.c.l.b16 %v507
  %v3683 = vunpack.c.h.b16 %v507
  %v3684 = vunpack.c.l.b16 %v508
  %v3685 = vunpack.c.h.b16 %v508
  %v3686 = vunpack.c.l.b16 %v509
  %v3687 = vunpack.c.h.b16 %v509
  %v3688 = vunpack.c.l.b16 %v510
  %v3689 = vunpack.c.h.b16 %v510
  %v3690 = vunpack.c.l.b16 %v511
  %v3691 = vunpack.c.h.b16 %v511
  %v3692 = vunpack.c.l.b16 %v512
  %v3693 = vunpack.c.h.b16 %v512
  %v3694 = vunpack.c.l.b16 %v513
  %v3695 = vunpack.c.h.b16 %v513
  %v3696 = vunpack.c.l.b16 %v514
  %v3697 = vunpack.c.h.b16 %v514
  %v3698 = vunpack.c.l.b16 %v515
  %v3699 = vunpack.c.h.b16 %v515
  %v3700 = vunpack.c.l.b16 %v516
  %v3701 = vunpack.c.h.b16 %v516
  %v3702 = vunpack.c.l.b16 %v517
  %v3703 = vunpack.c.h.b16 %v517
  %v3704 = vunpack.c.l.b16 %v518
  %v3705 = vunpack.c.h.b16 %v518
  %v3706 = vunpack.c.l.b16 %v519
  %v3707 = vunpack.c.h.b16 %v519
  %v3708 = vunpack.c.l.b16 %v520
  %v3709 = vunpack.c.h.b16 %v520
  %v3710 = vunpack.c.l.b16 %v521
  %v3711 = vunpack.c.h.b16 %v521
  %v3712 = vunpack.c.l.b16 %v522
  %v3713 = vunpack.c.h.b16 %v522
  %v3714 = vunpack.c.l.b16 %v523
  %v3715 = vunpack.c.h.b16 %v523
  %v3716 = vunpack.c.l.b16 %v524
  %v3717 = vunpack.c.h.b16 %v524
  %v3718 = vunpack.c.l.b16 %v525
  %v3719 = vunpack.c.h.b16 %v525
  %v3720 = vunpack.c.l.b16 %v526
  %v3721 = vunpack.c.h.b16 %v526
  %v3722 = vunpack.c.l.b16 %v527
  %v3723 = vunpack.c.h.b16 %v527
  %v3724 = vunpack.c.l.b16 %v528
  %v3725 = vunpack.c.h.b16 %v528
  %v3726 = vunpack.c.l.b16 %v529
  %v3727 = vunpack.c.h.b16 %v529
  %v3728 = vunpack.c.l.b16 %v530
  %v3729 = vunpack.c.h.b16 %v530
  %v3730 = vunpack.c.l.b16 %v531
  %v3731 = vunpack.c.h.b16 %v531
  %v3732 = vunpack.c.l.b16 %v532
  %v3733 = vunpack.c.h.b16 %v532
  %v3734 = vunpack.c.l.b16 %v533
  %v3735 = vunpack.c.h.b16 %v533
  %v3736 = vunpack.c.l.b16 %v534
  %v3737 = vunpack.c.h.b16 %v534
  %v3738 = vunpack.c.l.b16 %v535
  %v3739 = vunpack.c.h.b16 %v535
  %v3740 = vunpack.c.l.b16 %v536
  %v3741 = vunpack.c.h.b16 %v536
  %v3742 = vunpack.c.l.b16 %v537
  %v3743 = vunpack.c.h.b16 %v537
  %v3744 = vunpack.c.l.b16 %v538
  %v3745 = vunpack.c.h.b16 %v538
  %v3746 = vunpack.c.l.b16 %v539
  %v3747 = vunpack.c.h.b16 %v539
  %v3748 = vunpack.c.l.b16 %v540
  %v3749 = vunpack.c.h.b16 %v540
  %v3750 = vunpack.c.l.b16 %v541
  %v3751 = vunpack.c.h.b16 %v541
  %v3752 = vunpack.c.l.b16 %v542
  %v3753 = vunpack.c.h.b16 %v542
  %v3754 = vunpack.c.l.b16 %v543
  %v3755 = vunpack.c.h.b16 %v543
  %v3756 = vunpack.c.l.b16 %v544
  %v3757 = vunpack.c.h.b16 %v544
  %v3758 = vunpack.c.l.b16 %v545
  %v3759 = vunpack.c.h.b16 %v545
  %v3760 = vunpack.c.l.b16 %v546
  %v3761 = vunpack.c.h.b16 %v546
  %v3762 = vunpack.c.l.b16 %v547
  %v3763 = vunpack.c.h.b16 %v547
  %v3764 = vunpack.c.l.b16 %v548
  %v3765 = vunpack.c.h.b16 %v548
  %v3766 = vunpack.c.l.b16 %v549
  %v3767 = vunpack.c.h.b16 %v549
  %v3768 = vunpack.c.l.b16 %v550
  %v3769 = vunpack.c.h.b16 %v550
  %v3770 = vunpack.c.l.b16 %v551
  %v3771 = vunpack.c.h.b16 %v551
  %v3772 = vunpack.c.l.b16 %v552
  %v3773 = vunpack.c.h.b16 %v552
  %v3774 = vunpack.c.l.b16 %v553
  %v3775 = vunpack.c.h.b16 %v553
  %v3776 = vunpack.c.l.b16 %v554
  %v3777 = vunpack.c.h.b16 %v554
  %v3778 = vunpack.c.l.b16 %v555
  %v3779 = vunpack.c.h.b16 %v555
  %v3780 = vunpack.c.l.b16 %v556
  %v3781 = vunpack.c.h.b16 %v556
  %v3782 = vunpack.c.l.b16 %v557
  %v3783 = vunpack.c.h.b16 %v557
  %v3784 = vunpack.c.l.b16 %v558
  %v3785 = vunpack.c.h.b16 %v558
  %v3786 = vunpack.c.l.b16 %v559
  %v3787 = vunpack.c.h.b16 %v559
  %v3788 = vunpack.c.l.b16 %v560
  %v3789 = vunpack.c.h.b16 %v560
  %v3790 = vunpack.c.l.b16 %v561
  %v3791 = vunpack.c.h.b16 %v561
  %v3792 = vunpack.c.l.b16 %v562
  %v3793 = vunpack.c.h.b16 %v562
  %v3794 = vunpack.c.l.b16 %v563
  %v3795 = vunpack.c.h.b16 %v563
  %v3796 = vunpack.c.l.b16 %v564
  %v3797 = vunpack.c.h.b16 %v564
  %v3798 = vunpack.c.l.b16 %v565
  %v3799 = vunpack.c.h.b16 %v565
  %v3800 = vunpack.c.l.b16 %v566
  %v3801 = vunpack.c.h.b16 %v566
  %v3802 = vunpack.c.l.b16 %v567
  %v3803 = vunpack.c.h.b16 %v567
  %v3804 = vunpack.c.l.b16 %v568
  %v3805 = vunpack.c.h.b16 %v568
  %v3806 = vunpack.c.l.b16 %v569
  %v3807 = vunpack.c.h.b16 %v569
  %v3808 = vunpack.c.l.b16 %v570
  %v3809 = vunpack.c.h.b16 %v570
  %v3810 = vunpack.c.l.b16 %v571
  %v3811 = vunpack.c.h.b16 %v571
  %v3812 = vunpack.c.l.b16 %v572
  %v3813 = vunpack.c.h.b16 %v572
  %v3814 = vunpack.c.l.b16 %v573
  %v3815 = vunpack.c.h.b16 %v573
  %v3816 = vunpack.c.l.b16 %v574
  %v3817 = vunpack.c.h.b16 %v574
  %v3818 = vunpack.c.l.b16 %v575
  %v3819 = vunpack.c.h.b16 %v575
  %v3820 = vunpack.c.l.b16 %v576
  %v3821 = vunpack.c.h.b16 %v576
  %v3822 = vunpack.c.l.b16 %v577
  %v3823 = vunpack.c.h.b16 %v577
  %v3824 = vunpack.c.l.b16 %v578
  %v3825 = vunpack.c.h.b16 %v578
  %v3826 = vunpack.c.l.b16 %v579
  %v3827 = vunpack.c.h.b16 %v579
  %v3828 = vunpack.c.l.b16 %v580
  %v3829 = vunpack.c.h.b16 %v580
  %v3830 = vunpack.c.l.b16 %v581
  %v3831 = vunpack.c.h.b16 %v581
  %v3832 = vunpack.c.l.b16 %v582
  %v3833 = vunpack.c.h.b16 %v582
  %v3834 = vunpack.c.l.b16 %v583
  %v3835 = vunpack.c.h.b16 %v583
  %v3836 = vunpack.c.l.b16 %v584
  %v3837 = vunpack.c.h.b16 %v584
  %v3838 = vunpack.c.l.b16 %v585
  %v3839 = vunpack.c.h.b16 %v585
  %v3840 = vunpack.c.l.b16 %v586
  %v3841 = vunpack.c.h.b16 %v586
  %v3842 = vunpack.c.l.b16 %v587
  %v3843 = vunpack.c.h.b16 %v587
  %v3844 = vunpack.c.l.b16 %v588
  %v3845 = vunpack.c.h.b16 %v588
  %v3846 = vunpack.c.l.b16 %v589
  %v3847 = vunpack.c.h.b16 %v589
  %v3848 = vunpack.c.l.b16 %v590
  %v3849 = vunpack.c.h.b16 %v590
  %v3850 = vunpack.c.l.b16 %v591
  %v3851 = vunpack.c.h.b16 %v591
  %v3852 = vunpack.c.l.b16 %v592
  %v3853 = vunpack.c.h.b16 %v592
  %v3854 = vunpack.c.l.b16 %v593
  %v3855 = vunpack.c.h.b16 %v593
  %v3856 = vunpack.c.l.b16 %v594
  %v3857 = vunpack.c.h.b16 %v594
  %v3858 = vunpack.c.l.b16 %v595
  %v3859 = vunpack.c.h.b16 %v595
  %v3860 = vunpack.c.l.b16 %v596
  %v3861 = vunpack.c.h.b16 %v596
  %v3862 = vunpack.c.l.b16 %v597
  %v3863 = vunpack.c.h.b16 %v597
  %v3864 = vunpack.c.l.b16 %v598
  %v3865 = vunpack.c.h.b16 %v598
  %v3866 = vunpack.c.l.b16 %v599
  %v3867 = vunpack.c.h.b16 %v599
  %v3868 = vunpack.c.l.b16 %v600
  %v3869 = vunpack.c.h.b16 %v600
  %v3870 = vunpack.c.l.b16 %v601
  %v3871 = vunpack.c.h.b16 %v601
  %v3872 = vunpack.c.l.b16 %v602
  %v3873 = vunpack.c.h.b16 %v602
  %v3874 = vunpack.c.l.b16 %v603
  %v3875 = vunpack.c.h.b16 %v603
  %v3876 = vunpack.c.l.b16 %v604
  %v3877 = vunpack.c.h.b16 %v604
  %v3878 = vunpack.c.l.b16 %v605
  %v3879 = vunpack.c.h.b16 %v605
  %v3880 = vunpack.c.l.b16 %v606
  %v3881 = vunpack.c.h.b16 %v606
  %v3882 = vunpack.c.l.b16 %v607
  %v3883 = vunpack.c.h.b16 %v607
  %v3884 = vunpack.c.l.b16 %v608
  %v3885 = vunpack.c.h.b16 %v608
  %v3886 = vunpack.c.l.b16 %v609
  %v3887 = vunpack.c.h.b16 %v609
  %v3888 = vunpack.c.l.b16 %v610
  %v3889 = vunpack.c.h.b16 %v610
  %v3890 = vunpack.c.l.b16 %v611
  %v3891 = vunpack.c.h.b16 %v611
  %v3892 = vunpack.c.l.b16 %v612
  %v3893 = vunpack.c.h.b16 %v612
  %v3894 = vunpack.c.l.b16 %v613
  %v3895 = vunpack.c.h.b16 %v613
  %v3896 = vunpack.c.l.b16 %v614
  %v3897 = vunpack.c.h.b16 %v614
  %v3898 = vunpack.c.l.b16 %v615
  %v3899 = vunpack.c.h.b16 %v615
  %v3900 = vunpack.c.l.b16 %v616
  %v3901 = vunpack.c.h.b16 %v616
  %v3902 = vunpack.c.l.b16 %v617
  %v3903 = vunpack.c.h.b16 %v617
  %v3904 = vunpack.c.l.b16 %v618
  %v3905 = vunpack.c.h.b16 %v618
  %v3906 = vunpack.c.l.b16 %v619
  %v3907 = vunpack.c.h.b16 %v619
  %v3908 = vunpack.c.l.b16 %v620
  %v3909 = vunpack.c.h.b16 %v620
  %v3910 = vunpack.c.l.b16 %v621
  %v3911 = vunpack.c.h.b16 %v621
  %v3912 = vunpack.c.l.b16 %v622
  %v3913 = vunpack.c.h.b16 %v622
  %v3914 = vunpack.c.l.b16 %v623
  %v3915 = vunpack.c.h.b16 %v623
  %v3916 = vunpack.c.l.b16 %v624
  %v3917 = vunpack.c.h.b16 %v624
  %v3918 = vunpack.c.l.b16 %v625
  %v3919 = vunpack.c.h.b16 %v625
  %v3920 = vunpack.c.l.b16 %v626
  %v3921 = vunpack.c.h.b16 %v626
  %v3922 = vunpack.c.l.b16 %v627
  %v3923 = vunpack.c.h.b16 %v627
  %v3924 = vunpack.c.l.b16 %v628
  %v3925 = vunpack.c.h.b16 %v628
  %v3926 = vunpack.c.l.b16 %v629
  %v3927 = vunpack.c.h.b16 %v629
  %v3928 = vunpack.c.l.b16 %v630
  %v3929 = vunpack.c.h.b16 %v630
  %v3930 = vunpack.c.l.b16 %v631
  %v3931 = vunpack.c.h.b16 %v631
  %v3932 = vunpack.c.l.b16 %v632
  %v3933 = vunpack.c.h.b16 %v632
  %v3934 = vunpack.c.l.b16 %v633
  %v3935 = vunpack.c.h.b16 %v633
  %v3936 = vunpack.c.l.b16 %v634
  %v3937 = vunpack.c.h.b16 %v634
  %v3938 = vunpack.c.l.b16 %v635
  %v3939 = vunpack.c.h.b16 %v635
  %v3940 = vunpack.c.l.b16 %v636
  %v3941 = vunpack.c.h.b16 %v636
  %v3942 = vunpack.c.l.b16 %v637
  %v3943 = vunpack.c.h.b16 %v637
  %v3944 = vunpack.c.l.b16 %v638
  %v3945 = vunpack.c.h.b16 %v638
  %v3946 = vunpack.c.l.b16 %v639
  %v3947 = vunpack.c.h.b16 %v639
  %v3948 = vunpack.c.l.b16 %v640
  %v3949 = vunpack.c.h.b16 %v640
  %v3950 = vunpack.c.l.b16 %v641
  %v3951 = vunpack.c.h.b16 %v641
  %v3952 = vunpack.c.l.b16 %v642
  %v3953 = vunpack.c.h.b16 %v642
  %v3954 = vunpack.c.l.b16 %v643
  %v3955 = vunpack.c.h.b16 %v643
  %v3956 = vunpack.c.l.b16 %v644
  %v3957 = vunpack.c.h.b16 %v644
  %v3958 = vunpack.c.l.b16 %v645
  %v3959 = vunpack.c.h.b16 %v645
  %v3960 = vunpack.c.l.b16 %v646
  %v3961 = vunpack.c.h.b16 %v646
  %v3962 = vunpack.c.l.b16 %v647
  %v3963 = vunpack.c.h.b16 %v647
  %v3964 = vunpack.c.l.b16 %v648
  %v3965 = vunpack.c.h.b16 %v648
  %v3966 = vunpack.c.l.b16 %v649
  %v3967 = vunpack.c.h.b16 %v649
  %v3968 = vunpack.c.l.b16 %v650
  %v3969 = vunpack.c.h.b16 %v650
  %v3970 = vunpack.c.l.b16 %v651
  %v3971 = vunpack.c.h.b16 %v651
  %v3972 = vunpack.c.l.b16 %v652
  %v3973 = vunpack.c.h.b16 %v652
  %v3974 = vunpack.c.l.b16 %v653
  %v3975 = vunpack.c.h.b16 %v653
  %v3976 = vunpack.c.l.b16 %v654
  %v3977 = vunpack.c.h.b16 %v654
  %v3978 = vunpack.c.l.b16 %v655
  %v3979 = vunpack.c.h.b16 %v655
  %v3980 = vunpack.c.l.b16 %v656
  %v3981 = vunpack.c.h.b16 %v656
  %v3982 = vunpack.c.l.b16 %v657
  %v3983 = vunpack.c.h.b16 %v657
  %v3984 = vunpack.c.l.b16 %v658
  %v3985 = vunpack.c.h.b16 %v658
  %v3986 = vunpack.c.l.b16 %v659
  %v3987 = vunpack.c.h.b16 %v659
  %v3988 = vunpack.c.l.b16 %v660
  %v3989 = vunpack.c.h.b16 %v660
  %v3990 = vunpack.c.l.b16 %v661
  %v3991 = vunpack.c.h.b16 %v661
  %v3992 = vunpack.c.l.b16 %v662
  %v3993 = vunpack.c.h.b16 %v662
  %v3994 = vunpack.c.l.b16 %v663
  %v3995 = vunpack.c.h.b16 %v663
  %v3996 = vunpack.c.l.b16 %v664
  %v3997 = vunpack.c.h.b16 %v664
  %v3998 = vunpack.c.l.b16 %v665
  %v3999 = vunpack.c.h.b16 %v665
  %v4000 = vunpack.c.l.b16 %v666
  %v4001 = vunpack.c.h.b16 %v666
  %v4002 = vunpack.c.l.b16 %v667
  %v4003 = vunpack.c.h.b16 %v667
  %v4004 = vunpack.c.l.b16 %v668
  %v4005 = vunpack.c.h.b16 %v668
  %v4006 = vunpack.c.l.b16 %v669
  %v4007 = vunpack.c.h.b16 %v669
  %v4008 = vunpack.c.l.b16 %v670
  %v4009 = vunpack.c.h.b16 %v670
  %v4010 = vunpack.c.l.b16 %v671
  %v4011 = vunpack.c.h.b16 %v671
  %v4012 = vunpack.c.l.b16 %v672
  %v4013 = vunpack.c.h.b16 %v672
  %v4014 = vunpack.c.l.b16 %v673
  %v4015 = vunpack.c.h.b16 %v673
  %v4016 = vunpack.c.l.b16 %v674
  %v4017 = vunpack.c.h.b16 %v674
  %v4018 = vunpack.c.l.b16 %v675
  %v4019 = vunpack.c.h.b16 %v675
  %v4020 = vunpack.c.l.b16 %v676
  %v4021 = vunpack.c.h.b16 %v676
  %v4022 = vunpack.c.l.b16 %v677
  %v4023 = vunpack.c.h.b16 %v677
  %v4024 = vunpack.c.l.b16 %v678
  %v4025 = vunpack.c.h.b16 %v678
  %v4026 = vunpack.c.l.b16 %v679
  %v4027 = vunpack.c.h.b16 %v679
  %v4028 = vunpack.c.l.b16 %v680
  %v4029 = vunpack.c.h.b16 %v680
  %v4030 = vunpack.c.l.b16 %v681
  %v4031 = vunpack.c.h.b16 %v681
  %v4032 = vunpack.c.l.b16 %v682
  %v4033 = vunpack.c.h.b16 %v682
  %v4034 = vunpack.c.l.b16 %v683
  %v4035 = vunpack.c.h.b16 %v683
  %v4036 = vunpack.c.l.b16 %v684
  %v4037 = vunpack.c.h.b16 %v684
  %v4038 = vunpack.c.l.b16 %v685
  %v4039 = vunpack.c.h.b16 %v685
  %v4040 = vunpack.c.l.b16 %v686
  %v4041 = vunpack.c.h.b16 %v686
  %v4042 = vunpack.c.l.b16 %v687
  %v4043 = vunpack.c.h.b16 %v687
  %v4044 = vunpack.c.l.b16 %v688
  %v4045 = vunpack.c.h.b16 %v688
  %v4046 = vunpack.c.l.b16 %v689
  %v4047 = vunpack.c.h.b16 %v689
  %v4048 = vunpack.c.l.b16 %v690
  %v4049 = vunpack.c.h.b16 %v690
  %v4050 = vunpack.c.l.b16 %v691
  %v4051 = vunpack.c.h.b16 %v691
  %v4052 = vunpack.c.l.b16 %v692
  %v4053 = vunpack.c.h.b16 %v692
  %v4054 = vunpack.c.l.b16 %v693
  %v4055 = vunpack.c.h.b16 %v693
  %v4056 = vunpack.c.l.b16 %v694
  %v4057 = vunpack.c.h.b16 %v694
  %v4058 = vunpack.c.l.b16 %v695
  %v4059 = vunpack.c.h.b16 %v695
  %v4060 = vunpack.c.l.b16 %v696
  %v4061 = vunpack.c.h.b16 %v696
  %v4062 = vunpack.c.l.b16 %v697
  %v4063 = vunpack.c.h.b16 %v697
  %v4064 = vunpack.c.l.b16 %v698
  %v4065 = vunpack.c.h.b16 %v698
  %v4066 = vunpack.c.l.b16 %v699
  %v4067 = vunpack.c.h.b16 %v699
  %v4068 = vunpack.c.l.b16 %v700
  %v4069 = vunpack.c.h.b16 %v700
  %v4070 = vunpack.c.l.b16 %v701
  %v4071 = vunpack.c.h.b16 %v701
  %v4072 = vunpack.c.l.b16 %v702
  %v4073 = vunpack.c.h.b16 %v702
  %v4074 = vunpack.c.l.b16 %v703
  %v4075 = vunpack.c.h.b16 %v703
  %v4076 = vunpack.c.l.b16 %v704
  %v4077 = vunpack.c.h.b16 %v704
  %v4078 = vunpack.c.l.b16 %v705
  %v4079 = vunpack.c.h.b16 %v705
  %v4080 = vunpack.c.l.b16 %v706
  %v4081 = vunpack.c.h.b16 %v706
  %v4082 = vunpack.c.l.b16 %v707
  %v4083 = vunpack.c.h.b16 %v707
  %v4084 = vunpack.c.l.b16 %v708
  %v4085 = vunpack.c.h.b16 %v708
  %v4086 = vunpack.c.l.b16 %v709
  %v4087 = vunpack.c.h.b16 %v709
  %v4088 = vunpack.c.l.b16 %v710
  %v4089 = vunpack.c.h.b16 %v710
  %v4090 = vunpack.c.l.b16 %v711
  %v4091 = vunpack.c.h.b16 %v711
  %v4092 = vunpack.c.l.b16 %v712
  %v4093 = vunpack.c.h.b16 %v712
  %v4094 = vunpack.c.l.b16 %v713
  %v4095 = vunpack.c.h.b16 %v713
  %v4096 = vunpack.c.l.b16 %v714
  %v4097 = vunpack.c.h.b16 %v714
  %v4098 = vunpack.c.l.b16 %v715
  %v4099 = vunpack.c.h.b16 %v715
  %v4100 = vunpack.c.l.b16 %v716
  %v4101 = vunpack.c.h.b16 %v716
  %v4102 = vunpack.c.l.b16 %v717
  %v4103 = vunpack.c.h.b16 %v717
  %v4104 = vunpack.c.l.b16 %v718
  %v4105 = vunpack.c.h.b16 %v718
  %v4106 = vunpack.c.l.b16 %v719
  %v4107 = vunpack.c.h.b16 %v719
  %v4108 = vunpack.c.l.b16 %v720
  %v4109 = vunpack.c.h.b16 %v720
  %v4110 = vunpack.c.l.b16 %v721
  %v4111 = vunpack.c.h.b16 %v721
  %v4112 = vunpack.c.l.b16 %v722
  %v4113 = vunpack.c.h.b16 %v722
  %v4114 = vunpack.c.l.b16 %v723
  %v4115 = vunpack.c.h.b16 %v723
  %v4116 = vunpack.c.l.b16 %v724
  %v4117 = vunpack.c.h.b16 %v724
  %v4118 = vunpack.c.l.b16 %v725
  %v4119 = vunpack.c.h.b16 %v725
  %v4120 = vunpack.c.l.b16 %v726
  %v4121 = vunpack.c.h.b16 %v726
  %v4122 = vunpack.c.l.b16 %v727
  %v4123 = vunpack.c.h.b16 %v727
  %v4124 = vunpack.c.l.b16 %v728
  %v4125 = vunpack.c.h.b16 %v728
  %v4126 = vunpack.c.l.b16 %v729
  %v4127 = vunpack.c.h.b16 %v729
  %v4128 = vunpack.c.l.b16 %v730
  %v4129 = vunpack.c.h.b16 %v730
  %v4130 = vunpack.c.l.b16 %v731
  %v4131 = vunpack.c.h.b16 %v731
  %v4132 = vunpack.c.l.b16 %v732
  %v4133 = vunpack.c.h.b16 %v732
  %v4134 = vunpack.c.l.b16 %v733
  %v4135 = vunpack.c.h.b16 %v733
  %v4136 = vunpack.c.l.b16 %v734
  %v4137 = vunpack.c.h.b16 %v734
  %v4138 = vunpack.c.l.b16 %v735
  %v4139 = vunpack.c.h.b16 %v735
  %v4140 = vunpack.c.l.b16 %v736
  %v4141 = vunpack.c.h.b16 %v736
  %v4142 = vunpack.c.l.b16 %v737
  %v4143 = vunpack.c.h.b16 %v737
  %v4144 = vunpack.c.l.b16 %v738
  %v4145 = vunpack.c.h.b16 %v738
  %v4146 = vunpack.c.l.b16 %v739
  %v4147 = vunpack.c.h.b16 %v739
  %v4148 = vunpack.c.l.b16 %v740
  %v4149 = vunpack.c.h.b16 %v740
  %v4150 = vunpack.c.l.b16 %v741
  %v4151 = vunpack.c.h.b16 %v741
  %v4152 = vunpack.c.l.b16 %v742
  %v4153 = vunpack.c.h.b16 %v742
  %v4154 = vunpack.c.l.b16 %v743
  %v4155 = vunpack.c.h.b16 %v743
  %v4156 = vunpack.c.l.b16 %v744
  %v4157 = vunpack.c.h.b16 %v744
  %v4158 = vunpack.c.l.b16 %v745
  %v4159 = vunpack.c.h.b16 %v745
  %v4160 = vunpack.c.l.b16 %v746
  %v4161 = vunpack.c.h.b16 %v746
  %v4162 = vunpack.c.l.b16 %v747
  %v4163 = vunpack.c.h.b16 %v747
  %v4164 = vunpack.c.l.b16 %v748
  %v4165 = vunpack.c.h.b16 %v748
  %v4166 = vunpack.c.l.b16 %v749
  %v4167 = vunpack.c.h.b16 %v749
  %v4168 = vunpack.c.l.b16 %v750
  %v4169 = vunpack.c.h.b16 %v750
  %v4170 = vunpack.c.l.b16 %v751
  %v4171 = vunpack.c.h.b16 %v751
  %v4172 = vunpack.c.l.b16 %v752
  %v4173 = vunpack.c.h.b16 %v752
  %v4174 = vunpack.c.l.b16 %v753
  %v4175 = vunpack.c.h.b16 %v753
  %v4176 = vunpack.c.l.b16 %v754
  %v4177 = vunpack.c.h.b16 %v754
  %v4178 = vunpack.c.l.b16 %v755
  %v4179 = vunpack.c.h.b16 %v755
  %v4180 = vunpack.c.l.b16 %v756
  %v4181 = vunpack.c.h.b16 %v756
  %v4182 = vunpack.c.l.b16 %v757
  %v4183 = vunpack.c.h.b16 %v757
  %v4184 = vunpack.c.l.b16 %v758
  %v4185 = vunpack.c.h.b16 %v758
  %v4186 = vunpack.c.l.b16 %v759
  %v4187 = vunpack.c.h.b16 %v759
  %v4188 = vunpack.c.l.b16 %v760
  %v4189 = vunpack.c.h.b16 %v760
  %v4190 = vunpack.c.l.b16 %v761
  %v4191 = vunpack.c.h.b16 %v761
  %v4192 = vunpack.c.l.b16 %v762
  %v4193 = vunpack.c.h.b16 %v762
  %v4194 = vunpack.c.l.b16 %v763
  %v4195 = vunpack.c.h.b16 %v763
  %v4196 = vunpack.c.l.b16 %v764
  %v4197 = vunpack.c.h.b16 %v764
  %v4198 = vunpack.c.l.b16 %v765
  %v4199 = vunpack.c.h.b16 %v765
  %v4200 = vunpack.c.l.b16 %v766
  %v4201 = vunpack.c.h.b16 %v766
  %v4202 = vunpack.c.l.b16 %v767
  %v4203 = vunpack.c.h.b16 %v767
  %v4204 = vunpack.c.l.b16 %v768
  %v4205 = vunpack.c.h.b16 %v768
  %v4206 = vunpack.c.l.b16 %v769
  %v4207 = vunpack.c.h.b16 %v769
  %v4208 = vunpack.c.l.b16 %v770
  %v4209 = vunpack.c.h.b16 %v770
  %v4210 = vunpack.c.l.b16 %v771
  %v4211 = vunpack.c.h.b16 %v771
  %v4212 = vunpack.c.l.b16 %v772
  %v4213 = vunpack.c.h.b16 %v772
  %v4214 = vunpack.c.l.b16 %v773
  %v4215 = vunpack.c.h.b16 %v773
  %v4216 = vunpack.c.l.b16 %v774
  %v4217 = vunpack.c.h.b16 %v774
  %v4218 = vunpack.c.l.b16 %v775
  %v4219 = vunpack.c.h.b16 %v775
  %v4220 = vunpack.c.l.b16 %v776
  %v4221 = vunpack.c.h.b16 %v776
  %v4222 = vunpack.c.l.b16 %v777
  %v4223 = vunpack.c.h.b16 %v777
  %v4224 = vunpack.c.l.b16 %v778
  %v4225 = vunpack.c.h.b16 %v778
  %v4226 = vunpack.c.l.b16 %v779
  %v4227 = vunpack.c.h.b16 %v779
  %v4228 = vunpack.c.l.b16 %v780
  %v4229 = vunpack.c.h.b16 %v780
  %v4230 = vunpack.c.l.b16 %v781
  %v4231 = vunpack.c.h.b16 %v781
  %v4232 = vunpack.c.l.b16 %v782
  %v4233 = vunpack.c.h.b16 %v782
  %v4234 = vunpack.c.l.b16 %v783
  %v4235 = vunpack.c.h.b16 %v783
  %v4236 = vunpack.c.l.b16 %v784
  %v4237 = vunpack.c.h.b16 %v784
  %v4238 = vunpack.c.l.b16 %v785
  %v4239 = vunpack.c.h.b16 %v785
  %v4240 = vunpack.c.l.b16 %v786
  %v4241 = vunpack.c.h.b16 %v786
  %v4242 = vunpack.c.l.b16 %v787
  %v4243 = vunpack.c.h.b16 %v787
  %v4244 = vunpack.c.l.b16 %v788
  %v4245 = vunpack.c.h.b16 %v788
  %v4246 = vunpack.c.l.b16 %v789
  %v4247 = vunpack.c.h.b16 %v789
  %v4248 = vunpack.c.l.b16 %v790
  %v4249 = vunpack.c.h.b16 %v790
  %v4250 = vunpack.c.l.b16 %v791
  %v4251 = vunpack.c.h.b16 %v791
  %v4252 = vunpack.c.l.b16 %v792
  %v4253 = vunpack.c.h.b16 %v792
  %v4254 = vunpack.c.l.b16 %v793
  %v4255 = vunpack.c.h.b16 %v793
  %v4256 = vunpack.c.l.b16 %v794
  %v4257 = vunpack.c.h.b16 %v794
  %v4258 = vunpack.c.l.b16 %v795
  %v4259 = vunpack.c.h.b16 %v795
  %v4260 = vunpack.c.l.b16 %v796
  %v4261 = vunpack.c.h.b16 %v796
  %v4262 = vunpack.c.l.b16 %v797
  %v4263 = vunpack.c.h.b16 %v797
  %v4264 = vunpack.c.l.b16 %v798
  %v4265 = vunpack.c.h.b16 %v798
  %v4266 = vunpack.c.l.b16 %v799
  %v4267 = vunpack.c.h.b16 %v799
  %v4268 = vunpack.c.l.b16 %v800
  %v4269 = vunpack.c.h.b16 %v800
  %v4270 = vunpack.c.l.b16 %v801
  %v4271 = vunpack.c.h.b16 %v801
  %v4272 = vunpack.c.l.b16 %v802
  %v4273 = vunpack.c.h.b16 %v802
  %v4274 = vunpack.c.l.b16 %v803
  %v4275 = vunpack.c.h.b16 %v803
  %v4276 = vunpack.c.l.b16 %v804
  %v4277 = vunpack.c.h.b16 %v804
  %v4278 = vunpack.c.l.b16 %v805
  %v4279 = vunpack.c.h.b16 %v805
  %v4280 = vunpack.c.l.b16 %v806
  %v4281 = vunpack.c.h.b16 %v806
  %v4282 = vunpack.c.l.b16 %v807
  %v4283 = vunpack.c.h.b16 %v807
  %v4284 = vunpack.c.l.b16 %v808
  %v4285 = vunpack.c.h.b16 %v808
  %v4286 = vunpack.c.l.b16 %v809
  %v4287 = vunpack.c.h.b16 %v809
  %v4288 = vunpack.c.l.b16 %v810
  %v4289 = vunpack.c.h.b16 %v810
  %v4290 = vunpack.c.l.b16 %v811
  %v4291 = vunpack.c.h.b16 %v811
  %v4292 = vunpack.c.l.b16 %v812
  %v4293 = vunpack.c.h.b16 %v812
  %v4294 = vunpack.c.l.b16 %v813
  %v4295 = vunpack.c.h.b16 %v813
  %v4296 = vunpack.c.l.b16 %v814
  %v4297 = vunpack.c.h.b16 %v814
  %v4298 = vunpack.c.l.b16 %v815
  %v4299 = vunpack.c.h.b16 %v815
  %v4300 = vunpack.c.l.b16 %v816
  %v4301 = vunpack.c.h.b16 %v816
  %v4302 = vunpack.c.l.b16 %v817
  %v4303 = vunpack.c.h.b16 %v817
  %v4304 = vunpack.c.l.b16 %v818
  %v4305 = vunpack.c.h.b16 %v818
  %v4306 = vunpack.c.l.b16 %v819
  %v4307 = vunpack.c.h.b16 %v819
  %v4308 = vunpack.c.l.b16 %v820
  %v4309 = vunpack.c.h.b16 %v820
  %v4310 = vunpack.c.l.b16 %v821
  %v4311 = vunpack.c.h.b16 %v821
  %v4312 = vunpack.c.l.b16 %v822
  %v4313 = vunpack.c.h.b16 %v822
  %v4314 = vunpack.c.l.b16 %v823
  %v4315 = vunpack.c.h.b16 %v823
  %v4316 = vunpack.c.l.b16 %v824
  %v4317 = vunpack.c.h.b16 %v824
  %v4318 = vunpack.c.l.b16 %v825
  %v4319 = vunpack.c.h.b16 %v825
  %v4320 = vunpack.c.l.b16 %v826
  %v4321 = vunpack.c.h.b16 %v826
  %v4322 = vunpack.c.l.b16 %v827
  %v4323 = vunpack.c.h.b16 %v827
  %v4324 = vunpack.c.l.b16 %v828
  %v4325 = vunpack.c.h.b16 %v828
  %v4326 = vunpack.c.l.b16 %v829
  %v4327 = vunpack.c.h.b16 %v829
  %v4328 = vunpack.c.l.b16 %v830
  %v4329 = vunpack.c.h.b16 %v830
  %v4330 = vunpack.c.l.b16 %v831
  %v4331 = vunpack.c.h.b16 %v831
  %v4332 = vunpack.c.l.b16 %v832
  %v4333 = vunpack.c.h.b16 %v832
  %v4334 = vunpack.c.l.b16 %v833
  %v4335 = vunpack.c.h.b16 %v833
  %v4336 = vunpack.c.l.b16 %v834
  %v4337 = vunpack.c.h.b16 %v834
  %v4338 = vunpack.c.l.b16 %v835
  %v4339 = vunpack.c.h.b16 %v835
  %v4340 = vunpack.c.l.b16 %v836
  %v4341 = vunpack.c.h.b16 %v836
  %v4342 = vunpack.c.l.b16 %v837
  %v4343 = vunpack.c.h.b16 %v837
  %v4344 = vunpack.c.l.b16 %v838
  %v4345 = vunpack.c.h.b16 %v838
  %v4346 = vunpack.c.l.b16 %v839
  %v4347 = vunpack.c.h.b16 %v839
  %v4348 = vunpack.c.l.b16 %v840
  %v4349 = vunpack.c.h.b16 %v840
  %v4350 = vunpack.c.l.b16 %v841
  %v4351 = vunpack.c.h.b16 %v841
  %v4352 = vunpack.c.l.b16 %v842
  %v4353 = vunpack.c.h.b16 %v842
  %v4354 = vunpack.c.l.b16 %v843
  %v4355 = vunpack.c.h.b16 %v843
  %v4356 = vunpack.c.l.b16 %v844
  %v4357 = vunpack.c.h.b16 %v844
  %v4358 = vunpack.c.l.b16 %v845
  %v4359 = vunpack.c.h.b16 %v845
  %v4360 = vunpack.c.l.b16 %v846
  %v4361 = vunpack.c.h.b16 %v846
  %v4362 = vunpack.c.l.b16 %v847
  %v4363 = vunpack.c.h.b16 %v847
  %v4364 = vunpack.c.l.b16 %v848
  %v4365 = vunpack.c.h.b16 %v848
  %v4366 = vunpack.c.l.b16 %v849
  %v4367 = vunpack.c.h.b16 %v849
  %v4368 = vunpack.c.l.b16 %v850
  %v4369 = vunpack.c.h.b16 %v850
  %v4370 = vunpack.c.l.b16 %v851
  %v4371 = vunpack.c.h.b16 %v851
  %v4372 = vunpack.c.l.b16 %v852
  %v4373 = vunpack.c.h.b16 %v852
  %v4374 = vunpack.c.l.b16 %v853
  %v4375 = vunpack.c.h.b16 %v853
  %v4376 = vunpack.c.l.b16 %v854
  %v4377 = vunpack.c.h.b16 %v854
  %v4378 = vunpack.c.l.b16 %v855
  %v4379 = vunpack.c.h.b16 %v855
  %v4380 = vunpack.c.l.b16 %v856
  %v4381 = vunpack.c.h.b16 %v856
  %v4382 = vunpack.c.l.b16 %v857
  %v4383 = vunpack.c.h.b16 %v857
  %v4384 = vunpack.c.l.b16 %v858
  %v4385 = vunpack.c.h.b16 %v858
  %v4386 = vunpack.c.l.b16 %v859
  %v4387 = vunpack.c.h.b16 %v859
  %v4388 = vunpack.c.l.b16 %v860
  %v4389 = vunpack.c.h.b16 %v860
  %v4390 = vunpack.c.l.b16 %v861
  %v4391 = vunpack.c.h.b16 %v861
  %v4392 = vunpack.c.l.b16 %v862
  %v4393 = vunpack.c.h.b16 %v862
  %v4394 = vunpack.c.l.b16 %v863
  %v4395 = vunpack.c.h.b16 %v863
  %v4396 = vunpack.c.l.b16 %v864
  %v4397 = vunpack.c.h.b16 %v864
  %v4398 = vunpack.c.l.b16 %v865
  %v4399 = vunpack.c.h.b16 %v865
  %v4400 = vunpack.c.l.b16 %v866
  %v4401 = vunpack.c.h.b16 %v866
  %v4402 = vunpack.c.l.b16 %v867
  %v4403 = vunpack.c.h.b16 %v867
  %v4404 = vunpack.c.l.b16 %v868
  %v4405 = vunpack.c.h.b16 %v868
  %v4406 = vunpack.c.l.b16 %v869
  %v4407 = vunpack.c.h.b16 %v869
  %v4408 = vunpack.c.l.b16 %v870
  %v4409 = vunpack.c.h.b16 %v870
  %v4410 = vunpack.c.l.b16 %v871
  %v4411 = vunpack.c.h.b16 %v871
  %v4412 = vunpack.c.l.b16 %v872
  %v4413 = vunpack.c.h.b16 %v872
  %v4414 = vunpack.c.l.b16 %v873
  %v4415 = vunpack.c.h.b16 %v873
  %v4416 = vunpack.c.l.b16 %v874
  %v4417 = vunpack.c.h.b16 %v874
  %v4418 = vunpack.c.l.b16 %v875
  %v4419 = vunpack.c.h.b16 %v875
  %v4420 = vunpack.c.l.b16 %v876
  %v4421 = vunpack.c.h.b16 %v876
  %v4422 = vunpack.c.l.b16 %v877
  %v4423 = vunpack.c.h.b16 %v877
  %v4424 = vunpack.c.l.b16 %v878
  %v4425 = vunpack.c.h.b16 %v878
  %v4426 = vunpack.c.l.b16 %v879
  %v4427 = vunpack.c.h.b16 %v879
  %v4428 = vunpack.c.l.b16 %v880
  %v4429 = vunpack.c.h.b16 %v880
  %v4430 = vunpack.c.l.b16 %v881
  %v4431 = vunpack.c.h.b16 %v881
  %v4432 = vunpack.c.l.b16 %v882
  %v4433 = vunpack.c.h.b16 %v882
  %v4434 = vunpack.c.l.b16 %v883
  %v4435 = vunpack.c.h.b16 %v883
  %v4436 = vunpack.c.l.b16 %v884
  %v4437 = vunpack.c.h.b16 %v884
  %v4438 = vunpack.c.l.b16 %v885
  %v4439 = vunpack.c.h.b16 %v885
  %v4440 = vunpack.c.l.b16 %v886
  %v4441 = vunpack.c.h.b16 %v886
  %v4442 = vunpack.c.l.b16 %v887
  %v4443 = vunpack.c.h.b16 %v887
  %v4444 = vunpack.c.l.b16 %v888
  %v4445 = vunpack.c.h.b16 %v888
  %v4446 = vunpack.c.l.b16 %v889
  %v4447 = vunpack.c.h.b16 %v889
  %v4448 = vunpack.c.l.b16 %v890
  %v4449 = vunpack.c.h.b16 %v890
  %v4450 = vunpack.c.l.b16 %v891
  %v4451 = vunpack.c.h.b16 %v891
  %v4452 = vunpack.c.l.b16 %v892
  %v4453 = vunpack.c.h.b16 %v892
  %v4454 = vunpack.c.l.b16 %v893
  %v4455 = vunpack.c.h.b16 %v893
  %v4456 = vunpack.c.l.b16 %v894
  %v4457 = vunpack.c.h.b16 %v894
  %v4458 = vunpack.c.l.b16 %v895
  %v4459 = vunpack.c.h.b16 %v895
  %v4460 = vunpack.c.l.b16 %v896
  %v4461 = vunpack.c.h.b16 %v896
  %v4462 = vunpack.c.l.b16 %v897
  %v4463 = vunpack.c.h.b16 %v897
  %v4464 = vunpack.c.l.b16 %v898
  %v4465 = vunpack.c.h.b16 %v898
  %v4466 = vunpack.c.l.b16 %v899
  %v4467 = vunpack.c.h.b16 %v899
  %v4468 = vunpack.c.l.b16 %v900
  %v4469 = vunpack.c.h.b16 %v900
  %v4470 = vunpack.c.l.b16 %v901
  %v4471 = vunpack.c.h.b16 %v901
  %v4472 = vunpack.c.l.b16 %v902
  %v4473 = vunpack.c.h.b16 %v902
  %v4474 = vunpack.c.l.b16 %v903
  %v4475 = vunpack.c.h.b16 %v903
  %v4476 = vunpack.c.l.b16 %v904
  %v4477 = vunpack.c.h.b16 %v904
  %v4478 = vunpack.c.l.b16 %v905
  %v4479 = vunpack.c.h.b16 %v905
  %v4480 = vunpack.c.l.b16 %v906
  %v4481 = vunpack.c.h.b16 %v906
  %v4482 = vunpack.c.l.b16 %v907
  %v4483 = vunpack.c.h.b16 %v907
  %v4484 = vunpack.c.l.b16 %v908
  %v4485 = vunpack.c.h.b16 %v908
  %v4486 = vunpack.c.l.b16 %v909
  %v4487 = vunpack.c.h.b16 %v909
  %v4488 = vunpack.c.l.b16 %v910
  %v4489 = vunpack.c.h.b16 %v910
  %v4490 = vunpack.c.l.b16 %v911
  %v4491 = vunpack.c.h.b16 %v911
  %v4492 = vunpack.c.l.b16 %v912
  %v4493 = vunpack.c.h.b16 %v912
  %v4494 = vunpack.c.l.b16 %v913
  %v4495 = vunpack.c.h.b16 %v913
  %v4496 = vunpack.c.l.b16 %v914
  %v4497 = vunpack.c.h.b16 %v914
  %v4498 = vunpack.c.l.b16 %v915
  %v4499 = vunpack.c.h.b16 %v915
  %v4500 = vunpack.c.l.b16 %v916
  %v4501 = vunpack.c.h.b16 %v916
  %v4502 = vunpack.c.l.b16 %v917
  %v4503 = vunpack.c.h.b16 %v917
  %v4504 = vunpack.c.l.b16 %v918
  %v4505 = vunpack.c.h.b16 %v918
  %v4506 = vunpack.c.l.b16 %v919
  %v4507 = vunpack.c.h.b16 %v919
  %v4508 = vunpack.c.l.b16 %v920
  %v4509 = vunpack.c.h.b16 %v920
  %v4510 = vunpack.c.l.b16 %v921
  %v4511 = vunpack.c.h.b16 %v921
  %v4512 = vunpack.c.l.b16 %v922
  %v4513 = vunpack.c.h.b16 %v922
  %v4514 = vunpack.c.l.b16 %v923
  %v4515 = vunpack.c.h.b16 %v923
  %v4516 = vunpack.c.l.b16 %v924
  %v4517 = vunpack.c.h.b16 %v924
  %v4518 = vunpack.c.l.b16 %v925
  %v4519 = vunpack.c.h.b16 %v925
  %v4520 = vunpack.c.l.b16 %v926
  %v4521 = vunpack.c.h.b16 %v926
  %v4522 = vunpack.c.l.b16 %v927
  %v4523 = vunpack.c.h.b16 %v927
  %v4524 = vunpack.c.l.b16 %v928
  %v4525 = vunpack.c.h.b16 %v928
  %v4526 = vunpack.c.l.b16 %v929
  %v4527 = vunpack.c.h.b16 %v929
  %v4528 = vunpack.c.l.b16 %v930
  %v4529 = vunpack.c.h.b16 %v930
  %v4530 = vunpack.c.l.b16 %v931
  %v4531 = vunpack.c.h.b16 %v931
  %v4532 = vunpack.c.l.b16 %v932
  %v4533 = vunpack.c.h.b16 %v932
  %v4534 = vunpack.c.l.b16 %v933
  %v4535 = vunpack.c.h.b16 %v933
  %v4536 = vunpack.c.l.b16 %v934
  %v4537 = vunpack.c.h.b16 %v934
  %v4538 = vunpack.c.l.b16 %v935
  %v4539 = vunpack.c.h.b16 %v935
  %v4540 = vunpack.c.l.b16 %v936
  %v4541 = vunpack.c.h.b16 %v936
  %v4542 = vunpack.c.l.b16 %v937
  %v4543 = vunpack.c.h.b16 %v937
  %v4544 = vunpack.c.l.b16 %v938
  %v4545 = vunpack.c.h.b16 %v938
  %v4546 = vunpack.c.l.b16 %v939
  %v4547 = vunpack.c.h.b16 %v939
  %v4548 = vunpack.c.l.b16 %v940
  %v4549 = vunpack.c.h.b16 %v940
  %v4550 = vunpack.c.l.b16 %v941
  %v4551 = vunpack.c.h.b16 %v941
  %v4552 = vunpack.c.l.b16 %v942
  %v4553 = vunpack.c.h.b16 %v942
  %v4554 = vunpack.c.l.b16 %v943
  %v4555 = vunpack.c.h.b16 %v943
  %v4556 = vunpack.c.l.b16 %v944
  %v4557 = vunpack.c.h.b16 %v944
  %v4558 = vunpack.c.l.b16 %v945
  %v4559 = vunpack.c.h.b16 %v945
  %v4560 = vunpack.c.l.b16 %v946
  %v4561 = vunpack.c.h.b16 %v946
  %v4562 = vunpack.c.l.b16 %v947
  %v4563 = vunpack.c.h.b16 %v947
  %v4564 = vunpack.c.l.b16 %v948
  %v4565 = vunpack.c.h.b16 %v948
  %v4566 = vunpack.c.l.b16 %v949
  %v4567 = vunpack.c.h.b16 %v949
  %v4568 = vunpack.c.l.b16 %v950
  %v4569 = vunpack.c.h.b16 %v950
  %v4570 = vunpack.c.l.b16 %v951
  %v4571 = vunpack.c.h.b16 %v951
  %v4572 = vunpack.c.l.b16 %v952
  %v4573 = vunpack.c.h.b16 %v952
  %v4574 = vunpack.c.l.b16 %v953
  %v4575 = vunpack.c.h.b16 %v953
  %v4576 = vunpack.c.l.b16 %v954
  %v4577 = vunpack.c.h.b16 %v954
  %v4578 = vunpack.c.l.b16 %v955
  %v4579 = vunpack.c.h.b16 %v955
  %v4580 = vunpack.c.l.b16 %v956
  %v4581 = vunpack.c.h.b16 %v956
  %v4582 = vunpack.c.l.b16 %v957
  %v4583 = vunpack.c.h.b16 %v957
  %v4584 = vunpack.c.l.b16 %v958
  %v4585 = vunpack.c.h.b16 %v958
  %v4586 = vunpack.c.l.b16 %v959
  %v4587 = vunpack.c.h.b16 %v959
  %v4588 = vunpack.c.l.b16 %v960
  %v4589 = vunpack.c.h.b16 %v960
  %v4590 = vunpack.c.l.b16 %v961
  %v4591 = vunpack.c.h.b16 %v961
  %v4592 = vunpack.c.l.b16 %v962
  %v4593 = vunpack.c.h.b16 %v962
  %v4594 = vunpack.c.l.b16 %v963
  %v4595 = vunpack.c.h.b16 %v963
  %v4596 = vunpack.c.l.b16 %v964
  %v4597 = vunpack.c.h.b16 %v964
  %v4598 = vunpack.c.l.b16 %v965
  %v4599 = vunpack.c.h.b16 %v965
  %v4600 = vunpack.c.l.b16 %v966
  %v4601 = vunpack.c.h.b16 %v966
  %v4602 = vunpack.c.l.b16 %v967
  %v4603 = vunpack.c.h.b16 %v967
  %v4604 = vunpack.c.l.b16 %v968
  %v4605 = vunpack.c.h.b16 %v968
  %v4606 = vunpack.c.l.b16 %v969
  %v4607 = vunpack.c.h.b16 %v969
  %v4608 = vunpack.c.l.b16 %v970
  %v4609 = vunpack.c.h.b16 %v970
  %v4610 = vunpack.c.l.b16 %v971
  %v4611 = vunpack.c.h.b16 %v971
  %v4612 = vunpack.c.l.b16 %v972
  %v4613 = vunpack.c.h.b16 %v972
  %v4614 = vunpack.c.l.b16 %v973
  %v4615 = vunpack.c.h.b16 %v973
  %v4616 = vunpack.c.l.b16 %v974
  %v4617 = vunpack.c.h.b16 %v974
  %v4618 = vunpack.c.l.b16 %v975
  %v4619 = vunpack.c.h.b16 %v975
  %v4620 = vunpack.c.l.b16 %v976
  %v4621 = vunpack.c.h.b16 %v976
  %v4622 = vunpack.c.l.b16 %v977
  %v4623 = vunpack.c.h.b16 %v977
  %v4624 = vunpack.c.l.b16 %v978
  %v4625 = vunpack.c.h.b16 %v978
  %v4626 = vunpack.c.l.b16 %v979
  %v4627 = vunpack.c.h.b16 %v979
  %v4628 = vunpack.c.l.b16 %v980
  %v4629 = vunpack.c.h.b16 %v980
  %v4630 = vunpack.c.l.b16 %v981
  %v4631 = vunpack.c.h.b16 %v981
  %v4632 = vunpack.c.l.b16 %v982
  %v4633 = vunpack.c.h.b16 %v982
  %v4634 = vunpack.c.l.b16 %v983
  %v4635 = vunpack.c.h.b16 %v983
  %v4636 = vunpack.c.l.b16 %v984
  %v4637 = vunpack.c.h.b16 %v984
  %v4638 = vunpack.c.l.b16 %v985
  %v4639 = vunpack.c.h.b16 %v985
  %v4640 = vunpack.c.l.b16 %v986
  %v4641 = vunpack.c.h.b16 %v986
  %v4642 = vunpack.c.l.b16 %v987
  %v4643 = vunpack.c.h.b16 %v987
  %v4644 = vunpack.c.l.b16 %v988
  %v4645 = vunpack.c.h.b16 %v988
  %v4646 = vunpack.c.l.b16 %v989
  %v4647 = vunpack.c.h.b16 %v989
  %v4648 = vunpack.c.l.b16 %v990
  %v4649 = vunpack.c.h.b16 %v990
  %v4650 = vunpack.c.l.b16 %v991
  %v4651 = vunpack.c.h.b16 %v991
  %v4652 = vunpack.c.l.b16 %v992
  %v4653 = vunpack.c.h.b16 %v992
  %v4654 = vunpack.c.l.b16 %v993
  %v4655 = vunpack.c.h.b16 %v993
  %v4656 = vunpack.c.l.b16 %v994
  %v4657 = vunpack.c.h.b16 %v994
  %v4658 = vunpack.c.l.b16 %v995
  %v4659 = vunpack.c.h.b16 %v995
  %v4660 = vunpack.c.l.b16 %v996
  %v4661 = vunpack.c.h.b16 %v996
  %v4662 = vunpack.c.l.b16 %v997
  %v4663 = vunpack.c.h.b16 %v997
  %v4664 = vunpack.c.l.b16 %v998
  %v4665 = vunpack.c.h.b16 %v998
  %v4666 = vunpack.c.l.b16 %v999
  %v4667 = vunpack.c.h.b16 %v999
  %v4668 = vunpack.c.l.b16 %v1000
  %v4669 = vunpack.c.h.b16 %v1000
  %v4670 = vunpack.c.l.b16 %v1001
  %v4671 = vunpack.c.h.b16 %v1001
  %v4672 = vunpack.c.l.b16 %v1002
  %v4673 = vunpack.c.h.b16 %v1002
  %v4674 = vunpack.c.l.b16 %v1003
  %v4675 = vunpack.c.h.b16 %v1003
  %v4676 = vunpack.c.l.b16 %v1004
  %v4677 = vunpack.c.h.b16 %v1004
  %v4678 = vunpack.c.l.b16 %v1005
  %v4679 = vunpack.c.h.b16 %v1005
  %v4680 = vunpack.c.l.b16 %v1006
  %v4681 = vunpack.c.h.b16 %v1006
  %v4682 = vunpack.c.l.b16 %v1007
  %v4683 = vunpack.c.h.b16 %v1007
  %v4684 = vunpack.c.l.b16 %v1008
  %v4685 = vunpack.c.h.b16 %v1008
  %v4686 = vunpack.c.l.b16 %v1009
  %v4687 = vunpack.c.h.b16 %v1009
  %v4688 = vunpack.c.l.b16 %v1010
  %v4689 = vunpack.c.h.b16 %v1010
  %v4690 = vunpack.c.l.b16 %v1011
  %v4691 = vunpack.c.h.b16 %v1011
  %v4692 = vunpack.c.l.b16 %v1012
  %v4693 = vunpack.c.h.b16 %v1012
  %v4694 = vunpack.c.l.b16 %v1013
  %v4695 = vunpack.c.h.b16 %v1013
  %v4696 = vunpack.c.l.b16 %v1014
  %v4697 = vunpack.c.h.b16 %v1014
  %v4698 = vunpack.c.l.b16 %v1015
  %v4699 = vunpack.c.h.b16 %v1015
  %v4700 = vunpack.c.l.b16 %v1016
  %v4701 = vunpack.c.h.b16 %v1016
  %v4702 = vunpack.c.l.b16 %v1017
  %v4703 = vunpack.c.h.b16 %v1017
  %v4704 = vunpack.c.l.b16 %v1018
  %v4705 = vunpack.c.h.b16 %v1018
  %v4706 = vunpack.c.l.b16 %v1019
  %v4707 = vunpack.c.h.b16 %v1019
  %v4708 = vunpack.c.l.b16 %v1020
  %v4709 = vunpack.c.h.b16 %v1020
  %v4710 = vunpack.c.l.b16 %v1021
  %v4711 = vunpack.c.h.b16 %v1021
  %v4712 = vunpack.c.l.b16 %v1022
  %v4713 = vunpack.c.h.b16 %v1022
  %v4714 = vunpack.c.l.b16 %v1023
  %v4715 = vunpack.c.h.b16 %v1023
  %v4716 = vunpack.c.l.b16 %v1024
  %v4717 = vunpack.c.h.b16 %v1024
  %v4718 = vunpack.c.l.b16 %v1025
  %v4719 = vunpack.c.h.b16 %v1025
  %v4720 = vunpack.c.l.b16 %v1026
  %v4721 = vunpack.c.h.b16 %v1026
  %v4722 = vunpack.c.l.b16 %v1027
  %v4723 = vunpack.c.h.b16 %v1027
  %v4724 = vunpack.c.l.b16 %v1028
  %v4725 = vunpack.c.h.b16 %v1028
  %v4726 = vunpack.c.l.b16 %v1029
  %v4727 = vunpack.c.h.b16 %v1029
  %v4728 = vunpack.c.l.b16 %v1030
  %v4729 = vunpack.c.h.b16 %v1030
  %v4730 = vunpack.c.l.b16 %v1031
  %v4731 = vunpack.c.h.b16 %v1031
  %v4732 = vunpack.c.l.b16 %v1032
  %v4733 = vunpack.c.h.b16 %v1032
  %v4734 = vunpack.c.l.b16 %v1033
  %v4735 = vunpack.c.h.b16 %v1033
  %v4736 = vunpack.c.l.b16 %v1034
  %v4737 = vunpack.c.h.b16 %v1034
  %v4738 = vunpack.c.l.b16 %v1035
  %v4739 = vunpack.c.h.b16 %v1035
  %v4740 = vunpack.c.l.b16 %v1036
  %v4741 = vunpack.c.h.b16 %v1036
  %v4742 = vunpack.c.l.b16 %v1037
  %v4743 = vunpack.c.h.b16 %v1037
  %v4744 = vunpack.c.l.b16 %v1038
  %v4745 = vunpack.c.h.b16 %v1038
  %v4746 = vunpack.c.l.b16 %v1039
  %v4747 = vunpack.c.h.b16 %v1039
  %v4748 = vunpack.c.l.b16 %v1040
  %v4749 = vunpack.c.h.b16 %v1040
  %v4750 = vunpack.c.l.b16 %v1041
  %v4751 = vunpack.c.h.b16 %v1041
  %v4752 = vunpack.c.l.b16 %v1042
  %v4753 = vunpack.c.h.b16 %v1042
  %v4754 = vunpack.c.l.b16 %v1043
  %v4755 = vunpack.c.h.b16 %v1043
  %v4756 = vunpack.c.l.b16 %v1044
  %v4757 = vunpack.c.h.b16 %v1044
  %v4758 = vunpack.c.l.b16 %v1045
  %v4759 = vunpack.c.h.b16 %v1045
  %v4760 = vunpack.c.l.b16 %v1046
  %v4761 = vunpack.c.h.b16 %v1046
  %v4762 = vunpack.c.l.b16 %v1047
  %v4763 = vunpack.c.h.b16 %v1047
  %v4764 = vunpack.c.l.b16 %v1048
  %v4765 = vunpack.c.h.b16 %v1048
  %v4766 = vunpack.c.l.b16 %v1049
  %v4767 = vunpack.c.h.b16 %v1049
  %v4768 = vunpack.c.l.b16 %v1050
  %v4769 = vunpack.c.h.b16 %v1050
  %v4770 = vunpack.c.l.b16 %v1051
  %v4771 = vunpack.c.h.b16 %v1051
  %v4772 = vunpack.c.l.b16 %v1052
  %v4773 = vunpack.c.h.b16 %v1052
  %v4774 = vunpack.c.l.b16 %v1053
  %v4775 = vunpack.c.h.b16 %v1053
  %v4776 = vunpack.c.l.b16 %v1054
  %v4777 = vunpack.c.h.b16 %v1054
  %v4778 = vunpack.c.l.b16 %v1055
  %v4779 = vunpack.c.h.b16 %v1055
  %v4780 = vunpack.c.l.b16 %v1056
  %v4781 = vunpack.c.h.b16 %v1056
  %v4782 = vunpack.c.l.b16 %v1057
  %v4783 = vunpack.c.h.b16 %v1057
  %v4784 = vunpack.c.l.b16 %v1058
  %v4785 = vunpack.c.h.b16 %v1058
  %v4786 = vunpack.c.l.b16 %v1059
  %v4787 = vunpack.c.h.b16 %v1059
  %v4788 = vunpack.c.l.b16 %v1060
  %v4789 = vunpack.c.h.b16 %v1060
  %v4790 = vunpack.c.l.b16 %v1061
  %v4791 = vunpack.c.h.b16 %v1061
  %v4792 = vunpack.c.l.b16 %v1062
  %v4793 = vunpack.c.h.b16 %v1062
  %v4794 = vunpack.c.l.b16 %v1063
  %v4795 = vunpack.c.h.b16 %v1063
  %v4796 = vunpack.c.l.b16 %v1064
  %v4797 = vunpack.c.h.b16 %v1064
  %v4798 = vunpack.c.l.b16 %v1065
  %v4799 = vunpack.c.h.b16 %v1065
  %v4800 = vunpack.c.l.b16 %v1066
  %v4801 = vunpack.c.h.b16 %v1066
  %v4802 = vunpack.c.l.b16 %v1067
  %v4803 = vunpack.c.h.b16 %v1067
  %v4804 = vunpack.c.l.b16 %v1068
  %v4805 = vunpack.c.h.b16 %v1068
  %v4806 = vunpack.c.l.b16 %v1069
  %v4807 = vunpack.c.h.b16 %v1069
  %v4808 = vunpack.c.l.b16 %v1070
  %v4809 = vunpack.c.h.b16 %v1070
  %v4810 = vunpack.c.l.b16 %v1071
  %v4811 = vunpack.c.h.b16 %v1071
  %v4812 = vunpack.c.l.b16 %v1072
  %v4813 = vunpack.c.h.b16 %v1072
  %v4814 = vunpack.c.l.b16 %v1073
  %v4815 = vunpack.c.h.b16 %v1073
  %v4816 = vunpack.c.l.b16 %v1074
  %v4817 = vunpack.c.h.b16 %v1074
  %v4818 = vunpack.c.l.b16 %v1075
  %v4819 = vunpack.c.h.b16 %v1075
  %v4820 = vunpack.c.l.b16 %v1076
  %v4821 = vunpack.c.h.b16 %v1076
  %v4822 = vunpack.c.l.b16 %v1077
  %v4823 = vunpack.c.h.b16 %v1077
  %v4824 = vunpack.c.l.b16 %v1078
  %v4825 = vunpack.c.h.b16 %v1078
  %v4826 = vunpack.c.l.b16 %v1079
  %v4827 = vunpack.c.h.b16 %v1079
  %v4828 = vunpack.c.l.b16 %v1080
  %v4829 = vunpack.c.h.b16 %v1080
  %v4830 = vunpack.c.l.b16 %v1081
  %v4831 = vunpack.c.h.b16 %v1081
  %v4832 = vunpack.c.l.b16 %v1082
  %v4833 = vunpack.c.h.b16 %v1082
  %v4834 = vunpack.c.l.b16 %v1083
  %v4835 = vunpack.c.h.b16 %v1083
  %v4836 = vunpack.c.l.b16 %v1084
  %v4837 = vunpack.c.h.b16 %v1084
  %v4838 = vunpack.c.l.b16 %v1085
  %v4839 = vunpack.c.h.b16 %v1085
  %v4840 = vunpack.c.l.b16 %v1086
  %v4841 = vunpack.c.h.b16 %v1086
  %v4842 = vunpack.c.l.b16 %v1087
  %v4843 = vunpack.c.h.b16 %v1087
  %v4844 = vunpack.c.l.b16 %v1088
  %v4845 = vunpack.c.h.b16 %v1088
  %v4846 = vunpack.c.l.b16 %v1089
  %v4847 = vunpack.c.h.b16 %v1089
  %v4848 = vunpack.c.l.b16 %v1090
  %v4849 = vunpack.c.h.b16 %v1090
  %v4850 = vunpack.c.l.b16 %v1091
  %v4851 = vunpack.c.h.b16 %v1091
  %v4852 = vunpack.c.l.b16 %v1092
  %v4853 = vunpack.c.h.b16 %v1092
  %v4854 = vunpack.c.l.b16 %v1093
  %v4855 = vunpack.c.h.b16 %v1093
  %v4856 = vunpack.c.l.b16 %v1094
  %v4857 = vunpack.c.h.b16 %v1094
  %v4858 = vunpack.c.l.b16 %v1095
  %v4859 = vunpack.c.h.b16 %v1095
  %v4860 = vunpack.c.l.b16 %v1096
  %v4861 = vunpack.c.h.b16 %v1096
  %v4862 = vunpack.c.l.b16 %v1097
  %v4863 = vunpack.c.h.b16 %v1097
  %v4864 = vunpack.c.l.b16 %v1098
  %v4865 = vunpack.c.h.b16 %v1098
  %v4866 = vunpack.c.l.b16 %v1099
  %v4867 = vunpack.c.h.b16 %v1099
  %v4868 = vunpack.c.l.b16 %v1100
  %v4869 = vunpack.c.h.b16 %v1100
  %v4870 = vunpack.c.l.b16 %v1101
  %v4871 = vunpack.c.h.b16 %v1101
  %v4872 = vunpack.c.l.b16 %v1102
  %v4873 = vunpack.c.h.b16 %v1102
  %v4874 = vunpack.c.l.b16 %v1103
  %v4875 = vunpack.c.h.b16 %v1103
  %v4876 = vunpack.c.l.b16 %v1104
  %v4877 = vunpack.c.h.b16 %v1104
  %v4878 = vunpack.c.l.b16 %v1105
  %v4879 = vunpack.c.h.b16 %v1105
  %v4880 = vunpack.c.l.b16 %v1106
  %v4881 = vunpack.c.h.b16 %v1106
  %v4882 = vunpack.c.l.b16 %v1107
  %v4883 = vunpack.c.h.b16 %v1107
  %v4884 = vunpack.c.l.b16 %v1108
  %v4885 = vunpack.c.h.b16 %v1108
  %v4886 = vunpack.c.l.b16 %v1109
  %v4887 = vunpack.c.h.b16 %v1109
  %v4888 = vunpack.c.l.b16 %v1110
  %v4889 = vunpack.c.h.b16 %v1110
  %v4890 = vunpack.c.l.b16 %v1111
  %v4891 = vunpack.c.h.b16 %v1111
  %v4892 = vunpack.c.l.b16 %v1112
  %v4893 = vunpack.c.h.b16 %v1112
  %v4894 = vunpack.c.l.b16 %v1113
  %v4895 = vunpack.c.h.b16 %v1113
  %v4896 = vunpack.c.l.b16 %v1114
  %v4897 = vunpack.c.h.b16 %v1114
  %v4898 = vunpack.c.l.b16 %v1115
  %v4899 = vunpack.c.h.b16 %v1115
  %v4900 = vunpack.c.l.b16 %v1116
  %v4901 = vunpack.c.h.b16 %v1116
  %v4902 = vunpack.c.l.b16 %v1117
  %v4903 = vunpack.c.h.b16 %v1117
  %v4904 = vunpack.c.l.b16 %v1118
  %v4905 = vunpack.c.h.b16 %v1118
  %v4906 = vunpack.c.l.b16 %v1119
  %v4907 = vunpack.c.h.b16 %v1119
  %v4908 = vunpack.c.l.b16 %v1120
  %v4909 = vunpack.c.h.b16 %v1120
  %v4910 = vunpack.c.l.b16 %v1121
  %v4911 = vunpack.c.h.b16 %v1121
  %v4912 = vunpack.c.l.b16 %v1122
  %v4913 = vunpack.c.h.b16 %v1122
  %v4914 = vunpack.c.l.b16 %v1123
  %v4915 = vunpack.c.h.b16 %v1123
  %v4916 = vunpack.c.l.b16 %v1124
  %v4917 = vunpack.c.h.b16 %v1124
  %v4918 = vunpack.c.l.b16 %v1125
  %v4919 = vunpack.c.h.b16 %v1125
  %v4920 = vunpack.c.l.b16 %v1126
  %v4921 = vunpack.c.h.b16 %v1126
  %v4922 = vunpack.c.l.b16 %v1127
  %v4923 = vunpack.c.h.b16 %v1127
  %v4924 = vunpack.c.l.b16 %v1128
  %v4925 = vunpack.c.h.b16 %v1128
  %v4926 = vunpack.c.l.b16 %v1129
  %v4927 = vunpack.c.h.b16 %v1129
  %v4928 = vunpack.c.l.b16 %v1130
  %v4929 = vunpack.c.h.b16 %v1130
  %v4930 = vunpack.c.l.b16 %v1131
  %v4931 = vunpack.c.h.b16 %v1131
  %v4932 = vunpack.c.l.b16 %v1132
  %v4933 = vunpack.c.h.b16 %v1132
  %v4934 = vunpack.c.l.b16 %v1133
  %v4935 = vunpack.c.h.b16 %v1133
  %v4936 = vunpack.c.l.b16 %v1134
  %v4937 = vunpack.c.h.b16 %v1134
  %v4938 = vunpack.c.l.b16 %v1135
  %v4939 = vunpack.c.h.b16 %v1135
  %v4940 = vunpack.c.l.b16 %v1136
  %v4941 = vunpack.c.h.b16 %v1136
  %v4942 = vunpack.c.l.b16 %v1137
  %v4943 = vunpack.c.h.b16 %v1137
  %v4944 = vunpack.c.l.b16 %v1138
  %v4945 = vunpack.c.h.b16 %v1138
  %v4946 = vunpack.c.l.b16 %v1139
  %v4947 = vunpack.c.h.b16 %v1139
  %v4948 = vunpack.c.l.b16 %v1140
  %v4949 = vunpack.c.h.b16 %v1140
  %v4950 = vunpack.c.l.b16 %v1141
  %v4951 = vunpack.c.h.b16 %v1141
  %v4952 = vunpack.c.l.b16 %v1142
  %v4953 = vunpack.c.h.b16 %v1142
  %v4954 = vunpack.c.l.b16 %v1143
  %v4955 = vunpack.c.h.b16 %v1143
  %v4956 = vunpack.c.l.b16 %v1144
  %v4957 = vunpack.c.h.b16 %v1144
  %v4958 = vunpack.c.l.b16 %v1145
  %v4959 = vunpack.c.h.b16 %v1145
  %v4960 = vunpack.c.l.b16 %v1146
  %v4961 = vunpack.c.h.b16 %v1146
  %v4962 = vunpack.c.l.b16 %v1147
  %v4963 = vunpack.c.h.b16 %v1147
  %v4964 = vunpack.c.l.b16 %v1148
  %v4965 = vunpack.c.h.b16 %v1148
  %v4966 = vunpack.c.l.b16 %v1149
  %v4967 = vunpack.c.h.b16 %v1149
  %v4968 = vunpack.c.l.b16 %v1150
  %v4969 = vunpack.c.h.b16 %v1150
  %v4970 = vunpack.c.l.b16 %v1151
  %v4971 = vunpack.c.h.b16 %v1151
  %v4972 = vunpack.c.l.b16 %v1152
  %v4973 = vunpack.c.h.b16 %v1152
  %v4974 = vunpack.c.l.b16 %v1153
  %v4975 = vunpack.c.h.b16 %v1153
  %v4976 = vunpack.c.l.b16 %v1154
  %v4977 = vunpack.c.h.b16 %v1154
  %v4978 = vunpack.c.l.b16 %v1155
  %v4979 = vunpack.c.h.b16 %v1155
  %v4980 = vunpack.c.l.b16 %v1156
  %v4981 = vunpack.c.h.b16 %v1156
  %v4982 = vunpack.c.l.b16 %v1157
  %v4983 = vunpack.c.h.b16 %v1157
  %v4984 = vunpack.c.l.b16 %v1158
  %v4985 = vunpack.c.h.b16 %v1158
  %v4986 = vunpack.c.l.b16 %v1159
  %v4987 = vunpack.c.h.b16 %v1159
  %v4988 = vunpack.c.l.b16 %v1160
  %v4989 = vunpack.c.h.b16 %v1160
  %v4990 = vunpack.c.l.b16 %v1161
  %v4991 = vunpack.c.h.b16 %v1161
  %v4992 = vunpack.c.l.b16 %v1162
  %v4993 = vunpack.c.h.b16 %v1162
  %v4994 = vunpack.c.l.b16 %v1163
  %v4995 = vunpack.c.h.b16 %v1163
  %v4996 = vunpack.c.l.b16 %v1164
  %v4997 = vunpack.c.h.b16 %v1164
  %v4998 = vunpack.c.l.b16 %v1165
  %v4999 = vunpack.c.h.b16 %v1165
  %v5000 = vunpack.c.l.b16 %v1166
  %v5001 = vunpack.c.h.b16 %v1166
  %v5002 = vunpack.c.l.b16 %v1167
  %v5003 = vunpack.c.h.b16 %v1167
  %v5004 = vunpack.c.l.b16 %v1168
  %v5005 = vunpack.c.h.b16 %v1168
  %v5006 = vunpack.c.l.b16 %v1169
  %v5007 = vunpack.c.h.b16 %v1169
  %v5008 = vunpack.c.l.b16 %v1170
  %v5009 = vunpack.c.h.b16 %v1170
  %v5010 = vunpack.c.l.b16 %v1171
  %v5011 = vunpack.c.h.b16 %v1171
  %v5012 = vunpack.c.l.b16 %v1172
  %v5013 = vunpack.c.h.b16 %v1172
  %v5014 = vpack.c.b16 %v2782, %v2710
  %v5015 = vpack.c.b16 %v2783, %v2711
  %v5016 = vpack.c.b16 %v2784, %v2712
  %v5017 = vpack.c.b16 %v2785, %v2713
  %v5018 = vpack.c.b16 %v2786, %v2714
  %v5019 = vpack.c.b16 %v2787, %v2715
  %v5020 = vpack.c.b16 %v2788, %v2716
  %v5021 = vpack.c.b16 %v2789, %v2717
  %v5022 = vpack.c.b16 %v2790, %v2718
  %v5023 = vpack.c.b16 %v2791, %v2719
  %v5024 = vpack.c.b16 %v2792, %v2720
  %v5025 = vpack.c.b16 %v2793, %v2721
  %v5026 = vpack.c.b16 %v2794, %v2722
  %v5027 = vpack.c.b16 %v2795, %v2723
  %v5028 = vpack.c.b16 %v2796, %v2724
  %v5029 = vpack.c.b16 %v2797, %v2725
  %v5030 = vpack.c.b16 %v2798, %v2726
  %v5031 = vpack.c.b16 %v2799, %v2727
  %v5032 = vpack.c.b16 %v2800, %v2728
  %v5033 = vpack.c.b16 %v2801, %v2729
  %v5034 = vpack.c.b16 %v2802, %v2730
  %v5035 = vpack.c.b16 %v2803, %v2731
  %v5036 = vpack.c.b16 %v2804, %v2732
  %v5037 = vpack.c.b16 %v2805, %v2733
  %v5038 = vpack.c.b16 %v2806, %v2734
  %v5039 = vpack.c.b16 %v2807, %v2735
  %v5040 = vpack.c.b16 %v2808, %v2736
  %v5041 = vpack.c.b16 %v2809, %v2737
  %v5042 = vpack.c.b16 %v2810, %v2738
  %v5043 = vpack.c.b16 %v2811, %v2739
  %v5044 = vpack.c.b16 %v2812, %v2740
  %v5045 = vpack.c.b16 %v2813, %v2741
  %v5046 = vpack.c.b16 %v2814, %v2742
  %v5047 = vpack.c.b16 %v2815, %v2743
  %v5048 = vpack.c.b16 %v2816, %v2744
  %v5049 = vpack.c.b16 %v2817, %v2745
  %v5050 = vpack.c.b16 %v2818, %v2746
  %v5051 = vpack.c.b16 %v2819, %v2747
  %v5052 = vpack.c.b16 %v2820, %v2748
  %v5053 = vpack.c.b16 %v2821, %v2749
  %v5054 = vpack.c.b16 %v2822, %v2750
  %v5055 = vpack.c.b16 %v2823, %v2751
  %v5056 = vpack.c.b16 %v2824, %v2752
  %v5057 = vpack.c.b16 %v2825, %v2753
  %v5058 = vpack.c.b16 %v2826, %v2754
  %v5059 = vpack.c.b16 %v2827, %v2755
  %v5060 = vpack.c.b16 %v2828, %v2756
  %v5061 = vpack.c.b16 %v2829, %v2757
  %v5062 = vpack.c.b16 %v2830, %v2758
  %v5063 = vpack.c.b16 %v2831, %v2759
  %v5064 = vpack.c.b16 %v2832, %v2760
  %v5065 = vpack.c.b16 %v2833, %v2761
  %v5066 = vpack.c.b16 %v2834, %v2762
  %v5067 = vpack.c.b16 %v2835, %v2763
  %v5068 = vpack.c.b16 %v2836, %v2764
  %v5069 = vpack.c.b16 %v2837, %v2765
  %v5070 = vpack.c.b16 %v2838, %v2766
  %v5071 = vpack.c.b16 %v2839, %v2767
  %v5072 = vpack.c.b16 %v2840, %v2768
  %v5073 = vpack.c.b16 %v2841, %v2769
  %v5074 = vpack.c.b16 %v2842, %v2770
  %v5075 = vpack.c.b16 %v2843, %v2771
  %v5076 = vpack.c.b16 %v2844, %v2772
  %v5077 = vpack.c.b16 %v2845, %v2773
  %v5078 = vpack.c.b16 %v2846, %v2774
  %v5079 = vpack.c.b16 %v2847, %v2775
  %v5080 = vpack.c.b16 %v2848, %v2776
  %v5081 = vpack.c.b16 %v2849, %v2777
  %v5082 = vpack.c.b16 %v2850, %v2778
  %v5083 = vpack.c.b16 %v2851, %v2779
  %v5084 = vpack.c.b16 %v2852, %v2780
  %v5085 = vpack.c.b16 %v2853, %v2781
  %v5086 = vpack.c.b16 %v2926, %v2854
  %v5087 = vpack.c.b16 %v2927, %v2855
  %v5088 = vpack.c.b16 %v2928, %v2856
  %v5089 = vpack.c.b16 %v2929, %v2857
  %v5090 = vpack.c.b16 %v2930, %v2858
  %v5091 = vpack.c.b16 %v2931, %v2859
  %v5092 = vpack.c.b16 %v2932, %v2860
  %v5093 = vpack.c.b16 %v2933, %v2861
  %v5094 = vpack.c.b16 %v2934, %v2862
  %v5095 = vpack.c.b16 %v2935, %v2863
  %v5096 = vpack.c.b16 %v2936, %v2864
  %v5097 = vpack.c.b16 %v2937, %v2865
  %v5098 = vpack.c.b16 %v2938, %v2866
  %v5099 = vpack.c.b16 %v2939, %v2867
  %v5100 = vpack.c.b16 %v2940, %v2868
  %v5101 = vpack.c.b16 %v2941, %v2869
  %v5102 = vpack.c.b16 %v2942, %v2870
  %v5103 = vpack.c.b16 %v2943, %v2871
  %v5104 = vpack.c.b16 %v2944, %v2872
  %v5105 = vpack.c.b16 %v2945, %v2873
  %v5106 = vpack.c.b16 %v2946, %v2874
  %v5107 = vpack.c.b16 %v2947, %v2875
  %v5108 = vpack.c.b16 %v2948, %v2876
  %v5109 = vpack.c.b16 %v2949, %v2877
  %v5110 = vpack.c.b16 %v2950, %v2878
  %v5111 = vpack.c.b16 %v2951, %v2879
  %v5112 = vpack.c.b16 %v2952, %v2880
  %v5113 = vpack.c.b16 %v2953, %v2881
  %v5114 = vpack.c.b16 %v2954, %v2882
  %v5115 = vpack.c.b16 %v2955, %v2883
  %v5116 = vpack.c.b16 %v2956, %v2884
  %v5117 = vpack.c.b16 %v2957, %v2885
  %v5118 = vpack.c.b16 %v2958, %v2886
  %v5119 = vpack.c.b16 %v2959, %v2887
  %v5120 = vpack.c.b16 %v2960, %v2888
  %v5121 = vpack.c.b16 %v2961, %v2889
  %v5122 = vpack.c.b16 %v2962, %v2890
  %v5123 = vpack.c.b16 %v2963, %v2891
  %v5124 = vpack.c.b16 %v2964, %v2892
  %v5125 = vpack.c.b16 %v2965, %v2893
  %v5126 = vpack.c.b16 %v2966, %v2894
  %v5127 = vpack.c.b16 %v2967, %v2895
  %v5128 = vpack.c.b16 %v2968, %v2896
  %v5129 = vpack.c.b16 %v2969, %v2897
  %v5130 = vpack.c.b16 %v2970, %v2898
  %v5131 = vpack.c.b16 %v2971, %v2899
  %v5132 = vpack.c.b16 %v2972, %v2900
  %v5133 = vpack.c.b16 %v2973, %v2901
  %v5134 = vpack.c.b16 %v2974, %v2902
  %v5135 = vpack.c.b16 %v2975, %v2903
  %v5136 = vpack.c.b16 %v2976, %v2904
  %v5137 = vpack.c.b16 %v2977, %v2905
  %v5138 = vpack.c.b16 %v2978, %v2906
  %v5139 = vpack.c.b16 %v2979, %v2907
  %v5140 = vpack.c.b16 %v2980, %v2908
  %v5141 = vpack.c.b16 %v2981, %v2909
  %v5142 = vpack.c.b16 %v2982, %v2910
  %v5143 = vpack.c.b16 %v2983, %v2911
  %v5144 = vpack.c.b16 %v2984, %v2912
  %v5145 = vpack.c.b16 %v2985, %v2913
  %v5146 = vpack.c.b16 %v2986, %v2914
  %v5147 = vpack.c.b16 %v2987, %v2915
  %v5148 = vpack.c.b16 %v2988, %v2916
  %v5149 = vpack.c.b16 %v2989, %v2917
  %v5150 = vpack.c.b16 %v2990, %v2918
  %v5151 = vpack.c.b16 %v2991, %v2919
  %v5152 = vpack.c.b16 %v2992, %v2920
  %v5153 = vpack.c.b16 %v2993, %v2921
  %v5154 = vpack.c.b16 %v2994, %v2922
  %v5155 = vpack.c.b16 %v2995, %v2923
  %v5156 = vpack.c.b16 %v2996, %v2924
  %v5157 = vpack.c.b16 %v2997, %v2925
  %v5158 = vpack.c.b16 %v3070, %v2998
  %v5159 = vpack.c.b16 %v3071, %v2999
  %v5160 = vpack.c.b16 %v3072, %v3000
  %v5161 = vpack.c.b16 %v3073, %v3001
  %v5162 = vpack.c.b16 %v3074, %v3002
  %v5163 = vpack.c.b16 %v3075, %v3003
  %v5164 = vpack.c.b16 %v3076, %v3004
  %v5165 = vpack.c.b16 %v3077, %v3005
  %v5166 = vpack.c.b16 %v3078, %v3006
  %v5167 = vpack.c.b16 %v3079, %v3007
  %v5168 = vpack.c.b16 %v3080, %v3008
  %v5169 = vpack.c.b16 %v3081, %v3009
  %v5170 = vpack.c.b16 %v3082, %v3010
  %v5171 = vpack.c.b16 %v3083, %v3011
  %v5172 = vpack.c.b16 %v3084, %v3012
  %v5173 = vpack.c.b16 %v3085, %v3013
  %v5174 = vpack.c.b16 %v3086, %v3014
  %v5175 = vpack.c.b16 %v3087, %v3015
  %v5176 = vpack.c.b16 %v3088, %v3016
  %v5177 = vpack.c.b16 %v3089, %v3017
  %v5178 = vpack.c.b16 %v3090, %v3018
  %v5179 = vpack.c.b16 %v3091, %v3019
  %v5180 = vpack.c.b16 %v3092, %v3020
  %v5181 = vpack.c.b16 %v3093, %v3021
  %v5182 = vpack.c.b16 %v3094, %v3022
  %v5183 = vpack.c.b16 %v3095, %v3023
  %v5184 = vpack.c.b16 %v3096, %v3024
  %v5185 = vpack.c.b16 %v3097, %v3025
  %v5186 = vpack.c.b16 %v3098, %v3026
  %v5187 = vpack.c.b16 %v3099, %v3027
  %v5188 = vpack.c.b16 %v3100, %v3028
  %v5189 = vpack.c.b16 %v3101, %v3029
  %v5190 = vpack.c.b16 %v3102, %v3030
  %v5191 = vpack.c.b16 %v3103, %v3031
  %v5192 = vpack.c.b16 %v3104, %v3032
  %v5193 = vpack.c.b16 %v3105, %v3033
  %v5194 = vpack.c.b16 %v3106, %v3034
  %v5195 = vpack.c.b16 %v3107, %v3035
  %v5196 = vpack.c.b16 %v3108, %v3036
  %v5197 = vpack.c.b16 %v3109, %v3037
  %v5198 = vpack.c.b16 %v3110, %v3038
  %v5199 = vpack.c.b16 %v3111, %v3039
  %v5200 = vpack.c.b16 %v3112, %v3040
  %v5201 = vpack.c.b16 %v3113, %v3041
  %v5202 = vpack.c.b16 %v3114, %v3042
  %v5203 = vpack.c.b16 %v3115, %v3043
  %v5204 = vpack.c.b16 %v3116, %v3044
  %v5205 = vpack.c.b16 %v3117, %v3045
  %v5206 = vpack.c.b16 %v3118, %v3046
  %v5207 = vpack.c.b16 %v3119, %v3047
  %v5208 = vpack.c.b16 %v3120, %v3048
  %v5209 = vpack.c.b16 %v3121, %v3049
  %v5210 = vpack.c.b16 %v3122, %v3050
  %v5211 = vpack.c.b16 %v3123, %v3051
  %v5212 = vpack.c.b16 %v3124, %v3052
  %v5213 = vpack.c.b16 %v3125, %v3053
  %v5214 = vpack.c.b16 %v3126, %v3054
  %v5215 = vpack.c.b16 %v3127, %v3055
  %v5216 = vpack.c.b16 %v3128, %v3056
  %v5217 = vpack.c.b16 %v3129, %v3057
  %v5218 = vpack.c.b16 %v3130, %v3058
  %v5219 = vpack.c.b16 %v3131, %v3059
  %v5220 = vpack.c.b16 %v3132, %v3060
  %v5221 = vpack.c.b16 %v3133, %v3061
  %v5222 = vpack.c.b16 %v3134, %v3062
  %v5223 = vpack.c.b16 %v3135, %v3063
  %v5224 = vpack.c.b16 %v3136, %v3064
  %v5225 = vpack.c.b16 %v3137, %v3065
  %v5226 = vpack.c.b16 %v3138, %v3066
  %v5227 = vpack.c.b16 %v3139, %v3067
  %v5228 = vpack.c.b16 %v3140, %v3068
  %v5229 = vpack.c.b16 %v3141, %v3069
  %v5230 = vpack.c.b16 %v3214, %v3142
  %v5231 = vpack.c.b16 %v3215, %v3143
  %v5232 = vpack.c.b16 %v3216, %v3144
  %v5233 = vpack.c.b16 %v3217, %v3145
  %v5234 = vpack.c.b16 %v3218, %v3146
  %v5235 = vpack.c.b16 %v3219, %v3147
  %v5236 = vpack.c.b16 %v3220, %v3148
  %v5237 = vpack.c.b16 %v3221, %v3149
  %v5238 = vpack.c.b16 %v3222, %v3150
  %v5239 = vpack.c.b16 %v3223, %v3151
  %v5240 = vpack.c.b16 %v3224, %v3152
  %v5241 = vpack.c.b16 %v3225, %v3153
  %v5242 = vpack.c.b16 %v3226, %v3154
  %v5243 = vpack.c.b16 %v3227, %v3155
  %v5244 = vpack.c.b16 %v3228, %v3156
  %v5245 = vpack.c.b16 %v3229, %v3157
  %v5246 = vpack.c.b16 %v3230, %v3158
  %v5247 = vpack.c.b16 %v3231, %v3159
  %v5248 = vpack.c.b16 %v3232, %v3160
  %v5249 = vpack.c.b16 %v3233, %v3161
  %v5250 = vpack.c.b16 %v3234, %v3162
  %v5251 = vpack.c.b16 %v3235, %v3163
  %v5252 = vpack.c.b16 %v3236, %v3164
  %v5253 = vpack.c.b16 %v3237, %v3165
  %v5254 = vpack.c.b16 %v3238, %v3166
  %v5255 = vpack.c.b16 %v3239, %v3167
  %v5256 = vpack.c.b16 %v3240, %v3168
  %v5257 = vpack.c.b16 %v3241, %v3169
  %v5258 = vpack.c.b16 %v3242, %v3170
  %v5259 = vpack.c.b16 %v3243, %v3171
  %v5260 = vpack.c.b16 %v3244, %v3172
  %v5261 = vpack.c.b16 %v3245, %v3173
  %v5262 = vpack.c.b16 %v3246, %v3174
  %v5263 = vpack.c.b16 %v3247, %v3175
  %v5264 = vpack.c.b16 %v3248, %v3176
  %v5265 = vpack.c.b16 %v3249, %v3177
  %v5266 = vpack.c.b16 %v3250, %v3178
  %v5267 = vpack.c.b16 %v3251, %v3179
  %v5268 = vpack.c.b16 %v3252, %v3180
  %v5269 = vpack.c.b16 %v3253, %v3181
  %v5270 = vpack.c.b16 %v3254, %v3182
  %v5271 = vpack.c.b16 %v3255, %v3183
  %v5272 = vpack.c.b16 %v3256, %v3184
  %v5273 = vpack.c.b16 %v3257, %v3185
  %v5274 = vpack.c.b16 %v3258, %v3186
  %v5275 = vpack.c.b16 %v3259, %v3187
  %v5276 = vpack.c.b16 %v3260, %v3188
  %v5277 = vpack.c.b16 %v3261, %v3189
  %v5278 = vpack.c.b16 %v3262, %v3190
  %v5279 = vpack.c.b16 %v3263, %v3191
  %v5280 = vpack.c.b16 %v3264, %v3192
  %v5281 = vpack.c.b16 %v3265, %v3193
  %v5282 = vpack.c.b16 %v3266, %v3194
  %v5283 = vpack.c.b16 %v3267, %v3195
  %v5284 = vpack.c.b16 %v3268, %v3196
  %v5285 = vpack.c.b16 %v3269, %v3197
  %v5286 = vpack.c.b16 %v3270, %v3198
  %v5287 = vpack.c.b16 %v3271, %v3199
  %v5288 = vpack.c.b16 %v3272, %v3200
  %v5289 = vpack.c.b16 %v3273, %v3201
  %v5290 = vpack.c.b16 %v3274, %v3202
  %v5291 = vpack.c.b16 %v3275, %v3203
  %v5292 = vpack.c.b16 %v3276, %v3204
  %v5293 = vpack.c.b16 %v3277, %v3205
  %v5294 = vpack.c.b16 %v3278, %v3206
  %v5295 = vpack.c.b16 %v3279, %v3207
  %v5296 = vpack.c.b16 %v3280, %v3208
  %v5297 = vpack.c.b16 %v3281, %v3209
  %v5298 = vpack.c.b16 %v3282, %v3210
  %v5299 = vpack.c.b16 %v3283, %v3211
  %v5300 = vpack.c.b16 %v3284, %v3212
  %v5301 = vpack.c.b16 %v3285, %v3213
  %v5302 = vpack.c.b16 %v3358, %v3286
  %v5303 = vpack.c.b16 %v3359, %v3287
  %v5304 = vpack.c.b16 %v3360, %v3288
  %v5305 = vpack.c.b16 %v3361, %v3289
  %v5306 = vpack.c.b16 %v3362, %v3290
  %v5307 = vpack.c.b16 %v3363, %v3291
  %v5308 = vpack.c.b16 %v3364, %v3292
  %v5309 = vpack.c.b16 %v3365, %v3293
  %v5310 = vpack.c.b16 %v3366, %v3294
  %v5311 = vpack.c.b16 %v3367, %v3295
  %v5312 = vpack.c.b16 %v3368, %v3296
  %v5313 = vpack.c.b16 %v3369, %v3297
  %v5314 = vpack.c.b16 %v3370, %v3298
  %v5315 = vpack.c.b16 %v3371, %v3299
  %v5316 = vpack.c.b16 %v3372, %v3300
  %v5317 = vpack.c.b16 %v3373, %v3301
  %v5318 = vpack.c.b16 %v3374, %v3302
  %v5319 = vpack.c.b16 %v3375, %v3303
  %v5320 = vpack.c.b16 %v3376, %v3304
  %v5321 = vpack.c.b16 %v3377, %v3305
  %v5322 = vpack.c.b16 %v3378, %v3306
  %v5323 = vpack.c.b16 %v3379, %v3307
  %v5324 = vpack.c.b16 %v3380, %v3308
  %v5325 = vpack.c.b16 %v3381, %v3309
  %v5326 = vpack.c.b16 %v3382, %v3310
  %v5327 = vpack.c.b16 %v3383, %v3311
  %v5328 = vpack.c.b16 %v3384, %v3312
  %v5329 = vpack.c.b16 %v3385, %v3313
  %v5330 = vpack.c.b16 %v3386, %v3314
  %v5331 = vpack.c.b16 %v3387, %v3315
  %v5332 = vpack.c.b16 %v3388, %v3316
  %v5333 = vpack.c.b16 %v3389, %v3317
  %v5334 = vpack.c.b16 %v3390, %v3318
  %v5335 = vpack.c.b16 %v3391, %v3319
  %v5336 = vpack.c.b16 %v3392, %v3320
  %v5337 = vpack.c.b16 %v3393, %v3321
  %v5338 = vpack.c.b16 %v3394, %v3322
  %v5339 = vpack.c.b16 %v3395, %v3323
  %v5340 = vpack.c.b16 %v3396, %v3324
  %v5341 = vpack.c.b16 %v3397, %v3325
  %v5342 = vpack.c.b16 %v3398, %v3326
  %v5343 = vpack.c.b16 %v3399, %v3327
  %v5344 = vpack.c.b16 %v3400, %v3328
  %v5345 = vpack.c.b16 %v3401, %v3329
  %v5346 = vpack.c.b16 %v3402, %v3330
  %v5347 = vpack.c.b16 %v3403, %v3331
  %v5348 = vpack.c.b16 %v3404, %v3332
  %v5349 = vpack.c.b16 %v3405, %v3333
  %v5350 = vpack.c.b16 %v3406, %v3334
  %v5351 = vpack.c.b16 %v3407, %v3335
  %v5352 = vpack.c.b16 %v3408, %v3336
  %v5353 = vpack.c.b16 %v3409, %v3337
  %v5354 = vpack.c.b16 %v3410, %v3338
  %v5355 = vpack.c.b16 %v3411, %v3339
  %v5356 = vpack.c.b16 %v3412, %v3340
  %v5357 = vpack.c.b16 %v3413, %v3341
  %v5358 = vpack.c.b16 %v3414, %v3342
  %v5359 = vpack.c.b16 %v3415, %v3343
  %v5360 = vpack.c.b16 %v3416, %v3344
  %v5361 = vpack.c.b16 %v3417, %v3345
  %v5362 = vpack.c.b16 %v3418, %v3346
  %v5363 = vpack.c.b16 %v3419, %v3347
  %v5364 = vpack.c.b16 %v3420, %v3348
  %v5365 = vpack.c.b16 %v3421, %v3349
  %v5366 = vpack.c.b16 %v3422, %v3350
  %v5367 = vpack.c.b16 %v3423, %v3351
  %v5368 = vpack.c.b16 %v3424, %v3352
  %v5369 = vpack.c.b16 %v3425, %v3353
  %v5370 = vpack.c.b16 %v3426, %v3354
  %v5371 = vpack.c.b16 %v3427, %v3355
  %v5372 = vpack.c.b16 %v3428, %v3356
  %v5373 = vpack.c.b16 %v3429, %v3357
  %v5374 = vpack.c.b16 %v3502, %v3430
  %v5375 = vpack.c.b16 %v3503, %v3431
  %v5376 = vpack.c.b16 %v3504, %v3432
  %v5377 = vpack.c.b16 %v3505, %v3433
  %v5378 = vpack.c.b16 %v3506, %v3434
  %v5379 = vpack.c.b16 %v3507, %v3435
  %v5380 = vpack.c.b16 %v3508, %v3436
  %v5381 = vpack.c.b16 %v3509, %v3437
  %v5382 = vpack.c.b16 %v3510, %v3438
  %v5383 = vpack.c.b16 %v3511, %v3439
  %v5384 = vpack.c.b16 %v3512, %v3440
  %v5385 = vpack.c.b16 %v3513, %v3441
  %v5386 = vpack.c.b16 %v3514, %v3442
  %v5387 = vpack.c.b16 %v3515, %v3443
  %v5388 = vpack.c.b16 %v3516, %v3444
  %v5389 = vpack.c.b16 %v3517, %v3445
  %v5390 = vpack.c.b16 %v3518, %v3446
  %v5391 = vpack.c.b16 %v3519, %v3447
  %v5392 = vpack.c.b16 %v3520, %v3448
  %v5393 = vpack.c.b16 %v3521, %v3449
  %v5394 = vpack.c.b16 %v3522, %v3450
  %v5395 = vpack.c.b16 %v3523, %v3451
  %v5396 = vpack.c.b16 %v3524, %v3452
  %v5397 = vpack.c.b16 %v3525, %v3453
  %v5398 = vpack.c.b16 %v3526, %v3454
  %v5399 = vpack.c.b16 %v3527, %v3455
  %v5400 = vpack.c.b16 %v3528, %v3456
  %v5401 = vpack.c.b16 %v3529, %v3457
  %v5402 = vpack.c.b16 %v3530, %v3458
  %v5403 = vpack.c.b16 %v3531, %v3459
  %v5404 = vpack.c.b16 %v3532, %v3460
  %v5405 = vpack.c.b16 %v3533, %v3461
  %v5406 = vpack.c.b16 %v3534, %v3462
  %v5407 = vpack.c.b16 %v3535, %v3463
  %v5408 = vpack.c.b16 %v3536, %v3464
  %v5409 = vpack.c.b16 %v3537, %v3465
  %v5410 = vpack.c.b16 %v3538, %v3466
  %v5411 = vpack.c.b16 %v3539, %v3467
  %v5412 = vpack.c.b16 %v3540, %v3468
  %v5413 = vpack.c.b16 %v3541, %v3469
  %v5414 = vpack.c.b16 %v3542, %v3470
  %v5415 = vpack.c.b16 %v3543, %v3471
  %v5416 = vpack.c.b16 %v3544, %v3472
  %v5417 = vpack.c.b16 %v3545, %v3473
  %v5418 = vpack.c.b16 %v3546, %v3474
  %v5419 = vpack.c.b16 %v3547, %v3475
  %v5420 = vpack.c.b16 %v3548, %v3476
  %v5421 = vpack.c.b16 %v3549, %v3477
  %v5422 = vpack.c.b16 %v3550, %v3478
  %v5423 = vpack.c.b16 %v3551, %v3479
  %v5424 = vpack.c.b16 %v3552, %v3480
  %v5425 = vpack.c.b16 %v3553, %v3481
  %v5426 = vpack.c.b16 %v3554, %v3482
  %v5427 = vpack.c.b16 %v3555, %v3483
  %v5428 = vpack.c.b16 %v3556, %v3484
  %v5429 = vpack.c.b16 %v3557, %v3485
  %v5430 = vpack.c.b16 %v3558, %v3486
  %v5431 = vpack.c.b16 %v3559, %v3487
  %v5432 = vpack.c.b16 %v3560, %v3488
  %v5433 = vpack.c.b16 %v3561, %v3489
  %v5434 = vpack.c.b16 %v3562, %v3490
  %v5435 = vpack.c.b16 %v3563, %v3491
  %v5436 = vpack.c.b16 %v3564, %v3492
  %v5437 = vpack.c.b16 %v3565, %v3493
  %v5438 = vpack.c.b16 %v3566, %v3494
  %v5439 = vpack.c.b16 %v3567, %v3495
  %v5440 = vpack.c.b16 %v3568, %v3496
  %v5441 = vpack.c.b16 %v3569, %v3497
  %v5442 = vpack.c.b16 %v3570, %v3498
  %v5443 = vpack.c.b16 %v3571, %v3499
  %v5444 = vpack.c.b16 %v3572, %v3500
  %v5445 = vpack.c.b16 %v3573, %v3501
  %v5446 = vpack.c.b16 %v3646, %v3574
  %v5447 = vpack.c.b16 %v3647, %v3575
  %v5448 = vpack.c.b16 %v3648, %v3576
  %v5449 = vpack.c.b16 %v3649, %v3577
  %v5450 = vpack.c.b16 %v3650, %v3578
  %v5451 = vpack.c.b16 %v3651, %v3579
  %v5452 = vpack.c.b16 %v3652, %v3580
  %v5453 = vpack.c.b16 %v3653, %v3581
  %v5454 = vpack.c.b16 %v3654, %v3582
  %v5455 = vpack.c.b16 %v3655, %v3583
  %v5456 = vpack.c.b16 %v3656, %v3584
  %v5457 = vpack.c.b16 %v3657, %v3585
  %v5458 = vpack.c.b16 %v3658, %v3586
  %v5459 = vpack.c.b16 %v3659, %v3587
  %v5460 = vpack.c.b16 %v3660, %v3588
  %v5461 = vpack.c.b16 %v3661, %v3589
  %v5462 = vpack.c.b16 %v3662, %v3590
  %v5463 = vpack.c.b16 %v3663, %v3591
  %v5464 = vpack.c.b16 %v3664, %v3592
  %v5465 = vpack.c.b16 %v3665, %v3593
  %v5466 = vpack.c.b16 %v3666, %v3594
  %v5467 = vpack.c.b16 %v3667, %v3595
  %v5468 = vpack.c.b16 %v3668, %v3596
  %v5469 = vpack.c.b16 %v3669, %v3597
  %v5470 = vpack.c.b16 %v3670, %v3598
  %v5471 = vpack.c.b16 %v3671, %v3599
  %v5472 = vpack.c.b16 %v3672, %v3600
  %v5473 = vpack.c.b16 %v3673, %v3601
  %v5474 = vpack.c.b16 %v3674, %v3602
  %v5475 = vpack.c.b16 %v3675, %v3603
  %v5476 = vpack.c.b16 %v3676, %v3604
  %v5477 = vpack.c.b16 %v3677, %v3605
  %v5478 = vpack.c.b16 %v3678, %v3606
  %v5479 = vpack.c.b16 %v3679, %v3607
  %v5480 = vpack.c.b16 %v3680, %v3608
  %v5481 = vpack.c.b16 %v3681, %v3609
  %v5482 = vpack.c.b16 %v3682, %v3610
  %v5483 = vpack.c.b16 %v3683, %v3611
  %v5484 = vpack.c.b16 %v3684, %v3612
  %v5485 = vpack.c.b16 %v3685, %v3613
  %v5486 = vpack.c.b16 %v3686, %v3614
  %v5487 = vpack.c.b16 %v3687, %v3615
  %v5488 = vpack.c.b16 %v3688, %v3616
  %v5489 = vpack.c.b16 %v3689, %v3617
  %v5490 = vpack.c.b16 %v3690, %v3618
  %v5491 = vpack.c.b16 %v3691, %v3619
  %v5492 = vpack.c.b16 %v3692, %v3620
  %v5493 = vpack.c.b16 %v3693, %v3621
  %v5494 = vpack.c.b16 %v3694, %v3622
  %v5495 = vpack.c.b16 %v3695, %v3623
  %v5496 = vpack.c.b16 %v3696, %v3624
  %v5497 = vpack.c.b16 %v3697, %v3625
  %v5498 = vpack.c.b16 %v3698, %v3626
  %v5499 = vpack.c.b16 %v3699, %v3627
  %v5500 = vpack.c.b16 %v3700, %v3628
  %v5501 = vpack.c.b16 %v3701, %v3629
  %v5502 = vpack.c.b16 %v3702, %v3630
  %v5503 = vpack.c.b16 %v3703, %v3631
  %v5504 = vpack.c.b16 %v3704, %v3632
  %v5505 = vpack.c.b16 %v3705, %v3633
  %v5506 = vpack.c.b16 %v3706, %v3634
  %v5507 = vpack.c.b16 %v3707, %v3635
  %v5508 = vpack.c.b16 %v3708, %v3636
  %v5509 = vpack.c.b16 %v3709, %v3637
  %v5510 = vpack.c.b16 %v3710, %v3638
  %v5511 = vpack.c.b16 %v3711, %v3639
  %v5512 = vpack.c.b16 %v3712, %v3640
  %v5513 = vpack.c.b16 %v3713, %v3641
  %v5514 = vpack.c.b16 %v3714, %v3642
  %v5515 = vpack.c.b16 %v3715, %v3643
  %v5516 = vpack.c.b16 %v3716, %v3644
  %v5517 = vpack.c.b16 %v3717, %v3645
  %v5518 = vpack.c.b16 %v3790, %v3718
  %v5519 = vpack.c.b16 %v3791, %v3719
  %v5520 = vpack.c.b16 %v3792, %v3720
  %v5521 = vpack.c.b16 %v3793, %v3721
  %v5522 = vpack.c.b16 %v3794, %v3722
  %v5523 = vpack.c.b16 %v3795, %v3723
  %v5524 = vpack.c.b16 %v3796, %v3724
  %v5525 = vpack.c.b16 %v3797, %v3725
  %v5526 = vpack.c.b16 %v3798, %v3726
  %v5527 = vpack.c.b16 %v3799, %v3727
  %v5528 = vpack.c.b16 %v3800, %v3728
  %v5529 = vpack.c.b16 %v3801, %v3729
  %v5530 = vpack.c.b16 %v3802, %v3730
  %v5531 = vpack.c.b16 %v3803, %v3731
  %v5532 = vpack.c.b16 %v3804, %v3732
  %v5533 = vpack.c.b16 %v3805, %v3733
  %v5534 = vpack.c.b16 %v3806, %v3734
  %v5535 = vpack.c.b16 %v3807, %v3735
  %v5536 = vpack.c.b16 %v3808, %v3736
  %v5537 = vpack.c.b16 %v3809, %v3737
  %v5538 = vpack.c.b16 %v3810, %v3738
  %v5539 = vpack.c.b16 %v3811, %v3739
  %v5540 = vpack.c.b16 %v3812, %v3740
  %v5541 = vpack.c.b16 %v3813, %v3741
  %v5542 = vpack.c.b16 %v3814, %v3742
  %v5543 = vpack.c.b16 %v3815, %v3743
  %v5544 = vpack.c.b16 %v3816, %v3744
  %v5545 = vpack.c.b16 %v3817, %v3745
  %v5546 = vpack.c.b16 %v3818, %v3746
  %v5547 = vpack.c.b16 %v3819, %v3747
  %v5548 = vpack.c.b16 %v3820, %v3748
  %v5549 = vpack.c.b16 %v3821, %v3749
  %v5550 = vpack.c.b16 %v3822, %v3750
  %v5551 = vpack.c.b16 %v3823, %v3751
  %v5552 = vpack.c.b16 %v3824, %v3752
  %v5553 = vpack.c.b16 %v3825, %v3753
  %v5554 = vpack.c.b16 %v3826, %v3754
  %v5555 = vpack.c.b16 %v3827, %v3755
  %v5556 = vpack.c.b16 %v3828, %v3756
  %v5557 = vpack.c.b16 %v3829, %v3757
  %v5558 = vpack.c.b16 %v3830, %v3758
  %v5559 = vpack.c.b16 %v3831, %v3759
  %v5560 = vpack.c.b16 %v3832, %v3760
  %v5561 = vpack.c.b16 %v3833, %v3761
  %v5562 = vpack.c.b16 %v3834, %v3762
  %v5563 = vpack.c.b16 %v3835, %v3763
  %v5564 = vpack.c.b16 %v3836, %v3764
  %v5565 = vpack.c.b16 %v3837, %v3765
  %v5566 = vpack.c.b16 %v3838, %v3766
  %v5567 = vpack.c.b16 %v3839, %v3767
  %v5568 = vpack.c.b16 %v3840, %v3768
  %v5569 = vpack.c.b16 %v3841, %v3769
  %v5570 = vpack.c.b16 %v3842, %v3770
  %v5571 = vpack.c.b16 %v3843, %v3771
  %v5572 = vpack.c.b16 %v3844, %v3772
  %v5573 = vpack.c.b16 %v3845, %v3773
  %v5574 = vpack.c.b16 %v3846, %v3774
  %v5575 = vpack.c.b16 %v3847, %v3775
  %v5576 = vpack.c.b16 %v3848, %v3776
  %v5577 = vpack.c.b16 %v3849, %v3777
  %v5578 = vpack.c.b16 %v3850, %v3778
  %v5579 = vpack.c.b16 %v3851, %v3779
  %v5580 = vpack.c.b16 %v3852, %v3780
  %v5581 = vpack.c.b16 %v3853, %v3781
  %v5582 = vpack.c.b16 %v3854, %v3782
  %v5583 = vpack.c.b16 %v3855, %v3783
  %v5584 = vpack.c.b16 %v3856, %v3784
  %v5585 = vpack.c.b16 %v3857, %v3785
  %v5586 = vpack.c.b16 %v3858, %v3786
  %v5587 = vpack.c.b16 %v3859, %v3787
  %v5588 = vpack.c.b16 %v3860, %v3788
  %v5589 = vpack.c.b16 %v3861, %v3789
  %v5590 = vpack.c.b16 %v3934, %v3862
  %v5591 = vpack.c.b16 %v3935, %v3863
  %v5592 = vpack.c.b16 %v3936, %v3864
  %v5593 = vpack.c.b16 %v3937, %v3865
  %v5594 = vpack.c.b16 %v3938, %v3866
  %v5595 = vpack.c.b16 %v3939, %v3867
  %v5596 = vpack.c.b16 %v3940, %v3868
  %v5597 = vpack.c.b16 %v3941, %v3869
  %v5598 = vpack.c.b16 %v3942, %v3870
  %v5599 = vpack.c.b16 %v3943, %v3871
  %v5600 = vpack.c.b16 %v3944, %v3872
  %v5601 = vpack.c.b16 %v3945, %v3873
  %v5602 = vpack.c.b16 %v3946, %v3874
  %v5603 = vpack.c.b16 %v3947, %v3875
  %v5604 = vpack.c.b16 %v3948, %v3876
  %v5605 = vpack.c.b16 %v3949, %v3877
  %v5606 = vpack.c.b16 %v3950, %v3878
  %v5607 = vpack.c.b16 %v3951, %v3879
  %v5608 = vpack.c.b16 %v3952, %v3880
  %v5609 = vpack.c.b16 %v3953, %v3881
  %v5610 = vpack.c.b16 %v3954, %v3882
  %v5611 = vpack.c.b16 %v3955, %v3883
  %v5612 = vpack.c.b16 %v3956, %v3884
  %v5613 = vpack.c.b16 %v3957, %v3885
  %v5614 = vpack.c.b16 %v3958, %v3886
  %v5615 = vpack.c.b16 %v3959, %v3887
  %v5616 = vpack.c.b16 %v3960, %v3888
  %v5617 = vpack.c.b16 %v3961, %v3889
  %v5618 = vpack.c.b16 %v3962, %v3890
  %v5619 = vpack.c.b16 %v3963, %v3891
  %v5620 = vpack.c.b16 %v3964, %v3892
  %v5621 = vpack.c.b16 %v3965, %v3893
  %v5622 = vpack.c.b16 %v3966, %v3894
  %v5623 = vpack.c.b16 %v3967, %v3895
  %v5624 = vpack.c.b16 %v3968, %v3896
  %v5625 = vpack.c.b16 %v3969, %v3897
  %v5626 = vpack.c.b16 %v3970, %v3898
  %v5627 = vpack.c.b16 %v3971, %v3899
  %v5628 = vpack.c.b16 %v3972, %v3900
  %v5629 = vpack.c.b16 %v3973, %v3901
  %v5630 = vpack.c.b16 %v3974, %v3902
  %v5631 = vpack.c.b16 %v3975, %v3903
  %v5632 = vpack.c.b16 %v3976, %v3904
  %v5633 = vpack.c.b16 %v3977, %v3905
  %v5634 = vpack.c.b16 %v3978, %v3906
  %v5635 = vpack.c.b16 %v3979, %v3907
  %v5636 = vpack.c.b16 %v3980, %v3908
  %v5637 = vpack.c.b16 %v3981, %v3909
  %v5638 = vpack.c.b16 %v3982, %v3910
  %v5639 = vpack.c.b16 %v3983, %v3911
  %v5640 = vpack.c.b16 %v3984, %v3912
  %v5641 = vpack.c.b16 %v3985, %v3913
  %v5642 = vpack.c.b16 %v3986, %v3914
  %v5643 = vpack.c.b16 %v3987, %v3915
  %v5644 = vpack.c.b16 %v3988, %v3916
  %v5645 = vpack.c.b16 %v3989, %v3917
  %v5646 = vpack.c.b16 %v3990, %v3918
  %v5647 = vpack.c.b16 %v3991, %v3919
  %v5648 = vpack.c.b16 %v3992, %v3920
  %v5649 = vpack.c.b16 %v3993, %v3921
  %v5650 = vpack.c.b16 %v3994, %v3922
  %v5651 = vpack.c.b16 %v3995, %v3923
  %v5652 = vpack.c.b16 %v3996, %v3924
  %v5653 = vpack.c.b16 %v3997, %v3925
  %v5654 = vpack.c.b16 %v3998, %v3926
  %v5655 = vpack.c.b16 %v3999, %v3927
  %v5656 = vpack.c.b16 %v4000, %v3928
  %v5657 = vpack.c.b16 %v4001, %v3929
  %v5658 = vpack.c.b16 %v4002, %v3930
  %v5659 = vpack.c.b16 %v4003, %v3931
  %v5660 = vpack.c.b16 %v4004, %v3932
  %v5661 = vpack.c.b16 %v4005, %v3933
  %v5662 = vpack.c.b16 %v4078, %v4006
  %v5663 = vpack.c.b16 %v4079, %v4007
  %v5664 = vpack.c.b16 %v4080, %v4008
  %v5665 = vpack.c.b16 %v4081, %v4009
  %v5666 = vpack.c.b16 %v4082, %v4010
  %v5667 = vpack.c.b16 %v4083, %v4011
  %v5668 = vpack.c.b16 %v4084, %v4012
  %v5669 = vpack.c.b16 %v4085, %v4013
  %v5670 = vpack.c.b16 %v4086, %v4014
  %v5671 = vpack.c.b16 %v4087, %v4015
  %v5672 = vpack.c.b16 %v4088, %v4016
  %v5673 = vpack.c.b16 %v4089, %v4017
  %v5674 = vpack.c.b16 %v4090, %v4018
  %v5675 = vpack.c.b16 %v4091, %v4019
  %v5676 = vpack.c.b16 %v4092, %v4020
  %v5677 = vpack.c.b16 %v4093, %v4021
  %v5678 = vpack.c.b16 %v4094, %v4022
  %v5679 = vpack.c.b16 %v4095, %v4023
  %v5680 = vpack.c.b16 %v4096, %v4024
  %v5681 = vpack.c.b16 %v4097, %v4025
  %v5682 = vpack.c.b16 %v4098, %v4026
  %v5683 = vpack.c.b16 %v4099, %v4027
  %v5684 = vpack.c.b16 %v4100, %v4028
  %v5685 = vpack.c.b16 %v4101, %v4029
  %v5686 = vpack.c.b16 %v4102, %v4030
  %v5687 = vpack.c.b16 %v4103, %v4031
  %v5688 = vpack.c.b16 %v4104, %v4032
  %v5689 = vpack.c.b16 %v4105, %v4033
  %v5690 = vpack.c.b16 %v4106, %v4034
  %v5691 = vpack.c.b16 %v4107, %v4035
  %v5692 = vpack.c.b16 %v4108, %v4036
  %v5693 = vpack.c.b16 %v4109, %v4037
  %v5694 = vpack.c.b16 %v4110, %v4038
  %v5695 = vpack.c.b16 %v4111, %v4039
  %v5696 = vpack.c.b16 %v4112, %v4040
  %v5697 = vpack.c.b16 %v4113, %v4041
  %v5698 = vpack.c.b16 %v4114, %v4042
  %v5699 = vpack.c.b16 %v4115, %v4043
  %v5700 = vpack.c.b16 %v4116, %v4044
  %v5701 = vpack.c.b16 %v4117, %v4045
  %v5702 = vpack.c.b16 %v4118, %v4046
  %v5703 = vpack.c.b16 %v4119, %v4047
  %v5704 = vpack.c.b16 %v4120, %v4048
  %v5705 = vpack.c.b16 %v4121, %v4049
  %v5706 = vpack.c.b16 %v4122, %v4050
  %v5707 = vpack.c.b16 %v4123, %v4051
  %v5708 = vpack.c.b16 %v4124, %v4052
  %v5709 = vpack.c.b16 %v4125, %v4053
  %v5710 = vpack.c.b16 %v4126, %v4054
  %v5711 = vpack.c.b16 %v4127, %v4055
  %v5712 = vpack.c.b16 %v4128, %v4056
  %v5713 = vpack.c.b16 %v4129, %v4057
  %v5714 = vpack.c.b16 %v4130, %v4058
  %v5715 = vpack.c.b16 %v4131, %v4059
  %v5716 = vpack.c.b16 %v4132, %v4060
  %v5717 = vpack.c.b16 %v4133, %v4061
  %v5718 = vpack.c.b16 %v4134, %v4062
  %v5719 = vpack.c.b16 %v4135, %v4063
  %v5720 = vpack.c.b16 %v4136, %v4064
  %v5721 = vpack.c.b16 %v4137, %v4065
  %v5722 = vpack.c.b16 %v4138, %v4066
  %v5723 = vpack.c.b16 %v4139, %v4067
  %v5724 = vpack.c.b16 %v4140, %v4068
  %v5725 = vpack.c.b16 %v4141, %v4069
  %v5726 = vpack.c.b16 %v4142, %v4070
  %v5727 = vpack.c.b16 %v4143, %v4071
  %v5728 = vpack.c.b16 %v4144, %v4072
  %v5729 = vpack.c.b16 %v4145, %v4073
  %v5730 = vpack.c.b16 %v4146, %v4074
  %v5731 = vpack.c.b16 %v4147, %v4075
  %v5732 = vpack.c.b16 %v4148, %v4076
  %v5733 = vpack.c.b16 %v4149, %v4077
  %v5734 = vpack.c.b16 %v4222, %v4150
  %v5735 = vpack.c.b16 %v4223, %v4151
  %v5736 = vpack.c.b16 %v4224, %v4152
  %v5737 = vpack.c.b16 %v4225, %v4153
  %v5738 = vpack.c.b16 %v4226, %v4154
  %v5739 = vpack.c.b16 %v4227, %v4155
  %v5740 = vpack.c.b16 %v4228, %v4156
  %v5741 = vpack.c.b16 %v4229, %v4157
  %v5742 = vpack.c.b16 %v4230, %v4158
  %v5743 = vpack.c.b16 %v4231, %v4159
  %v5744 = vpack.c.b16 %v4232, %v4160
  %v5745 = vpack.c.b16 %v4233, %v4161
  %v5746 = vpack.c.b16 %v4234, %v4162
  %v5747 = vpack.c.b16 %v4235, %v4163
  %v5748 = vpack.c.b16 %v4236, %v4164
  %v5749 = vpack.c.b16 %v4237, %v4165
  %v5750 = vpack.c.b16 %v4238, %v4166
  %v5751 = vpack.c.b16 %v4239, %v4167
  %v5752 = vpack.c.b16 %v4240, %v4168
  %v5753 = vpack.c.b16 %v4241, %v4169
  %v5754 = vpack.c.b16 %v4242, %v4170
  %v5755 = vpack.c.b16 %v4243, %v4171
  %v5756 = vpack.c.b16 %v4244, %v4172
  %v5757 = vpack.c.b16 %v4245, %v4173
  %v5758 = vpack.c.b16 %v4246, %v4174
  %v5759 = vpack.c.b16 %v4247, %v4175
  %v5760 = vpack.c.b16 %v4248, %v4176
  %v5761 = vpack.c.b16 %v4249, %v4177
  %v5762 = vpack.c.b16 %v4250, %v4178
  %v5763 = vpack.c.b16 %v4251, %v4179
  %v5764 = vpack.c.b16 %v4252, %v4180
  %v5765 = vpack.c.b16 %v4253, %v4181
  %v5766 = vpack.c.b16 %v4254, %v4182
  %v5767 = vpack.c.b16 %v4255, %v4183
  %v5768 = vpack.c.b16 %v4256, %v4184
  %v5769 = vpack.c.b16 %v4257, %v4185
  %v5770 = vpack.c.b16 %v4258, %v4186
  %v5771 = vpack.c.b16 %v4259, %v4187
  %v5772 = vpack.c.b16 %v4260, %v4188
  %v5773 = vpack.c.b16 %v4261, %v4189
  %v5774 = vpack.c.b16 %v4262, %v4190
  %v5775 = vpack.c.b16 %v4263, %v4191
  %v5776 = vpack.c.b16 %v4264, %v4192
  %v5777 = vpack.c.b16 %v4265, %v4193
  %v5778 = vpack.c.b16 %v4266, %v4194
  %v5779 = vpack.c.b16 %v4267, %v4195
  %v5780 = vpack.c.b16 %v4268, %v4196
  %v5781 = vpack.c.b16 %v4269, %v4197
  %v5782 = vpack.c.b16 %v4270, %v4198
  %v5783 = vpack.c.b16 %v4271, %v4199
  %v5784 = vpack.c.b16 %v4272, %v4200
  %v5785 = vpack.c.b16 %v4273, %v4201
  %v5786 = vpack.c.b16 %v4274, %v4202
  %v5787 = vpack.c.b16 %v4275, %v4203
  %v5788 = vpack.c.b16 %v4276, %v4204
  %v5789 = vpack.c.b16 %v4277, %v4205
  %v5790 = vpack.c.b16 %v4278, %v4206
  %v5791 = vpack.c.b16 %v4279, %v4207
  %v5792 = vpack.c.b16 %v4280, %v4208
  %v5793 = vpack.c.b16 %v4281, %v4209
  %v5794 = vpack.c.b16 %v4282, %v4210
  %v5795 = vpack.c.b16 %v4283, %v4211
  %v5796 = vpack.c.b16 %v4284, %v4212
  %v5797 = vpack.c.b16 %v4285, %v4213
  %v5798 = vpack.c.b16 %v4286, %v4214
  %v5799 = vpack.c.b16 %v4287, %v4215
  %v5800 = vpack.c.b16 %v4288, %v4216
  %v5801 = vpack.c.b16 %v4289, %v4217
  %v5802 = vpack.c.b16 %v4290, %v4218
  %v5803 = vpack.c.b16 %v4291, %v4219
  %v5804 = vpack.c.b16 %v4292, %v4220
  %v5805 = vpack.c.b16 %v4293, %v4221
  %v5806 = vpack.c.b16 %v4366, %v4294
  %v5807 = vpack.c.b16 %v4367, %v4295
  %v5808 = vpack.c.b16 %v4368, %v4296
  %v5809 = vpack.c.b16 %v4369, %v4297
  %v5810 = vpack.c.b16 %v4370, %v4298
  %v5811 = vpack.c.b16 %v4371, %v4299
  %v5812 = vpack.c.b16 %v4372, %v4300
  %v5813 = vpack.c.b16 %v4373, %v4301
  %v5814 = vpack.c.b16 %v4374, %v4302
  %v5815 = vpack.c.b16 %v4375, %v4303
  %v5816 = vpack.c.b16 %v4376, %v4304
  %v5817 = vpack.c.b16 %v4377, %v4305
  %v5818 = vpack.c.b16 %v4378, %v4306
  %v5819 = vpack.c.b16 %v4379, %v4307
  %v5820 = vpack.c.b16 %v4380, %v4308
  %v5821 = vpack.c.b16 %v4381, %v4309
  %v5822 = vpack.c.b16 %v4382, %v4310
  %v5823 = vpack.c.b16 %v4383, %v4311
  %v5824 = vpack.c.b16 %v4384, %v4312
  %v5825 = vpack.c.b16 %v4385, %v4313
  %v5826 = vpack.c.b16 %v4386, %v4314
  %v5827 = vpack.c.b16 %v4387, %v4315
  %v5828 = vpack.c.b16 %v4388, %v4316
  %v5829 = vpack.c.b16 %v4389, %v4317
  %v5830 = vpack.c.b16 %v4390, %v4318
  %v5831 = vpack.c.b16 %v4391, %v4319
  %v5832 = vpack.c.b16 %v4392, %v4320
  %v5833 = vpack.c.b16 %v4393, %v4321
  %v5834 = vpack.c.b16 %v4394, %v4322
  %v5835 = vpack.c.b16 %v4395, %v4323
  %v5836 = vpack.c.b16 %v4396, %v4324
  %v5837 = vpack.c.b16 %v4397, %v4325
  %v5838 = vpack.c.b16 %v4398, %v4326
  %v5839 = vpack.c.b16 %v4399, %v4327
  %v5840 = vpack.c.b16 %v4400, %v4328
  %v5841 = vpack.c.b16 %v4401, %v4329
  %v5842 = vpack.c.b16 %v4402, %v4330
  %v5843 = vpack.c.b16 %v4403, %v4331
  %v5844 = vpack.c.b16 %v4404, %v4332
  %v5845 = vpack.c.b16 %v4405, %v4333
  %v5846 = vpack.c.b16 %v4406, %v4334
  %v5847 = vpack.c.b16 %v4407, %v4335
  %v5848 = vpack.c.b16 %v4408, %v4336
  %v5849 = vpack.c.b16 %v4409, %v4337
  %v5850 = vpack.c.b16 %v4410, %v4338
  %v5851 = vpack.c.b16 %v4411, %v4339
  %v5852 = vpack.c.b16 %v4412, %v4340
  %v5853 = vpack.c.b16 %v4413, %v4341
  %v5854 = vpack.c.b16 %v4414, %v4342
  %v5855 = vpack.c.b16 %v4415, %v4343
  %v5856 = vpack.c.b16 %v4416, %v4344
  %v5857 = vpack.c.b16 %v4417, %v4345
  %v5858 = vpack.c.b16 %v4418, %v4346
  %v5859 = vpack.c.b16 %v4419, %v4347
  %v5860 = vpack.c.b16 %v4420, %v4348
  %v5861 = vpack.c.b16 %v4421, %v4349
  %v5862 = vpack.c.b16 %v4422, %v4350
  %v5863 = vpack.c.b16 %v4423, %v4351
  %v5864 = vpack.c.b16 %v4424, %v4352
  %v5865 = vpack.c.b16 %v4425, %v4353
  %v5866 = vpack.c.b16 %v4426, %v4354
  %v5867 = vpack.c.b16 %v4427, %v4355
  %v5868 = vpack.c.b16 %v4428, %v4356
  %v5869 = vpack.c.b16 %v4429, %v4357
  %v5870 = vpack.c.b16 %v4430, %v4358
  %v5871 = vpack.c.b16 %v4431, %v4359
  %v5872 = vpack.c.b16 %v4432, %v4360
  %v5873 = vpack.c.b16 %v4433, %v4361
  %v5874 = vpack.c.b16 %v4434, %v4362
  %v5875 = vpack.c.b16 %v4435, %v4363
  %v5876 = vpack.c.b16 %v4436, %v4364
  %v5877 = vpack.c.b16 %v4437, %v4365
  %v5878 = vpack.c.b16 %v4510, %v4438
  %v5879 = vpack.c.b16 %v4511, %v4439
  %v5880 = vpack.c.b16 %v4512, %v4440
  %v5881 = vpack.c.b16 %v4513, %v4441
  %v5882 = vpack.c.b16 %v4514, %v4442
  %v5883 = vpack.c.b16 %v4515, %v4443
  %v5884 = vpack.c.b16 %v4516, %v4444
  %v5885 = vpack.c.b16 %v4517, %v4445
  %v5886 = vpack.c.b16 %v4518, %v4446
  %v5887 = vpack.c.b16 %v4519, %v4447
  %v5888 = vpack.c.b16 %v4520, %v4448
  %v5889 = vpack.c.b16 %v4521, %v4449
  %v5890 = vpack.c.b16 %v4522, %v4450
  %v5891 = vpack.c.b16 %v4523, %v4451
  %v5892 = vpack.c.b16 %v4524, %v4452
  %v5893 = vpack.c.b16 %v4525, %v4453
  %v5894 = vpack.c.b16 %v4526, %v4454
  %v5895 = vpack.c.b16 %v4527, %v4455
  %v5896 = vpack.c.b16 %v4528, %v4456
  %v5897 = vpack.c.b16 %v4529, %v4457
  %v5898 = vpack.c.b16 %v4530, %v4458
  %v5899 = vpack.c.b16 %v4531, %v4459
  %v5900 = vpack.c.b16 %v4532, %v4460
  %v5901 = vpack.c.b16 %v4533, %v4461
  %v5902 = vpack.c.b16 %v4534, %v4462
  %v5903 = vpack.c.b16 %v4535, %v4463
  %v5904 = vpack.c.b16 %v4536, %v4464
  %v5905 = vpack.c.b16 %v4537, %v4465
  %v5906 = vpack.c.b16 %v4538, %v4466
  %v5907 = vpack.c.b16 %v4539, %v4467
  %v5908 = vpack.c.b16 %v4540, %v4468
  %v5909 = vpack.c.b16 %v4541, %v4469
  %v5910 = vpack.c.b16 %v4542, %v4470
  %v5911 = vpack.c.b16 %v4543, %v4471
  %v5912 = vpack.c.b16 %v4544, %v4472
  %v5913 = vpack.c.b16 %v4545, %v4473
  %v5914 = vpack.c.b16 %v4546, %v4474
  %v5915 = vpack.c.b16 %v4547, %v4475
  %v5916 = vpack.c.b16 %v4548, %v4476
  %v5917 = vpack.c.b16 %v4549, %v4477
  %v5918 = vpack.c.b16 %v4550, %v4478
  %v5919 = vpack.c.b16 %v4551, %v4479
  %v5920 = vpack.c.b16 %v4552, %v4480
  %v5921 = vpack.c.b16 %v4553, %v4481
  %v5922 = vpack.c.b16 %v4554, %v4482
  %v5923 = vpack.c.b16 %v4555, %v4483
  %v5924 = vpack.c.b16 %v4556, %v4484
  %v5925 = vpack.c.b16 %v4557, %v4485
  %v5926 = vpack.c.b16 %v4558, %v4486
  %v5927 = vpack.c.b16 %v4559, %v4487
  %v5928 = vpack.c.b16 %v4560, %v4488
  %v5929 = vpack.c.b16 %v4561, %v4489
  %v5930 = vpack.c.b16 %v4562, %v4490
  %v5931 = vpack.c.b16 %v4563, %v4491
  %v5932 = vpack.c.b16 %v4564, %v4492
  %v5933 = vpack.c.b16 %v4565, %v4493
  %v5934 = vpack.c.b16 %v4566, %v4494
  %v5935 = vpack.c.b16 %v4567, %v4495
  %v5936 = vpack.c.b16 %v4568, %v4496
  %v5937 = vpack.c.b16 %v4569, %v4497
  %v5938 = vpack.c.b16 %v4570, %v4498
  %v5939 = vpack.c.b16 %v4571, %v4499
  %v5940 = vpack.c.b16 %v4572, %v4500
  %v5941 = vpack.c.b16 %v4573, %v4501
  %v5942 = vpack.c.b16 %v4574, %v4502
  %v5943 = vpack.c.b16 %v4575, %v4503
  %v5944 = vpack.c.b16 %v4576, %v4504
  %v5945 = vpack.c.b16 %v4577, %v4505
  %v5946 = vpack.c.b16 %v4578, %v4506
  %v5947 = vpack.c.b16 %v4579, %v4507
  %v5948 = vpack.c.b16 %v4580, %v4508
  %v5949 = vpack.c.b16 %v4581, %v4509
  %v5950 = vpack.c.b16 %v4654, %v4582
  %v5951 = vpack.c.b16 %v4655, %v4583
  %v5952 = vpack.c.b16 %v4656, %v4584
  %v5953 = vpack.c.b16 %v4657, %v4585
  %v5954 = vpack.c.b16 %v4658, %v4586
  %v5955 = vpack.c.b16 %v4659, %v4587
  %v5956 = vpack.c.b16 %v4660, %v4588
  %v5957 = vpack.c.b16 %v4661, %v4589
  %v5958 = vpack.c.b16 %v4662, %v4590
  %v5959 = vpack.c.b16 %v4663, %v4591
  %v5960 = vpack.c.b16 %v4664, %v4592
  %v5961 = vpack.c.b16 %v4665, %v4593
  %v5962 = vpack.c.b16 %v4666, %v4594
  %v5963 = vpack.c.b16 %v4667, %v4595
  %v5964 = vpack.c.b16 %v4668, %v4596
  %v5965 = vpack.c.b16 %v4669, %v4597
  %v5966 = vpack.c.b16 %v4670, %v4598
  %v5967 = vpack.c.b16 %v4671, %v4599
  %v5968 = vpack.c.b16 %v4672, %v4600
  %v5969 = vpack.c.b16 %v4673, %v4601
  %v5970 = vpack.c.b16 %v4674, %v4602
  %v5971 = vpack.c.b16 %v4675, %v4603
  %v5972 = vpack.c.b16 %v4676, %v4604
  %v5973 = vpack.c.b16 %v4677, %v4605
  %v5974 = vpack.c.b16 %v4678, %v4606
  %v5975 = vpack.c.b16 %v4679, %v4607
  %v5976 = vpack.c.b16 %v4680, %v4608
  %v5977 = vpack.c.b16 %v4681, %v4609
  %v5978 = vpack.c.b16 %v4682, %v4610
  %v5979 = vpack.c.b16 %v4683, %v4611
  %v5980 = vpack.c.b16 %v4684, %v4612
  %v5981 = vpack.c.b16 %v4685, %v4613
  %v5982 = vpack.c.b16 %v4686, %v4614
  %v5983 = vpack.c.b16 %v4687, %v4615
  %v5984 = vpack.c.b16 %v4688, %v4616
  %v5985 = vpack.c.b16 %v4689, %v4617
  %v5986 = vpack.c.b16 %v4690, %v4618
  %v5987 = vpack.c.b16 %v4691, %v4619
  %v5988 = vpack.c.b16 %v4692, %v4620
  %v5989 = vpack.c.b16 %v4693, %v4621
  %v5990 = vpack.c.b16 %v4694, %v4622
  %v5991 = vpack.c.b16 %v4695, %v4623
  %v5992 = vpack.c.b16 %v4696, %v4624
  %v5993 = vpack.c.b16 %v4697, %v4625
  %v5994 = vpack.c.b16 %v4698, %v4626
  %v5995 = vpack.c.b16 %v4699, %v4627
  %v5996 = vpack.c.b16 %v4700, %v4628
  %v5997 = vpack.c.b16 %v4701, %v4629
  %v5998 = vpack.c.b16 %v4702, %v4630
  %v5999 = vpack.c.b16 %v4703, %v4631
  %v6000 = vpack.c.b16 %v4704, %v4632
  %v6001 = vpack.c.b16 %v4705, %v4633
  %v6002 = vpack.c.b16 %v4706, %v4634
  %v6003 = vpack.c.b16 %v4707, %v4635
  %v6004 = vpack.c.b16 %v4708, %v4636
  %v6005 = vpack.c.b16 %v4709, %v4637
  %v6006 = vpack.c.b16 %v4710, %v4638
  %v6007 = vpack.c.b16 %v4711, %v4639
  %v6008 = vpack.c.b16 %v4712, %v4640
  %v6009 = vpack.c.b16 %v4713, %v4641
  %v6010 = vpack.c.b16 %v4714, %v4642
  %v6011 = vpack.c.b16 %v4715, %v4643
  %v6012 = vpack.c.b16 %v4716, %v4644
  %v6013 = vpack.c.b16 %v4717, %v4645
  %v6014 = vpack.c.b16 %v4718, %v4646
  %v6015 = vpack.c.b16 %v4719, %v4647
  %v6016 = vpack.c.b16 %v4720, %v4648
  %v6017 = vpack.c.b16 %v4721, %v4649
  %v6018 = vpack.c.b16 %v4722, %v4650
  %v6019 = vpack.c.b16 %v4723, %v4651
  %v6020 = vpack.c.b16 %v4724, %v4652
  %v6021 = vpack.c.b16 %v4725, %v4653
  %v6022 = vpack.c.b16 %v4798, %v4726
  %v6023 = vpack.c.b16 %v4799, %v4727
  %v6024 = vpack.c.b16 %v4800, %v4728
  %v6025 = vpack.c.b16 %v4801, %v4729
  %v6026 = vpack.c.b16 %v4802, %v4730
  %v6027 = vpack.c.b16 %v4803, %v4731
  %v6028 = vpack.c.b16 %v4804, %v4732
  %v6029 = vpack.c.b16 %v4805, %v4733
  %v6030 = vpack.c.b16 %v4806, %v4734
  %v6031 = vpack.c.b16 %v4807, %v4735
  %v6032 = vpack.c.b16 %v4808, %v4736
  %v6033 = vpack.c.b16 %v4809, %v4737
  %v6034 = vpack.c.b16 %v4810, %v4738
  %v6035 = vpack.c.b16 %v4811, %v4739
  %v6036 = vpack.c.b16 %v4812, %v4740
  %v6037 = vpack.c.b16 %v4813, %v4741
  %v6038 = vpack.c.b16 %v4814, %v4742
  %v6039 = vpack.c.b16 %v4815, %v4743
  %v6040 = vpack.c.b16 %v4816, %v4744
  %v6041 = vpack.c.b16 %v4817, %v4745
  %v6042 = vpack.c.b16 %v4818, %v4746
  %v6043 = vpack.c.b16 %v4819, %v4747
  %v6044 = vpack.c.b16 %v4820, %v4748
  %v6045 = vpack.c.b16 %v4821, %v4749
  %v6046 = vpack.c.b16 %v4822, %v4750
  %v6047 = vpack.c.b16 %v4823, %v4751
  %v6048 = vpack.c.b16 %v4824, %v4752
  %v6049 = vpack.c.b16 %v4825, %v4753
  %v6050 = vpack.c.b16 %v4826, %v4754
  %v6051 = vpack.c.b16 %v4827, %v4755
  %v6052 = vpack.c.b16 %v4828, %v4756
  %v6053 = vpack.c.b16 %v4829, %v4757
  %v6054 = vpack.c.b16 %v4830, %v4758
  %v6055 = vpack.c.b16 %v4831, %v4759
  %v6056 = vpack.c.b16 %v4832, %v4760
  %v6057 = vpack.c.b16 %v4833, %v4761
  %v6058 = vpack.c.b16 %v4834, %v4762
  %v6059 = vpack.c.b16 %v4835, %v4763
  %v6060 = vpack.c.b16 %v4836, %v4764
  %v6061 = vpack.c.b16 %v4837, %v4765
  %v6062 = vpack.c.b16 %v4838, %v4766
  %v6063 = vpack.c.b16 %v4839, %v4767
  %v6064 = vpack.c.b16 %v4840, %v4768
  %v6065 = vpack.c.b16 %v4841, %v4769
  %v6066 = vpack.c.b16 %v4842, %v4770
  %v6067 = vpack.c.b16 %v4843, %v4771
  %v6068 = vpack.c.b16 %v4844, %v4772
  %v6069 = vpack.c.b16 %v4845, %v4773
  %v6070 = vpack.c.b16 %v4846, %v4774
  %v6071 = vpack.c.b16 %v4847, %v4775
  %v6072 = vpack.c.b16 %v4848, %v4776
  %v6073 = vpack.c.b16 %v4849, %v4777
  %v6074 = vpack.c.b16 %v4850, %v4778
  %v6075 = vpack.c.b16 %v4851, %v4779
  %v6076 = vpack.c.b16 %v4852, %v4780
  %v6077 = vpack.c.b16 %v4853, %v4781
  %v6078 = vpack.c.b16 %v4854, %v4782
  %v6079 = vpack.c.b16 %v4855, %v4783
  %v6080 = vpack.c.b16 %v4856, %v4784
  %v6081 = vpack.c.b16 %v4857, %v4785
  %v6082 = vpack.c.b16 %v4858, %v4786
  %v6083 = vpack.c.b16 %v4859, %v4787
  %v6084 = vpack.c.b16 %v4860, %v4788
  %v6085 = vpack.c.b16 %v4861, %v4789
  %v6086 = vpack.c.b16 %v4862, %v4790
  %v6087 = vpack.c.b16 %v4863, %v4791
  %v6088 = vpack.c.b16 %v4864, %v4792
  %v6089 = vpack.c.b16 %v4865, %v4793
  %v6090 = vpack.c.b16 %v4866, %v4794
  %v6091 = vpack.c.b16 %v4867, %v4795
  %v6092 = vpack.c.b16 %v4868, %v4796
  %v6093 = vpack.c.b16 %v4869, %v4797
  %v6094 = vpack.c.b16 %v4942, %v4870
  %v6095 = vpack.c.b16 %v4943, %v4871
  %v6096 = vpack.c.b16 %v4944, %v4872
  %v6097 = vpack.c.b16 %v4945, %v4873
  %v6098 = vpack.c.b16 %v4946, %v4874
  %v6099 = vpack.c.b16 %v4947, %v4875
  %v6100 = vpack.c.b16 %v4948, %v4876
  %v6101 = vpack.c.b16 %v4949, %v4877
  %v6102 = vpack.c.b16 %v4950, %v4878
  %v6103 = vpack.c.b16 %v4951, %v4879
  %v6104 = vpack.c.b16 %v4952, %v4880
  %v6105 = vpack.c.b16 %v4953, %v4881
  %v6106 = vpack.c.b16 %v4954, %v4882
  %v6107 = vpack.c.b16 %v4955, %v4883
  %v6108 = vpack.c.b16 %v4956, %v4884
  %v6109 = vpack.c.b16 %v4957, %v4885
  %v6110 = vpack.c.b16 %v4958, %v4886
  %v6111 = vpack.c.b16 %v4959, %v4887
  %v6112 = vpack.c.b16 %v4960, %v4888
  %v6113 = vpack.c.b16 %v4961, %v4889
  %v6114 = vpack.c.b16 %v4962, %v4890
  %v6115 = vpack.c.b16 %v4963, %v4891
  %v6116 = vpack.c.b16 %v4964, %v4892
  %v6117 = vpack.c.b16 %v4965, %v4893
  %v6118 = vpack.c.b16 %v4966, %v4894
  %v6119 = vpack.c.b16 %v4967, %v4895
  %v6120 = vpack.c.b16 %v4968, %v4896
  %v6121 = vpack.c.b16 %v4969, %v4897
  %v6122 = vpack.c.b16 %v4970, %v4898
  %v6123 = vpack.c.b16 %v4971, %v4899
  %v6124 = vpack.c.b16 %v4972, %v4900
  %v6125 = vpack.c.b16 %v4973, %v4901
  %v6126 = vpack.c.b16 %v4974, %v4902
  %v6127 = vpack.c.b16 %v4975, %v4903
  %v6128 = vpack.c.b16 %v4976, %v4904
  %v6129 = vpack.c.b16 %v4977, %v4905
  %v6130 = vpack.c.b16 %v4978, %v4906
  %v6131 = vpack.c.b16 %v4979, %v4907
  %v6132 = vpack.c.b16 %v4980, %v4908
  %v6133 = vpack.c.b16 %v4981, %v4909
  %v6134 = vpack.c.b16 %v4982, %v4910
  %v6135 = vpack.c.b16 %v4983, %v4911
  %v6136 = vpack.c.b16 %v4984, %v4912
  %v6137 = vpack.c.b16 %v4985, %v4913
  %v6138 = vpack.c.b16 %v4986, %v4914
  %v6139 = vpack.c.b16 %v4987, %v4915
  %v6140 = vpack.c.b16 %v4988, %v4916
  %v6141 = vpack.c.b16 %v4989, %v4917
  %v6142 = vpack.c.b16 %v4990, %v4918
  %v6143 = vpack.c.b16 %v4991, %v4919
  %v6144 = vpack.c.b16 %v4992, %v4920
  %v6145 = vpack.c.b16 %v4993, %v4921
  %v6146 = vpack.c.b16 %v4994, %v4922
  %v6147 = vpack.c.b16 %v4995, %v4923
  %v6148 = vpack.c.b16 %v4996, %v4924
  %v6149 = vpack.c.b16 %v4997, %v4925
  %v6150 = vpack.c.b16 %v4998, %v4926
  %v6151 = vpack.c.b16 %v4999, %v4927
  %v6152 = vpack.c.b16 %v5000, %v4928
  %v6153 = vpack.c.b16 %v5001, %v4929
  %v6154 = vpack.c.b16 %v5002, %v4930
  %v6155 = vpack.c.b16 %v5003, %v4931
  %v6156 = vpack.c.b16 %v5004, %v4932
  %v6157 = vpack.c.b16 %v5005, %v4933
  %v6158 = vpack.c.b16 %v5006, %v4934
  %v6159 = vpack.c.b16 %v5007, %v4935
  %v6160 = vpack.c.b16 %v5008, %v4936
  %v6161 = vpack.c.b16 %v5009, %v4937
  %v6162 = vpack.c.b16 %v5010, %v4938
  %v6163 = vpack.c.b16 %v5011, %v4939
  %v6164 = vpack.c.b16 %v5012, %v4940
  %v6165 = vpack.c.b16 %v5013, %v4941
  %7318 = vmatprep.subr.bf16.mxu0 %v5015
  %7319 = vmatpush1.bf16.msra.mxu0 %v5014
  %7320 = vmatprep.subr.bf16.mxu0 %v5087
  %7321 = vmatpush1.bf16.msra.mxu0 %v5086
  %7322 = vmatprep.subr.bf16.mxu0 %v5159
  %7323 = vmatpush1.bf16.msra.mxu0 %v5158
  %7324 = vmatprep.subr.bf16.mxu0 %v5231
  %7325 = vmatpush1.bf16.msra.mxu0 %v5230
  %7326 = vmatprep.subr.bf16.mxu0 %v5303
  %7327 = vmatpush1.bf16.msra.mxu0 %v5302
  %7328 = vmatprep.subr.bf16.mxu0 %v5375
  %7329 = vmatpush1.bf16.msra.mxu0 %v5374
  %7330 = vmatprep.subr.bf16.mxu0 %v5447
  %7331 = vmatpush1.bf16.msra.mxu0 %v5446
  %7332 = vmatprep.subr.bf16.mxu0 %v5519
  %7333 = vmatpush1.bf16.msra.mxu0 %v5518
  %7334 = vmatprep.subr.bf16.mxu0 %v5591
  %7335 = vmatpush1.bf16.msra.mxu0 %v5590
  %7336 = vmatprep.subr.bf16.mxu0 %v5663
  %7337 = vmatpush1.bf16.msra.mxu0 %v5662
  %7338 = vmatprep.subr.bf16.mxu0 %v5735
  %7339 = vmatpush1.bf16.msra.mxu0 %v5734
  %7340 = vmatprep.subr.bf16.mxu0 %v5807
  %7341 = vmatpush1.bf16.msra.mxu0 %v5806
  %7342 = vmatprep.subr.bf16.mxu0 %v5879
  %7343 = vmatpush1.bf16.msra.mxu0 %v5878
  %7344 = vmatprep.subr.bf16.mxu0 %v5951
  %7345 = vmatpush1.bf16.msra.mxu0 %v5950
  %7346 = vmatprep.subr.bf16.mxu0 %v6023
  %7347 = vmatpush1.bf16.msra.mxu0 %v6022
  %7348 = vmatprep.subr.bf16.mxu0 %v6095
  %7349 = vmatpush1.bf16.msra.mxu0 %v6094
  %7350 = vmatprep.mubr.bf16.mxu0 %v1555
  %7351 = vmatmul.mubr.bf16.gmra.mrb[0].mxu0 %v1554
  %v7352 = vpop.f32.mrb[0].mxu0
  %v7353 = vadd.f32 %v1194, %v7352
  %v7354 = vpop.f32.mrb[0].mxu0
  %v7355 = vadd.f32 %v1198, %v7354
  %v7356 = vpop.f32.mrb[0].mxu0
  %v7357 = vpop.f32.mrb[0].mxu0
  %7358 = vdwg.mxu0
  %7359 = vmatprep.subr.bf16.mxu0 %v5017
  %7360 = vmatpush1.bf16.msra.mxu0 %v5016
  %7361 = vmatprep.subr.bf16.mxu0 %v5089
  %7362 = vmatpush1.bf16.msra.mxu0 %v5088
  %7363 = vmatprep.subr.bf16.mxu0 %v5161
  %7364 = vmatpush1.bf16.msra.mxu0 %v5160
  %7365 = vmatprep.subr.bf16.mxu0 %v5233
  %7366 = vmatpush1.bf16.msra.mxu0 %v5232
  %7367 = vmatprep.subr.bf16.mxu0 %v5305
  %7368 = vmatpush1.bf16.msra.mxu0 %v5304
  %7369 = vmatprep.subr.bf16.mxu0 %v5377
  %7370 = vmatpush1.bf16.msra.mxu0 %v5376
  %7371 = vmatprep.subr.bf16.mxu0 %v5449
  %7372 = vmatpush1.bf16.msra.mxu0 %v5448
  %7373 = vmatprep.subr.bf16.mxu0 %v5521
  %7374 = vmatpush1.bf16.msra.mxu0 %v5520
  %7375 = vmatprep.subr.bf16.mxu0 %v5593
  %7376 = vmatpush1.bf16.msra.mxu0 %v5592
  %7377 = vmatprep.subr.bf16.mxu0 %v5665
  %7378 = vmatpush1.bf16.msra.mxu0 %v5664
  %7379 = vmatprep.subr.bf16.mxu0 %v5737
  %7380 = vmatpush1.bf16.msra.mxu0 %v5736
  %7381 = vmatprep.subr.bf16.mxu0 %v5809
  %7382 = vmatpush1.bf16.msra.mxu0 %v5808
  %7383 = vmatprep.subr.bf16.mxu0 %v5881
  %7384 = vmatpush1.bf16.msra.mxu0 %v5880
  %7385 = vmatprep.subr.bf16.mxu0 %v5953
  %7386 = vmatpush1.bf16.msra.mxu0 %v5952
  %7387 = vmatprep.subr.bf16.mxu0 %v6025
  %7388 = vmatpush1.bf16.msra.mxu0 %v6024
  %7389 = vmatprep.subr.bf16.mxu0 %v6097
  %7390 = vmatpush1.bf16.msra.mxu0 %v6096
  %7391 = vmatprep.mubr.bf16.mxu0 %v1555
  %7392 = vmatmul.mubr.bf16.gmra.mrb[0].mxu0 %v1554
  %v7393 = vpop.f32.mrb[0].mxu0
  %v7394 = vadd.f32 %v1202, %v7393
  %v7395 = vpop.f32.mrb[0].mxu0
  %v7396 = vadd.f32 %v1206, %v7395
  %v7397 = vpop.f32.mrb[0].mxu0
  %v7398 = vpop.f32.mrb[0].mxu0
  %7399 = vdwg.mxu0
  %7400 = vmatprep.subr.bf16.mxu0 %v5019
  %7401 = vmatpush1.bf16.msra.mxu0 %v5018
  %7402 = vmatprep.subr.bf16.mxu0 %v5091
  %7403 = vmatpush1.bf16.msra.mxu0 %v5090
  %7404 = vmatprep.subr.bf16.mxu0 %v5163
  %7405 = vmatpush1.bf16.msra.mxu0 %v5162
  %7406 = vmatprep.subr.bf16.mxu0 %v5235
  %7407 = vmatpush1.bf16.msra.mxu0 %v5234
  %7408 = vmatprep.subr.bf16.mxu0 %v5307
  %7409 = vmatpush1.bf16.msra.mxu0 %v5306
  %7410 = vmatprep.subr.bf16.mxu0 %v5379
  %7411 = vmatpush1.bf16.msra.mxu0 %v5378
  %7412 = vmatprep.subr.bf16.mxu0 %v5451
  %7413 = vmatpush1.bf16.msra.mxu0 %v5450
  %7414 = vmatprep.subr.bf16.mxu0 %v5523
  %7415 = vmatpush1.bf16.msra.mxu0 %v5522
  %7416 = vmatprep.subr.bf16.mxu0 %v5595
  %7417 = vmatpush1.bf16.msra.mxu0 %v5594
  %7418 = vmatprep.subr.bf16.mxu0 %v5667
  %7419 = vmatpush1.bf16.msra.mxu0 %v5666
  %7420 = vmatprep.subr.bf16.mxu0 %v5739
  %7421 = vmatpush1.bf16.msra.mxu0 %v5738
  %7422 = vmatprep.subr.bf16.mxu0 %v5811
  %7423 = vmatpush1.bf16.msra.mxu0 %v5810
  %7424 = vmatprep.subr.bf16.mxu0 %v5883
  %7425 = vmatpush1.bf16.msra.mxu0 %v5882
  %7426 = vmatprep.subr.bf16.mxu0 %v5955
  %7427 = vmatpush1.bf16.msra.mxu0 %v5954
  %7428 = vmatprep.subr.bf16.mxu0 %v6027
  %7429 = vmatpush1.bf16.msra.mxu0 %v6026
  %7430 = vmatprep.subr.bf16.mxu0 %v6099
  %7431 = vmatpush1.bf16.msra.mxu0 %v6098
  %7432 = vmatprep.mubr.bf16.mxu0 %v1555
  %7433 = vmatmul.mubr.bf16.gmra.mrb[0].mxu0 %v1554
  %v7434 = vpop.f32.mrb[0].mxu0
  %v7435 = vadd.f32 %v1210, %v7434
  %v7436 = vpop.f32.mrb[0].mxu0
  %v7437 = vadd.f32 %v1214, %v7436
  %v7438 = vpop.f32.mrb[0].mxu0
  %v7439 = vpop.f32.mrb[0].mxu0
  %7440 = vdwg.mxu0
  %7441 = vmatprep.subr.bf16.mxu0 %v5021
  %7442 = vmatpush1.bf16.msra.mxu0 %v5020
  %7443 = vmatprep.subr.bf16.mxu0 %v5093
  %7444 = vmatpush1.bf16.msra.mxu0 %v5092
  %7445 = vmatprep.subr.bf16.mxu0 %v5165
  %7446 = vmatpush1.bf16.msra.mxu0 %v5164
  %7447 = vmatprep.subr.bf16.mxu0 %v5237
  %7448 = vmatpush1.bf16.msra.mxu0 %v5236
  %7449 = vmatprep.subr.bf16.mxu0 %v5309
  %7450 = vmatpush1.bf16.msra.mxu0 %v5308
  %7451 = vmatprep.subr.bf16.mxu0 %v5381
  %7452 = vmatpush1.bf16.msra.mxu0 %v5380
  %7453 = vmatprep.subr.bf16.mxu0 %v5453
  %7454 = vmatpush1.bf16.msra.mxu0 %v5452
  %7455 = vmatprep.subr.bf16.mxu0 %v5525
  %7456 = vmatpush1.bf16.msra.mxu0 %v5524
  %7457 = vmatprep.subr.bf16.mxu0 %v5597
  %7458 = vmatpush1.bf16.msra.mxu0 %v5596
  %7459 = vmatprep.subr.bf16.mxu0 %v5669
  %7460 = vmatpush1.bf16.msra.mxu0 %v5668
  %7461 = vmatprep.subr.bf16.mxu0 %v5741
  %7462 = vmatpush1.bf16.msra.mxu0 %v5740
  %7463 = vmatprep.subr.bf16.mxu0 %v5813
  %7464 = vmatpush1.bf16.msra.mxu0 %v5812
  %7465 = vmatprep.subr.bf16.mxu0 %v5885
  %7466 = vmatpush1.bf16.msra.mxu0 %v5884
  %7467 = vmatprep.subr.bf16.mxu0 %v5957
  %7468 = vmatpush1.bf16.msra.mxu0 %v5956
  %7469 = vmatprep.subr.bf16.mxu0 %v6029
  %7470 = vmatpush1.bf16.msra.mxu0 %v6028
  %7471 = vmatprep.subr.bf16.mxu0 %v6101
  %7472 = vmatpush1.bf16.msra.mxu0 %v6100
  %7473 = vmatprep.mubr.bf16.mxu0 %v1555
  %7474 = vmatmul.mubr.bf16.gmra.mrb[0].mxu0 %v1554
  %v7475 = vpop.f32.mrb[0].mxu0
  %v7476 = vadd.f32 %v1218, %v7475
  %v7477 = vpop.f32.mrb[0].mxu0
  %v7478 = vadd.f32 %v1222, %v7477
  %v7479 = vpop.f32.mrb[0].mxu0
  %v7480 = vpop.f32.mrb[0].mxu0
  %7481 = vdwg.mxu0
  %7482 = vmatprep.subr.bf16.mxu0 %v5023
  %7483 = vmatpush1.bf16.msra.mxu0 %v5022
  %7484 = vmatprep.subr.bf16.mxu0 %v5095
  %7485 = vmatpush1.bf16.msra.mxu0 %v5094
  %7486 = vmatprep.subr.bf16.mxu0 %v5167
  %7487 = vmatpush1.bf16.msra.mxu0 %v5166
  %7488 = vmatprep.subr.bf16.mxu0 %v5239
  %7489 = vmatpush1.bf16.msra.mxu0 %v5238
  %7490 = vmatprep.subr.bf16.mxu0 %v5311
  %7491 = vmatpush1.bf16.msra.mxu0 %v5310
  %7492 = vmatprep.subr.bf16.mxu0 %v5383
  %7493 = vmatpush1.bf16.msra.mxu0 %v5382
  %7494 = vmatprep.subr.bf16.mxu0 %v5455
  %7495 = vmatpush1.bf16.msra.mxu0 %v5454
  %7496 = vmatprep.subr.bf16.mxu0 %v5527
  %7497 = vmatpush1.bf16.msra.mxu0 %v5526
  %7498 = vmatprep.subr.bf16.mxu0 %v5599
  %7499 = vmatpush1.bf16.msra.mxu0 %v5598
  %7500 = vmatprep.subr.bf16.mxu0 %v5671
  %7501 = vmatpush1.bf16.msra.mxu0 %v5670
  %7502 = vmatprep.subr.bf16.mxu0 %v5743
  %7503 = vmatpush1.bf16.msra.mxu0 %v5742
  %7504 = vmatprep.subr.bf16.mxu0 %v5815
  %7505 = vmatpush1.bf16.msra.mxu0 %v5814
  %7506 = vmatprep.subr.bf16.mxu0 %v5887
  %7507 = vmatpush1.bf16.msra.mxu0 %v5886
  %7508 = vmatprep.subr.bf16.mxu0 %v5959
  %7509 = vmatpush1.bf16.msra.mxu0 %v5958
  %7510 = vmatprep.subr.bf16.mxu0 %v6031
  %7511 = vmatpush1.bf16.msra.mxu0 %v6030
  %7512 = vmatprep.subr.bf16.mxu0 %v6103
  %7513 = vmatpush1.bf16.msra.mxu0 %v6102
  %7514 = vmatprep.mubr.bf16.mxu0 %v1555
  %7515 = vmatmul.mubr.bf16.gmra.mrb[0].mxu0 %v1554
  %v7516 = vpop.f32.mrb[0].mxu0
  %v7517 = vadd.f32 %v1226, %v7516
  %v7518 = vpop.f32.mrb[0].mxu0
  %v7519 = vadd.f32 %v1230, %v7518
  %v7520 = vpop.f32.mrb[0].mxu0
  %v7521 = vpop.f32.mrb[0].mxu0
  %7522 = vdwg.mxu0
  %7523 = vmatprep.subr.bf16.mxu0 %v5025
  %7524 = vmatpush1.bf16.msra.mxu0 %v5024
  %7525 = vmatprep.subr.bf16.mxu0 %v5097
  %7526 = vmatpush1.bf16.msra.mxu0 %v5096
  %7527 = vmatprep.subr.bf16.mxu0 %v5169
  %7528 = vmatpush1.bf16.msra.mxu0 %v5168
  %7529 = vmatprep.subr.bf16.mxu0 %v5241
  %7530 = vmatpush1.bf16.msra.mxu0 %v5240
  %7531 = vmatprep.subr.bf16.mxu0 %v5313
  %7532 = vmatpush1.bf16.msra.mxu0 %v5312
  %7533 = vmatprep.subr.bf16.mxu0 %v5385
  %7534 = vmatpush1.bf16.msra.mxu0 %v5384
  %7535 = vmatprep.subr.bf16.mxu0 %v5457
  %7536 = vmatpush1.bf16.msra.mxu0 %v5456
  %7537 = vmatprep.subr.bf16.mxu0 %v5529
  %7538 = vmatpush1.bf16.msra.mxu0 %v5528
  %7539 = vmatprep.subr.bf16.mxu0 %v5601
  %7540 = vmatpush1.bf16.msra.mxu0 %v5600
  %7541 = vmatprep.subr.bf16.mxu0 %v5673
  %7542 = vmatpush1.bf16.msra.mxu0 %v5672
  %7543 = vmatprep.subr.bf16.mxu0 %v5745
  %7544 = vmatpush1.bf16.msra.mxu0 %v5744
  %7545 = vmatprep.subr.bf16.mxu0 %v5817
  %7546 = vmatpush1.bf16.msra.mxu0 %v5816
  %7547 = vmatprep.subr.bf16.mxu0 %v5889
  %7548 = vmatpush1.bf16.msra.mxu0 %v5888
  %7549 = vmatprep.subr.bf16.mxu0 %v5961
  %7550 = vmatpush1.bf16.msra.mxu0 %v5960
  %7551 = vmatprep.subr.bf16.mxu0 %v6033
  %7552 = vmatpush1.bf16.msra.mxu0 %v6032
  %7553 = vmatprep.subr.bf16.mxu0 %v6105
  %7554 = vmatpush1.bf16.msra.mxu0 %v6104
  %7555 = vmatprep.mubr.bf16.mxu0 %v1555
  %7556 = vmatmul.mubr.bf16.gmra.mrb[0].mxu0 %v1554
  %v7557 = vpop.f32.mrb[0].mxu0
  %v7558 = vadd.f32 %v1234, %v7557
  %v7559 = vpop.f32.mrb[0].mxu0
  %v7560 = vadd.f32 %v1238, %v7559
  %v7561 = vpop.f32.mrb[0].mxu0
  %v7562 = vpop.f32.mrb[0].mxu0
  %7563 = vdwg.mxu0
  %7564 = vmatprep.subr.bf16.mxu0 %v5027
  %7565 = vmatpush1.bf16.msra.mxu0 %v5026
  %7566 = vmatprep.subr.bf16.mxu0 %v5099
  %7567 = vmatpush1.bf16.msra.mxu0 %v5098
  %7568 = vmatprep.subr.bf16.mxu0 %v5171
  %7569 = vmatpush1.bf16.msra.mxu0 %v5170
  %7570 = vmatprep.subr.bf16.mxu0 %v5243
  %7571 = vmatpush1.bf16.msra.mxu0 %v5242
  %7572 = vmatprep.subr.bf16.mxu0 %v5315
  %7573 = vmatpush1.bf16.msra.mxu0 %v5314
  %7574 = vmatprep.subr.bf16.mxu0 %v5387
  %7575 = vmatpush1.bf16.msra.mxu0 %v5386
  %7576 = vmatprep.subr.bf16.mxu0 %v5459
  %7577 = vmatpush1.bf16.msra.mxu0 %v5458
  %7578 = vmatprep.subr.bf16.mxu0 %v5531
  %7579 = vmatpush1.bf16.msra.mxu0 %v5530
  %7580 = vmatprep.subr.bf16.mxu0 %v5603
  %7581 = vmatpush1.bf16.msra.mxu0 %v5602
  %7582 = vmatprep.subr.bf16.mxu0 %v5675
  %7583 = vmatpush1.bf16.msra.mxu0 %v5674
  %7584 = vmatprep.subr.bf16.mxu0 %v5747
  %7585 = vmatpush1.bf16.msra.mxu0 %v5746
  %7586 = vmatprep.subr.bf16.mxu0 %v5819
  %7587 = vmatpush1.bf16.msra.mxu0 %v5818
  %7588 = vmatprep.subr.bf16.mxu0 %v5891
  %7589 = vmatpush1.bf16.msra.mxu0 %v5890
  %7590 = vmatprep.subr.bf16.mxu0 %v5963
  %7591 = vmatpush1.bf16.msra.mxu0 %v5962
  %7592 = vmatprep.subr.bf16.mxu0 %v6035
  %7593 = vmatpush1.bf16.msra.mxu0 %v6034
  %7594 = vmatprep.subr.bf16.mxu0 %v6107
  %7595 = vmatpush1.bf16.msra.mxu0 %v6106
  %7596 = vmatprep.mubr.bf16.mxu0 %v1555
  %7597 = vmatmul.mubr.bf16.gmra.mrb[0].mxu0 %v1554
  %v7598 = vpop.f32.mrb[0].mxu0
  %v7599 = vadd.f32 %v1242, %v7598
  %v7600 = vpop.f32.mrb[0].mxu0
  %v7601 = vadd.f32 %v1246, %v7600
  %v7602 = vpop.f32.mrb[0].mxu0
  %v7603 = vpop.f32.mrb[0].mxu0
  %7604 = vdwg.mxu0
  %7605 = vmatprep.subr.bf16.mxu0 %v5029
  %7606 = vmatpush1.bf16.msra.mxu0 %v5028
  %7607 = vmatprep.subr.bf16.mxu0 %v5101
  %7608 = vmatpush1.bf16.msra.mxu0 %v5100
  %7609 = vmatprep.subr.bf16.mxu0 %v5173
  %7610 = vmatpush1.bf16.msra.mxu0 %v5172
  %7611 = vmatprep.subr.bf16.mxu0 %v5245
  %7612 = vmatpush1.bf16.msra.mxu0 %v5244
  %7613 = vmatprep.subr.bf16.mxu0 %v5317
  %7614 = vmatpush1.bf16.msra.mxu0 %v5316
  %7615 = vmatprep.subr.bf16.mxu0 %v5389
  %7616 = vmatpush1.bf16.msra.mxu0 %v5388
  %7617 = vmatprep.subr.bf16.mxu0 %v5461
  %7618 = vmatpush1.bf16.msra.mxu0 %v5460
  %7619 = vmatprep.subr.bf16.mxu0 %v5533
  %7620 = vmatpush1.bf16.msra.mxu0 %v5532
  %7621 = vmatprep.subr.bf16.mxu0 %v5605
  %7622 = vmatpush1.bf16.msra.mxu0 %v5604
  %7623 = vmatprep.subr.bf16.mxu0 %v5677
  %7624 = vmatpush1.bf16.msra.mxu0 %v5676
  %7625 = vmatprep.subr.bf16.mxu0 %v5749
  %7626 = vmatpush1.bf16.msra.mxu0 %v5748
  %7627 = vmatprep.subr.bf16.mxu0 %v5821
  %7628 = vmatpush1.bf16.msra.mxu0 %v5820
  %7629 = vmatprep.subr.bf16.mxu0 %v5893
  %7630 = vmatpush1.bf16.msra.mxu0 %v5892
  %7631 = vmatprep.subr.bf16.mxu0 %v5965
  %7632 = vmatpush1.bf16.msra.mxu0 %v5964
  %7633 = vmatprep.subr.bf16.mxu0 %v6037
  %7634 = vmatpush1.bf16.msra.mxu0 %v6036
  %7635 = vmatprep.subr.bf16.mxu0 %v6109
  %7636 = vmatpush1.bf16.msra.mxu0 %v6108
  %7637 = vmatprep.mubr.bf16.mxu0 %v1555
  %7638 = vmatmul.mubr.bf16.gmra.mrb[0].mxu0 %v1554
  %v7639 = vpop.f32.mrb[0].mxu0
  %v7640 = vadd.f32 %v1250, %v7639
  %v7641 = vpop.f32.mrb[0].mxu0
  %v7642 = vadd.f32 %v1254, %v7641
  %v7643 = vpop.f32.mrb[0].mxu0
  %v7644 = vpop.f32.mrb[0].mxu0
  %7645 = vdwg.mxu0
  %7646 = vmatprep.subr.bf16.mxu0 %v5031
  %7647 = vmatpush1.bf16.msra.mxu0 %v5030
  %7648 = vmatprep.subr.bf16.mxu0 %v5103
  %7649 = vmatpush1.bf16.msra.mxu0 %v5102
  %7650 = vmatprep.subr.bf16.mxu0 %v5175
  %7651 = vmatpush1.bf16.msra.mxu0 %v5174
  %7652 = vmatprep.subr.bf16.mxu0 %v5247
  %7653 = vmatpush1.bf16.msra.mxu0 %v5246
  %7654 = vmatprep.subr.bf16.mxu0 %v5319
  %7655 = vmatpush1.bf16.msra.mxu0 %v5318
  %7656 = vmatprep.subr.bf16.mxu0 %v5391
  %7657 = vmatpush1.bf16.msra.mxu0 %v5390
  %7658 = vmatprep.subr.bf16.mxu0 %v5463
  %7659 = vmatpush1.bf16.msra.mxu0 %v5462
  %7660 = vmatprep.subr.bf16.mxu0 %v5535
  %7661 = vmatpush1.bf16.msra.mxu0 %v5534
  %7662 = vmatprep.subr.bf16.mxu0 %v5607
  %7663 = vmatpush1.bf16.msra.mxu0 %v5606
  %7664 = vmatprep.subr.bf16.mxu0 %v5679
  %7665 = vmatpush1.bf16.msra.mxu0 %v5678
  %7666 = vmatprep.subr.bf16.mxu0 %v5751
  %7667 = vmatpush1.bf16.msra.mxu0 %v5750
  %7668 = vmatprep.subr.bf16.mxu0 %v5823
  %7669 = vmatpush1.bf16.msra.mxu0 %v5822
  %7670 = vmatprep.subr.bf16.mxu0 %v5895
  %7671 = vmatpush1.bf16.msra.mxu0 %v5894
  %7672 = vmatprep.subr.bf16.mxu0 %v5967
  %7673 = vmatpush1.bf16.msra.mxu0 %v5966
  %7674 = vmatprep.subr.bf16.mxu0 %v6039
  %7675 = vmatpush1.bf16.msra.mxu0 %v6038
  %7676 = vmatprep.subr.bf16.mxu0 %v6111
  %7677 = vmatpush1.bf16.msra.mxu0 %v6110
  %7678 = vmatprep.mubr.bf16.mxu0 %v1555
  %7679 = vmatmul.mubr.bf16.gmra.mrb[0].mxu0 %v1554
  %v7680 = vpop.f32.mrb[0].mxu0
  %v7681 = vadd.f32 %v1258, %v7680
  %v7682 = vpop.f32.mrb[0].mxu0
  %v7683 = vadd.f32 %v1262, %v7682
  %v7684 = vpop.f32.mrb[0].mxu0
  %v7685 = vpop.f32.mrb[0].mxu0
  %7686 = vdwg.mxu0
  %7687 = vmatprep.subr.bf16.mxu0 %v5033
  %7688 = vmatpush1.bf16.msra.mxu0 %v5032
  %7689 = vmatprep.subr.bf16.mxu0 %v5105
  %7690 = vmatpush1.bf16.msra.mxu0 %v5104
  %7691 = vmatprep.subr.bf16.mxu0 %v5177
  %7692 = vmatpush1.bf16.msra.mxu0 %v5176
  %7693 = vmatprep.subr.bf16.mxu0 %v5249
  %7694 = vmatpush1.bf16.msra.mxu0 %v5248
  %7695 = vmatprep.subr.bf16.mxu0 %v5321
  %7696 = vmatpush1.bf16.msra.mxu0 %v5320
  %7697 = vmatprep.subr.bf16.mxu0 %v5393
  %7698 = vmatpush1.bf16.msra.mxu0 %v5392
  %7699 = vmatprep.subr.bf16.mxu0 %v5465
  %7700 = vmatpush1.bf16.msra.mxu0 %v5464
  %7701 = vmatprep.subr.bf16.mxu0 %v5537
  %7702 = vmatpush1.bf16.msra.mxu0 %v5536
  %7703 = vmatprep.subr.bf16.mxu0 %v5609
  %7704 = vmatpush1.bf16.msra.mxu0 %v5608
  %7705 = vmatprep.subr.bf16.mxu0 %v5681
  %7706 = vmatpush1.bf16.msra.mxu0 %v5680
  %7707 = vmatprep.subr.bf16.mxu0 %v5753
  %7708 = vmatpush1.bf16.msra.mxu0 %v5752
  %7709 = vmatprep.subr.bf16.mxu0 %v5825
  %7710 = vmatpush1.bf16.msra.mxu0 %v5824
  %7711 = vmatprep.subr.bf16.mxu0 %v5897
  %7712 = vmatpush1.bf16.msra.mxu0 %v5896
  %7713 = vmatprep.subr.bf16.mxu0 %v5969
  %7714 = vmatpush1.bf16.msra.mxu0 %v5968
  %7715 = vmatprep.subr.bf16.mxu0 %v6041
  %7716 = vmatpush1.bf16.msra.mxu0 %v6040
  %7717 = vmatprep.subr.bf16.mxu0 %v6113
  %7718 = vmatpush1.bf16.msra.mxu0 %v6112
  %7719 = vmatprep.mubr.bf16.mxu0 %v1555
  %7720 = vmatmul.mubr.bf16.gmra.mrb[0].mxu0 %v1554
  %v7721 = vpop.f32.mrb[0].mxu0
  %v7722 = vadd.f32 %v1266, %v7721
  %v7723 = vpop.f32.mrb[0].mxu0
  %v7724 = vadd.f32 %v1270, %v7723
  %v7725 = vpop.f32.mrb[0].mxu0
  %v7726 = vpop.f32.mrb[0].mxu0
  %7727 = vdwg.mxu0
  %7728 = vmatprep.subr.bf16.mxu0 %v5035
  %7729 = vmatpush1.bf16.msra.mxu0 %v5034
  %7730 = vmatprep.subr.bf16.mxu0 %v5107
  %7731 = vmatpush1.bf16.msra.mxu0 %v5106
  %7732 = vmatprep.subr.bf16.mxu0 %v5179
  %7733 = vmatpush1.bf16.msra.mxu0 %v5178
  %7734 = vmatprep.subr.bf16.mxu0 %v5251
  %7735 = vmatpush1.bf16.msra.mxu0 %v5250
  %7736 = vmatprep.subr.bf16.mxu0 %v5323
  %7737 = vmatpush1.bf16.msra.mxu0 %v5322
  %7738 = vmatprep.subr.bf16.mxu0 %v5395
  %7739 = vmatpush1.bf16.msra.mxu0 %v5394
  %7740 = vmatprep.subr.bf16.mxu0 %v5467
  %7741 = vmatpush1.bf16.msra.mxu0 %v5466
  %7742 = vmatprep.subr.bf16.mxu0 %v5539
  %7743 = vmatpush1.bf16.msra.mxu0 %v5538
  %7744 = vmatprep.subr.bf16.mxu0 %v5611
  %7745 = vmatpush1.bf16.msra.mxu0 %v5610
  %7746 = vmatprep.subr.bf16.mxu0 %v5683
  %7747 = vmatpush1.bf16.msra.mxu0 %v5682
  %7748 = vmatprep.subr.bf16.mxu0 %v5755
  %7749 = vmatpush1.bf16.msra.mxu0 %v5754
  %7750 = vmatprep.subr.bf16.mxu0 %v5827
  %7751 = vmatpush1.bf16.msra.mxu0 %v5826
  %7752 = vmatprep.subr.bf16.mxu0 %v5899
  %7753 = vmatpush1.bf16.msra.mxu0 %v5898
  %7754 = vmatprep.subr.bf16.mxu0 %v5971
  %7755 = vmatpush1.bf16.msra.mxu0 %v5970
  %7756 = vmatprep.subr.bf16.mxu0 %v6043
  %7757 = vmatpush1.bf16.msra.mxu0 %v6042
  %7758 = vmatprep.subr.bf16.mxu0 %v6115
  %7759 = vmatpush1.bf16.msra.mxu0 %v6114
  %7760 = vmatprep.mubr.bf16.mxu0 %v1555
  %7761 = vmatmul.mubr.bf16.gmra.mrb[0].mxu0 %v1554
  %v7762 = vpop.f32.mrb[0].mxu0
  %v7763 = vadd.f32 %v1274, %v7762
  %v7764 = vpop.f32.mrb[0].mxu0
  %v7765 = vadd.f32 %v1278, %v7764
  %v7766 = vpop.f32.mrb[0].mxu0
  %v7767 = vpop.f32.mrb[0].mxu0
  %7768 = vdwg.mxu0
  %7769 = vmatprep.subr.bf16.mxu0 %v5037
  %7770 = vmatpush1.bf16.msra.mxu0 %v5036
  %7771 = vmatprep.subr.bf16.mxu0 %v5109
  %7772 = vmatpush1.bf16.msra.mxu0 %v5108
  %7773 = vmatprep.subr.bf16.mxu0 %v5181
  %7774 = vmatpush1.bf16.msra.mxu0 %v5180
  %7775 = vmatprep.subr.bf16.mxu0 %v5253
  %7776 = vmatpush1.bf16.msra.mxu0 %v5252
  %7777 = vmatprep.subr.bf16.mxu0 %v5325
  %7778 = vmatpush1.bf16.msra.mxu0 %v5324
  %7779 = vmatprep.subr.bf16.mxu0 %v5397
  %7780 = vmatpush1.bf16.msra.mxu0 %v5396
  %7781 = vmatprep.subr.bf16.mxu0 %v5469
  %7782 = vmatpush1.bf16.msra.mxu0 %v5468
  %7783 = vmatprep.subr.bf16.mxu0 %v5541
  %7784 = vmatpush1.bf16.msra.mxu0 %v5540
  %7785 = vmatprep.subr.bf16.mxu0 %v5613
  %7786 = vmatpush1.bf16.msra.mxu0 %v5612
  %7787 = vmatprep.subr.bf16.mxu0 %v5685
  %7788 = vmatpush1.bf16.msra.mxu0 %v5684
  %7789 = vmatprep.subr.bf16.mxu0 %v5757
  %7790 = vmatpush1.bf16.msra.mxu0 %v5756
  %7791 = vmatprep.subr.bf16.mxu0 %v5829
  %7792 = vmatpush1.bf16.msra.mxu0 %v5828
  %7793 = vmatprep.subr.bf16.mxu0 %v5901
  %7794 = vmatpush1.bf16.msra.mxu0 %v5900
  %7795 = vmatprep.subr.bf16.mxu0 %v5973
  %7796 = vmatpush1.bf16.msra.mxu0 %v5972
  %7797 = vmatprep.subr.bf16.mxu0 %v6045
  %7798 = vmatpush1.bf16.msra.mxu0 %v6044
  %7799 = vmatprep.subr.bf16.mxu0 %v6117
  %7800 = vmatpush1.bf16.msra.mxu0 %v6116
  %7801 = vmatprep.mubr.bf16.mxu0 %v1555
  %7802 = vmatmul.mubr.bf16.gmra.mrb[0].mxu0 %v1554
  %v7803 = vpop.f32.mrb[0].mxu0
  %v7804 = vadd.f32 %v1282, %v7803
  %v7805 = vpop.f32.mrb[0].mxu0
  %v7806 = vadd.f32 %v1286, %v7805
  %v7807 = vpop.f32.mrb[0].mxu0
  %v7808 = vpop.f32.mrb[0].mxu0
  %7809 = vdwg.mxu0
  %7810 = vmatprep.subr.bf16.mxu0 %v5039
  %7811 = vmatpush1.bf16.msra.mxu0 %v5038
  %7812 = vmatprep.subr.bf16.mxu0 %v5111
  %7813 = vmatpush1.bf16.msra.mxu0 %v5110
  %7814 = vmatprep.subr.bf16.mxu0 %v5183
  %7815 = vmatpush1.bf16.msra.mxu0 %v5182
  %7816 = vmatprep.subr.bf16.mxu0 %v5255
  %7817 = vmatpush1.bf16.msra.mxu0 %v5254
  %7818 = vmatprep.subr.bf16.mxu0 %v5327
  %7819 = vmatpush1.bf16.msra.mxu0 %v5326
  %7820 = vmatprep.subr.bf16.mxu0 %v5399
  %7821 = vmatpush1.bf16.msra.mxu0 %v5398
  %7822 = vmatprep.subr.bf16.mxu0 %v5471
  %7823 = vmatpush1.bf16.msra.mxu0 %v5470
  %7824 = vmatprep.subr.bf16.mxu0 %v5543
  %7825 = vmatpush1.bf16.msra.mxu0 %v5542
  %7826 = vmatprep.subr.bf16.mxu0 %v5615
  %7827 = vmatpush1.bf16.msra.mxu0 %v5614
  %7828 = vmatprep.subr.bf16.mxu0 %v5687
  %7829 = vmatpush1.bf16.msra.mxu0 %v5686
  %7830 = vmatprep.subr.bf16.mxu0 %v5759
  %7831 = vmatpush1.bf16.msra.mxu0 %v5758
  %7832 = vmatprep.subr.bf16.mxu0 %v5831
  %7833 = vmatpush1.bf16.msra.mxu0 %v5830
  %7834 = vmatprep.subr.bf16.mxu0 %v5903
  %7835 = vmatpush1.bf16.msra.mxu0 %v5902
  %7836 = vmatprep.subr.bf16.mxu0 %v5975
  %7837 = vmatpush1.bf16.msra.mxu0 %v5974
  %7838 = vmatprep.subr.bf16.mxu0 %v6047
  %7839 = vmatpush1.bf16.msra.mxu0 %v6046
  %7840 = vmatprep.subr.bf16.mxu0 %v6119
  %7841 = vmatpush1.bf16.msra.mxu0 %v6118
  %7842 = vmatprep.mubr.bf16.mxu0 %v1555
  %7843 = vmatmul.mubr.bf16.gmra.mrb[0].mxu0 %v1554
  %v7844 = vpop.f32.mrb[0].mxu0
  %v7845 = vadd.f32 %v1290, %v7844
  %v7846 = vpop.f32.mrb[0].mxu0
  %v7847 = vadd.f32 %v1294, %v7846
  %v7848 = vpop.f32.mrb[0].mxu0
  %v7849 = vpop.f32.mrb[0].mxu0
  %7850 = vdwg.mxu0
  %7851 = vmatprep.subr.bf16.mxu0 %v5041
  %7852 = vmatpush1.bf16.msra.mxu0 %v5040
  %7853 = vmatprep.subr.bf16.mxu0 %v5113
  %7854 = vmatpush1.bf16.msra.mxu0 %v5112
  %7855 = vmatprep.subr.bf16.mxu0 %v5185
  %7856 = vmatpush1.bf16.msra.mxu0 %v5184
  %7857 = vmatprep.subr.bf16.mxu0 %v5257
  %7858 = vmatpush1.bf16.msra.mxu0 %v5256
  %7859 = vmatprep.subr.bf16.mxu0 %v5329
  %7860 = vmatpush1.bf16.msra.mxu0 %v5328
  %7861 = vmatprep.subr.bf16.mxu0 %v5401
  %7862 = vmatpush1.bf16.msra.mxu0 %v5400
  %7863 = vmatprep.subr.bf16.mxu0 %v5473
  %7864 = vmatpush1.bf16.msra.mxu0 %v5472
  %7865 = vmatprep.subr.bf16.mxu0 %v5545
  %7866 = vmatpush1.bf16.msra.mxu0 %v5544
  %7867 = vmatprep.subr.bf16.mxu0 %v5617
  %7868 = vmatpush1.bf16.msra.mxu0 %v5616
  %7869 = vmatprep.subr.bf16.mxu0 %v5689
  %7870 = vmatpush1.bf16.msra.mxu0 %v5688
  %7871 = vmatprep.subr.bf16.mxu0 %v5761
  %7872 = vmatpush1.bf16.msra.mxu0 %v5760
  %7873 = vmatprep.subr.bf16.mxu0 %v5833
  %7874 = vmatpush1.bf16.msra.mxu0 %v5832
  %7875 = vmatprep.subr.bf16.mxu0 %v5905
  %7876 = vmatpush1.bf16.msra.mxu0 %v5904
  %7877 = vmatprep.subr.bf16.mxu0 %v5977
  %7878 = vmatpush1.bf16.msra.mxu0 %v5976
  %7879 = vmatprep.subr.bf16.mxu0 %v6049
  %7880 = vmatpush1.bf16.msra.mxu0 %v6048
  %7881 = vmatprep.subr.bf16.mxu0 %v6121
  %7882 = vmatpush1.bf16.msra.mxu0 %v6120
  %7883 = vmatprep.mubr.bf16.mxu0 %v1555
  %7884 = vmatmul.mubr.bf16.gmra.mrb[0].mxu0 %v1554
  %v7885 = vpop.f32.mrb[0].mxu0
  %v7886 = vadd.f32 %v1298, %v7885
  %v7887 = vpop.f32.mrb[0].mxu0
  %v7888 = vadd.f32 %v1302, %v7887
  %v7889 = vpop.f32.mrb[0].mxu0
  %v7890 = vpop.f32.mrb[0].mxu0
  %7891 = vdwg.mxu0
  %7892 = vmatprep.subr.bf16.mxu0 %v5043
  %7893 = vmatpush1.bf16.msra.mxu0 %v5042
  %7894 = vmatprep.subr.bf16.mxu0 %v5115
  %7895 = vmatpush1.bf16.msra.mxu0 %v5114
  %7896 = vmatprep.subr.bf16.mxu0 %v5187
  %7897 = vmatpush1.bf16.msra.mxu0 %v5186
  %7898 = vmatprep.subr.bf16.mxu0 %v5259
  %7899 = vmatpush1.bf16.msra.mxu0 %v5258
  %7900 = vmatprep.subr.bf16.mxu0 %v5331
  %7901 = vmatpush1.bf16.msra.mxu0 %v5330
  %7902 = vmatprep.subr.bf16.mxu0 %v5403
  %7903 = vmatpush1.bf16.msra.mxu0 %v5402
  %7904 = vmatprep.subr.bf16.mxu0 %v5475
  %7905 = vmatpush1.bf16.msra.mxu0 %v5474
  %7906 = vmatprep.subr.bf16.mxu0 %v5547
  %7907 = vmatpush1.bf16.msra.mxu0 %v5546
  %7908 = vmatprep.subr.bf16.mxu0 %v5619
  %7909 = vmatpush1.bf16.msra.mxu0 %v5618
  %7910 = vmatprep.subr.bf16.mxu0 %v5691
  %7911 = vmatpush1.bf16.msra.mxu0 %v5690
  %7912 = vmatprep.subr.bf16.mxu0 %v5763
  %7913 = vmatpush1.bf16.msra.mxu0 %v5762
  %7914 = vmatprep.subr.bf16.mxu0 %v5835
  %7915 = vmatpush1.bf16.msra.mxu0 %v5834
  %7916 = vmatprep.subr.bf16.mxu0 %v5907
  %7917 = vmatpush1.bf16.msra.mxu0 %v5906
  %7918 = vmatprep.subr.bf16.mxu0 %v5979
  %7919 = vmatpush1.bf16.msra.mxu0 %v5978
  %7920 = vmatprep.subr.bf16.mxu0 %v6051
  %7921 = vmatpush1.bf16.msra.mxu0 %v6050
  %7922 = vmatprep.subr.bf16.mxu0 %v6123
  %7923 = vmatpush1.bf16.msra.mxu0 %v6122
  %7924 = vmatprep.mubr.bf16.mxu0 %v1555
  %7925 = vmatmul.mubr.bf16.gmra.mrb[0].mxu0 %v1554
  %v7926 = vpop.f32.mrb[0].mxu0
  %v7927 = vadd.f32 %v1306, %v7926
  %v7928 = vpop.f32.mrb[0].mxu0
  %v7929 = vadd.f32 %v1310, %v7928
  %v7930 = vpop.f32.mrb[0].mxu0
  %v7931 = vpop.f32.mrb[0].mxu0
  %7932 = vdwg.mxu0
  %7933 = vmatprep.subr.bf16.mxu0 %v5045
  %7934 = vmatpush1.bf16.msra.mxu0 %v5044
  %7935 = vmatprep.subr.bf16.mxu0 %v5117
  %7936 = vmatpush1.bf16.msra.mxu0 %v5116
  %7937 = vmatprep.subr.bf16.mxu0 %v5189
  %7938 = vmatpush1.bf16.msra.mxu0 %v5188
  %7939 = vmatprep.subr.bf16.mxu0 %v5261
  %7940 = vmatpush1.bf16.msra.mxu0 %v5260
  %7941 = vmatprep.subr.bf16.mxu0 %v5333
  %7942 = vmatpush1.bf16.msra.mxu0 %v5332
  %7943 = vmatprep.subr.bf16.mxu0 %v5405
  %7944 = vmatpush1.bf16.msra.mxu0 %v5404
  %7945 = vmatprep.subr.bf16.mxu0 %v5477
  %7946 = vmatpush1.bf16.msra.mxu0 %v5476
  %7947 = vmatprep.subr.bf16.mxu0 %v5549
  %7948 = vmatpush1.bf16.msra.mxu0 %v5548
  %7949 = vmatprep.subr.bf16.mxu0 %v5621
  %7950 = vmatpush1.bf16.msra.mxu0 %v5620
  %7951 = vmatprep.subr.bf16.mxu0 %v5693
  %7952 = vmatpush1.bf16.msra.mxu0 %v5692
  %7953 = vmatprep.subr.bf16.mxu0 %v5765
  %7954 = vmatpush1.bf16.msra.mxu0 %v5764
  %7955 = vmatprep.subr.bf16.mxu0 %v5837
  %7956 = vmatpush1.bf16.msra.mxu0 %v5836
  %7957 = vmatprep.subr.bf16.mxu0 %v5909
  %7958 = vmatpush1.bf16.msra.mxu0 %v5908
  %7959 = vmatprep.subr.bf16.mxu0 %v5981
  %7960 = vmatpush1.bf16.msra.mxu0 %v5980
  %7961 = vmatprep.subr.bf16.mxu0 %v6053
  %7962 = vmatpush1.bf16.msra.mxu0 %v6052
  %7963 = vmatprep.subr.bf16.mxu0 %v6125
  %7964 = vmatpush1.bf16.msra.mxu0 %v6124
  %7965 = vmatprep.mubr.bf16.mxu0 %v1555
  %7966 = vmatmul.mubr.bf16.gmra.mrb[0].mxu0 %v1554
  %v7967 = vpop.f32.mrb[0].mxu0
  %v7968 = vadd.f32 %v1314, %v7967
  %v7969 = vpop.f32.mrb[0].mxu0
  %v7970 = vadd.f32 %v1318, %v7969
  %v7971 = vpop.f32.mrb[0].mxu0
  %v7972 = vpop.f32.mrb[0].mxu0
  %7973 = vdwg.mxu0
  %7974 = vmatprep.subr.bf16.mxu0 %v5047
  %7975 = vmatpush1.bf16.msra.mxu0 %v5046
  %7976 = vmatprep.subr.bf16.mxu0 %v5119
  %7977 = vmatpush1.bf16.msra.mxu0 %v5118
  %7978 = vmatprep.subr.bf16.mxu0 %v5191
  %7979 = vmatpush1.bf16.msra.mxu0 %v5190
  %7980 = vmatprep.subr.bf16.mxu0 %v5263
  %7981 = vmatpush1.bf16.msra.mxu0 %v5262
  %7982 = vmatprep.subr.bf16.mxu0 %v5335
  %7983 = vmatpush1.bf16.msra.mxu0 %v5334
  %7984 = vmatprep.subr.bf16.mxu0 %v5407
  %7985 = vmatpush1.bf16.msra.mxu0 %v5406
  %7986 = vmatprep.subr.bf16.mxu0 %v5479
  %7987 = vmatpush1.bf16.msra.mxu0 %v5478
  %7988 = vmatprep.subr.bf16.mxu0 %v5551
  %7989 = vmatpush1.bf16.msra.mxu0 %v5550
  %7990 = vmatprep.subr.bf16.mxu0 %v5623
  %7991 = vmatpush1.bf16.msra.mxu0 %v5622
  %7992 = vmatprep.subr.bf16.mxu0 %v5695
  %7993 = vmatpush1.bf16.msra.mxu0 %v5694
  %7994 = vmatprep.subr.bf16.mxu0 %v5767
  %7995 = vmatpush1.bf16.msra.mxu0 %v5766
  %7996 = vmatprep.subr.bf16.mxu0 %v5839
  %7997 = vmatpush1.bf16.msra.mxu0 %v5838
  %7998 = vmatprep.subr.bf16.mxu0 %v5911
  %7999 = vmatpush1.bf16.msra.mxu0 %v5910
  %8000 = vmatprep.subr.bf16.mxu0 %v5983
  %8001 = vmatpush1.bf16.msra.mxu0 %v5982
  %8002 = vmatprep.subr.bf16.mxu0 %v6055
  %8003 = vmatpush1.bf16.msra.mxu0 %v6054
  %8004 = vmatprep.subr.bf16.mxu0 %v6127
  %8005 = vmatpush1.bf16.msra.mxu0 %v6126
  %8006 = vmatprep.mubr.bf16.mxu0 %v1555
  %8007 = vmatmul.mubr.bf16.gmra.mrb[0].mxu0 %v1554
  %v8008 = vpop.f32.mrb[0].mxu0
  %v8009 = vadd.f32 %v1322, %v8008
  %v8010 = vpop.f32.mrb[0].mxu0
  %v8011 = vadd.f32 %v1326, %v8010
  %v8012 = vpop.f32.mrb[0].mxu0
  %v8013 = vpop.f32.mrb[0].mxu0
  %8014 = vdwg.mxu0
  %8015 = vmatprep.subr.bf16.mxu0 %v5049
  %8016 = vmatpush1.bf16.msra.mxu0 %v5048
  %8017 = vmatprep.subr.bf16.mxu0 %v5121
  %8018 = vmatpush1.bf16.msra.mxu0 %v5120
  %8019 = vmatprep.subr.bf16.mxu0 %v5193
  %8020 = vmatpush1.bf16.msra.mxu0 %v5192
  %8021 = vmatprep.subr.bf16.mxu0 %v5265
  %8022 = vmatpush1.bf16.msra.mxu0 %v5264
  %8023 = vmatprep.subr.bf16.mxu0 %v5337
  %8024 = vmatpush1.bf16.msra.mxu0 %v5336
  %8025 = vmatprep.subr.bf16.mxu0 %v5409
  %8026 = vmatpush1.bf16.msra.mxu0 %v5408
  %8027 = vmatprep.subr.bf16.mxu0 %v5481
  %8028 = vmatpush1.bf16.msra.mxu0 %v5480
  %8029 = vmatprep.subr.bf16.mxu0 %v5553
  %8030 = vmatpush1.bf16.msra.mxu0 %v5552
  %8031 = vmatprep.subr.bf16.mxu0 %v5625
  %8032 = vmatpush1.bf16.msra.mxu0 %v5624
  %8033 = vmatprep.subr.bf16.mxu0 %v5697
  %8034 = vmatpush1.bf16.msra.mxu0 %v5696
  %8035 = vmatprep.subr.bf16.mxu0 %v5769
  %8036 = vmatpush1.bf16.msra.mxu0 %v5768
  %8037 = vmatprep.subr.bf16.mxu0 %v5841
  %8038 = vmatpush1.bf16.msra.mxu0 %v5840
  %8039 = vmatprep.subr.bf16.mxu0 %v5913
  %8040 = vmatpush1.bf16.msra.mxu0 %v5912
  %8041 = vmatprep.subr.bf16.mxu0 %v5985
  %8042 = vmatpush1.bf16.msra.mxu0 %v5984
  %8043 = vmatprep.subr.bf16.mxu0 %v6057
  %8044 = vmatpush1.bf16.msra.mxu0 %v6056
  %8045 = vmatprep.subr.bf16.mxu0 %v6129
  %8046 = vmatpush1.bf16.msra.mxu0 %v6128
  %8047 = vmatprep.mubr.bf16.mxu0 %v1555
  %8048 = vmatmul.mubr.bf16.gmra.mrb[0].mxu0 %v1554
  %v8049 = vpop.f32.mrb[0].mxu0
  %v8050 = vadd.f32 %v1330, %v8049
  %v8051 = vpop.f32.mrb[0].mxu0
  %v8052 = vadd.f32 %v1334, %v8051
  %v8053 = vpop.f32.mrb[0].mxu0
  %v8054 = vpop.f32.mrb[0].mxu0
  %8055 = vdwg.mxu0
  %8056 = vmatprep.subr.bf16.mxu0 %v5051
  %8057 = vmatpush1.bf16.msra.mxu0 %v5050
  %8058 = vmatprep.subr.bf16.mxu0 %v5123
  %8059 = vmatpush1.bf16.msra.mxu0 %v5122
  %8060 = vmatprep.subr.bf16.mxu0 %v5195
  %8061 = vmatpush1.bf16.msra.mxu0 %v5194
  %8062 = vmatprep.subr.bf16.mxu0 %v5267
  %8063 = vmatpush1.bf16.msra.mxu0 %v5266
  %8064 = vmatprep.subr.bf16.mxu0 %v5339
  %8065 = vmatpush1.bf16.msra.mxu0 %v5338
  %8066 = vmatprep.subr.bf16.mxu0 %v5411
  %8067 = vmatpush1.bf16.msra.mxu0 %v5410
  %8068 = vmatprep.subr.bf16.mxu0 %v5483
  %8069 = vmatpush1.bf16.msra.mxu0 %v5482
  %8070 = vmatprep.subr.bf16.mxu0 %v5555
  %8071 = vmatpush1.bf16.msra.mxu0 %v5554
  %8072 = vmatprep.subr.bf16.mxu0 %v5627
  %8073 = vmatpush1.bf16.msra.mxu0 %v5626
  %8074 = vmatprep.subr.bf16.mxu0 %v5699
  %8075 = vmatpush1.bf16.msra.mxu0 %v5698
  %8076 = vmatprep.subr.bf16.mxu0 %v5771
  %8077 = vmatpush1.bf16.msra.mxu0 %v5770
  %8078 = vmatprep.subr.bf16.mxu0 %v5843
  %8079 = vmatpush1.bf16.msra.mxu0 %v5842
  %8080 = vmatprep.subr.bf16.mxu0 %v5915
  %8081 = vmatpush1.bf16.msra.mxu0 %v5914
  %8082 = vmatprep.subr.bf16.mxu0 %v5987
  %8083 = vmatpush1.bf16.msra.mxu0 %v5986
  %8084 = vmatprep.subr.bf16.mxu0 %v6059
  %8085 = vmatpush1.bf16.msra.mxu0 %v6058
  %8086 = vmatprep.subr.bf16.mxu0 %v6131
  %8087 = vmatpush1.bf16.msra.mxu0 %v6130
  %8088 = vmatprep.mubr.bf16.mxu0 %v1555
  %8089 = vmatmul.mubr.bf16.gmra.mrb[0].mxu0 %v1554
  %v8090 = vpop.f32.mrb[0].mxu0
  %v8091 = vadd.f32 %v1338, %v8090
  %v8092 = vpop.f32.mrb[0].mxu0
  %v8093 = vadd.f32 %v1342, %v8092
  %v8094 = vpop.f32.mrb[0].mxu0
  %v8095 = vpop.f32.mrb[0].mxu0
  %8096 = vdwg.mxu0
  %8097 = vmatprep.subr.bf16.mxu0 %v5053
  %8098 = vmatpush1.bf16.msra.mxu0 %v5052
  %8099 = vmatprep.subr.bf16.mxu0 %v5125
  %8100 = vmatpush1.bf16.msra.mxu0 %v5124
  %8101 = vmatprep.subr.bf16.mxu0 %v5197
  %8102 = vmatpush1.bf16.msra.mxu0 %v5196
  %8103 = vmatprep.subr.bf16.mxu0 %v5269
  %8104 = vmatpush1.bf16.msra.mxu0 %v5268
  %8105 = vmatprep.subr.bf16.mxu0 %v5341
  %8106 = vmatpush1.bf16.msra.mxu0 %v5340
  %8107 = vmatprep.subr.bf16.mxu0 %v5413
  %8108 = vmatpush1.bf16.msra.mxu0 %v5412
  %8109 = vmatprep.subr.bf16.mxu0 %v5485
  %8110 = vmatpush1.bf16.msra.mxu0 %v5484
  %8111 = vmatprep.subr.bf16.mxu0 %v5557
  %8112 = vmatpush1.bf16.msra.mxu0 %v5556
  %8113 = vmatprep.subr.bf16.mxu0 %v5629
  %8114 = vmatpush1.bf16.msra.mxu0 %v5628
  %8115 = vmatprep.subr.bf16.mxu0 %v5701
  %8116 = vmatpush1.bf16.msra.mxu0 %v5700
  %8117 = vmatprep.subr.bf16.mxu0 %v5773
  %8118 = vmatpush1.bf16.msra.mxu0 %v5772
  %8119 = vmatprep.subr.bf16.mxu0 %v5845
  %8120 = vmatpush1.bf16.msra.mxu0 %v5844
  %8121 = vmatprep.subr.bf16.mxu0 %v5917
  %8122 = vmatpush1.bf16.msra.mxu0 %v5916
  %8123 = vmatprep.subr.bf16.mxu0 %v5989
  %8124 = vmatpush1.bf16.msra.mxu0 %v5988
  %8125 = vmatprep.subr.bf16.mxu0 %v6061
  %8126 = vmatpush1.bf16.msra.mxu0 %v6060
  %8127 = vmatprep.subr.bf16.mxu0 %v6133
  %8128 = vmatpush1.bf16.msra.mxu0 %v6132
  %8129 = vmatprep.mubr.bf16.mxu0 %v1555
  %8130 = vmatmul.mubr.bf16.gmra.mrb[0].mxu0 %v1554
  %v8131 = vpop.f32.mrb[0].mxu0
  %v8132 = vadd.f32 %v1346, %v8131
  %v8133 = vpop.f32.mrb[0].mxu0
  %v8134 = vadd.f32 %v1350, %v8133
  %v8135 = vpop.f32.mrb[0].mxu0
  %v8136 = vpop.f32.mrb[0].mxu0
  %8137 = vdwg.mxu0
  %8138 = vmatprep.subr.bf16.mxu0 %v5055
  %8139 = vmatpush1.bf16.msra.mxu0 %v5054
  %8140 = vmatprep.subr.bf16.mxu0 %v5127
  %8141 = vmatpush1.bf16.msra.mxu0 %v5126
  %8142 = vmatprep.subr.bf16.mxu0 %v5199
  %8143 = vmatpush1.bf16.msra.mxu0 %v5198
  %8144 = vmatprep.subr.bf16.mxu0 %v5271
  %8145 = vmatpush1.bf16.msra.mxu0 %v5270
  %8146 = vmatprep.subr.bf16.mxu0 %v5343
  %8147 = vmatpush1.bf16.msra.mxu0 %v5342
  %8148 = vmatprep.subr.bf16.mxu0 %v5415
  %8149 = vmatpush1.bf16.msra.mxu0 %v5414
  %8150 = vmatprep.subr.bf16.mxu0 %v5487
  %8151 = vmatpush1.bf16.msra.mxu0 %v5486
  %8152 = vmatprep.subr.bf16.mxu0 %v5559
  %8153 = vmatpush1.bf16.msra.mxu0 %v5558
  %8154 = vmatprep.subr.bf16.mxu0 %v5631
  %8155 = vmatpush1.bf16.msra.mxu0 %v5630
  %8156 = vmatprep.subr.bf16.mxu0 %v5703
  %8157 = vmatpush1.bf16.msra.mxu0 %v5702
  %8158 = vmatprep.subr.bf16.mxu0 %v5775
  %8159 = vmatpush1.bf16.msra.mxu0 %v5774
  %8160 = vmatprep.subr.bf16.mxu0 %v5847
  %8161 = vmatpush1.bf16.msra.mxu0 %v5846
  %8162 = vmatprep.subr.bf16.mxu0 %v5919
  %8163 = vmatpush1.bf16.msra.mxu0 %v5918
  %8164 = vmatprep.subr.bf16.mxu0 %v5991
  %8165 = vmatpush1.bf16.msra.mxu0 %v5990
  %8166 = vmatprep.subr.bf16.mxu0 %v6063
  %8167 = vmatpush1.bf16.msra.mxu0 %v6062
  %8168 = vmatprep.subr.bf16.mxu0 %v6135
  %8169 = vmatpush1.bf16.msra.mxu0 %v6134
  %8170 = vmatprep.mubr.bf16.mxu0 %v1555
  %8171 = vmatmul.mubr.bf16.gmra.mrb[0].mxu0 %v1554
  %v8172 = vpop.f32.mrb[0].mxu0
  %v8173 = vadd.f32 %v1354, %v8172
  %v8174 = vpop.f32.mrb[0].mxu0
  %v8175 = vadd.f32 %v1358, %v8174
  %v8176 = vpop.f32.mrb[0].mxu0
  %v8177 = vpop.f32.mrb[0].mxu0
  %8178 = vdwg.mxu0
  %8179 = vmatprep.subr.bf16.mxu0 %v5057
  %8180 = vmatpush1.bf16.msra.mxu0 %v5056
  %8181 = vmatprep.subr.bf16.mxu0 %v5129
  %8182 = vmatpush1.bf16.msra.mxu0 %v5128
  %8183 = vmatprep.subr.bf16.mxu0 %v5201
  %8184 = vmatpush1.bf16.msra.mxu0 %v5200
  %8185 = vmatprep.subr.bf16.mxu0 %v5273
  %8186 = vmatpush1.bf16.msra.mxu0 %v5272
  %8187 = vmatprep.subr.bf16.mxu0 %v5345
  %8188 = vmatpush1.bf16.msra.mxu0 %v5344
  %8189 = vmatprep.subr.bf16.mxu0 %v5417
  %8190 = vmatpush1.bf16.msra.mxu0 %v5416
  %8191 = vmatprep.subr.bf16.mxu0 %v5489
  %8192 = vmatpush1.bf16.msra.mxu0 %v5488
  %8193 = vmatprep.subr.bf16.mxu0 %v5561
  %8194 = vmatpush1.bf16.msra.mxu0 %v5560
  %8195 = vmatprep.subr.bf16.mxu0 %v5633
  %8196 = vmatpush1.bf16.msra.mxu0 %v5632
  %8197 = vmatprep.subr.bf16.mxu0 %v5705
  %8198 = vmatpush1.bf16.msra.mxu0 %v5704
  %8199 = vmatprep.subr.bf16.mxu0 %v5777
  %8200 = vmatpush1.bf16.msra.mxu0 %v5776
  %8201 = vmatprep.subr.bf16.mxu0 %v5849
  %8202 = vmatpush1.bf16.msra.mxu0 %v5848
  %8203 = vmatprep.subr.bf16.mxu0 %v5921
  %8204 = vmatpush1.bf16.msra.mxu0 %v5920
  %8205 = vmatprep.subr.bf16.mxu0 %v5993
  %8206 = vmatpush1.bf16.msra.mxu0 %v5992
  %8207 = vmatprep.subr.bf16.mxu0 %v6065
  %8208 = vmatpush1.bf16.msra.mxu0 %v6064
  %8209 = vmatprep.subr.bf16.mxu0 %v6137
  %8210 = vmatpush1.bf16.msra.mxu0 %v6136
  %8211 = vmatprep.mubr.bf16.mxu0 %v1555
  %8212 = vmatmul.mubr.bf16.gmra.mrb[0].mxu0 %v1554
  %v8213 = vpop.f32.mrb[0].mxu0
  %v8214 = vadd.f32 %v1362, %v8213
  %v8215 = vpop.f32.mrb[0].mxu0
  %v8216 = vadd.f32 %v1366, %v8215
  %v8217 = vpop.f32.mrb[0].mxu0
  %v8218 = vpop.f32.mrb[0].mxu0
  %8219 = vdwg.mxu0
  %8220 = vmatprep.subr.bf16.mxu0 %v5059
  %8221 = vmatpush1.bf16.msra.mxu0 %v5058
  %8222 = vmatprep.subr.bf16.mxu0 %v5131
  %8223 = vmatpush1.bf16.msra.mxu0 %v5130
  %8224 = vmatprep.subr.bf16.mxu0 %v5203
  %8225 = vmatpush1.bf16.msra.mxu0 %v5202
  %8226 = vmatprep.subr.bf16.mxu0 %v5275
  %8227 = vmatpush1.bf16.msra.mxu0 %v5274
  %8228 = vmatprep.subr.bf16.mxu0 %v5347
  %8229 = vmatpush1.bf16.msra.mxu0 %v5346
  %8230 = vmatprep.subr.bf16.mxu0 %v5419
  %8231 = vmatpush1.bf16.msra.mxu0 %v5418
  %8232 = vmatprep.subr.bf16.mxu0 %v5491
  %8233 = vmatpush1.bf16.msra.mxu0 %v5490
  %8234 = vmatprep.subr.bf16.mxu0 %v5563
  %8235 = vmatpush1.bf16.msra.mxu0 %v5562
  %8236 = vmatprep.subr.bf16.mxu0 %v5635
  %8237 = vmatpush1.bf16.msra.mxu0 %v5634
  %8238 = vmatprep.subr.bf16.mxu0 %v5707
  %8239 = vmatpush1.bf16.msra.mxu0 %v5706
  %8240 = vmatprep.subr.bf16.mxu0 %v5779
  %8241 = vmatpush1.bf16.msra.mxu0 %v5778
  %8242 = vmatprep.subr.bf16.mxu0 %v5851
  %8243 = vmatpush1.bf16.msra.mxu0 %v5850
  %8244 = vmatprep.subr.bf16.mxu0 %v5923
  %8245 = vmatpush1.bf16.msra.mxu0 %v5922
  %8246 = vmatprep.subr.bf16.mxu0 %v5995
  %8247 = vmatpush1.bf16.msra.mxu0 %v5994
  %8248 = vmatprep.subr.bf16.mxu0 %v6067
  %8249 = vmatpush1.bf16.msra.mxu0 %v6066
  %8250 = vmatprep.subr.bf16.mxu0 %v6139
  %8251 = vmatpush1.bf16.msra.mxu0 %v6138
  %8252 = vmatprep.mubr.bf16.mxu0 %v1555
  %8253 = vmatmul.mubr.bf16.gmra.mrb[0].mxu0 %v1554
  %v8254 = vpop.f32.mrb[0].mxu0
  %v8255 = vadd.f32 %v1370, %v8254
  %v8256 = vpop.f32.mrb[0].mxu0
  %v8257 = vadd.f32 %v1374, %v8256
  %v8258 = vpop.f32.mrb[0].mxu0
  %v8259 = vpop.f32.mrb[0].mxu0
  %8260 = vdwg.mxu0
  %8261 = vmatprep.subr.bf16.mxu0 %v5061
  %8262 = vmatpush1.bf16.msra.mxu0 %v5060
  %8263 = vmatprep.subr.bf16.mxu0 %v5133
  %8264 = vmatpush1.bf16.msra.mxu0 %v5132
  %8265 = vmatprep.subr.bf16.mxu0 %v5205
  %8266 = vmatpush1.bf16.msra.mxu0 %v5204
  %8267 = vmatprep.subr.bf16.mxu0 %v5277
  %8268 = vmatpush1.bf16.msra.mxu0 %v5276
  %8269 = vmatprep.subr.bf16.mxu0 %v5349
  %8270 = vmatpush1.bf16.msra.mxu0 %v5348
  %8271 = vmatprep.subr.bf16.mxu0 %v5421
  %8272 = vmatpush1.bf16.msra.mxu0 %v5420
  %8273 = vmatprep.subr.bf16.mxu0 %v5493
  %8274 = vmatpush1.bf16.msra.mxu0 %v5492
  %8275 = vmatprep.subr.bf16.mxu0 %v5565
  %8276 = vmatpush1.bf16.msra.mxu0 %v5564
  %8277 = vmatprep.subr.bf16.mxu0 %v5637
  %8278 = vmatpush1.bf16.msra.mxu0 %v5636
  %8279 = vmatprep.subr.bf16.mxu0 %v5709
  %8280 = vmatpush1.bf16.msra.mxu0 %v5708
  %8281 = vmatprep.subr.bf16.mxu0 %v5781
  %8282 = vmatpush1.bf16.msra.mxu0 %v5780
  %8283 = vmatprep.subr.bf16.mxu0 %v5853
  %8284 = vmatpush1.bf16.msra.mxu0 %v5852
  %8285 = vmatprep.subr.bf16.mxu0 %v5925
  %8286 = vmatpush1.bf16.msra.mxu0 %v5924
  %8287 = vmatprep.subr.bf16.mxu0 %v5997
  %8288 = vmatpush1.bf16.msra.mxu0 %v5996
  %8289 = vmatprep.subr.bf16.mxu0 %v6069
  %8290 = vmatpush1.bf16.msra.mxu0 %v6068
  %8291 = vmatprep.subr.bf16.mxu0 %v6141
  %8292 = vmatpush1.bf16.msra.mxu0 %v6140
  %8293 = vmatprep.mubr.bf16.mxu0 %v1555
  %8294 = vmatmul.mubr.bf16.gmra.mrb[0].mxu0 %v1554
  %v8295 = vpop.f32.mrb[0].mxu0
  %v8296 = vadd.f32 %v1378, %v8295
  %v8297 = vpop.f32.mrb[0].mxu0
  %v8298 = vadd.f32 %v1382, %v8297
  %v8299 = vpop.f32.mrb[0].mxu0
  %v8300 = vpop.f32.mrb[0].mxu0
  %8301 = vdwg.mxu0
  %8302 = vmatprep.subr.bf16.mxu0 %v5063
  %8303 = vmatpush1.bf16.msra.mxu0 %v5062
  %8304 = vmatprep.subr.bf16.mxu0 %v5135
  %8305 = vmatpush1.bf16.msra.mxu0 %v5134
  %8306 = vmatprep.subr.bf16.mxu0 %v5207
  %8307 = vmatpush1.bf16.msra.mxu0 %v5206
  %8308 = vmatprep.subr.bf16.mxu0 %v5279
  %8309 = vmatpush1.bf16.msra.mxu0 %v5278
  %8310 = vmatprep.subr.bf16.mxu0 %v5351
  %8311 = vmatpush1.bf16.msra.mxu0 %v5350
  %8312 = vmatprep.subr.bf16.mxu0 %v5423
  %8313 = vmatpush1.bf16.msra.mxu0 %v5422
  %8314 = vmatprep.subr.bf16.mxu0 %v5495
  %8315 = vmatpush1.bf16.msra.mxu0 %v5494
  %8316 = vmatprep.subr.bf16.mxu0 %v5567
  %8317 = vmatpush1.bf16.msra.mxu0 %v5566
  %8318 = vmatprep.subr.bf16.mxu0 %v5639
  %8319 = vmatpush1.bf16.msra.mxu0 %v5638
  %8320 = vmatprep.subr.bf16.mxu0 %v5711
  %8321 = vmatpush1.bf16.msra.mxu0 %v5710
  %8322 = vmatprep.subr.bf16.mxu0 %v5783
  %8323 = vmatpush1.bf16.msra.mxu0 %v5782
  %8324 = vmatprep.subr.bf16.mxu0 %v5855
  %8325 = vmatpush1.bf16.msra.mxu0 %v5854
  %8326 = vmatprep.subr.bf16.mxu0 %v5927
  %8327 = vmatpush1.bf16.msra.mxu0 %v5926
  %8328 = vmatprep.subr.bf16.mxu0 %v5999
  %8329 = vmatpush1.bf16.msra.mxu0 %v5998
  %8330 = vmatprep.subr.bf16.mxu0 %v6071
  %8331 = vmatpush1.bf16.msra.mxu0 %v6070
  %8332 = vmatprep.subr.bf16.mxu0 %v6143
  %8333 = vmatpush1.bf16.msra.mxu0 %v6142
  %8334 = vmatprep.mubr.bf16.mxu0 %v1555
  %8335 = vmatmul.mubr.bf16.gmra.mrb[0].mxu0 %v1554
  %v8336 = vpop.f32.mrb[0].mxu0
  %v8337 = vadd.f32 %v1386, %v8336
  %v8338 = vpop.f32.mrb[0].mxu0
  %v8339 = vadd.f32 %v1390, %v8338
  %v8340 = vpop.f32.mrb[0].mxu0
  %v8341 = vpop.f32.mrb[0].mxu0
  %8342 = vdwg.mxu0
  %8343 = vmatprep.subr.bf16.mxu0 %v5065
  %8344 = vmatpush1.bf16.msra.mxu0 %v5064
  %8345 = vmatprep.subr.bf16.mxu0 %v5137
  %8346 = vmatpush1.bf16.msra.mxu0 %v5136
  %8347 = vmatprep.subr.bf16.mxu0 %v5209
  %8348 = vmatpush1.bf16.msra.mxu0 %v5208
  %8349 = vmatprep.subr.bf16.mxu0 %v5281
  %8350 = vmatpush1.bf16.msra.mxu0 %v5280
  %8351 = vmatprep.subr.bf16.mxu0 %v5353
  %8352 = vmatpush1.bf16.msra.mxu0 %v5352
  %8353 = vmatprep.subr.bf16.mxu0 %v5425
  %8354 = vmatpush1.bf16.msra.mxu0 %v5424
  %8355 = vmatprep.subr.bf16.mxu0 %v5497
  %8356 = vmatpush1.bf16.msra.mxu0 %v5496
  %8357 = vmatprep.subr.bf16.mxu0 %v5569
  %8358 = vmatpush1.bf16.msra.mxu0 %v5568
  %8359 = vmatprep.subr.bf16.mxu0 %v5641
  %8360 = vmatpush1.bf16.msra.mxu0 %v5640
  %8361 = vmatprep.subr.bf16.mxu0 %v5713
  %8362 = vmatpush1.bf16.msra.mxu0 %v5712
  %8363 = vmatprep.subr.bf16.mxu0 %v5785
  %8364 = vmatpush1.bf16.msra.mxu0 %v5784
  %8365 = vmatprep.subr.bf16.mxu0 %v5857
  %8366 = vmatpush1.bf16.msra.mxu0 %v5856
  %8367 = vmatprep.subr.bf16.mxu0 %v5929
  %8368 = vmatpush1.bf16.msra.mxu0 %v5928
  %8369 = vmatprep.subr.bf16.mxu0 %v6001
  %8370 = vmatpush1.bf16.msra.mxu0 %v6000
  %8371 = vmatprep.subr.bf16.mxu0 %v6073
  %8372 = vmatpush1.bf16.msra.mxu0 %v6072
  %8373 = vmatprep.subr.bf16.mxu0 %v6145
  %8374 = vmatpush1.bf16.msra.mxu0 %v6144
  %8375 = vmatprep.mubr.bf16.mxu0 %v1555
  %8376 = vmatmul.mubr.bf16.gmra.mrb[0].mxu0 %v1554
  %v8377 = vpop.f32.mrb[0].mxu0
  %v8378 = vadd.f32 %v1394, %v8377
  %v8379 = vpop.f32.mrb[0].mxu0
  %v8380 = vadd.f32 %v1398, %v8379
  %v8381 = vpop.f32.mrb[0].mxu0
  %v8382 = vpop.f32.mrb[0].mxu0
  %8383 = vdwg.mxu0
  %8384 = vmatprep.subr.bf16.mxu0 %v5067
  %8385 = vmatpush1.bf16.msra.mxu0 %v5066
  %8386 = vmatprep.subr.bf16.mxu0 %v5139
  %8387 = vmatpush1.bf16.msra.mxu0 %v5138
  %8388 = vmatprep.subr.bf16.mxu0 %v5211
  %8389 = vmatpush1.bf16.msra.mxu0 %v5210
  %8390 = vmatprep.subr.bf16.mxu0 %v5283
  %8391 = vmatpush1.bf16.msra.mxu0 %v5282
  %8392 = vmatprep.subr.bf16.mxu0 %v5355
  %8393 = vmatpush1.bf16.msra.mxu0 %v5354
  %8394 = vmatprep.subr.bf16.mxu0 %v5427
  %8395 = vmatpush1.bf16.msra.mxu0 %v5426
  %8396 = vmatprep.subr.bf16.mxu0 %v5499
  %8397 = vmatpush1.bf16.msra.mxu0 %v5498
  %8398 = vmatprep.subr.bf16.mxu0 %v5571
  %8399 = vmatpush1.bf16.msra.mxu0 %v5570
  %8400 = vmatprep.subr.bf16.mxu0 %v5643
  %8401 = vmatpush1.bf16.msra.mxu0 %v5642
  %8402 = vmatprep.subr.bf16.mxu0 %v5715
  %8403 = vmatpush1.bf16.msra.mxu0 %v5714
  %8404 = vmatprep.subr.bf16.mxu0 %v5787
  %8405 = vmatpush1.bf16.msra.mxu0 %v5786
  %8406 = vmatprep.subr.bf16.mxu0 %v5859
  %8407 = vmatpush1.bf16.msra.mxu0 %v5858
  %8408 = vmatprep.subr.bf16.mxu0 %v5931
  %8409 = vmatpush1.bf16.msra.mxu0 %v5930
  %8410 = vmatprep.subr.bf16.mxu0 %v6003
  %8411 = vmatpush1.bf16.msra.mxu0 %v6002
  %8412 = vmatprep.subr.bf16.mxu0 %v6075
  %8413 = vmatpush1.bf16.msra.mxu0 %v6074
  %8414 = vmatprep.subr.bf16.mxu0 %v6147
  %8415 = vmatpush1.bf16.msra.mxu0 %v6146
  %8416 = vmatprep.mubr.bf16.mxu0 %v1555
  %8417 = vmatmul.mubr.bf16.gmra.mrb[0].mxu0 %v1554
  %v8418 = vpop.f32.mrb[0].mxu0
  %v8419 = vadd.f32 %v1402, %v8418
  %v8420 = vpop.f32.mrb[0].mxu0
  %v8421 = vadd.f32 %v1406, %v8420
  %v8422 = vpop.f32.mrb[0].mxu0
  %v8423 = vpop.f32.mrb[0].mxu0
  %8424 = vdwg.mxu0
  %8425 = vmatprep.subr.bf16.mxu0 %v5069
  %8426 = vmatpush1.bf16.msra.mxu0 %v5068
  %8427 = vmatprep.subr.bf16.mxu0 %v5141
  %8428 = vmatpush1.bf16.msra.mxu0 %v5140
  %8429 = vmatprep.subr.bf16.mxu0 %v5213
  %8430 = vmatpush1.bf16.msra.mxu0 %v5212
  %8431 = vmatprep.subr.bf16.mxu0 %v5285
  %8432 = vmatpush1.bf16.msra.mxu0 %v5284
  %8433 = vmatprep.subr.bf16.mxu0 %v5357
  %8434 = vmatpush1.bf16.msra.mxu0 %v5356
  %8435 = vmatprep.subr.bf16.mxu0 %v5429
  %8436 = vmatpush1.bf16.msra.mxu0 %v5428
  %8437 = vmatprep.subr.bf16.mxu0 %v5501
  %8438 = vmatpush1.bf16.msra.mxu0 %v5500
  %8439 = vmatprep.subr.bf16.mxu0 %v5573
  %8440 = vmatpush1.bf16.msra.mxu0 %v5572
  %8441 = vmatprep.subr.bf16.mxu0 %v5645
  %8442 = vmatpush1.bf16.msra.mxu0 %v5644
  %8443 = vmatprep.subr.bf16.mxu0 %v5717
  %8444 = vmatpush1.bf16.msra.mxu0 %v5716
  %8445 = vmatprep.subr.bf16.mxu0 %v5789
  %8446 = vmatpush1.bf16.msra.mxu0 %v5788
  %8447 = vmatprep.subr.bf16.mxu0 %v5861
  %8448 = vmatpush1.bf16.msra.mxu0 %v5860
  %8449 = vmatprep.subr.bf16.mxu0 %v5933
  %8450 = vmatpush1.bf16.msra.mxu0 %v5932
  %8451 = vmatprep.subr.bf16.mxu0 %v6005
  %8452 = vmatpush1.bf16.msra.mxu0 %v6004
  %8453 = vmatprep.subr.bf16.mxu0 %v6077
  %8454 = vmatpush1.bf16.msra.mxu0 %v6076
  %8455 = vmatprep.subr.bf16.mxu0 %v6149
  %8456 = vmatpush1.bf16.msra.mxu0 %v6148
  %8457 = vmatprep.mubr.bf16.mxu0 %v1555
  %8458 = vmatmul.mubr.bf16.gmra.mrb[0].mxu0 %v1554
  %v8459 = vpop.f32.mrb[0].mxu0
  %v8460 = vadd.f32 %v1410, %v8459
  %v8461 = vpop.f32.mrb[0].mxu0
  %v8462 = vadd.f32 %v1414, %v8461
  %v8463 = vpop.f32.mrb[0].mxu0
  %v8464 = vpop.f32.mrb[0].mxu0
  %8465 = vdwg.mxu0
  %8466 = vmatprep.subr.bf16.mxu0 %v5071
  %8467 = vmatpush1.bf16.msra.mxu0 %v5070
  %8468 = vmatprep.subr.bf16.mxu0 %v5143
  %8469 = vmatpush1.bf16.msra.mxu0 %v5142
  %8470 = vmatprep.subr.bf16.mxu0 %v5215
  %8471 = vmatpush1.bf16.msra.mxu0 %v5214
  %8472 = vmatprep.subr.bf16.mxu0 %v5287
  %8473 = vmatpush1.bf16.msra.mxu0 %v5286
  %8474 = vmatprep.subr.bf16.mxu0 %v5359
  %8475 = vmatpush1.bf16.msra.mxu0 %v5358
  %8476 = vmatprep.subr.bf16.mxu0 %v5431
  %8477 = vmatpush1.bf16.msra.mxu0 %v5430
  %8478 = vmatprep.subr.bf16.mxu0 %v5503
  %8479 = vmatpush1.bf16.msra.mxu0 %v5502
  %8480 = vmatprep.subr.bf16.mxu0 %v5575
  %8481 = vmatpush1.bf16.msra.mxu0 %v5574
  %8482 = vmatprep.subr.bf16.mxu0 %v5647
  %8483 = vmatpush1.bf16.msra.mxu0 %v5646
  %8484 = vmatprep.subr.bf16.mxu0 %v5719
  %8485 = vmatpush1.bf16.msra.mxu0 %v5718
  %8486 = vmatprep.subr.bf16.mxu0 %v5791
  %8487 = vmatpush1.bf16.msra.mxu0 %v5790
  %8488 = vmatprep.subr.bf16.mxu0 %v5863
  %8489 = vmatpush1.bf16.msra.mxu0 %v5862
  %8490 = vmatprep.subr.bf16.mxu0 %v5935
  %8491 = vmatpush1.bf16.msra.mxu0 %v5934
  %8492 = vmatprep.subr.bf16.mxu0 %v6007
  %8493 = vmatpush1.bf16.msra.mxu0 %v6006
  %8494 = vmatprep.subr.bf16.mxu0 %v6079
  %8495 = vmatpush1.bf16.msra.mxu0 %v6078
  %8496 = vmatprep.subr.bf16.mxu0 %v6151
  %8497 = vmatpush1.bf16.msra.mxu0 %v6150
  %8498 = vmatprep.mubr.bf16.mxu0 %v1555
  %8499 = vmatmul.mubr.bf16.gmra.mrb[0].mxu0 %v1554
  %v8500 = vpop.f32.mrb[0].mxu0
  %v8501 = vadd.f32 %v1418, %v8500
  %v8502 = vpop.f32.mrb[0].mxu0
  %v8503 = vadd.f32 %v1422, %v8502
  %v8504 = vpop.f32.mrb[0].mxu0
  %v8505 = vpop.f32.mrb[0].mxu0
  %8506 = vdwg.mxu0
  %8507 = vmatprep.subr.bf16.mxu0 %v5073
  %8508 = vmatpush1.bf16.msra.mxu0 %v5072
  %8509 = vmatprep.subr.bf16.mxu0 %v5145
  %8510 = vmatpush1.bf16.msra.mxu0 %v5144
  %8511 = vmatprep.subr.bf16.mxu0 %v5217
  %8512 = vmatpush1.bf16.msra.mxu0 %v5216
  %8513 = vmatprep.subr.bf16.mxu0 %v5289
  %8514 = vmatpush1.bf16.msra.mxu0 %v5288
  %8515 = vmatprep.subr.bf16.mxu0 %v5361
  %8516 = vmatpush1.bf16.msra.mxu0 %v5360
  %8517 = vmatprep.subr.bf16.mxu0 %v5433
  %8518 = vmatpush1.bf16.msra.mxu0 %v5432
  %8519 = vmatprep.subr.bf16.mxu0 %v5505
  %8520 = vmatpush1.bf16.msra.mxu0 %v5504
  %8521 = vmatprep.subr.bf16.mxu0 %v5577
  %8522 = vmatpush1.bf16.msra.mxu0 %v5576
  %8523 = vmatprep.subr.bf16.mxu0 %v5649
  %8524 = vmatpush1.bf16.msra.mxu0 %v5648
  %8525 = vmatprep.subr.bf16.mxu0 %v5721
  %8526 = vmatpush1.bf16.msra.mxu0 %v5720
  %8527 = vmatprep.subr.bf16.mxu0 %v5793
  %8528 = vmatpush1.bf16.msra.mxu0 %v5792
  %8529 = vmatprep.subr.bf16.mxu0 %v5865
  %8530 = vmatpush1.bf16.msra.mxu0 %v5864
  %8531 = vmatprep.subr.bf16.mxu0 %v5937
  %8532 = vmatpush1.bf16.msra.mxu0 %v5936
  %8533 = vmatprep.subr.bf16.mxu0 %v6009
  %8534 = vmatpush1.bf16.msra.mxu0 %v6008
  %8535 = vmatprep.subr.bf16.mxu0 %v6081
  %8536 = vmatpush1.bf16.msra.mxu0 %v6080
  %8537 = vmatprep.subr.bf16.mxu0 %v6153
  %8538 = vmatpush1.bf16.msra.mxu0 %v6152
  %8539 = vmatprep.mubr.bf16.mxu0 %v1555
  %8540 = vmatmul.mubr.bf16.gmra.mrb[0].mxu0 %v1554
  %v8541 = vpop.f32.mrb[0].mxu0
  %v8542 = vadd.f32 %v1426, %v8541
  %v8543 = vpop.f32.mrb[0].mxu0
  %v8544 = vadd.f32 %v1430, %v8543
  %v8545 = vpop.f32.mrb[0].mxu0
  %v8546 = vpop.f32.mrb[0].mxu0
  %8547 = vdwg.mxu0
  %8548 = vmatprep.subr.bf16.mxu0 %v5075
  %8549 = vmatpush1.bf16.msra.mxu0 %v5074
  %8550 = vmatprep.subr.bf16.mxu0 %v5147
  %8551 = vmatpush1.bf16.msra.mxu0 %v5146
  %8552 = vmatprep.subr.bf16.mxu0 %v5219
  %8553 = vmatpush1.bf16.msra.mxu0 %v5218
  %8554 = vmatprep.subr.bf16.mxu0 %v5291
  %8555 = vmatpush1.bf16.msra.mxu0 %v5290
  %8556 = vmatprep.subr.bf16.mxu0 %v5363
  %8557 = vmatpush1.bf16.msra.mxu0 %v5362
  %8558 = vmatprep.subr.bf16.mxu0 %v5435
  %8559 = vmatpush1.bf16.msra.mxu0 %v5434
  %8560 = vmatprep.subr.bf16.mxu0 %v5507
  %8561 = vmatpush1.bf16.msra.mxu0 %v5506
  %8562 = vmatprep.subr.bf16.mxu0 %v5579
  %8563 = vmatpush1.bf16.msra.mxu0 %v5578
  %8564 = vmatprep.subr.bf16.mxu0 %v5651
  %8565 = vmatpush1.bf16.msra.mxu0 %v5650
  %8566 = vmatprep.subr.bf16.mxu0 %v5723
  %8567 = vmatpush1.bf16.msra.mxu0 %v5722
  %8568 = vmatprep.subr.bf16.mxu0 %v5795
  %8569 = vmatpush1.bf16.msra.mxu0 %v5794
  %8570 = vmatprep.subr.bf16.mxu0 %v5867
  %8571 = vmatpush1.bf16.msra.mxu0 %v5866
  %8572 = vmatprep.subr.bf16.mxu0 %v5939
  %8573 = vmatpush1.bf16.msra.mxu0 %v5938
  %8574 = vmatprep.subr.bf16.mxu0 %v6011
  %8575 = vmatpush1.bf16.msra.mxu0 %v6010
  %8576 = vmatprep.subr.bf16.mxu0 %v6083
  %8577 = vmatpush1.bf16.msra.mxu0 %v6082
  %8578 = vmatprep.subr.bf16.mxu0 %v6155
  %8579 = vmatpush1.bf16.msra.mxu0 %v6154
  %8580 = vmatprep.mubr.bf16.mxu0 %v1555
  %8581 = vmatmul.mubr.bf16.gmra.mrb[0].mxu0 %v1554
  %v8582 = vpop.f32.mrb[0].mxu0
  %v8583 = vadd.f32 %v1434, %v8582
  %v8584 = vpop.f32.mrb[0].mxu0
  %v8585 = vadd.f32 %v1438, %v8584
  %v8586 = vpop.f32.mrb[0].mxu0
  %v8587 = vpop.f32.mrb[0].mxu0
  %8588 = vdwg.mxu0
  %8589 = vmatprep.subr.bf16.mxu0 %v5077
  %8590 = vmatpush1.bf16.msra.mxu0 %v5076
  %8591 = vmatprep.subr.bf16.mxu0 %v5149
  %8592 = vmatpush1.bf16.msra.mxu0 %v5148
  %8593 = vmatprep.subr.bf16.mxu0 %v5221
  %8594 = vmatpush1.bf16.msra.mxu0 %v5220
  %8595 = vmatprep.subr.bf16.mxu0 %v5293
  %8596 = vmatpush1.bf16.msra.mxu0 %v5292
  %8597 = vmatprep.subr.bf16.mxu0 %v5365
  %8598 = vmatpush1.bf16.msra.mxu0 %v5364
  %8599 = vmatprep.subr.bf16.mxu0 %v5437
  %8600 = vmatpush1.bf16.msra.mxu0 %v5436
  %8601 = vmatprep.subr.bf16.mxu0 %v5509
  %8602 = vmatpush1.bf16.msra.mxu0 %v5508
  %8603 = vmatprep.subr.bf16.mxu0 %v5581
  %8604 = vmatpush1.bf16.msra.mxu0 %v5580
  %8605 = vmatprep.subr.bf16.mxu0 %v5653
  %8606 = vmatpush1.bf16.msra.mxu0 %v5652
  %8607 = vmatprep.subr.bf16.mxu0 %v5725
  %8608 = vmatpush1.bf16.msra.mxu0 %v5724
  %8609 = vmatprep.subr.bf16.mxu0 %v5797
  %8610 = vmatpush1.bf16.msra.mxu0 %v5796
  %8611 = vmatprep.subr.bf16.mxu0 %v5869
  %8612 = vmatpush1.bf16.msra.mxu0 %v5868
  %8613 = vmatprep.subr.bf16.mxu0 %v5941
  %8614 = vmatpush1.bf16.msra.mxu0 %v5940
  %8615 = vmatprep.subr.bf16.mxu0 %v6013
  %8616 = vmatpush1.bf16.msra.mxu0 %v6012
  %8617 = vmatprep.subr.bf16.mxu0 %v6085
  %8618 = vmatpush1.bf16.msra.mxu0 %v6084
  %8619 = vmatprep.subr.bf16.mxu0 %v6157
  %8620 = vmatpush1.bf16.msra.mxu0 %v6156
  %8621 = vmatprep.mubr.bf16.mxu0 %v1555
  %8622 = vmatmul.mubr.bf16.gmra.mrb[0].mxu0 %v1554
  %v8623 = vpop.f32.mrb[0].mxu0
  %v8624 = vadd.f32 %v1442, %v8623
  %v8625 = vpop.f32.mrb[0].mxu0
  %v8626 = vadd.f32 %v1446, %v8625
  %v8627 = vpop.f32.mrb[0].mxu0
  %v8628 = vpop.f32.mrb[0].mxu0
  %8629 = vdwg.mxu0
  %8630 = vmatprep.subr.bf16.mxu0 %v5079
  %8631 = vmatpush1.bf16.msra.mxu0 %v5078
  %8632 = vmatprep.subr.bf16.mxu0 %v5151
  %8633 = vmatpush1.bf16.msra.mxu0 %v5150
  %8634 = vmatprep.subr.bf16.mxu0 %v5223
  %8635 = vmatpush1.bf16.msra.mxu0 %v5222
  %8636 = vmatprep.subr.bf16.mxu0 %v5295
  %8637 = vmatpush1.bf16.msra.mxu0 %v5294
  %8638 = vmatprep.subr.bf16.mxu0 %v5367
  %8639 = vmatpush1.bf16.msra.mxu0 %v5366
  %8640 = vmatprep.subr.bf16.mxu0 %v5439
  %8641 = vmatpush1.bf16.msra.mxu0 %v5438
  %8642 = vmatprep.subr.bf16.mxu0 %v5511
  %8643 = vmatpush1.bf16.msra.mxu0 %v5510
  %8644 = vmatprep.subr.bf16.mxu0 %v5583
  %8645 = vmatpush1.bf16.msra.mxu0 %v5582
  %8646 = vmatprep.subr.bf16.mxu0 %v5655
  %8647 = vmatpush1.bf16.msra.mxu0 %v5654
  %8648 = vmatprep.subr.bf16.mxu0 %v5727
  %8649 = vmatpush1.bf16.msra.mxu0 %v5726
  %8650 = vmatprep.subr.bf16.mxu0 %v5799
  %8651 = vmatpush1.bf16.msra.mxu0 %v5798
  %8652 = vmatprep.subr.bf16.mxu0 %v5871
  %8653 = vmatpush1.bf16.msra.mxu0 %v5870
  %8654 = vmatprep.subr.bf16.mxu0 %v5943
  %8655 = vmatpush1.bf16.msra.mxu0 %v5942
  %8656 = vmatprep.subr.bf16.mxu0 %v6015
  %8657 = vmatpush1.bf16.msra.mxu0 %v6014
  %8658 = vmatprep.subr.bf16.mxu0 %v6087
  %8659 = vmatpush1.bf16.msra.mxu0 %v6086
  %8660 = vmatprep.subr.bf16.mxu0 %v6159
  %8661 = vmatpush1.bf16.msra.mxu0 %v6158
  %8662 = vmatprep.mubr.bf16.mxu0 %v1555
  %8663 = vmatmul.mubr.bf16.gmra.mrb[0].mxu0 %v1554
  %v8664 = vpop.f32.mrb[0].mxu0
  %v8665 = vadd.f32 %v1450, %v8664
  %v8666 = vpop.f32.mrb[0].mxu0
  %v8667 = vadd.f32 %v1454, %v8666
  %v8668 = vpop.f32.mrb[0].mxu0
  %v8669 = vpop.f32.mrb[0].mxu0
  %8670 = vdwg.mxu0
  %8671 = vmatprep.subr.bf16.mxu0 %v5081
  %8672 = vmatpush1.bf16.msra.mxu0 %v5080
  %8673 = vmatprep.subr.bf16.mxu0 %v5153
  %8674 = vmatpush1.bf16.msra.mxu0 %v5152
  %8675 = vmatprep.subr.bf16.mxu0 %v5225
  %8676 = vmatpush1.bf16.msra.mxu0 %v5224
  %8677 = vmatprep.subr.bf16.mxu0 %v5297
  %8678 = vmatpush1.bf16.msra.mxu0 %v5296
  %8679 = vmatprep.subr.bf16.mxu0 %v5369
  %8680 = vmatpush1.bf16.msra.mxu0 %v5368
  %8681 = vmatprep.subr.bf16.mxu0 %v5441
  %8682 = vmatpush1.bf16.msra.mxu0 %v5440
  %8683 = vmatprep.subr.bf16.mxu0 %v5513
  %8684 = vmatpush1.bf16.msra.mxu0 %v5512
  %8685 = vmatprep.subr.bf16.mxu0 %v5585
  %8686 = vmatpush1.bf16.msra.mxu0 %v5584
  %8687 = vmatprep.subr.bf16.mxu0 %v5657
  %8688 = vmatpush1.bf16.msra.mxu0 %v5656
  %8689 = vmatprep.subr.bf16.mxu0 %v5729
  %8690 = vmatpush1.bf16.msra.mxu0 %v5728
  %8691 = vmatprep.subr.bf16.mxu0 %v5801
  %8692 = vmatpush1.bf16.msra.mxu0 %v5800
  %8693 = vmatprep.subr.bf16.mxu0 %v5873
  %8694 = vmatpush1.bf16.msra.mxu0 %v5872
  %8695 = vmatprep.subr.bf16.mxu0 %v5945
  %8696 = vmatpush1.bf16.msra.mxu0 %v5944
  %8697 = vmatprep.subr.bf16.mxu0 %v6017
  %8698 = vmatpush1.bf16.msra.mxu0 %v6016
  %8699 = vmatprep.subr.bf16.mxu0 %v6089
  %8700 = vmatpush1.bf16.msra.mxu0 %v6088
  %8701 = vmatprep.subr.bf16.mxu0 %v6161
  %8702 = vmatpush1.bf16.msra.mxu0 %v6160
  %8703 = vmatprep.mubr.bf16.mxu0 %v1555
  %8704 = vmatmul.mubr.bf16.gmra.mrb[0].mxu0 %v1554
  %v8705 = vpop.f32.mrb[0].mxu0
  %v8706 = vadd.f32 %v1458, %v8705
  %v8707 = vpop.f32.mrb[0].mxu0
  %v8708 = vadd.f32 %v1462, %v8707
  %v8709 = vpop.f32.mrb[0].mxu0
  %v8710 = vpop.f32.mrb[0].mxu0
  %8711 = vdwg.mxu0
  %8712 = vmatprep.subr.bf16.mxu0 %v5083
  %8713 = vmatpush1.bf16.msra.mxu0 %v5082
  %8714 = vmatprep.subr.bf16.mxu0 %v5155
  %8715 = vmatpush1.bf16.msra.mxu0 %v5154
  %8716 = vmatprep.subr.bf16.mxu0 %v5227
  %8717 = vmatpush1.bf16.msra.mxu0 %v5226
  %8718 = vmatprep.subr.bf16.mxu0 %v5299
  %8719 = vmatpush1.bf16.msra.mxu0 %v5298
  %8720 = vmatprep.subr.bf16.mxu0 %v5371
  %8721 = vmatpush1.bf16.msra.mxu0 %v5370
  %8722 = vmatprep.subr.bf16.mxu0 %v5443
  %8723 = vmatpush1.bf16.msra.mxu0 %v5442
  %8724 = vmatprep.subr.bf16.mxu0 %v5515
  %8725 = vmatpush1.bf16.msra.mxu0 %v5514
  %8726 = vmatprep.subr.bf16.mxu0 %v5587
  %8727 = vmatpush1.bf16.msra.mxu0 %v5586
  %8728 = vmatprep.subr.bf16.mxu0 %v5659
  %8729 = vmatpush1.bf16.msra.mxu0 %v5658
  %8730 = vmatprep.subr.bf16.mxu0 %v5731
  %8731 = vmatpush1.bf16.msra.mxu0 %v5730
  %8732 = vmatprep.subr.bf16.mxu0 %v5803
  %8733 = vmatpush1.bf16.msra.mxu0 %v5802
  %8734 = vmatprep.subr.bf16.mxu0 %v5875
  %8735 = vmatpush1.bf16.msra.mxu0 %v5874
  %8736 = vmatprep.subr.bf16.mxu0 %v5947
  %8737 = vmatpush1.bf16.msra.mxu0 %v5946
  %8738 = vmatprep.subr.bf16.mxu0 %v6019
  %8739 = vmatpush1.bf16.msra.mxu0 %v6018
  %8740 = vmatprep.subr.bf16.mxu0 %v6091
  %8741 = vmatpush1.bf16.msra.mxu0 %v6090
  %8742 = vmatprep.subr.bf16.mxu0 %v6163
  %8743 = vmatpush1.bf16.msra.mxu0 %v6162
  %8744 = vmatprep.mubr.bf16.mxu0 %v1555
  %8745 = vmatmul.mubr.bf16.gmra.mrb[0].mxu0 %v1554
  %v8746 = vpop.f32.mrb[0].mxu0
  %v8747 = vadd.f32 %v1466, %v8746
  %v8748 = vpop.f32.mrb[0].mxu0
  %v8749 = vadd.f32 %v1470, %v8748
  %v8750 = vpop.f32.mrb[0].mxu0
  %v8751 = vpop.f32.mrb[0].mxu0
  %8752 = vdwg.mxu0
  %8753 = vmatprep.subr.bf16.mxu0 %v5085
  %8754 = vmatpush1.bf16.msra.mxu0 %v5084
  %8755 = vmatprep.subr.bf16.mxu0 %v5157
  %8756 = vmatpush1.bf16.msra.mxu0 %v5156
  %8757 = vmatprep.subr.bf16.mxu0 %v5229
  %8758 = vmatpush1.bf16.msra.mxu0 %v5228
  %8759 = vmatprep.subr.bf16.mxu0 %v5301
  %8760 = vmatpush1.bf16.msra.mxu0 %v5300
  %8761 = vmatprep.subr.bf16.mxu0 %v5373
  %8762 = vmatpush1.bf16.msra.mxu0 %v5372
  %8763 = vmatprep.subr.bf16.mxu0 %v5445
  %8764 = vmatpush1.bf16.msra.mxu0 %v5444
  %8765 = vmatprep.subr.bf16.mxu0 %v5517
  %8766 = vmatpush1.bf16.msra.mxu0 %v5516
  %8767 = vmatprep.subr.bf16.mxu0 %v5589
  %8768 = vmatpush1.bf16.msra.mxu0 %v5588
  %8769 = vmatprep.subr.bf16.mxu0 %v5661
  %8770 = vmatpush1.bf16.msra.mxu0 %v5660
  %8771 = vmatprep.subr.bf16.mxu0 %v5733
  %8772 = vmatpush1.bf16.msra.mxu0 %v5732
  %8773 = vmatprep.subr.bf16.mxu0 %v5805
  %8774 = vmatpush1.bf16.msra.mxu0 %v5804
  %8775 = vmatprep.subr.bf16.mxu0 %v5877
  %8776 = vmatpush1.bf16.msra.mxu0 %v5876
  %8777 = vmatprep.subr.bf16.mxu0 %v5949
  %8778 = vmatpush1.bf16.msra.mxu0 %v5948
  %8779 = vmatprep.subr.bf16.mxu0 %v6021
  %8780 = vmatpush1.bf16.msra.mxu0 %v6020
  %8781 = vmatprep.subr.bf16.mxu0 %v6093
  %8782 = vmatpush1.bf16.msra.mxu0 %v6092
  %8783 = vmatprep.subr.bf16.mxu0 %v6165
  %8784 = vmatpush1.bf16.msra.mxu0 %v6164
  %8785 = vmatprep.mubr.bf16.mxu0 %v1555
  %8786 = vmatmul.mubr.bf16.gmra.mrb[0].mxu0 %v1554
  %v8787 = vpop.f32.mrb[0].mxu0
  %v8788 = vadd.f32 %v1474, %v8787
  %v8789 = vpop.f32.mrb[0].mxu0
  %v8790 = vadd.f32 %v1478, %v8789
  %v8791 = vpop.f32.mrb[0].mxu0
  %v8792 = vpop.f32.mrb[0].mxu0
  %8793 = vdwg.mxu0
  %v8794 = vmax.f32 %v7353, 0.0
  %v8795 = vmax.f32 %v7355, 0.0
  %v8796 = vmax.f32 %v7394, 0.0
  %v8797 = vmax.f32 %v7396, 0.0
  %v8798 = vmax.f32 %v7435, 0.0
  %v8799 = vmax.f32 %v7437, 0.0
  %v8800 = vmax.f32 %v7476, 0.0
  %v8801 = vmax.f32 %v7478, 0.0
  %v8802 = vmax.f32 %v7517, 0.0
  %v8803 = vmax.f32 %v7519, 0.0
  %v8804 = vmax.f32 %v7558, 0.0
  %v8805 = vmax.f32 %v7560, 0.0
  %v8806 = vmax.f32 %v7599, 0.0
  %v8807 = vmax.f32 %v7601, 0.0
  %v8808 = vmax.f32 %v7640, 0.0
  %v8809 = vmax.f32 %v7642, 0.0
  %v8810 = vmax.f32 %v7681, 0.0
  %v8811 = vmax.f32 %v7683, 0.0
  %v8812 = vmax.f32 %v7722, 0.0
  %v8813 = vmax.f32 %v7724, 0.0
  %v8814 = vmax.f32 %v7763, 0.0
  %v8815 = vmax.f32 %v7765, 0.0
  %v8816 = vmax.f32 %v7804, 0.0
  %v8817 = vmax.f32 %v7806, 0.0
  %v8818 = vmax.f32 %v7845, 0.0
  %v8819 = vmax.f32 %v7847, 0.0
  %v8820 = vmax.f32 %v7886, 0.0
  %v8821 = vmax.f32 %v7888, 0.0
  %v8822 = vmax.f32 %v7927, 0.0
  %v8823 = vmax.f32 %v7929, 0.0
  %v8824 = vmax.f32 %v7968, 0.0
  %v8825 = vmax.f32 %v7970, 0.0
  %v8826 = vmax.f32 %v8009, 0.0
  %v8827 = vmax.f32 %v8011, 0.0
  %v8828 = vmax.f32 %v8050, 0.0
  %v8829 = vmax.f32 %v8052, 0.0
  %v8830 = vmax.f32 %v8091, 0.0
  %v8831 = vmax.f32 %v8093, 0.0
  %v8832 = vmax.f32 %v8132, 0.0
  %v8833 = vmax.f32 %v8134, 0.0
  %v8834 = vmax.f32 %v8173, 0.0
  %v8835 = vmax.f32 %v8175, 0.0
  %v8836 = vmax.f32 %v8214, 0.0
  %v8837 = vmax.f32 %v8216, 0.0
  %v8838 = vmax.f32 %v8255, 0.0
  %v8839 = vmax.f32 %v8257, 0.0
  %v8840 = vmax.f32 %v8296, 0.0
  %v8841 = vmax.f32 %v8298, 0.0
  %v8842 = vmax.f32 %v8337, 0.0
  %v8843 = vmax.f32 %v8339, 0.0
  %v8844 = vmax.f32 %v8378, 0.0
  %v8845 = vmax.f32 %v8380, 0.0
  %v8846 = vmax.f32 %v8419, 0.0
  %v8847 = vmax.f32 %v8421, 0.0
  %v8848 = vmax.f32 %v8460, 0.0
  %v8849 = vmax.f32 %v8462, 0.0
  %v8850 = vmax.f32 %v8501, 0.0
  %v8851 = vmax.f32 %v8503, 0.0
  %v8852 = vmax.f32 %v8542, 0.0
  %v8853 = vmax.f32 %v8544, 0.0
  %v8854 = vmax.f32 %v8583, 0.0
  %v8855 = vmax.f32 %v8585, 0.0
  %v8856 = vmax.f32 %v8624, 0.0
  %v8857 = vmax.f32 %v8626, 0.0
  %v8858 = vmax.f32 %v8665, 0.0
  %v8859 = vmax.f32 %v8667, 0.0
  %v8860 = vmax.f32 %v8706, 0.0
  %v8861 = vmax.f32 %v8708, 0.0
  %v8862 = vmax.f32 %v8747, 0.0
  %v8863 = vmax.f32 %v8749, 0.0
  %v8864 = vmax.f32 %v8788, 0.0
  %v8865 = vmax.f32 %v8790, 0.0
  %v8866 = vld [vmem:[%s3] sm:$0xff]
  %v8867 = vld [vmem:[%s3 + $0x8] sm:$0xff]
  %v8868 = vld [vmem:[%s3 + $0x10] sm:$0xff]
  %v8869 = vld [vmem:[%s3 + $0x18] sm:$0xff]
  %v8870 = vld [vmem:[%s3 + $0x20] sm:$0xff]
  %v8871 = vld [vmem:[%s3 + $0x28] sm:$0xff]
  %v8872 = vld [vmem:[%s3 + $0x30] sm:$0xff]
  %v8873 = vld [vmem:[%s3 + $0x38] sm:$0xff]
  %v8874 = vld [vmem:[%s3 + $0x40] sm:$0xff]
  %v8875 = vld [vmem:[%s3 + $0x48] sm:$0xff]
  %v8876 = vld [vmem:[%s3 + $0x50] sm:$0xff]
  %v8877 = vld [vmem:[%s3 + $0x58] sm:$0xff]
  %v8878 = vld [vmem:[%s3 + $0x60] sm:$0xff]
  %v8879 = vld [vmem:[%s3 + $0x68] sm:$0xff]
  %v8880 = vld [vmem:[%s3 + $0x70] sm:$0xff]
  %v8881 = vld [vmem:[%s3 + $0x78] sm:$0xff]
  %v8882 = vld [vmem:[%s3 + $0x80] sm:$0xff]
  %v8883 = vld [vmem:[%s3 + $0x88] sm:$0xff]
  %v8884 = vld [vmem:[%s3 + $0x90] sm:$0xff]
  %v8885 = vld [vmem:[%s3 + $0x98] sm:$0xff]
  %v8886 = vld [vmem:[%s3 + $0xa0] sm:$0xff]
  %v8887 = vld [vmem:[%s3 + $0xa8] sm:$0xff]
  %v8888 = vld [vmem:[%s3 + $0xb0] sm:$0xff]
  %v8889 = vld [vmem:[%s3 + $0xb8] sm:$0xff]
  %v8890 = vld [vmem:[%s3 + $0xc0] sm:$0xff]
  %v8891 = vld [vmem:[%s3 + $0xc8] sm:$0xff]
  %v8892 = vld [vmem:[%s3 + $0xd0] sm:$0xff]
  %v8893 = vld [vmem:[%s3 + $0xd8] sm:$0xff]
  %v8894 = vld [vmem:[%s3 + $0xe0] sm:$0xff]
  %v8895 = vld [vmem:[%s3 + $0xe8] sm:$0xff]
  %v8896 = vld [vmem:[%s3 + $0xf0] sm:$0xff]
  %v8897 = vld [vmem:[%s3 + $0xf8] sm:$0xff]
  %v8898 = vld [vmem:[%s3 + $0x100] sm:$0xff]
  %v8899 = vld [vmem:[%s3 + $0x108] sm:$0xff]
  %v8900 = vld [vmem:[%s3 + $0x110] sm:$0xff]
  %v8901 = vld [vmem:[%s3 + $0x118] sm:$0xff]
  %v8902 = vld [vmem:[%s3 + $0x120] sm:$0xff]
  %v8903 = vld [vmem:[%s3 + $0x128] sm:$0xff]
  %v8904 = vld [vmem:[%s3 + $0x130] sm:$0xff]
  %v8905 = vld [vmem:[%s3 + $0x138] sm:$0xff]
  %v8906 = vld [vmem:[%s3 + $0x140] sm:$0xff]
  %v8907 = vld [vmem:[%s3 + $0x148] sm:$0xff]
  %v8908 = vld [vmem:[%s3 + $0x150] sm:$0xff]
  %v8909 = vld [vmem:[%s3 + $0x158] sm:$0xff]
  %v8910 = vld [vmem:[%s3 + $0x160] sm:$0xff]
  %v8911 = vld [vmem:[%s3 + $0x168] sm:$0xff]
  %v8912 = vld [vmem:[%s3 + $0x170] sm:$0xff]
  %v8913 = vld [vmem:[%s3 + $0x178] sm:$0xff]
  %v8914 = vld [vmem:[%s3 + $0x180] sm:$0xff]
  %v8915 = vld [vmem:[%s3 + $0x188] sm:$0xff]
  %v8916 = vld [vmem:[%s3 + $0x190] sm:$0xff]
  %v8917 = vld [vmem:[%s3 + $0x198] sm:$0xff]
  %v8918 = vld [vmem:[%s3 + $0x1a0] sm:$0xff]
  %v8919 = vld [vmem:[%s3 + $0x1a8] sm:$0xff]
  %v8920 = vld [vmem:[%s3 + $0x1b0] sm:$0xff]
  %v8921 = vld [vmem:[%s3 + $0x1b8] sm:$0xff]
  %v8922 = vld [vmem:[%s3 + $0x1c0] sm:$0xff]
  %v8923 = vld [vmem:[%s3 + $0x1c8] sm:$0xff]
  %v8924 = vld [vmem:[%s3 + $0x1d0] sm:$0xff]
  %v8925 = vld [vmem:[%s3 + $0x1d8] sm:$0xff]
  %v8926 = vld [vmem:[%s3 + $0x1e0] sm:$0xff]
  %v8927 = vld [vmem:[%s3 + $0x1e8] sm:$0xff]
  %v8928 = vld [vmem:[%s3 + $0x1f0] sm:$0xff]
  %v8929 = vld [vmem:[%s3 + $0x1f8] sm:$0xff]
  %v8930 = vld [vmem:[%s3 + $0x200] sm:$0xff]
  %v8931 = vld [vmem:[%s3 + $0x208] sm:$0xff]
  %v8932 = vld [vmem:[%s3 + $0x210] sm:$0xff]
  %v8933 = vld [vmem:[%s3 + $0x218] sm:$0xff]
  %v8934 = vld [vmem:[%s3 + $0x220] sm:$0xff]
  %v8935 = vld [vmem:[%s3 + $0x228] sm:$0xff]
  %v8936 = vld [vmem:[%s3 + $0x230] sm:$0xff]
  %v8937 = vld [vmem:[%s3 + $0x238] sm:$0xff]
  %v8938 = vld [vmem:[%s3 + $0x240] sm:$0xff]
  %v8939 = vld [vmem:[%s3 + $0x248] sm:$0xff]
  %v8940 = vld [vmem:[%s3 + $0x250] sm:$0xff]
  %v8941 = vld [vmem:[%s3 + $0x258] sm:$0xff]
  %v8942 = vld [vmem:[%s3 + $0x260] sm:$0xff]
  %v8943 = vld [vmem:[%s3 + $0x268] sm:$0xff]
  %v8944 = vld [vmem:[%s3 + $0x270] sm:$0xff]
  %v8945 = vld [vmem:[%s3 + $0x278] sm:$0xff]
  %v8946 = vld [vmem:[%s3 + $0x280] sm:$0xff]
  %v8947 = vld [vmem:[%s3 + $0x288] sm:$0xff]
  %v8948 = vld [vmem:[%s3 + $0x290] sm:$0xff]
  %v8949 = vld [vmem:[%s3 + $0x298] sm:$0xff]
  %v8950 = vld [vmem:[%s3 + $0x2a0] sm:$0xff]
  %v8951 = vld [vmem:[%s3 + $0x2a8] sm:$0xff]
  %v8952 = vld [vmem:[%s3 + $0x2b0] sm:$0xff]
  %v8953 = vld [vmem:[%s3 + $0x2b8] sm:$0xff]
  %v8954 = vld [vmem:[%s3 + $0x2c0] sm:$0xff]
  %v8955 = vld [vmem:[%s3 + $0x2c8] sm:$0xff]
  %v8956 = vld [vmem:[%s3 + $0x2d0] sm:$0xff]
  %v8957 = vld [vmem:[%s3 + $0x2d8] sm:$0xff]
  %v8958 = vld [vmem:[%s3 + $0x2e0] sm:$0xff]
  %v8959 = vld [vmem:[%s3 + $0x2e8] sm:$0xff]
  %v8960 = vld [vmem:[%s3 + $0x2f0] sm:$0xff]
  %v8961 = vld [vmem:[%s3 + $0x2f8] sm:$0xff]
  %v8962 = vld [vmem:[%s3 + $0x300] sm:$0xff]
  %v8963 = vld [vmem:[%s3 + $0x308] sm:$0xff]
  %v8964 = vld [vmem:[%s3 + $0x310] sm:$0xff]
  %v8965 = vld [vmem:[%s3 + $0x318] sm:$0xff]
  %v8966 = vld [vmem:[%s3 + $0x320] sm:$0xff]
  %v8967 = vld [vmem:[%s3 + $0x328] sm:$0xff]
  %v8968 = vld [vmem:[%s3 + $0x330] sm:$0xff]
  %v8969 = vld [vmem:[%s3 + $0x338] sm:$0xff]
  %v8970 = vld [vmem:[%s3 + $0x340] sm:$0xff]
  %v8971 = vld [vmem:[%s3 + $0x348] sm:$0xff]
  %v8972 = vld [vmem:[%s3 + $0x350] sm:$0xff]
  %v8973 = vld [vmem:[%s3 + $0x358] sm:$0xff]
  %v8974 = vld [vmem:[%s3 + $0x360] sm:$0xff]
  %v8975 = vld [vmem:[%s3 + $0x368] sm:$0xff]
  %v8976 = vld [vmem:[%s3 + $0x370] sm:$0xff]
  %v8977 = vld [vmem:[%s3 + $0x378] sm:$0xff]
  %v8978 = vld [vmem:[%s3 + $0x380] sm:$0xff]
  %v8979 = vld [vmem:[%s3 + $0x388] sm:$0xff]
  %v8980 = vld [vmem:[%s3 + $0x390] sm:$0xff]
  %v8981 = vld [vmem:[%s3 + $0x398] sm:$0xff]
  %v8982 = vld [vmem:[%s3 + $0x3a0] sm:$0xff]
  %v8983 = vld [vmem:[%s3 + $0x3a8] sm:$0xff]
  %v8984 = vld [vmem:[%s3 + $0x3b0] sm:$0xff]
  %v8985 = vld [vmem:[%s3 + $0x3b8] sm:$0xff]
  %v8986 = vld [vmem:[%s3 + $0x3c0] sm:$0xff]
  %v8987 = vld [vmem:[%s3 + $0x3c8] sm:$0xff]
  %v8988 = vld [vmem:[%s3 + $0x3d0] sm:$0xff]
  %v8989 = vld [vmem:[%s3 + $0x3d8] sm:$0xff]
  %v8990 = vld [vmem:[%s3 + $0x3e0] sm:$0xff]
  %v8991 = vld [vmem:[%s3 + $0x3e8] sm:$0xff]
  %v8992 = vld [vmem:[%s3 + $0x3f0] sm:$0xff]
  %v8993 = vld [vmem:[%s3 + $0x3f8] sm:$0xff]
  %v8994 = vld [vmem:[%s3 + $0x400] sm:$0xff]
  %v8995 = vld [vmem:[%s3 + $0x408] sm:$0xff]
  %v8996 = vld [vmem:[%s3 + $0x410] sm:$0xff]
  %v8997 = vld [vmem:[%s3 + $0x418] sm:$0xff]
  %v8998 = vld [vmem:[%s3 + $0x420] sm:$0xff]
  %v8999 = vld [vmem:[%s3 + $0x428] sm:$0xff]
  %v9000 = vld [vmem:[%s3 + $0x430] sm:$0xff]
  %v9001 = vld [vmem:[%s3 + $0x438] sm:$0xff]
  %v9002 = vld [vmem:[%s3 + $0x440] sm:$0xff]
  %v9003 = vld [vmem:[%s3 + $0x448] sm:$0xff]
  %v9004 = vld [vmem:[%s3 + $0x450] sm:$0xff]
  %v9005 = vld [vmem:[%s3 + $0x458] sm:$0xff]
  %v9006 = vld [vmem:[%s3 + $0x460] sm:$0xff]
  %v9007 = vld [vmem:[%s3 + $0x468] sm:$0xff]
  %v9008 = vld [vmem:[%s3 + $0x470] sm:$0xff]
  %v9009 = vld [vmem:[%s3 + $0x478] sm:$0xff]
  %v9010 = vld [vmem:[%s3 + $0x480] sm:$0xff]
  %v9011 = vld [vmem:[%s3 + $0x488] sm:$0xff]
  %v9012 = vld [vmem:[%s3 + $0x490] sm:$0xff]
  %v9013 = vld [vmem:[%s3 + $0x498] sm:$0xff]
  %v9014 = vld [vmem:[%s3 + $0x4a0] sm:$0xff]
  %v9015 = vld [vmem:[%s3 + $0x4a8] sm:$0xff]
  %v9016 = vld [vmem:[%s3 + $0x4b0] sm:$0xff]
  %v9017 = vld [vmem:[%s3 + $0x4b8] sm:$0xff]
  %v9018 = vld [vmem:[%s3 + $0x4c0] sm:$0xff]
  %v9019 = vld [vmem:[%s3 + $0x4c8] sm:$0xff]
  %v9020 = vld [vmem:[%s3 + $0x4d0] sm:$0xff]
  %v9021 = vld [vmem:[%s3 + $0x4d8] sm:$0xff]
  %v9022 = vld [vmem:[%s3 + $0x4e0] sm:$0xff]
  %v9023 = vld [vmem:[%s3 + $0x4e8] sm:$0xff]
  %v9024 = vld [vmem:[%s3 + $0x4f0] sm:$0xff]
  %v9025 = vld [vmem:[%s3 + $0x4f8] sm:$0xff]
  %v9026 = vld [vmem:[%s3 + $0x500] sm:$0xff]
  %v9027 = vld [vmem:[%s3 + $0x508] sm:$0xff]
  %v9028 = vld [vmem:[%s3 + $0x510] sm:$0xff]
  %v9029 = vld [vmem:[%s3 + $0x518] sm:$0xff]
  %v9030 = vld [vmem:[%s3 + $0x520] sm:$0xff]
  %v9031 = vld [vmem:[%s3 + $0x528] sm:$0xff]
  %v9032 = vld [vmem:[%s3 + $0x530] sm:$0xff]
  %v9033 = vld [vmem:[%s3 + $0x538] sm:$0xff]
  %v9034 = vld [vmem:[%s3 + $0x540] sm:$0xff]
  %v9035 = vld [vmem:[%s3 + $0x548] sm:$0xff]
  %v9036 = vld [vmem:[%s3 + $0x550] sm:$0xff]
  %v9037 = vld [vmem:[%s3 + $0x558] sm:$0xff]
  %v9038 = vld [vmem:[%s3 + $0x560] sm:$0xff]
  %v9039 = vld [vmem:[%s3 + $0x568] sm:$0xff]
  %v9040 = vld [vmem:[%s3 + $0x570] sm:$0xff]
  %v9041 = vld [vmem:[%s3 + $0x578] sm:$0xff]
  %v9042 = vld [vmem:[%s3 + $0x580] sm:$0xff]
  %v9043 = vld [vmem:[%s3 + $0x588] sm:$0xff]
  %v9044 = vld [vmem:[%s3 + $0x590] sm:$0xff]
  %v9045 = vld [vmem:[%s3 + $0x598] sm:$0xff]
  %v9046 = vld [vmem:[%s3 + $0x5a0] sm:$0xff]
  %v9047 = vld [vmem:[%s3 + $0x5a8] sm:$0xff]
  %v9048 = vld [vmem:[%s3 + $0x5b0] sm:$0xff]
  %v9049 = vld [vmem:[%s3 + $0x5b8] sm:$0xff]
  %v9050 = vld [vmem:[%s3 + $0x5c0] sm:$0xff]
  %v9051 = vld [vmem:[%s3 + $0x5c8] sm:$0xff]
  %v9052 = vld [vmem:[%s3 + $0x5d0] sm:$0xff]
  %v9053 = vld [vmem:[%s3 + $0x5d8] sm:$0xff]
  %v9054 = vld [vmem:[%s3 + $0x5e0] sm:$0xff]
  %v9055 = vld [vmem:[%s3 + $0x5e8] sm:$0xff]
  %v9056 = vld [vmem:[%s3 + $0x5f0] sm:$0xff]
  %v9057 = vld [vmem:[%s3 + $0x5f8] sm:$0xff]
  %v9058 = vld [vmem:[%s3 + $0x600] sm:$0xff]
  %v9059 = vld [vmem:[%s3 + $0x608] sm:$0xff]
  %v9060 = vld [vmem:[%s3 + $0x610] sm:$0xff]
  %v9061 = vld [vmem:[%s3 + $0x618] sm:$0xff]
  %v9062 = vld [vmem:[%s3 + $0x620] sm:$0xff]
  %v9063 = vld [vmem:[%s3 + $0x628] sm:$0xff]
  %v9064 = vld [vmem:[%s3 + $0x630] sm:$0xff]
  %v9065 = vld [vmem:[%s3 + $0x638] sm:$0xff]
  %v9066 = vld [vmem:[%s3 + $0x640] sm:$0xff]
  %v9067 = vld [vmem:[%s3 + $0x648] sm:$0xff]
  %v9068 = vld [vmem:[%s3 + $0x650] sm:$0xff]
  %v9069 = vld [vmem:[%s3 + $0x658] sm:$0xff]
  %v9070 = vld [vmem:[%s3 + $0x660] sm:$0xff]
  %v9071 = vld [vmem:[%s3 + $0x668] sm:$0xff]
  %v9072 = vld [vmem:[%s3 + $0x670] sm:$0xff]
  %v9073 = vld [vmem:[%s3 + $0x678] sm:$0xff]
  %v9074 = vld [vmem:[%s3 + $0x680] sm:$0xff]
  %v9075 = vld [vmem:[%s3 + $0x688] sm:$0xff]
  %v9076 = vld [vmem:[%s3 + $0x690] sm:$0xff]
  %v9077 = vld [vmem:[%s3 + $0x698] sm:$0xff]
  %v9078 = vld [vmem:[%s3 + $0x6a0] sm:$0xff]
  %v9079 = vld [vmem:[%s3 + $0x6a8] sm:$0xff]
  %v9080 = vld [vmem:[%s3 + $0x6b0] sm:$0xff]
  %v9081 = vld [vmem:[%s3 + $0x6b8] sm:$0xff]
  %v9082 = vld [vmem:[%s3 + $0x6c0] sm:$0xff]
  %v9083 = vld [vmem:[%s3 + $0x6c8] sm:$0xff]
  %v9084 = vld [vmem:[%s3 + $0x6d0] sm:$0xff]
  %v9085 = vld [vmem:[%s3 + $0x6d8] sm:$0xff]
  %v9086 = vld [vmem:[%s3 + $0x6e0] sm:$0xff]
  %v9087 = vld [vmem:[%s3 + $0x6e8] sm:$0xff]
  %v9088 = vld [vmem:[%s3 + $0x6f0] sm:$0xff]
  %v9089 = vld [vmem:[%s3 + $0x6f8] sm:$0xff]
  %v9090 = vld [vmem:[%s3 + $0x700] sm:$0xff]
  %v9091 = vld [vmem:[%s3 + $0x708] sm:$0xff]
  %v9092 = vld [vmem:[%s3 + $0x710] sm:$0xff]
  %v9093 = vld [vmem:[%s3 + $0x718] sm:$0xff]
  %v9094 = vld [vmem:[%s3 + $0x720] sm:$0xff]
  %v9095 = vld [vmem:[%s3 + $0x728] sm:$0xff]
  %v9096 = vld [vmem:[%s3 + $0x730] sm:$0xff]
  %v9097 = vld [vmem:[%s3 + $0x738] sm:$0xff]
  %v9098 = vld [vmem:[%s3 + $0x740] sm:$0xff]
  %v9099 = vld [vmem:[%s3 + $0x748] sm:$0xff]
  %v9100 = vld [vmem:[%s3 + $0x750] sm:$0xff]
  %v9101 = vld [vmem:[%s3 + $0x758] sm:$0xff]
  %v9102 = vld [vmem:[%s3 + $0x760] sm:$0xff]
  %v9103 = vld [vmem:[%s3 + $0x768] sm:$0xff]
  %v9104 = vld [vmem:[%s3 + $0x770] sm:$0xff]
  %v9105 = vld [vmem:[%s3 + $0x778] sm:$0xff]
  %v9106 = vld [vmem:[%s3 + $0x780] sm:$0xff]
  %v9107 = vld [vmem:[%s3 + $0x788] sm:$0xff]
  %v9108 = vld [vmem:[%s3 + $0x790] sm:$0xff]
  %v9109 = vld [vmem:[%s3 + $0x798] sm:$0xff]
  %v9110 = vld [vmem:[%s3 + $0x7a0] sm:$0xff]
  %v9111 = vld [vmem:[%s3 + $0x7a8] sm:$0xff]
  %v9112 = vld [vmem:[%s3 + $0x7b0] sm:$0xff]
  %v9113 = vld [vmem:[%s3 + $0x7b8] sm:$0xff]
  %v9114 = vld [vmem:[%s3 + $0x7c0] sm:$0xff]
  %v9115 = vld [vmem:[%s3 + $0x7c8] sm:$0xff]
  %v9116 = vld [vmem:[%s3 + $0x7d0] sm:$0xff]
  %v9117 = vld [vmem:[%s3 + $0x7d8] sm:$0xff]
  %v9118 = vld [vmem:[%s3 + $0x7e0] sm:$0xff]
  %v9119 = vld [vmem:[%s3 + $0x7e8] sm:$0xff]
  %v9120 = vld [vmem:[%s3 + $0x7f0] sm:$0xff]
  %v9121 = vld [vmem:[%s3 + $0x7f8] sm:$0xff]
  %v9122 = vld [vmem:[%s3 + $0x800] sm:$0xff]
  %v9123 = vld [vmem:[%s3 + $0x808] sm:$0xff]
  %v9124 = vld [vmem:[%s3 + $0x810] sm:$0xff]
  %v9125 = vld [vmem:[%s3 + $0x818] sm:$0xff]
  %v9126 = vld [vmem:[%s3 + $0x820] sm:$0xff]
  %v9127 = vld [vmem:[%s3 + $0x828] sm:$0xff]
  %v9128 = vld [vmem:[%s3 + $0x830] sm:$0xff]
  %v9129 = vld [vmem:[%s3 + $0x838] sm:$0xff]
  %v9130 = vld [vmem:[%s3 + $0x840] sm:$0xff]
  %v9131 = vld [vmem:[%s3 + $0x848] sm:$0xff]
  %v9132 = vld [vmem:[%s3 + $0x850] sm:$0xff]
  %v9133 = vld [vmem:[%s3 + $0x858] sm:$0xff]
  %v9134 = vld [vmem:[%s3 + $0x860] sm:$0xff]
  %v9135 = vld [vmem:[%s3 + $0x868] sm:$0xff]
  %v9136 = vld [vmem:[%s3 + $0x870] sm:$0xff]
  %v9137 = vld [vmem:[%s3 + $0x878] sm:$0xff]
  %v9138 = vld [vmem:[%s3 + $0x880] sm:$0xff]
  %v9139 = vld [vmem:[%s3 + $0x888] sm:$0xff]
  %v9140 = vld [vmem:[%s3 + $0x890] sm:$0xff]
  %v9141 = vld [vmem:[%s3 + $0x898] sm:$0xff]
  %v9142 = vld [vmem:[%s3 + $0x8a0] sm:$0xff]
  %v9143 = vld [vmem:[%s3 + $0x8a8] sm:$0xff]
  %v9144 = vld [vmem:[%s3 + $0x8b0] sm:$0xff]
  %v9145 = vld [vmem:[%s3 + $0x8b8] sm:$0xff]
  %v9146 = vld [vmem:[%s3 + $0x8c0] sm:$0xff]
  %v9147 = vld [vmem:[%s3 + $0x8c8] sm:$0xff]
  %v9148 = vld [vmem:[%s3 + $0x8d0] sm:$0xff]
  %v9149 = vld [vmem:[%s3 + $0x8d8] sm:$0xff]
  %v9150 = vld [vmem:[%s3 + $0x8e0] sm:$0xff]
  %v9151 = vld [vmem:[%s3 + $0x8e8] sm:$0xff]
  %v9152 = vld [vmem:[%s3 + $0x8f0] sm:$0xff]
  %v9153 = vld [vmem:[%s3 + $0x8f8] sm:$0xff]
  %v9154 = vld [vmem:[%s3 + $0x900] sm:$0xff]
  %v9155 = vld [vmem:[%s3 + $0x908] sm:$0xff]
  %v9156 = vld [vmem:[%s3 + $0x910] sm:$0xff]
  %v9157 = vld [vmem:[%s3 + $0x918] sm:$0xff]
  %v9158 = vld [vmem:[%s3 + $0x920] sm:$0xff]
  %v9159 = vld [vmem:[%s3 + $0x928] sm:$0xff]
  %v9160 = vld [vmem:[%s3 + $0x930] sm:$0xff]
  %v9161 = vld [vmem:[%s3 + $0x938] sm:$0xff]
  %v9162 = vld [vmem:[%s3 + $0x940] sm:$0xff]
  %v9163 = vld [vmem:[%s3 + $0x948] sm:$0xff]
  %v9164 = vld [vmem:[%s3 + $0x950] sm:$0xff]
  %v9165 = vld [vmem:[%s3 + $0x958] sm:$0xff]
  %v9166 = vld [vmem:[%s3 + $0x960] sm:$0xff]
  %v9167 = vld [vmem:[%s3 + $0x968] sm:$0xff]
  %v9168 = vld [vmem:[%s3 + $0x970] sm:$0xff]
  %v9169 = vld [vmem:[%s3 + $0x978] sm:$0xff]
  %v9170 = vld [vmem:[%s3 + $0x980] sm:$0xff]
  %v9171 = vld [vmem:[%s3 + $0x988] sm:$0xff]
  %v9172 = vld [vmem:[%s3 + $0x990] sm:$0xff]
  %v9173 = vld [vmem:[%s3 + $0x998] sm:$0xff]
  %v9174 = vld [vmem:[%s3 + $0x9a0] sm:$0xff]
  %v9175 = vld [vmem:[%s3 + $0x9a8] sm:$0xff]
  %v9176 = vld [vmem:[%s3 + $0x9b0] sm:$0xff]
  %v9177 = vld [vmem:[%s3 + $0x9b8] sm:$0xff]
  %v9178 = vld [vmem:[%s3 + $0x9c0] sm:$0xff]
  %v9179 = vld [vmem:[%s3 + $0x9c8] sm:$0xff]
  %v9180 = vld [vmem:[%s3 + $0x9d0] sm:$0xff]
  %v9181 = vld [vmem:[%s3 + $0x9d8] sm:$0xff]
  %v9182 = vld [vmem:[%s3 + $0x9e0] sm:$0xff]
  %v9183 = vld [vmem:[%s3 + $0x9e8] sm:$0xff]
  %v9184 = vld [vmem:[%s3 + $0x9f0] sm:$0xff]
  %v9185 = vld [vmem:[%s3 + $0x9f8] sm:$0xff]
  %v9186 = vld [vmem:[%s3 + $0xa00] sm:$0xff]
  %v9187 = vld [vmem:[%s3 + $0xa08] sm:$0xff]
  %v9188 = vld [vmem:[%s3 + $0xa10] sm:$0xff]
  %v9189 = vld [vmem:[%s3 + $0xa18] sm:$0xff]
  %v9190 = vld [vmem:[%s3 + $0xa20] sm:$0xff]
  %v9191 = vld [vmem:[%s3 + $0xa28] sm:$0xff]
  %v9192 = vld [vmem:[%s3 + $0xa30] sm:$0xff]
  %v9193 = vld [vmem:[%s3 + $0xa38] sm:$0xff]
  %v9194 = vld [vmem:[%s3 + $0xa40] sm:$0xff]
  %v9195 = vld [vmem:[%s3 + $0xa48] sm:$0xff]
  %v9196 = vld [vmem:[%s3 + $0xa50] sm:$0xff]
  %v9197 = vld [vmem:[%s3 + $0xa58] sm:$0xff]
  %v9198 = vld [vmem:[%s3 + $0xa60] sm:$0xff]
  %v9199 = vld [vmem:[%s3 + $0xa68] sm:$0xff]
  %v9200 = vld [vmem:[%s3 + $0xa70] sm:$0xff]
  %v9201 = vld [vmem:[%s3 + $0xa78] sm:$0xff]
  %v9202 = vld [vmem:[%s3 + $0xa80] sm:$0xff]
  %v9203 = vld [vmem:[%s3 + $0xa88] sm:$0xff]
  %v9204 = vld [vmem:[%s3 + $0xa90] sm:$0xff]
  %v9205 = vld [vmem:[%s3 + $0xa98] sm:$0xff]
  %v9206 = vld [vmem:[%s3 + $0xaa0] sm:$0xff]
  %v9207 = vld [vmem:[%s3 + $0xaa8] sm:$0xff]
  %v9208 = vld [vmem:[%s3 + $0xab0] sm:$0xff]
  %v9209 = vld [vmem:[%s3 + $0xab8] sm:$0xff]
  %v9210 = vld [vmem:[%s3 + $0xac0] sm:$0xff]
  %v9211 = vld [vmem:[%s3 + $0xac8] sm:$0xff]
  %v9212 = vld [vmem:[%s3 + $0xad0] sm:$0xff]
  %v9213 = vld [vmem:[%s3 + $0xad8] sm:$0xff]
  %v9214 = vld [vmem:[%s3 + $0xae0] sm:$0xff]
  %v9215 = vld [vmem:[%s3 + $0xae8] sm:$0xff]
  %v9216 = vld [vmem:[%s3 + $0xaf0] sm:$0xff]
  %v9217 = vld [vmem:[%s3 + $0xaf8] sm:$0xff]
  %v9218 = vld [vmem:[%s3 + $0xb00] sm:$0xff]
  %v9219 = vld [vmem:[%s3 + $0xb08] sm:$0xff]
  %v9220 = vld [vmem:[%s3 + $0xb10] sm:$0xff]
  %v9221 = vld [vmem:[%s3 + $0xb18] sm:$0xff]
  %v9222 = vld [vmem:[%s3 + $0xb20] sm:$0xff]
  %v9223 = vld [vmem:[%s3 + $0xb28] sm:$0xff]
  %v9224 = vld [vmem:[%s3 + $0xb30] sm:$0xff]
  %v9225 = vld [vmem:[%s3 + $0xb38] sm:$0xff]
  %v9226 = vld [vmem:[%s3 + $0xb40] sm:$0xff]
  %v9227 = vld [vmem:[%s3 + $0xb48] sm:$0xff]
  %v9228 = vld [vmem:[%s3 + $0xb50] sm:$0xff]
  %v9229 = vld [vmem:[%s3 + $0xb58] sm:$0xff]
  %v9230 = vld [vmem:[%s3 + $0xb60] sm:$0xff]
  %v9231 = vld [vmem:[%s3 + $0xb68] sm:$0xff]
  %v9232 = vld [vmem:[%s3 + $0xb70] sm:$0xff]
  %v9233 = vld [vmem:[%s3 + $0xb78] sm:$0xff]
  %v9234 = vld [vmem:[%s3 + $0xb80] sm:$0xff]
  %v9235 = vld [vmem:[%s3 + $0xb88] sm:$0xff]
  %v9236 = vld [vmem:[%s3 + $0xb90] sm:$0xff]
  %v9237 = vld [vmem:[%s3 + $0xb98] sm:$0xff]
  %v9238 = vld [vmem:[%s3 + $0xba0] sm:$0xff]
  %v9239 = vld [vmem:[%s3 + $0xba8] sm:$0xff]
  %v9240 = vld [vmem:[%s3 + $0xbb0] sm:$0xff]
  %v9241 = vld [vmem:[%s3 + $0xbb8] sm:$0xff]
  %v9242 = vld [vmem:[%s3 + $0xbc0] sm:$0xff]
  %v9243 = vld [vmem:[%s3 + $0xbc8] sm:$0xff]
  %v9244 = vld [vmem:[%s3 + $0xbd0] sm:$0xff]
  %v9245 = vld [vmem:[%s3 + $0xbd8] sm:$0xff]
  %v9246 = vld [vmem:[%s3 + $0xbe0] sm:$0xff]
  %v9247 = vld [vmem:[%s3 + $0xbe8] sm:$0xff]
  %v9248 = vld [vmem:[%s3 + $0xbf0] sm:$0xff]
  %v9249 = vld [vmem:[%s3 + $0xbf8] sm:$0xff]
  %v9250 = vld [vmem:[%s3 + $0xc00] sm:$0xff]
  %v9251 = vld [vmem:[%s3 + $0xc08] sm:$0xff]
  %v9252 = vld [vmem:[%s3 + $0xc10] sm:$0xff]
  %v9253 = vld [vmem:[%s3 + $0xc18] sm:$0xff]
  %v9254 = vld [vmem:[%s3 + $0xc20] sm:$0xff]
  %v9255 = vld [vmem:[%s3 + $0xc28] sm:$0xff]
  %v9256 = vld [vmem:[%s3 + $0xc30] sm:$0xff]
  %v9257 = vld [vmem:[%s3 + $0xc38] sm:$0xff]
  %v9258 = vld [vmem:[%s3 + $0xc40] sm:$0xff]
  %v9259 = vld [vmem:[%s3 + $0xc48] sm:$0xff]
  %v9260 = vld [vmem:[%s3 + $0xc50] sm:$0xff]
  %v9261 = vld [vmem:[%s3 + $0xc58] sm:$0xff]
  %v9262 = vld [vmem:[%s3 + $0xc60] sm:$0xff]
  %v9263 = vld [vmem:[%s3 + $0xc68] sm:$0xff]
  %v9264 = vld [vmem:[%s3 + $0xc70] sm:$0xff]
  %v9265 = vld [vmem:[%s3 + $0xc78] sm:$0xff]
  %v9266 = vld [vmem:[%s3 + $0xc80] sm:$0xff]
  %v9267 = vld [vmem:[%s3 + $0xc88] sm:$0xff]
  %v9268 = vld [vmem:[%s3 + $0xc90] sm:$0xff]
  %v9269 = vld [vmem:[%s3 + $0xc98] sm:$0xff]
  %v9270 = vld [vmem:[%s3 + $0xca0] sm:$0xff]
  %v9271 = vld [vmem:[%s3 + $0xca8] sm:$0xff]
  %v9272 = vld [vmem:[%s3 + $0xcb0] sm:$0xff]
  %v9273 = vld [vmem:[%s3 + $0xcb8] sm:$0xff]
  %v9274 = vld [vmem:[%s3 + $0xcc0] sm:$0xff]
  %v9275 = vld [vmem:[%s3 + $0xcc8] sm:$0xff]
  %v9276 = vld [vmem:[%s3 + $0xcd0] sm:$0xff]
  %v9277 = vld [vmem:[%s3 + $0xcd8] sm:$0xff]
  %v9278 = vld [vmem:[%s3 + $0xce0] sm:$0xff]
  %v9279 = vld [vmem:[%s3 + $0xce8] sm:$0xff]
  %v9280 = vld [vmem:[%s3 + $0xcf0] sm:$0xff]
  %v9281 = vld [vmem:[%s3 + $0xcf8] sm:$0xff]
  %v9282 = vld [vmem:[%s3 + $0xd00] sm:$0xff]
  %v9283 = vld [vmem:[%s3 + $0xd08] sm:$0xff]
  %v9284 = vld [vmem:[%s3 + $0xd10] sm:$0xff]
  %v9285 = vld [vmem:[%s3 + $0xd18] sm:$0xff]
  %v9286 = vld [vmem:[%s3 + $0xd20] sm:$0xff]
  %v9287 = vld [vmem:[%s3 + $0xd28] sm:$0xff]
  %v9288 = vld [vmem:[%s3 + $0xd30] sm:$0xff]
  %v9289 = vld [vmem:[%s3 + $0xd38] sm:$0xff]
  %v9290 = vld [vmem:[%s3 + $0xd40] sm:$0xff]
  %v9291 = vld [vmem:[%s3 + $0xd48] sm:$0xff]
  %v9292 = vld [vmem:[%s3 + $0xd50] sm:$0xff]
  %v9293 = vld [vmem:[%s3 + $0xd58] sm:$0xff]
  %v9294 = vld [vmem:[%s3 + $0xd60] sm:$0xff]
  %v9295 = vld [vmem:[%s3 + $0xd68] sm:$0xff]
  %v9296 = vld [vmem:[%s3 + $0xd70] sm:$0xff]
  %v9297 = vld [vmem:[%s3 + $0xd78] sm:$0xff]
  %v9298 = vld [vmem:[%s3 + $0xd80] sm:$0xff]
  %v9299 = vld [vmem:[%s3 + $0xd88] sm:$0xff]
  %v9300 = vld [vmem:[%s3 + $0xd90] sm:$0xff]
  %v9301 = vld [vmem:[%s3 + $0xd98] sm:$0xff]
  %v9302 = vld [vmem:[%s3 + $0xda0] sm:$0xff]
  %v9303 = vld [vmem:[%s3 + $0xda8] sm:$0xff]
  %v9304 = vld [vmem:[%s3 + $0xdb0] sm:$0xff]
  %v9305 = vld [vmem:[%s3 + $0xdb8] sm:$0xff]
  %v9306 = vld [vmem:[%s3 + $0xdc0] sm:$0xff]
  %v9307 = vld [vmem:[%s3 + $0xdc8] sm:$0xff]
  %v9308 = vld [vmem:[%s3 + $0xdd0] sm:$0xff]
  %v9309 = vld [vmem:[%s3 + $0xdd8] sm:$0xff]
  %v9310 = vld [vmem:[%s3 + $0xde0] sm:$0xff]
  %v9311 = vld [vmem:[%s3 + $0xde8] sm:$0xff]
  %v9312 = vld [vmem:[%s3 + $0xdf0] sm:$0xff]
  %v9313 = vld [vmem:[%s3 + $0xdf8] sm:$0xff]
  %v9314 = vld [vmem:[%s3 + $0xe00] sm:$0xff]
  %v9315 = vld [vmem:[%s3 + $0xe08] sm:$0xff]
  %v9316 = vld [vmem:[%s3 + $0xe10] sm:$0xff]
  %v9317 = vld [vmem:[%s3 + $0xe18] sm:$0xff]
  %v9318 = vld [vmem:[%s3 + $0xe20] sm:$0xff]
  %v9319 = vld [vmem:[%s3 + $0xe28] sm:$0xff]
  %v9320 = vld [vmem:[%s3 + $0xe30] sm:$0xff]
  %v9321 = vld [vmem:[%s3 + $0xe38] sm:$0xff]
  %v9322 = vld [vmem:[%s3 + $0xe40] sm:$0xff]
  %v9323 = vld [vmem:[%s3 + $0xe48] sm:$0xff]
  %v9324 = vld [vmem:[%s3 + $0xe50] sm:$0xff]
  %v9325 = vld [vmem:[%s3 + $0xe58] sm:$0xff]
  %v9326 = vld [vmem:[%s3 + $0xe60] sm:$0xff]
  %v9327 = vld [vmem:[%s3 + $0xe68] sm:$0xff]
  %v9328 = vld [vmem:[%s3 + $0xe70] sm:$0xff]
  %v9329 = vld [vmem:[%s3 + $0xe78] sm:$0xff]
  %v9330 = vld [vmem:[%s3 + $0xe80] sm:$0xff]
  %v9331 = vld [vmem:[%s3 + $0xe88] sm:$0xff]
  %v9332 = vld [vmem:[%s3 + $0xe90] sm:$0xff]
  %v9333 = vld [vmem:[%s3 + $0xe98] sm:$0xff]
  %v9334 = vld [vmem:[%s3 + $0xea0] sm:$0xff]
  %v9335 = vld [vmem:[%s3 + $0xea8] sm:$0xff]
  %v9336 = vld [vmem:[%s3 + $0xeb0] sm:$0xff]
  %v9337 = vld [vmem:[%s3 + $0xeb8] sm:$0xff]
  %v9338 = vld [vmem:[%s3 + $0xec0] sm:$0xff]
  %v9339 = vld [vmem:[%s3 + $0xec8] sm:$0xff]
  %v9340 = vld [vmem:[%s3 + $0xed0] sm:$0xff]
  %v9341 = vld [vmem:[%s3 + $0xed8] sm:$0xff]
  %v9342 = vld [vmem:[%s3 + $0xee0] sm:$0xff]
  %v9343 = vld [vmem:[%s3 + $0xee8] sm:$0xff]
  %v9344 = vld [vmem:[%s3 + $0xef0] sm:$0xff]
  %v9345 = vld [vmem:[%s3 + $0xef8] sm:$0xff]
  %v9346 = vld [vmem:[%s3 + $0xf00] sm:$0xff]
  %v9347 = vld [vmem:[%s3 + $0xf08] sm:$0xff]
  %v9348 = vld [vmem:[%s3 + $0xf10] sm:$0xff]
  %v9349 = vld [vmem:[%s3 + $0xf18] sm:$0xff]
  %v9350 = vld [vmem:[%s3 + $0xf20] sm:$0xff]
  %v9351 = vld [vmem:[%s3 + $0xf28] sm:$0xff]
  %v9352 = vld [vmem:[%s3 + $0xf30] sm:$0xff]
  %v9353 = vld [vmem:[%s3 + $0xf38] sm:$0xff]
  %v9354 = vld [vmem:[%s3 + $0xf40] sm:$0xff]
  %v9355 = vld [vmem:[%s3 + $0xf48] sm:$0xff]
  %v9356 = vld [vmem:[%s3 + $0xf50] sm:$0xff]
  %v9357 = vld [vmem:[%s3 + $0xf58] sm:$0xff]
  %v9358 = vld [vmem:[%s3 + $0xf60] sm:$0xff]
  %v9359 = vld [vmem:[%s3 + $0xf68] sm:$0xff]
  %v9360 = vld [vmem:[%s3 + $0xf70] sm:$0xff]
  %v9361 = vld [vmem:[%s3 + $0xf78] sm:$0xff]
  %v9362 = vld [vmem:[%s3 + $0xf80] sm:$0xff]
  %v9363 = vld [vmem:[%s3 + $0xf88] sm:$0xff]
  %v9364 = vld [vmem:[%s3 + $0xf90] sm:$0xff]
  %v9365 = vld [vmem:[%s3 + $0xf98] sm:$0xff]
  %v9366 = vld [vmem:[%s3 + $0xfa0] sm:$0xff]
  %v9367 = vld [vmem:[%s3 + $0xfa8] sm:$0xff]
  %v9368 = vld [vmem:[%s3 + $0xfb0] sm:$0xff]
  %v9369 = vld [vmem:[%s3 + $0xfb8] sm:$0xff]
  %v9370 = vld [vmem:[%s3 + $0xfc0] sm:$0xff]
  %v9371 = vld [vmem:[%s3 + $0xfc8] sm:$0xff]
  %v9372 = vld [vmem:[%s3 + $0xfd0] sm:$0xff]
  %v9373 = vld [vmem:[%s3 + $0xfd8] sm:$0xff]
  %v9374 = vld [vmem:[%s3 + $0xfe0] sm:$0xff]
  %v9375 = vld [vmem:[%s3 + $0xfe8] sm:$0xff]
  %v9376 = vld [vmem:[%s3 + $0xff0] sm:$0xff]
  %v9377 = vld [vmem:[%s3 + $0xff8] sm:$0xff]
  %v9378 = vld [vmem:[%s3 + $0x1000] sm:$0xff]
  %v9379 = vld [vmem:[%s3 + $0x1008] sm:$0xff]
  %v9380 = vld [vmem:[%s3 + $0x1010] sm:$0xff]
  %v9381 = vld [vmem:[%s3 + $0x1018] sm:$0xff]
  %v9382 = vld [vmem:[%s3 + $0x1020] sm:$0xff]
  %v9383 = vld [vmem:[%s3 + $0x1028] sm:$0xff]
  %v9384 = vld [vmem:[%s3 + $0x1030] sm:$0xff]
  %v9385 = vld [vmem:[%s3 + $0x1038] sm:$0xff]
  %v9386 = vld [vmem:[%s3 + $0x1040] sm:$0xff]
  %v9387 = vld [vmem:[%s3 + $0x1048] sm:$0xff]
  %v9388 = vld [vmem:[%s3 + $0x1050] sm:$0xff]
  %v9389 = vld [vmem:[%s3 + $0x1058] sm:$0xff]
  %v9390 = vld [vmem:[%s3 + $0x1060] sm:$0xff]
  %v9391 = vld [vmem:[%s3 + $0x1068] sm:$0xff]
  %v9392 = vld [vmem:[%s3 + $0x1070] sm:$0xff]
  %v9393 = vld [vmem:[%s3 + $0x1078] sm:$0xff]
  %v9394 = vld [vmem:[%s3 + $0x1080] sm:$0xff]
  %v9395 = vld [vmem:[%s3 + $0x1088] sm:$0xff]
  %v9396 = vld [vmem:[%s3 + $0x1090] sm:$0xff]
  %v9397 = vld [vmem:[%s3 + $0x1098] sm:$0xff]
  %v9398 = vld [vmem:[%s3 + $0x10a0] sm:$0xff]
  %v9399 = vld [vmem:[%s3 + $0x10a8] sm:$0xff]
  %v9400 = vld [vmem:[%s3 + $0x10b0] sm:$0xff]
  %v9401 = vld [vmem:[%s3 + $0x10b8] sm:$0xff]
  %v9402 = vld [vmem:[%s3 + $0x10c0] sm:$0xff]
  %v9403 = vld [vmem:[%s3 + $0x10c8] sm:$0xff]
  %v9404 = vld [vmem:[%s3 + $0x10d0] sm:$0xff]
  %v9405 = vld [vmem:[%s3 + $0x10d8] sm:$0xff]
  %v9406 = vld [vmem:[%s3 + $0x10e0] sm:$0xff]
  %v9407 = vld [vmem:[%s3 + $0x10e8] sm:$0xff]
  %v9408 = vld [vmem:[%s3 + $0x10f0] sm:$0xff]
  %v9409 = vld [vmem:[%s3 + $0x10f8] sm:$0xff]
  %v9410 = vld [vmem:[%s3 + $0x1100] sm:$0xff]
  %v9411 = vld [vmem:[%s3 + $0x1108] sm:$0xff]
  %v9412 = vld [vmem:[%s3 + $0x1110] sm:$0xff]
  %v9413 = vld [vmem:[%s3 + $0x1118] sm:$0xff]
  %v9414 = vld [vmem:[%s3 + $0x1120] sm:$0xff]
  %v9415 = vld [vmem:[%s3 + $0x1128] sm:$0xff]
  %v9416 = vld [vmem:[%s3 + $0x1130] sm:$0xff]
  %v9417 = vld [vmem:[%s3 + $0x1138] sm:$0xff]
  %v9418 = vld [vmem:[%s3 + $0x1140] sm:$0xff]
  %v9419 = vld [vmem:[%s3 + $0x1148] sm:$0xff]
  %v9420 = vld [vmem:[%s3 + $0x1150] sm:$0xff]
  %v9421 = vld [vmem:[%s3 + $0x1158] sm:$0xff]
  %v9422 = vld [vmem:[%s3 + $0x1160] sm:$0xff]
  %v9423 = vld [vmem:[%s3 + $0x1168] sm:$0xff]
  %v9424 = vld [vmem:[%s3 + $0x1170] sm:$0xff]
  %v9425 = vld [vmem:[%s3 + $0x1178] sm:$0xff]
  %v9426 = vld [vmem:[%s3 + $0x1180] sm:$0xff]
  %v9427 = vld [vmem:[%s3 + $0x1188] sm:$0xff]
  %v9428 = vld [vmem:[%s3 + $0x1190] sm:$0xff]
  %v9429 = vld [vmem:[%s3 + $0x1198] sm:$0xff]
  %v9430 = vld [vmem:[%s3 + $0x11a0] sm:$0xff]
  %v9431 = vld [vmem:[%s3 + $0x11a8] sm:$0xff]
  %v9432 = vld [vmem:[%s3 + $0x11b0] sm:$0xff]
  %v9433 = vld [vmem:[%s3 + $0x11b8] sm:$0xff]
  %v9434 = vld [vmem:[%s3 + $0x11c0] sm:$0xff]
  %v9435 = vld [vmem:[%s3 + $0x11c8] sm:$0xff]
  %v9436 = vld [vmem:[%s3 + $0x11d0] sm:$0xff]
  %v9437 = vld [vmem:[%s3 + $0x11d8] sm:$0xff]
  %v9438 = vld [vmem:[%s3 + $0x11e0] sm:$0xff]
  %v9439 = vld [vmem:[%s3 + $0x11e8] sm:$0xff]
  %v9440 = vld [vmem:[%s3 + $0x11f0] sm:$0xff]
  %v9441 = vld [vmem:[%s3 + $0x11f8] sm:$0xff]
  %v9442 = vld [vmem:[%s3 + $0x1200] sm:$0xff]
  %v9443 = vld [vmem:[%s3 + $0x1208] sm:$0xff]
  %v9444 = vld [vmem:[%s3 + $0x1210] sm:$0xff]
  %v9445 = vld [vmem:[%s3 + $0x1218] sm:$0xff]
  %v9446 = vld [vmem:[%s3 + $0x1220] sm:$0xff]
  %v9447 = vld [vmem:[%s3 + $0x1228] sm:$0xff]
  %v9448 = vld [vmem:[%s3 + $0x1230] sm:$0xff]
  %v9449 = vld [vmem:[%s3 + $0x1238] sm:$0xff]
  %v9450 = vld [vmem:[%s3 + $0x1240] sm:$0xff]
  %v9451 = vld [vmem:[%s3 + $0x1248] sm:$0xff]
  %v9452 = vld [vmem:[%s3 + $0x1250] sm:$0xff]
  %v9453 = vld [vmem:[%s3 + $0x1258] sm:$0xff]
  %v9454 = vld [vmem:[%s3 + $0x1260] sm:$0xff]
  %v9455 = vld [vmem:[%s3 + $0x1268] sm:$0xff]
  %v9456 = vld [vmem:[%s3 + $0x1270] sm:$0xff]
  %v9457 = vld [vmem:[%s3 + $0x1278] sm:$0xff]
  %v9458 = vld [vmem:[%s3 + $0x1280] sm:$0xff]
  %v9459 = vld [vmem:[%s3 + $0x1288] sm:$0xff]
  %v9460 = vld [vmem:[%s3 + $0x1290] sm:$0xff]
  %v9461 = vld [vmem:[%s3 + $0x1298] sm:$0xff]
  %v9462 = vld [vmem:[%s3 + $0x12a0] sm:$0xff]
  %v9463 = vld [vmem:[%s3 + $0x12a8] sm:$0xff]
  %v9464 = vld [vmem:[%s3 + $0x12b0] sm:$0xff]
  %v9465 = vld [vmem:[%s3 + $0x12b8] sm:$0xff]
  %v9466 = vld [vmem:[%s3 + $0x12c0] sm:$0xff]
  %v9467 = vld [vmem:[%s3 + $0x12c8] sm:$0xff]
  %v9468 = vld [vmem:[%s3 + $0x12d0] sm:$0xff]
  %v9469 = vld [vmem:[%s3 + $0x12d8] sm:$0xff]
  %v9470 = vld [vmem:[%s3 + $0x12e0] sm:$0xff]
  %v9471 = vld [vmem:[%s3 + $0x12e8] sm:$0xff]
  %v9472 = vld [vmem:[%s3 + $0x12f0] sm:$0xff]
  %v9473 = vld [vmem:[%s3 + $0x12f8] sm:$0xff]
  %v9474 = vld [vmem:[%s3 + $0x1300] sm:$0xff]
  %v9475 = vld [vmem:[%s3 + $0x1308] sm:$0xff]
  %v9476 = vld [vmem:[%s3 + $0x1310] sm:$0xff]
  %v9477 = vld [vmem:[%s3 + $0x1318] sm:$0xff]
  %v9478 = vld [vmem:[%s3 + $0x1320] sm:$0xff]
  %v9479 = vld [vmem:[%s3 + $0x1328] sm:$0xff]
  %v9480 = vld [vmem:[%s3 + $0x1330] sm:$0xff]
  %v9481 = vld [vmem:[%s3 + $0x1338] sm:$0xff]
  %v9482 = vld [vmem:[%s3 + $0x1340] sm:$0xff]
  %v9483 = vld [vmem:[%s3 + $0x1348] sm:$0xff]
  %v9484 = vld [vmem:[%s3 + $0x1350] sm:$0xff]
  %v9485 = vld [vmem:[%s3 + $0x1358] sm:$0xff]
  %v9486 = vld [vmem:[%s3 + $0x1360] sm:$0xff]
  %v9487 = vld [vmem:[%s3 + $0x1368] sm:$0xff]
  %v9488 = vld [vmem:[%s3 + $0x1370] sm:$0xff]
  %v9489 = vld [vmem:[%s3 + $0x1378] sm:$0xff]
  %v9490 = vld [vmem:[%s3 + $0x1380] sm:$0xff]
  %v9491 = vld [vmem:[%s3 + $0x1388] sm:$0xff]
  %v9492 = vld [vmem:[%s3 + $0x1390] sm:$0xff]
  %v9493 = vld [vmem:[%s3 + $0x1398] sm:$0xff]
  %v9494 = vld [vmem:[%s3 + $0x13a0] sm:$0xff]
  %v9495 = vld [vmem:[%s3 + $0x13a8] sm:$0xff]
  %v9496 = vld [vmem:[%s3 + $0x13b0] sm:$0xff]
  %v9497 = vld [vmem:[%s3 + $0x13b8] sm:$0xff]
  %v9498 = vld [vmem:[%s3 + $0x13c0] sm:$0xff]
  %v9499 = vld [vmem:[%s3 + $0x13c8] sm:$0xff]
  %v9500 = vld [vmem:[%s3 + $0x13d0] sm:$0xff]
  %v9501 = vld [vmem:[%s3 + $0x13d8] sm:$0xff]
  %v9502 = vld [vmem:[%s3 + $0x13e0] sm:$0xff]
  %v9503 = vld [vmem:[%s3 + $0x13e8] sm:$0xff]
  %v9504 = vld [vmem:[%s3 + $0x13f0] sm:$0xff]
  %v9505 = vld [vmem:[%s3 + $0x13f8] sm:$0xff]
  %v9506 = vld [vmem:[%s3 + $0x1400] sm:$0xff]
  %v9507 = vld [vmem:[%s3 + $0x1408] sm:$0xff]
  %v9508 = vld [vmem:[%s3 + $0x1410] sm:$0xff]
  %v9509 = vld [vmem:[%s3 + $0x1418] sm:$0xff]
  %v9510 = vld [vmem:[%s3 + $0x1420] sm:$0xff]
  %v9511 = vld [vmem:[%s3 + $0x1428] sm:$0xff]
  %v9512 = vld [vmem:[%s3 + $0x1430] sm:$0xff]
  %v9513 = vld [vmem:[%s3 + $0x1438] sm:$0xff]
  %v9514 = vld [vmem:[%s3 + $0x1440] sm:$0xff]
  %v9515 = vld [vmem:[%s3 + $0x1448] sm:$0xff]
  %v9516 = vld [vmem:[%s3 + $0x1450] sm:$0xff]
  %v9517 = vld [vmem:[%s3 + $0x1458] sm:$0xff]
  %v9518 = vld [vmem:[%s3 + $0x1460] sm:$0xff]
  %v9519 = vld [vmem:[%s3 + $0x1468] sm:$0xff]
  %v9520 = vld [vmem:[%s3 + $0x1470] sm:$0xff]
  %v9521 = vld [vmem:[%s3 + $0x1478] sm:$0xff]
  %v9522 = vld [vmem:[%s3 + $0x1480] sm:$0xff]
  %v9523 = vld [vmem:[%s3 + $0x1488] sm:$0xff]
  %v9524 = vld [vmem:[%s3 + $0x1490] sm:$0xff]
  %v9525 = vld [vmem:[%s3 + $0x1498] sm:$0xff]
  %v9526 = vld [vmem:[%s3 + $0x14a0] sm:$0xff]
  %v9527 = vld [vmem:[%s3 + $0x14a8] sm:$0xff]
  %v9528 = vld [vmem:[%s3 + $0x14b0] sm:$0xff]
  %v9529 = vld [vmem:[%s3 + $0x14b8] sm:$0xff]
  %v9530 = vld [vmem:[%s3 + $0x14c0] sm:$0xff]
  %v9531 = vld [vmem:[%s3 + $0x14c8] sm:$0xff]
  %v9532 = vld [vmem:[%s3 + $0x14d0] sm:$0xff]
  %v9533 = vld [vmem:[%s3 + $0x14d8] sm:$0xff]
  %v9534 = vld [vmem:[%s3 + $0x14e0] sm:$0xff]
  %v9535 = vld [vmem:[%s3 + $0x14e8] sm:$0xff]
  %v9536 = vld [vmem:[%s3 + $0x14f0] sm:$0xff]
  %v9537 = vld [vmem:[%s3 + $0x14f8] sm:$0xff]
  %v9538 = vld [vmem:[%s3 + $0x1500] sm:$0xff]
  %v9539 = vld [vmem:[%s3 + $0x1508] sm:$0xff]
  %v9540 = vld [vmem:[%s3 + $0x1510] sm:$0xff]
  %v9541 = vld [vmem:[%s3 + $0x1518] sm:$0xff]
  %v9542 = vld [vmem:[%s3 + $0x1520] sm:$0xff]
  %v9543 = vld [vmem:[%s3 + $0x1528] sm:$0xff]
  %v9544 = vld [vmem:[%s3 + $0x1530] sm:$0xff]
  %v9545 = vld [vmem:[%s3 + $0x1538] sm:$0xff]
  %v9546 = vld [vmem:[%s3 + $0x1540] sm:$0xff]
  %v9547 = vld [vmem:[%s3 + $0x1548] sm:$0xff]
  %v9548 = vld [vmem:[%s3 + $0x1550] sm:$0xff]
  %v9549 = vld [vmem:[%s3 + $0x1558] sm:$0xff]
  %v9550 = vld [vmem:[%s3 + $0x1560] sm:$0xff]
  %v9551 = vld [vmem:[%s3 + $0x1568] sm:$0xff]
  %v9552 = vld [vmem:[%s3 + $0x1570] sm:$0xff]
  %v9553 = vld [vmem:[%s3 + $0x1578] sm:$0xff]
  %v9554 = vld [vmem:[%s3 + $0x1580] sm:$0xff]
  %v9555 = vld [vmem:[%s3 + $0x1588] sm:$0xff]
  %v9556 = vld [vmem:[%s3 + $0x1590] sm:$0xff]
  %v9557 = vld [vmem:[%s3 + $0x1598] sm:$0xff]
  %v9558 = vld [vmem:[%s3 + $0x15a0] sm:$0xff]
  %v9559 = vld [vmem:[%s3 + $0x15a8] sm:$0xff]
  %v9560 = vld [vmem:[%s3 + $0x15b0] sm:$0xff]
  %v9561 = vld [vmem:[%s3 + $0x15b8] sm:$0xff]
  %v9562 = vld [vmem:[%s3 + $0x15c0] sm:$0xff]
  %v9563 = vld [vmem:[%s3 + $0x15c8] sm:$0xff]
  %v9564 = vld [vmem:[%s3 + $0x15d0] sm:$0xff]
  %v9565 = vld [vmem:[%s3 + $0x15d8] sm:$0xff]
  %v9566 = vld [vmem:[%s3 + $0x15e0] sm:$0xff]
  %v9567 = vld [vmem:[%s3 + $0x15e8] sm:$0xff]
  %v9568 = vld [vmem:[%s3 + $0x15f0] sm:$0xff]
  %v9569 = vld [vmem:[%s3 + $0x15f8] sm:$0xff]
  %v9570 = vld [vmem:[%s3 + $0x1600] sm:$0xff]
  %v9571 = vld [vmem:[%s3 + $0x1608] sm:$0xff]
  %v9572 = vld [vmem:[%s3 + $0x1610] sm:$0xff]
  %v9573 = vld [vmem:[%s3 + $0x1618] sm:$0xff]
  %v9574 = vld [vmem:[%s3 + $0x1620] sm:$0xff]
  %v9575 = vld [vmem:[%s3 + $0x1628] sm:$0xff]
  %v9576 = vld [vmem:[%s3 + $0x1630] sm:$0xff]
  %v9577 = vld [vmem:[%s3 + $0x1638] sm:$0xff]
  %v9578 = vld [vmem:[%s3 + $0x1640] sm:$0xff]
  %v9579 = vld [vmem:[%s3 + $0x1648] sm:$0xff]
  %v9580 = vld [vmem:[%s3 + $0x1650] sm:$0xff]
  %v9581 = vld [vmem:[%s3 + $0x1658] sm:$0xff]
  %v9582 = vld [vmem:[%s3 + $0x1660] sm:$0xff]
  %v9583 = vld [vmem:[%s3 + $0x1668] sm:$0xff]
  %v9584 = vld [vmem:[%s3 + $0x1670] sm:$0xff]
  %v9585 = vld [vmem:[%s3 + $0x1678] sm:$0xff]
  %v9586 = vld [vmem:[%s3 + $0x1680] sm:$0xff]
  %v9587 = vld [vmem:[%s3 + $0x1688] sm:$0xff]
  %v9588 = vld [vmem:[%s3 + $0x1690] sm:$0xff]
  %v9589 = vld [vmem:[%s3 + $0x1698] sm:$0xff]
  %v9590 = vld [vmem:[%s3 + $0x16a0] sm:$0xff]
  %v9591 = vld [vmem:[%s3 + $0x16a8] sm:$0xff]
  %v9592 = vld [vmem:[%s3 + $0x16b0] sm:$0xff]
  %v9593 = vld [vmem:[%s3 + $0x16b8] sm:$0xff]
  %v9594 = vld [vmem:[%s3 + $0x16c0] sm:$0xff]
  %v9595 = vld [vmem:[%s3 + $0x16c8] sm:$0xff]
  %v9596 = vld [vmem:[%s3 + $0x16d0] sm:$0xff]
  %v9597 = vld [vmem:[%s3 + $0x16d8] sm:$0xff]
  %v9598 = vld [vmem:[%s3 + $0x16e0] sm:$0xff]
  %v9599 = vld [vmem:[%s3 + $0x16e8] sm:$0xff]
  %v9600 = vld [vmem:[%s3 + $0x16f0] sm:$0xff]
  %v9601 = vld [vmem:[%s3 + $0x16f8] sm:$0xff]
  %v9602 = vld [vmem:[%s3 + $0x1700] sm:$0xff]
  %v9603 = vld [vmem:[%s3 + $0x1708] sm:$0xff]
  %v9604 = vld [vmem:[%s3 + $0x1710] sm:$0xff]
  %v9605 = vld [vmem:[%s3 + $0x1718] sm:$0xff]
  %v9606 = vld [vmem:[%s3 + $0x1720] sm:$0xff]
  %v9607 = vld [vmem:[%s3 + $0x1728] sm:$0xff]
  %v9608 = vld [vmem:[%s3 + $0x1730] sm:$0xff]
  %v9609 = vld [vmem:[%s3 + $0x1738] sm:$0xff]
  %v9610 = vld [vmem:[%s3 + $0x1740] sm:$0xff]
  %v9611 = vld [vmem:[%s3 + $0x1748] sm:$0xff]
  %v9612 = vld [vmem:[%s3 + $0x1750] sm:$0xff]
  %v9613 = vld [vmem:[%s3 + $0x1758] sm:$0xff]
  %v9614 = vld [vmem:[%s3 + $0x1760] sm:$0xff]
  %v9615 = vld [vmem:[%s3 + $0x1768] sm:$0xff]
  %v9616 = vld [vmem:[%s3 + $0x1770] sm:$0xff]
  %v9617 = vld [vmem:[%s3 + $0x1778] sm:$0xff]
  %v9618 = vld [vmem:[%s3 + $0x1780] sm:$0xff]
  %v9619 = vld [vmem:[%s3 + $0x1788] sm:$0xff]
  %v9620 = vld [vmem:[%s3 + $0x1790] sm:$0xff]
  %v9621 = vld [vmem:[%s3 + $0x1798] sm:$0xff]
  %v9622 = vld [vmem:[%s3 + $0x17a0] sm:$0xff]
  %v9623 = vld [vmem:[%s3 + $0x17a8] sm:$0xff]
  %v9624 = vld [vmem:[%s3 + $0x17b0] sm:$0xff]
  %v9625 = vld [vmem:[%s3 + $0x17b8] sm:$0xff]
  %v9626 = vld [vmem:[%s3 + $0x17c0] sm:$0xff]
  %v9627 = vld [vmem:[%s3 + $0x17c8] sm:$0xff]
  %v9628 = vld [vmem:[%s3 + $0x17d0] sm:$0xff]
  %v9629 = vld [vmem:[%s3 + $0x17d8] sm:$0xff]
  %v9630 = vld [vmem:[%s3 + $0x17e0] sm:$0xff]
  %v9631 = vld [vmem:[%s3 + $0x17e8] sm:$0xff]
  %v9632 = vld [vmem:[%s3 + $0x17f0] sm:$0xff]
  %v9633 = vld [vmem:[%s3 + $0x17f8] sm:$0xff]
  %v9634 = vld [vmem:[%s3 + $0x1800] sm:$0xff]
  %v9635 = vld [vmem:[%s3 + $0x1808] sm:$0xff]
  %v9636 = vld [vmem:[%s3 + $0x1810] sm:$0xff]
  %v9637 = vld [vmem:[%s3 + $0x1818] sm:$0xff]
  %v9638 = vld [vmem:[%s3 + $0x1820] sm:$0xff]
  %v9639 = vld [vmem:[%s3 + $0x1828] sm:$0xff]
  %v9640 = vld [vmem:[%s3 + $0x1830] sm:$0xff]
  %v9641 = vld [vmem:[%s3 + $0x1838] sm:$0xff]
  %v9642 = vld [vmem:[%s3 + $0x1840] sm:$0xff]
  %v9643 = vld [vmem:[%s3 + $0x1848] sm:$0xff]
  %v9644 = vld [vmem:[%s3 + $0x1850] sm:$0xff]
  %v9645 = vld [vmem:[%s3 + $0x1858] sm:$0xff]
  %v9646 = vld [vmem:[%s3 + $0x1860] sm:$0xff]
  %v9647 = vld [vmem:[%s3 + $0x1868] sm:$0xff]
  %v9648 = vld [vmem:[%s3 + $0x1870] sm:$0xff]
  %v9649 = vld [vmem:[%s3 + $0x1878] sm:$0xff]
  %v9650 = vld [vmem:[%s3 + $0x1880] sm:$0xff]
  %v9651 = vld [vmem:[%s3 + $0x1888] sm:$0xff]
  %v9652 = vld [vmem:[%s3 + $0x1890] sm:$0xff]
  %v9653 = vld [vmem:[%s3 + $0x1898] sm:$0xff]
  %v9654 = vld [vmem:[%s3 + $0x18a0] sm:$0xff]
  %v9655 = vld [vmem:[%s3 + $0x18a8] sm:$0xff]
  %v9656 = vld [vmem:[%s3 + $0x18b0] sm:$0xff]
  %v9657 = vld [vmem:[%s3 + $0x18b8] sm:$0xff]
  %v9658 = vld [vmem:[%s3 + $0x18c0] sm:$0xff]
  %v9659 = vld [vmem:[%s3 + $0x18c8] sm:$0xff]
  %v9660 = vld [vmem:[%s3 + $0x18d0] sm:$0xff]
  %v9661 = vld [vmem:[%s3 + $0x18d8] sm:$0xff]
  %v9662 = vld [vmem:[%s3 + $0x18e0] sm:$0xff]
  %v9663 = vld [vmem:[%s3 + $0x18e8] sm:$0xff]
  %v9664 = vld [vmem:[%s3 + $0x18f0] sm:$0xff]
  %v9665 = vld [vmem:[%s3 + $0x18f8] sm:$0xff]
  %v9666 = vld [vmem:[%s3 + $0x1900] sm:$0xff]
  %v9667 = vld [vmem:[%s3 + $0x1908] sm:$0xff]
  %v9668 = vld [vmem:[%s3 + $0x1910] sm:$0xff]
  %v9669 = vld [vmem:[%s3 + $0x1918] sm:$0xff]
  %v9670 = vld [vmem:[%s3 + $0x1920] sm:$0xff]
  %v9671 = vld [vmem:[%s3 + $0x1928] sm:$0xff]
  %v9672 = vld [vmem:[%s3 + $0x1930] sm:$0xff]
  %v9673 = vld [vmem:[%s3 + $0x1938] sm:$0xff]
  %v9674 = vld [vmem:[%s3 + $0x1940] sm:$0xff]
  %v9675 = vld [vmem:[%s3 + $0x1948] sm:$0xff]
  %v9676 = vld [vmem:[%s3 + $0x1950] sm:$0xff]
  %v9677 = vld [vmem:[%s3 + $0x1958] sm:$0xff]
  %v9678 = vld [vmem:[%s3 + $0x1960] sm:$0xff]
  %v9679 = vld [vmem:[%s3 + $0x1968] sm:$0xff]
  %v9680 = vld [vmem:[%s3 + $0x1970] sm:$0xff]
  %v9681 = vld [vmem:[%s3 + $0x1978] sm:$0xff]
  %v9682 = vld [vmem:[%s3 + $0x1980] sm:$0xff]
  %v9683 = vld [vmem:[%s3 + $0x1988] sm:$0xff]
  %v9684 = vld [vmem:[%s3 + $0x1990] sm:$0xff]
  %v9685 = vld [vmem:[%s3 + $0x1998] sm:$0xff]
  %v9686 = vld [vmem:[%s3 + $0x19a0] sm:$0xff]
  %v9687 = vld [vmem:[%s3 + $0x19a8] sm:$0xff]
  %v9688 = vld [vmem:[%s3 + $0x19b0] sm:$0xff]
  %v9689 = vld [vmem:[%s3 + $0x19b8] sm:$0xff]
  %v9690 = vld [vmem:[%s3 + $0x19c0] sm:$0xff]
  %v9691 = vld [vmem:[%s3 + $0x19c8] sm:$0xff]
  %v9692 = vld [vmem:[%s3 + $0x19d0] sm:$0xff]
  %v9693 = vld [vmem:[%s3 + $0x19d8] sm:$0xff]
  %v9694 = vld [vmem:[%s3 + $0x19e0] sm:$0xff]
  %v9695 = vld [vmem:[%s3 + $0x19e8] sm:$0xff]
  %v9696 = vld [vmem:[%s3 + $0x19f0] sm:$0xff]
  %v9697 = vld [vmem:[%s3 + $0x19f8] sm:$0xff]
  %v9698 = vld [vmem:[%s3 + $0x1a00] sm:$0xff]
  %v9699 = vld [vmem:[%s3 + $0x1a08] sm:$0xff]
  %v9700 = vld [vmem:[%s3 + $0x1a10] sm:$0xff]
  %v9701 = vld [vmem:[%s3 + $0x1a18] sm:$0xff]
  %v9702 = vld [vmem:[%s3 + $0x1a20] sm:$0xff]
  %v9703 = vld [vmem:[%s3 + $0x1a28] sm:$0xff]
  %v9704 = vld [vmem:[%s3 + $0x1a30] sm:$0xff]
  %v9705 = vld [vmem:[%s3 + $0x1a38] sm:$0xff]
  %v9706 = vld [vmem:[%s3 + $0x1a40] sm:$0xff]
  %v9707 = vld [vmem:[%s3 + $0x1a48] sm:$0xff]
  %v9708 = vld [vmem:[%s3 + $0x1a50] sm:$0xff]
  %v9709 = vld [vmem:[%s3 + $0x1a58] sm:$0xff]
  %v9710 = vld [vmem:[%s3 + $0x1a60] sm:$0xff]
  %v9711 = vld [vmem:[%s3 + $0x1a68] sm:$0xff]
  %v9712 = vld [vmem:[%s3 + $0x1a70] sm:$0xff]
  %v9713 = vld [vmem:[%s3 + $0x1a78] sm:$0xff]
  %v9714 = vld [vmem:[%s3 + $0x1a80] sm:$0xff]
  %v9715 = vld [vmem:[%s3 + $0x1a88] sm:$0xff]
  %v9716 = vld [vmem:[%s3 + $0x1a90] sm:$0xff]
  %v9717 = vld [vmem:[%s3 + $0x1a98] sm:$0xff]
  %v9718 = vld [vmem:[%s3 + $0x1aa0] sm:$0xff]
  %v9719 = vld [vmem:[%s3 + $0x1aa8] sm:$0xff]
  %v9720 = vld [vmem:[%s3 + $0x1ab0] sm:$0xff]
  %v9721 = vld [vmem:[%s3 + $0x1ab8] sm:$0xff]
  %v9722 = vld [vmem:[%s3 + $0x1ac0] sm:$0xff]
  %v9723 = vld [vmem:[%s3 + $0x1ac8] sm:$0xff]
  %v9724 = vld [vmem:[%s3 + $0x1ad0] sm:$0xff]
  %v9725 = vld [vmem:[%s3 + $0x1ad8] sm:$0xff]
  %v9726 = vld [vmem:[%s3 + $0x1ae0] sm:$0xff]
  %v9727 = vld [vmem:[%s3 + $0x1ae8] sm:$0xff]
  %v9728 = vld [vmem:[%s3 + $0x1af0] sm:$0xff]
  %v9729 = vld [vmem:[%s3 + $0x1af8] sm:$0xff]
  %v9730 = vld [vmem:[%s3 + $0x1b00] sm:$0xff]
  %v9731 = vld [vmem:[%s3 + $0x1b08] sm:$0xff]
  %v9732 = vld [vmem:[%s3 + $0x1b10] sm:$0xff]
  %v9733 = vld [vmem:[%s3 + $0x1b18] sm:$0xff]
  %v9734 = vld [vmem:[%s3 + $0x1b20] sm:$0xff]
  %v9735 = vld [vmem:[%s3 + $0x1b28] sm:$0xff]
  %v9736 = vld [vmem:[%s3 + $0x1b30] sm:$0xff]
  %v9737 = vld [vmem:[%s3 + $0x1b38] sm:$0xff]
  %v9738 = vld [vmem:[%s3 + $0x1b40] sm:$0xff]
  %v9739 = vld [vmem:[%s3 + $0x1b48] sm:$0xff]
  %v9740 = vld [vmem:[%s3 + $0x1b50] sm:$0xff]
  %v9741 = vld [vmem:[%s3 + $0x1b58] sm:$0xff]
  %v9742 = vld [vmem:[%s3 + $0x1b60] sm:$0xff]
  %v9743 = vld [vmem:[%s3 + $0x1b68] sm:$0xff]
  %v9744 = vld [vmem:[%s3 + $0x1b70] sm:$0xff]
  %v9745 = vld [vmem:[%s3 + $0x1b78] sm:$0xff]
  %v9746 = vld [vmem:[%s3 + $0x1b80] sm:$0xff]
  %v9747 = vld [vmem:[%s3 + $0x1b88] sm:$0xff]
  %v9748 = vld [vmem:[%s3 + $0x1b90] sm:$0xff]
  %v9749 = vld [vmem:[%s3 + $0x1b98] sm:$0xff]
  %v9750 = vld [vmem:[%s3 + $0x1ba0] sm:$0xff]
  %v9751 = vld [vmem:[%s3 + $0x1ba8] sm:$0xff]
  %v9752 = vld [vmem:[%s3 + $0x1bb0] sm:$0xff]
  %v9753 = vld [vmem:[%s3 + $0x1bb8] sm:$0xff]
  %v9754 = vld [vmem:[%s3 + $0x1bc0] sm:$0xff]
  %v9755 = vld [vmem:[%s3 + $0x1bc8] sm:$0xff]
  %v9756 = vld [vmem:[%s3 + $0x1bd0] sm:$0xff]
  %v9757 = vld [vmem:[%s3 + $0x1bd8] sm:$0xff]
  %v9758 = vld [vmem:[%s3 + $0x1be0] sm:$0xff]
  %v9759 = vld [vmem:[%s3 + $0x1be8] sm:$0xff]
  %v9760 = vld [vmem:[%s3 + $0x1bf0] sm:$0xff]
  %v9761 = vld [vmem:[%s3 + $0x1bf8] sm:$0xff]
  %v9762 = vld [vmem:[%s3 + $0x1c00] sm:$0xff]
  %v9763 = vld [vmem:[%s3 + $0x1c08] sm:$0xff]
  %v9764 = vld [vmem:[%s3 + $0x1c10] sm:$0xff]
  %v9765 = vld [vmem:[%s3 + $0x1c18] sm:$0xff]
  %v9766 = vld [vmem:[%s3 + $0x1c20] sm:$0xff]
  %v9767 = vld [vmem:[%s3 + $0x1c28] sm:$0xff]
  %v9768 = vld [vmem:[%s3 + $0x1c30] sm:$0xff]
  %v9769 = vld [vmem:[%s3 + $0x1c38] sm:$0xff]
  %v9770 = vld [vmem:[%s3 + $0x1c40] sm:$0xff]
  %v9771 = vld [vmem:[%s3 + $0x1c48] sm:$0xff]
  %v9772 = vld [vmem:[%s3 + $0x1c50] sm:$0xff]
  %v9773 = vld [vmem:[%s3 + $0x1c58] sm:$0xff]
  %v9774 = vld [vmem:[%s3 + $0x1c60] sm:$0xff]
  %v9775 = vld [vmem:[%s3 + $0x1c68] sm:$0xff]
  %v9776 = vld [vmem:[%s3 + $0x1c70] sm:$0xff]
  %v9777 = vld [vmem:[%s3 + $0x1c78] sm:$0xff]
  %v9778 = vld [vmem:[%s3 + $0x1c80] sm:$0xff]
  %v9779 = vld [vmem:[%s3 + $0x1c88] sm:$0xff]
  %v9780 = vld [vmem:[%s3 + $0x1c90] sm:$0xff]
  %v9781 = vld [vmem:[%s3 + $0x1c98] sm:$0xff]
  %v9782 = vld [vmem:[%s3 + $0x1ca0] sm:$0xff]
  %v9783 = vld [vmem:[%s3 + $0x1ca8] sm:$0xff]
  %v9784 = vld [vmem:[%s3 + $0x1cb0] sm:$0xff]
  %v9785 = vld [vmem:[%s3 + $0x1cb8] sm:$0xff]
  %v9786 = vld [vmem:[%s3 + $0x1cc0] sm:$0xff]
  %v9787 = vld [vmem:[%s3 + $0x1cc8] sm:$0xff]
  %v9788 = vld [vmem:[%s3 + $0x1cd0] sm:$0xff]
  %v9789 = vld [vmem:[%s3 + $0x1cd8] sm:$0xff]
  %v9790 = vld [vmem:[%s3 + $0x1ce0] sm:$0xff]
  %v9791 = vld [vmem:[%s3 + $0x1ce8] sm:$0xff]
  %v9792 = vld [vmem:[%s3 + $0x1cf0] sm:$0xff]
  %v9793 = vld [vmem:[%s3 + $0x1cf8] sm:$0xff]
  %v9794 = vld [vmem:[%s3 + $0x1d00] sm:$0xff]
  %v9795 = vld [vmem:[%s3 + $0x1d08] sm:$0xff]
  %v9796 = vld [vmem:[%s3 + $0x1d10] sm:$0xff]
  %v9797 = vld [vmem:[%s3 + $0x1d18] sm:$0xff]
  %v9798 = vld [vmem:[%s3 + $0x1d20] sm:$0xff]
  %v9799 = vld [vmem:[%s3 + $0x1d28] sm:$0xff]
  %v9800 = vld [vmem:[%s3 + $0x1d30] sm:$0xff]
  %v9801 = vld [vmem:[%s3 + $0x1d38] sm:$0xff]
  %v9802 = vld [vmem:[%s3 + $0x1d40] sm:$0xff]
  %v9803 = vld [vmem:[%s3 + $0x1d48] sm:$0xff]
  %v9804 = vld [vmem:[%s3 + $0x1d50] sm:$0xff]
  %v9805 = vld [vmem:[%s3 + $0x1d58] sm:$0xff]
  %v9806 = vld [vmem:[%s3 + $0x1d60] sm:$0xff]
  %v9807 = vld [vmem:[%s3 + $0x1d68] sm:$0xff]
  %v9808 = vld [vmem:[%s3 + $0x1d70] sm:$0xff]
  %v9809 = vld [vmem:[%s3 + $0x1d78] sm:$0xff]
  %v9810 = vld [vmem:[%s3 + $0x1d80] sm:$0xff]
  %v9811 = vld [vmem:[%s3 + $0x1d88] sm:$0xff]
  %v9812 = vld [vmem:[%s3 + $0x1d90] sm:$0xff]
  %v9813 = vld [vmem:[%s3 + $0x1d98] sm:$0xff]
  %v9814 = vld [vmem:[%s3 + $0x1da0] sm:$0xff]
  %v9815 = vld [vmem:[%s3 + $0x1da8] sm:$0xff]
  %v9816 = vld [vmem:[%s3 + $0x1db0] sm:$0xff]
  %v9817 = vld [vmem:[%s3 + $0x1db8] sm:$0xff]
  %v9818 = vld [vmem:[%s3 + $0x1dc0] sm:$0xff]
  %v9819 = vld [vmem:[%s3 + $0x1dc8] sm:$0xff]
  %v9820 = vld [vmem:[%s3 + $0x1dd0] sm:$0xff]
  %v9821 = vld [vmem:[%s3 + $0x1dd8] sm:$0xff]
  %v9822 = vld [vmem:[%s3 + $0x1de0] sm:$0xff]
  %v9823 = vld [vmem:[%s3 + $0x1de8] sm:$0xff]
  %v9824 = vld [vmem:[%s3 + $0x1df0] sm:$0xff]
  %v9825 = vld [vmem:[%s3 + $0x1df8] sm:$0xff]
  %v9826 = vld [vmem:[%s3 + $0x1e00] sm:$0xff]
  %v9827 = vld [vmem:[%s3 + $0x1e08] sm:$0xff]
  %v9828 = vld [vmem:[%s3 + $0x1e10] sm:$0xff]
  %v9829 = vld [vmem:[%s3 + $0x1e18] sm:$0xff]
  %v9830 = vld [vmem:[%s3 + $0x1e20] sm:$0xff]
  %v9831 = vld [vmem:[%s3 + $0x1e28] sm:$0xff]
  %v9832 = vld [vmem:[%s3 + $0x1e30] sm:$0xff]
  %v9833 = vld [vmem:[%s3 + $0x1e38] sm:$0xff]
  %v9834 = vld [vmem:[%s3 + $0x1e40] sm:$0xff]
  %v9835 = vld [vmem:[%s3 + $0x1e48] sm:$0xff]
  %v9836 = vld [vmem:[%s3 + $0x1e50] sm:$0xff]
  %v9837 = vld [vmem:[%s3 + $0x1e58] sm:$0xff]
  %v9838 = vld [vmem:[%s3 + $0x1e60] sm:$0xff]
  %v9839 = vld [vmem:[%s3 + $0x1e68] sm:$0xff]
  %v9840 = vld [vmem:[%s3 + $0x1e70] sm:$0xff]
  %v9841 = vld [vmem:[%s3 + $0x1e78] sm:$0xff]
  %v9842 = vld [vmem:[%s3 + $0x1e80] sm:$0xff]
  %v9843 = vld [vmem:[%s3 + $0x1e88] sm:$0xff]
  %v9844 = vld [vmem:[%s3 + $0x1e90] sm:$0xff]
  %v9845 = vld [vmem:[%s3 + $0x1e98] sm:$0xff]
  %v9846 = vld [vmem:[%s3 + $0x1ea0] sm:$0xff]
  %v9847 = vld [vmem:[%s3 + $0x1ea8] sm:$0xff]
  %v9848 = vld [vmem:[%s3 + $0x1eb0] sm:$0xff]
  %v9849 = vld [vmem:[%s3 + $0x1eb8] sm:$0xff]
  %v9850 = vld [vmem:[%s3 + $0x1ec0] sm:$0xff]
  %v9851 = vld [vmem:[%s3 + $0x1ec8] sm:$0xff]
  %v9852 = vld [vmem:[%s3 + $0x1ed0] sm:$0xff]
  %v9853 = vld [vmem:[%s3 + $0x1ed8] sm:$0xff]
  %v9854 = vld [vmem:[%s3 + $0x1ee0] sm:$0xff]
  %v9855 = vld [vmem:[%s3 + $0x1ee8] sm:$0xff]
  %v9856 = vld [vmem:[%s3 + $0x1ef0] sm:$0xff]
  %v9857 = vld [vmem:[%s3 + $0x1ef8] sm:$0xff]
  %v9858 = vld [vmem:[%s3 + $0x1f00] sm:$0xff]
  %v9859 = vld [vmem:[%s3 + $0x1f08] sm:$0xff]
  %v9860 = vld [vmem:[%s3 + $0x1f10] sm:$0xff]
  %v9861 = vld [vmem:[%s3 + $0x1f18] sm:$0xff]
  %v9862 = vld [vmem:[%s3 + $0x1f20] sm:$0xff]
  %v9863 = vld [vmem:[%s3 + $0x1f28] sm:$0xff]
  %v9864 = vld [vmem:[%s3 + $0x1f30] sm:$0xff]
  %v9865 = vld [vmem:[%s3 + $0x1f38] sm:$0xff]
  %v9866 = vld [vmem:[%s3 + $0x1f40] sm:$0xff]
  %v9867 = vld [vmem:[%s3 + $0x1f48] sm:$0xff]
  %v9868 = vld [vmem:[%s3 + $0x1f50] sm:$0xff]
  %v9869 = vld [vmem:[%s3 + $0x1f58] sm:$0xff]
  %v9870 = vld [vmem:[%s3 + $0x1f60] sm:$0xff]
  %v9871 = vld [vmem:[%s3 + $0x1f68] sm:$0xff]
  %v9872 = vld [vmem:[%s3 + $0x1f70] sm:$0xff]
  %v9873 = vld [vmem:[%s3 + $0x1f78] sm:$0xff]
  %v9874 = vld [vmem:[%s3 + $0x1f80] sm:$0xff]
  %v9875 = vld [vmem:[%s3 + $0x1f88] sm:$0xff]
  %v9876 = vld [vmem:[%s3 + $0x1f90] sm:$0xff]
  %v9877 = vld [vmem:[%s3 + $0x1f98] sm:$0xff]
  %v9878 = vld [vmem:[%s3 + $0x1fa0] sm:$0xff]
  %v9879 = vld [vmem:[%s3 + $0x1fa8] sm:$0xff]
  %v9880 = vld [vmem:[%s3 + $0x1fb0] sm:$0xff]
  %v9881 = vld [vmem:[%s3 + $0x1fb8] sm:$0xff]
  %v9882 = vld [vmem:[%s3 + $0x1fc0] sm:$0xff]
  %v9883 = vld [vmem:[%s3 + $0x1fc8] sm:$0xff]
  %v9884 = vld [vmem:[%s3 + $0x1fd0] sm:$0xff]
  %v9885 = vld [vmem:[%s3 + $0x1fd8] sm:$0xff]
  %v9886 = vld [vmem:[%s3 + $0x1fe0] sm:$0xff]
  %v9887 = vld [vmem:[%s3 + $0x1fe8] sm:$0xff]
  %v9888 = vld [vmem:[%s3 + $0x1ff0] sm:$0xff]
  %v9889 = vld [vmem:[%s3 + $0x1ff8] sm:$0xff]
  %v9890 = vld [vmem:[%s3 + $0x2000] sm:$0xff]
  %v9891 = vld [vmem:[%s3 + $0x2008] sm:$0xff]
  %v9892 = vld [vmem:[%s3 + $0x2010] sm:$0xff]
  %v9893 = vld [vmem:[%s3 + $0x2018] sm:$0xff]
  %v9894 = vld [vmem:[%s3 + $0x2020] sm:$0xff]
  %v9895 = vld [vmem:[%s3 + $0x2028] sm:$0xff]
  %v9896 = vld [vmem:[%s3 + $0x2030] sm:$0xff]
  %v9897 = vld [vmem:[%s3 + $0x2038] sm:$0xff]
  %v9898 = vld [vmem:[%s3 + $0x2040] sm:$0xff]
  %v9899 = vld [vmem:[%s3 + $0x2048] sm:$0xff]
  %v9900 = vld [vmem:[%s3 + $0x2050] sm:$0xff]
  %v9901 = vld [vmem:[%s3 + $0x2058] sm:$0xff]
  %v9902 = vld [vmem:[%s3 + $0x2060] sm:$0xff]
  %v9903 = vld [vmem:[%s3 + $0x2068] sm:$0xff]
  %v9904 = vld [vmem:[%s3 + $0x2070] sm:$0xff]
  %v9905 = vld [vmem:[%s3 + $0x2078] sm:$0xff]
  %v9906 = vld [vmem:[%s3 + $0x2080] sm:$0xff]
  %v9907 = vld [vmem:[%s3 + $0x2088] sm:$0xff]
  %v9908 = vld [vmem:[%s3 + $0x2090] sm:$0xff]
  %v9909 = vld [vmem:[%s3 + $0x2098] sm:$0xff]
  %v9910 = vld [vmem:[%s3 + $0x20a0] sm:$0xff]
  %v9911 = vld [vmem:[%s3 + $0x20a8] sm:$0xff]
  %v9912 = vld [vmem:[%s3 + $0x20b0] sm:$0xff]
  %v9913 = vld [vmem:[%s3 + $0x20b8] sm:$0xff]
  %v9914 = vld [vmem:[%s3 + $0x20c0] sm:$0xff]
  %v9915 = vld [vmem:[%s3 + $0x20c8] sm:$0xff]
  %v9916 = vld [vmem:[%s3 + $0x20d0] sm:$0xff]
  %v9917 = vld [vmem:[%s3 + $0x20d8] sm:$0xff]
  %v9918 = vld [vmem:[%s3 + $0x20e0] sm:$0xff]
  %v9919 = vld [vmem:[%s3 + $0x20e8] sm:$0xff]
  %v9920 = vld [vmem:[%s3 + $0x20f0] sm:$0xff]
  %v9921 = vld [vmem:[%s3 + $0x20f8] sm:$0xff]
  %v9922 = vld [vmem:[%s3 + $0x2100] sm:$0xff]
  %v9923 = vld [vmem:[%s3 + $0x2108] sm:$0xff]
  %v9924 = vld [vmem:[%s3 + $0x2110] sm:$0xff]
  %v9925 = vld [vmem:[%s3 + $0x2118] sm:$0xff]
  %v9926 = vld [vmem:[%s3 + $0x2120] sm:$0xff]
  %v9927 = vld [vmem:[%s3 + $0x2128] sm:$0xff]
  %v9928 = vld [vmem:[%s3 + $0x2130] sm:$0xff]
  %v9929 = vld [vmem:[%s3 + $0x2138] sm:$0xff]
  %v9930 = vld [vmem:[%s3 + $0x2140] sm:$0xff]
  %v9931 = vld [vmem:[%s3 + $0x2148] sm:$0xff]
  %v9932 = vld [vmem:[%s3 + $0x2150] sm:$0xff]
  %v9933 = vld [vmem:[%s3 + $0x2158] sm:$0xff]
  %v9934 = vld [vmem:[%s3 + $0x2160] sm:$0xff]
  %v9935 = vld [vmem:[%s3 + $0x2168] sm:$0xff]
  %v9936 = vld [vmem:[%s3 + $0x2170] sm:$0xff]
  %v9937 = vld [vmem:[%s3 + $0x2178] sm:$0xff]
  %v9938 = vld [vmem:[%s3 + $0x2180] sm:$0xff]
  %v9939 = vld [vmem:[%s3 + $0x2188] sm:$0xff]
  %v9940 = vld [vmem:[%s3 + $0x2190] sm:$0xff]
  %v9941 = vld [vmem:[%s3 + $0x2198] sm:$0xff]
  %v9942 = vld [vmem:[%s3 + $0x21a0] sm:$0xff]
  %v9943 = vld [vmem:[%s3 + $0x21a8] sm:$0xff]
  %v9944 = vld [vmem:[%s3 + $0x21b0] sm:$0xff]
  %v9945 = vld [vmem:[%s3 + $0x21b8] sm:$0xff]
  %v9946 = vld [vmem:[%s3 + $0x21c0] sm:$0xff]
  %v9947 = vld [vmem:[%s3 + $0x21c8] sm:$0xff]
  %v9948 = vld [vmem:[%s3 + $0x21d0] sm:$0xff]
  %v9949 = vld [vmem:[%s3 + $0x21d8] sm:$0xff]
  %v9950 = vld [vmem:[%s3 + $0x21e0] sm:$0xff]
  %v9951 = vld [vmem:[%s3 + $0x21e8] sm:$0xff]
  %v9952 = vld [vmem:[%s3 + $0x21f0] sm:$0xff]
  %v9953 = vld [vmem:[%s3 + $0x21f8] sm:$0xff]
  %v9954 = vld [vmem:[%s3 + $0x2200] sm:$0xff]
  %v9955 = vld [vmem:[%s3 + $0x2208] sm:$0xff]
  %v9956 = vld [vmem:[%s3 + $0x2210] sm:$0xff]
  %v9957 = vld [vmem:[%s3 + $0x2218] sm:$0xff]
  %v9958 = vld [vmem:[%s3 + $0x2220] sm:$0xff]
  %v9959 = vld [vmem:[%s3 + $0x2228] sm:$0xff]
  %v9960 = vld [vmem:[%s3 + $0x2230] sm:$0xff]
  %v9961 = vld [vmem:[%s3 + $0x2238] sm:$0xff]
  %v9962 = vld [vmem:[%s3 + $0x2240] sm:$0xff]
  %v9963 = vld [vmem:[%s3 + $0x2248] sm:$0xff]
  %v9964 = vld [vmem:[%s3 + $0x2250] sm:$0xff]
  %v9965 = vld [vmem:[%s3 + $0x2258] sm:$0xff]
  %v9966 = vld [vmem:[%s3 + $0x2260] sm:$0xff]
  %v9967 = vld [vmem:[%s3 + $0x2268] sm:$0xff]
  %v9968 = vld [vmem:[%s3 + $0x2270] sm:$0xff]
  %v9969 = vld [vmem:[%s3 + $0x2278] sm:$0xff]
  %v9970 = vld [vmem:[%s3 + $0x2280] sm:$0xff]
  %v9971 = vld [vmem:[%s3 + $0x2288] sm:$0xff]
  %v9972 = vld [vmem:[%s3 + $0x2290] sm:$0xff]
  %v9973 = vld [vmem:[%s3 + $0x2298] sm:$0xff]
  %v9974 = vld [vmem:[%s3 + $0x22a0] sm:$0xff]
  %v9975 = vld [vmem:[%s3 + $0x22a8] sm:$0xff]
  %v9976 = vld [vmem:[%s3 + $0x22b0] sm:$0xff]
  %v9977 = vld [vmem:[%s3 + $0x22b8] sm:$0xff]
  %v9978 = vld [vmem:[%s3 + $0x22c0] sm:$0xff]
  %v9979 = vld [vmem:[%s3 + $0x22c8] sm:$0xff]
  %v9980 = vld [vmem:[%s3 + $0x22d0] sm:$0xff]
  %v9981 = vld [vmem:[%s3 + $0x22d8] sm:$0xff]
  %v9982 = vld [vmem:[%s3 + $0x22e0] sm:$0xff]
  %v9983 = vld [vmem:[%s3 + $0x22e8] sm:$0xff]
  %v9984 = vld [vmem:[%s3 + $0x22f0] sm:$0xff]
  %v9985 = vld [vmem:[%s3 + $0x22f8] sm:$0xff]
  %v9986 = vld [vmem:[%s3 + $0x2300] sm:$0xff]
  %v9987 = vld [vmem:[%s3 + $0x2308] sm:$0xff]
  %v9988 = vld [vmem:[%s3 + $0x2310] sm:$0xff]
  %v9989 = vld [vmem:[%s3 + $0x2318] sm:$0xff]
  %v9990 = vld [vmem:[%s3 + $0x2320] sm:$0xff]
  %v9991 = vld [vmem:[%s3 + $0x2328] sm:$0xff]
  %v9992 = vld [vmem:[%s3 + $0x2330] sm:$0xff]
  %v9993 = vld [vmem:[%s3 + $0x2338] sm:$0xff]
  %v9994 = vld [vmem:[%s3 + $0x2340] sm:$0xff]
  %v9995 = vld [vmem:[%s3 + $0x2348] sm:$0xff]
  %v9996 = vld [vmem:[%s3 + $0x2350] sm:$0xff]
  %v9997 = vld [vmem:[%s3 + $0x2358] sm:$0xff]
  %v9998 = vld [vmem:[%s3 + $0x2360] sm:$0xff]
  %v9999 = vld [vmem:[%s3 + $0x2368] sm:$0xff]
  %v10000 = vld [vmem:[%s3 + $0x2370] sm:$0xff]
  %v10001 = vld [vmem:[%s3 + $0x2378] sm:$0xff]
  %v10002 = vld [vmem:[%s3 + $0x2380] sm:$0xff]
  %v10003 = vld [vmem:[%s3 + $0x2388] sm:$0xff]
  %v10004 = vld [vmem:[%s3 + $0x2390] sm:$0xff]
  %v10005 = vld [vmem:[%s3 + $0x2398] sm:$0xff]
  %v10006 = vld [vmem:[%s3 + $0x23a0] sm:$0xff]
  %v10007 = vld [vmem:[%s3 + $0x23a8] sm:$0xff]
  %v10008 = vld [vmem:[%s3 + $0x23b0] sm:$0xff]
  %v10009 = vld [vmem:[%s3 + $0x23b8] sm:$0xff]
  %v10010 = vld [vmem:[%s3 + $0x23c0] sm:$0xff]
  %v10011 = vld [vmem:[%s3 + $0x23c8] sm:$0xff]
  %v10012 = vld [vmem:[%s3 + $0x23d0] sm:$0xff]
  %v10013 = vld [vmem:[%s3 + $0x23d8] sm:$0xff]
  %v10014 = vld [vmem:[%s3 + $0x23e0] sm:$0xff]
  %v10015 = vld [vmem:[%s3 + $0x23e8] sm:$0xff]
  %v10016 = vld [vmem:[%s3 + $0x23f0] sm:$0xff]
  %v10017 = vld [vmem:[%s3 + $0x23f8] sm:$0xff]
  %v10018 = vld [vmem:[%s4] sm:$0x1]
  %v10020 = vlaneseq
  %v10021 = vshrl.u32 %v10020, 7
  %v10022 = vsub.s32 0, %v10021
  %v10023 = vrot.slane %v10018, %v10022
  %10025 = vmatprep.subr.mxu0 0.0
  %10026 = vmatpush1.msra.mxu0 %v8866
  %10027 = vmatprep.subr.mxu0 0.0
  %10028 = vmatpush1.msra.mxu0 %v8867
  %10029 = vmatprep.subr.mxu0 0.0
  %10030 = vmatpush1.msra.mxu0 %v8868
  %10031 = vmatprep.subr.mxu0 0.0
  %10032 = vmatpush1.msra.mxu0 %v8869
  %10033 = vmatprep.subr.mxu0 0.0
  %10034 = vmatpush1.msra.mxu0 %v8870
  %10035 = vmatprep.subr.mxu0 0.0
  %10036 = vmatpush1.msra.mxu0 %v8871
  %10037 = vmatprep.subr.mxu0 0.0
  %10038 = vmatpush1.msra.mxu0 %v8872
  %10039 = vmatprep.subr.mxu0 0.0
  %10040 = vmatpush1.msra.mxu0 %v8873
  %10041 = vmatprep.subr.mxu0 0.0
  %10042 = vmatpush1.msra.mxu0 %v8874
  %10043 = vmatprep.subr.mxu0 0.0
  %10044 = vmatpush1.msra.mxu0 %v8875
  %10045 = vmatprep.subr.mxu0 0.0
  %10046 = vmatpush1.msra.mxu0 %v8876
  %10047 = vmatprep.subr.mxu0 0.0
  %10048 = vmatpush1.msra.mxu0 %v8877
  %10049 = vmatprep.subr.mxu0 0.0
  %10050 = vmatpush1.msra.mxu0 %v8878
  %10051 = vmatprep.subr.mxu0 0.0
  %10052 = vmatpush1.msra.mxu0 %v8879
  %10053 = vmatprep.subr.mxu0 0.0
  %10054 = vmatpush1.msra.mxu0 %v8880
  %10055 = vmatprep.subr.mxu0 0.0
  %10056 = vmatpush1.msra.mxu0 %v8881
  %10057 = vmatprep.subr.mxu0 0.0
  %10058 = vmatpush1.msra.mxu0 %v8882
  %10059 = vmatprep.subr.mxu0 0.0
  %10060 = vmatpush1.msra.mxu0 %v8883
  %10061 = vmatprep.subr.mxu0 0.0
  %10062 = vmatpush1.msra.mxu0 %v8884
  %10063 = vmatprep.subr.mxu0 0.0
  %10064 = vmatpush1.msra.mxu0 %v8885
  %10065 = vmatprep.subr.mxu0 0.0
  %10066 = vmatpush1.msra.mxu0 %v8886
  %10067 = vmatprep.subr.mxu0 0.0
  %10068 = vmatpush1.msra.mxu0 %v8887
  %10069 = vmatprep.subr.mxu0 0.0
  %10070 = vmatpush1.msra.mxu0 %v8888
  %10071 = vmatprep.subr.mxu0 0.0
  %10072 = vmatpush1.msra.mxu0 %v8889
  %10073 = vmatprep.subr.mxu0 0.0
  %10074 = vmatpush1.msra.mxu0 %v8890
  %10075 = vmatprep.subr.mxu0 0.0
  %10076 = vmatpush1.msra.mxu0 %v8891
  %10077 = vmatprep.subr.mxu0 0.0
  %10078 = vmatpush1.msra.mxu0 %v8892
  %10079 = vmatprep.subr.mxu0 0.0
  %10080 = vmatpush1.msra.mxu0 %v8893
  %10081 = vmatprep.subr.mxu0 0.0
  %10082 = vmatpush1.msra.mxu0 %v8894
  %10083 = vmatprep.subr.mxu0 0.0
  %10084 = vmatpush1.msra.mxu0 %v8895
  %10085 = vmatprep.subr.mxu0 0.0
  %10086 = vmatpush1.msra.mxu0 %v8896
  %10087 = vmatprep.subr.mxu0 0.0
  %10088 = vmatpush1.msra.mxu0 %v8897
  %10089 = vmatprep.mubr.f32.mxu0 %v8795
  %10090 = vmatmul.mubr.f32.gmra.mrb[0].mxu0 %v8794
  %v10091 = vpop.f32.mrb[0].mxu0
  %v10092 = vadd.f32 %v10023, %v10091
  %v10093 = vpop.f32.mrb[0].mxu0
  %10094 = vdwg.mxu0
  %10095 = vmatprep.subr.mxu0 0.0
  %10096 = vmatpush1.msra.mxu0 %v8898
  %10097 = vmatprep.subr.mxu0 0.0
  %10098 = vmatpush1.msra.mxu0 %v8899
  %10099 = vmatprep.subr.mxu0 0.0
  %10100 = vmatpush1.msra.mxu0 %v8900
  %10101 = vmatprep.subr.mxu0 0.0
  %10102 = vmatpush1.msra.mxu0 %v8901
  %10103 = vmatprep.subr.mxu0 0.0
  %10104 = vmatpush1.msra.mxu0 %v8902
  %10105 = vmatprep.subr.mxu0 0.0
  %10106 = vmatpush1.msra.mxu0 %v8903
  %10107 = vmatprep.subr.mxu0 0.0
  %10108 = vmatpush1.msra.mxu0 %v8904
  %10109 = vmatprep.subr.mxu0 0.0
  %10110 = vmatpush1.msra.mxu0 %v8905
  %10111 = vmatprep.subr.mxu0 0.0
  %10112 = vmatpush1.msra.mxu0 %v8906
  %10113 = vmatprep.subr.mxu0 0.0
  %10114 = vmatpush1.msra.mxu0 %v8907
  %10115 = vmatprep.subr.mxu0 0.0
  %10116 = vmatpush1.msra.mxu0 %v8908
  %10117 = vmatprep.subr.mxu0 0.0
  %10118 = vmatpush1.msra.mxu0 %v8909
  %10119 = vmatprep.subr.mxu0 0.0
  %10120 = vmatpush1.msra.mxu0 %v8910
  %10121 = vmatprep.subr.mxu0 0.0
  %10122 = vmatpush1.msra.mxu0 %v8911
  %10123 = vmatprep.subr.mxu0 0.0
  %10124 = vmatpush1.msra.mxu0 %v8912
  %10125 = vmatprep.subr.mxu0 0.0
  %10126 = vmatpush1.msra.mxu0 %v8913
  %10127 = vmatprep.subr.mxu0 0.0
  %10128 = vmatpush1.msra.mxu0 %v8914
  %10129 = vmatprep.subr.mxu0 0.0
  %10130 = vmatpush1.msra.mxu0 %v8915
  %10131 = vmatprep.subr.mxu0 0.0
  %10132 = vmatpush1.msra.mxu0 %v8916
  %10133 = vmatprep.subr.mxu0 0.0
  %10134 = vmatpush1.msra.mxu0 %v8917
  %10135 = vmatprep.subr.mxu0 0.0
  %10136 = vmatpush1.msra.mxu0 %v8918
  %10137 = vmatprep.subr.mxu0 0.0
  %10138 = vmatpush1.msra.mxu0 %v8919
  %10139 = vmatprep.subr.mxu0 0.0
  %10140 = vmatpush1.msra.mxu0 %v8920
  %10141 = vmatprep.subr.mxu0 0.0
  %10142 = vmatpush1.msra.mxu0 %v8921
  %10143 = vmatprep.subr.mxu0 0.0
  %10144 = vmatpush1.msra.mxu0 %v8922
  %10145 = vmatprep.subr.mxu0 0.0
  %10146 = vmatpush1.msra.mxu0 %v8923
  %10147 = vmatprep.subr.mxu0 0.0
  %10148 = vmatpush1.msra.mxu0 %v8924
  %10149 = vmatprep.subr.mxu0 0.0
  %10150 = vmatpush1.msra.mxu0 %v8925
  %10151 = vmatprep.subr.mxu0 0.0
  %10152 = vmatpush1.msra.mxu0 %v8926
  %10153 = vmatprep.subr.mxu0 0.0
  %10154 = vmatpush1.msra.mxu0 %v8927
  %10155 = vmatprep.subr.mxu0 0.0
  %10156 = vmatpush1.msra.mxu0 %v8928
  %10157 = vmatprep.subr.mxu0 0.0
  %10158 = vmatpush1.msra.mxu0 %v8929
  %10159 = vmatprep.mubr.f32.mxu0 %v8797
  %10160 = vmatmul.mubr.f32.gmra.mrb[0].mxu0 %v8796
  %v10161 = vpop.f32.mrb[0].mxu0
  %v10162 = vadd.f32 %v10092, %v10161
  %v10163 = vpop.f32.mrb[0].mxu0
  %10164 = vdwg.mxu0
  %10165 = vmatprep.subr.mxu0 0.0
  %10166 = vmatpush1.msra.mxu0 %v8930
  %10167 = vmatprep.subr.mxu0 0.0
  %10168 = vmatpush1.msra.mxu0 %v8931
  %10169 = vmatprep.subr.mxu0 0.0
  %10170 = vmatpush1.msra.mxu0 %v8932
  %10171 = vmatprep.subr.mxu0 0.0
  %10172 = vmatpush1.msra.mxu0 %v8933
  %10173 = vmatprep.subr.mxu0 0.0
  %10174 = vmatpush1.msra.mxu0 %v8934
  %10175 = vmatprep.subr.mxu0 0.0
  %10176 = vmatpush1.msra.mxu0 %v8935
  %10177 = vmatprep.subr.mxu0 0.0
  %10178 = vmatpush1.msra.mxu0 %v8936
  %10179 = vmatprep.subr.mxu0 0.0
  %10180 = vmatpush1.msra.mxu0 %v8937
  %10181 = vmatprep.subr.mxu0 0.0
  %10182 = vmatpush1.msra.mxu0 %v8938
  %10183 = vmatprep.subr.mxu0 0.0
  %10184 = vmatpush1.msra.mxu0 %v8939
  %10185 = vmatprep.subr.mxu0 0.0
  %10186 = vmatpush1.msra.mxu0 %v8940
  %10187 = vmatprep.subr.mxu0 0.0
  %10188 = vmatpush1.msra.mxu0 %v8941
  %10189 = vmatprep.subr.mxu0 0.0
  %10190 = vmatpush1.msra.mxu0 %v8942
  %10191 = vmatprep.subr.mxu0 0.0
  %10192 = vmatpush1.msra.mxu0 %v8943
  %10193 = vmatprep.subr.mxu0 0.0
  %10194 = vmatpush1.msra.mxu0 %v8944
  %10195 = vmatprep.subr.mxu0 0.0
  %10196 = vmatpush1.msra.mxu0 %v8945
  %10197 = vmatprep.subr.mxu0 0.0
  %10198 = vmatpush1.msra.mxu0 %v8946
  %10199 = vmatprep.subr.mxu0 0.0
  %10200 = vmatpush1.msra.mxu0 %v8947
  %10201 = vmatprep.subr.mxu0 0.0
  %10202 = vmatpush1.msra.mxu0 %v8948
  %10203 = vmatprep.subr.mxu0 0.0
  %10204 = vmatpush1.msra.mxu0 %v8949
  %10205 = vmatprep.subr.mxu0 0.0
  %10206 = vmatpush1.msra.mxu0 %v8950
  %10207 = vmatprep.subr.mxu0 0.0
  %10208 = vmatpush1.msra.mxu0 %v8951
  %10209 = vmatprep.subr.mxu0 0.0
  %10210 = vmatpush1.msra.mxu0 %v8952
  %10211 = vmatprep.subr.mxu0 0.0
  %10212 = vmatpush1.msra.mxu0 %v8953
  %10213 = vmatprep.subr.mxu0 0.0
  %10214 = vmatpush1.msra.mxu0 %v8954
  %10215 = vmatprep.subr.mxu0 0.0
  %10216 = vmatpush1.msra.mxu0 %v8955
  %10217 = vmatprep.subr.mxu0 0.0
  %10218 = vmatpush1.msra.mxu0 %v8956
  %10219 = vmatprep.subr.mxu0 0.0
  %10220 = vmatpush1.msra.mxu0 %v8957
  %10221 = vmatprep.subr.mxu0 0.0
  %10222 = vmatpush1.msra.mxu0 %v8958
  %10223 = vmatprep.subr.mxu0 0.0
  %10224 = vmatpush1.msra.mxu0 %v8959
  %10225 = vmatprep.subr.mxu0 0.0
  %10226 = vmatpush1.msra.mxu0 %v8960
  %10227 = vmatprep.subr.mxu0 0.0
  %10228 = vmatpush1.msra.mxu0 %v8961
  %10229 = vmatprep.mubr.f32.mxu0 %v8799
  %10230 = vmatmul.mubr.f32.gmra.mrb[0].mxu0 %v8798
  %v10231 = vpop.f32.mrb[0].mxu0
  %v10232 = vadd.f32 %v10162, %v10231
  %v10233 = vpop.f32.mrb[0].mxu0
  %10234 = vdwg.mxu0
  %10235 = vmatprep.subr.mxu0 0.0
  %10236 = vmatpush1.msra.mxu0 %v8962
  %10237 = vmatprep.subr.mxu0 0.0
  %10238 = vmatpush1.msra.mxu0 %v8963
  %10239 = vmatprep.subr.mxu0 0.0
  %10240 = vmatpush1.msra.mxu0 %v8964
  %10241 = vmatprep.subr.mxu0 0.0
  %10242 = vmatpush1.msra.mxu0 %v8965
  %10243 = vmatprep.subr.mxu0 0.0
  %10244 = vmatpush1.msra.mxu0 %v8966
  %10245 = vmatprep.subr.mxu0 0.0
  %10246 = vmatpush1.msra.mxu0 %v8967
  %10247 = vmatprep.subr.mxu0 0.0
  %10248 = vmatpush1.msra.mxu0 %v8968
  %10249 = vmatprep.subr.mxu0 0.0
  %10250 = vmatpush1.msra.mxu0 %v8969
  %10251 = vmatprep.subr.mxu0 0.0
  %10252 = vmatpush1.msra.mxu0 %v8970
  %10253 = vmatprep.subr.mxu0 0.0
  %10254 = vmatpush1.msra.mxu0 %v8971
  %10255 = vmatprep.subr.mxu0 0.0
  %10256 = vmatpush1.msra.mxu0 %v8972
  %10257 = vmatprep.subr.mxu0 0.0
  %10258 = vmatpush1.msra.mxu0 %v8973
  %10259 = vmatprep.subr.mxu0 0.0
  %10260 = vmatpush1.msra.mxu0 %v8974
  %10261 = vmatprep.subr.mxu0 0.0
  %10262 = vmatpush1.msra.mxu0 %v8975
  %10263 = vmatprep.subr.mxu0 0.0
  %10264 = vmatpush1.msra.mxu0 %v8976
  %10265 = vmatprep.subr.mxu0 0.0
  %10266 = vmatpush1.msra.mxu0 %v8977
  %10267 = vmatprep.subr.mxu0 0.0
  %10268 = vmatpush1.msra.mxu0 %v8978
  %10269 = vmatprep.subr.mxu0 0.0
  %10270 = vmatpush1.msra.mxu0 %v8979
  %10271 = vmatprep.subr.mxu0 0.0
  %10272 = vmatpush1.msra.mxu0 %v8980
  %10273 = vmatprep.subr.mxu0 0.0
  %10274 = vmatpush1.msra.mxu0 %v8981
  %10275 = vmatprep.subr.mxu0 0.0
  %10276 = vmatpush1.msra.mxu0 %v8982
  %10277 = vmatprep.subr.mxu0 0.0
  %10278 = vmatpush1.msra.mxu0 %v8983
  %10279 = vmatprep.subr.mxu0 0.0
  %10280 = vmatpush1.msra.mxu0 %v8984
  %10281 = vmatprep.subr.mxu0 0.0
  %10282 = vmatpush1.msra.mxu0 %v8985
  %10283 = vmatprep.subr.mxu0 0.0
  %10284 = vmatpush1.msra.mxu0 %v8986
  %10285 = vmatprep.subr.mxu0 0.0
  %10286 = vmatpush1.msra.mxu0 %v8987
  %10287 = vmatprep.subr.mxu0 0.0
  %10288 = vmatpush1.msra.mxu0 %v8988
  %10289 = vmatprep.subr.mxu0 0.0
  %10290 = vmatpush1.msra.mxu0 %v8989
  %10291 = vmatprep.subr.mxu0 0.0
  %10292 = vmatpush1.msra.mxu0 %v8990
  %10293 = vmatprep.subr.mxu0 0.0
  %10294 = vmatpush1.msra.mxu0 %v8991
  %10295 = vmatprep.subr.mxu0 0.0
  %10296 = vmatpush1.msra.mxu0 %v8992
  %10297 = vmatprep.subr.mxu0 0.0
  %10298 = vmatpush1.msra.mxu0 %v8993
  %10299 = vmatprep.mubr.f32.mxu0 %v8801
  %10300 = vmatmul.mubr.f32.gmra.mrb[0].mxu0 %v8800
  %v10301 = vpop.f32.mrb[0].mxu0
  %v10302 = vadd.f32 %v10232, %v10301
  %v10303 = vpop.f32.mrb[0].mxu0
  %10304 = vdwg.mxu0
  %10305 = vmatprep.subr.mxu0 0.0
  %10306 = vmatpush1.msra.mxu0 %v8994
  %10307 = vmatprep.subr.mxu0 0.0
  %10308 = vmatpush1.msra.mxu0 %v8995
  %10309 = vmatprep.subr.mxu0 0.0
  %10310 = vmatpush1.msra.mxu0 %v8996
  %10311 = vmatprep.subr.mxu0 0.0
  %10312 = vmatpush1.msra.mxu0 %v8997
  %10313 = vmatprep.subr.mxu0 0.0
  %10314 = vmatpush1.msra.mxu0 %v8998
  %10315 = vmatprep.subr.mxu0 0.0
  %10316 = vmatpush1.msra.mxu0 %v8999
  %10317 = vmatprep.subr.mxu0 0.0
  %10318 = vmatpush1.msra.mxu0 %v9000
  %10319 = vmatprep.subr.mxu0 0.0
  %10320 = vmatpush1.msra.mxu0 %v9001
  %10321 = vmatprep.subr.mxu0 0.0
  %10322 = vmatpush1.msra.mxu0 %v9002
  %10323 = vmatprep.subr.mxu0 0.0
  %10324 = vmatpush1.msra.mxu0 %v9003
  %10325 = vmatprep.subr.mxu0 0.0
  %10326 = vmatpush1.msra.mxu0 %v9004
  %10327 = vmatprep.subr.mxu0 0.0
  %10328 = vmatpush1.msra.mxu0 %v9005
  %10329 = vmatprep.subr.mxu0 0.0
  %10330 = vmatpush1.msra.mxu0 %v9006
  %10331 = vmatprep.subr.mxu0 0.0
  %10332 = vmatpush1.msra.mxu0 %v9007
  %10333 = vmatprep.subr.mxu0 0.0
  %10334 = vmatpush1.msra.mxu0 %v9008
  %10335 = vmatprep.subr.mxu0 0.0
  %10336 = vmatpush1.msra.mxu0 %v9009
  %10337 = vmatprep.subr.mxu0 0.0
  %10338 = vmatpush1.msra.mxu0 %v9010
  %10339 = vmatprep.subr.mxu0 0.0
  %10340 = vmatpush1.msra.mxu0 %v9011
  %10341 = vmatprep.subr.mxu0 0.0
  %10342 = vmatpush1.msra.mxu0 %v9012
  %10343 = vmatprep.subr.mxu0 0.0
  %10344 = vmatpush1.msra.mxu0 %v9013
  %10345 = vmatprep.subr.mxu0 0.0
  %10346 = vmatpush1.msra.mxu0 %v9014
  %10347 = vmatprep.subr.mxu0 0.0
  %10348 = vmatpush1.msra.mxu0 %v9015
  %10349 = vmatprep.subr.mxu0 0.0
  %10350 = vmatpush1.msra.mxu0 %v9016
  %10351 = vmatprep.subr.mxu0 0.0
  %10352 = vmatpush1.msra.mxu0 %v9017
  %10353 = vmatprep.subr.mxu0 0.0
  %10354 = vmatpush1.msra.mxu0 %v9018
  %10355 = vmatprep.subr.mxu0 0.0
  %10356 = vmatpush1.msra.mxu0 %v9019
  %10357 = vmatprep.subr.mxu0 0.0
  %10358 = vmatpush1.msra.mxu0 %v9020
  %10359 = vmatprep.subr.mxu0 0.0
  %10360 = vmatpush1.msra.mxu0 %v9021
  %10361 = vmatprep.subr.mxu0 0.0
  %10362 = vmatpush1.msra.mxu0 %v9022
  %10363 = vmatprep.subr.mxu0 0.0
  %10364 = vmatpush1.msra.mxu0 %v9023
  %10365 = vmatprep.subr.mxu0 0.0
  %10366 = vmatpush1.msra.mxu0 %v9024
  %10367 = vmatprep.subr.mxu0 0.0
  %10368 = vmatpush1.msra.mxu0 %v9025
  %10369 = vmatprep.mubr.f32.mxu0 %v8803
  %10370 = vmatmul.mubr.f32.gmra.mrb[0].mxu0 %v8802
  %v10371 = vpop.f32.mrb[0].mxu0
  %v10372 = vadd.f32 %v10302, %v10371
  %v10373 = vpop.f32.mrb[0].mxu0
  %10374 = vdwg.mxu0
  %10375 = vmatprep.subr.mxu0 0.0
  %10376 = vmatpush1.msra.mxu0 %v9026
  %10377 = vmatprep.subr.mxu0 0.0
  %10378 = vmatpush1.msra.mxu0 %v9027
  %10379 = vmatprep.subr.mxu0 0.0
  %10380 = vmatpush1.msra.mxu0 %v9028
  %10381 = vmatprep.subr.mxu0 0.0
  %10382 = vmatpush1.msra.mxu0 %v9029
  %10383 = vmatprep.subr.mxu0 0.0
  %10384 = vmatpush1.msra.mxu0 %v9030
  %10385 = vmatprep.subr.mxu0 0.0
  %10386 = vmatpush1.msra.mxu0 %v9031
  %10387 = vmatprep.subr.mxu0 0.0
  %10388 = vmatpush1.msra.mxu0 %v9032
  %10389 = vmatprep.subr.mxu0 0.0
  %10390 = vmatpush1.msra.mxu0 %v9033
  %10391 = vmatprep.subr.mxu0 0.0
  %10392 = vmatpush1.msra.mxu0 %v9034
  %10393 = vmatprep.subr.mxu0 0.0
  %10394 = vmatpush1.msra.mxu0 %v9035
  %10395 = vmatprep.subr.mxu0 0.0
  %10396 = vmatpush1.msra.mxu0 %v9036
  %10397 = vmatprep.subr.mxu0 0.0
  %10398 = vmatpush1.msra.mxu0 %v9037
  %10399 = vmatprep.subr.mxu0 0.0
  %10400 = vmatpush1.msra.mxu0 %v9038
  %10401 = vmatprep.subr.mxu0 0.0
  %10402 = vmatpush1.msra.mxu0 %v9039
  %10403 = vmatprep.subr.mxu0 0.0
  %10404 = vmatpush1.msra.mxu0 %v9040
  %10405 = vmatprep.subr.mxu0 0.0
  %10406 = vmatpush1.msra.mxu0 %v9041
  %10407 = vmatprep.subr.mxu0 0.0
  %10408 = vmatpush1.msra.mxu0 %v9042
  %10409 = vmatprep.subr.mxu0 0.0
  %10410 = vmatpush1.msra.mxu0 %v9043
  %10411 = vmatprep.subr.mxu0 0.0
  %10412 = vmatpush1.msra.mxu0 %v9044
  %10413 = vmatprep.subr.mxu0 0.0
  %10414 = vmatpush1.msra.mxu0 %v9045
  %10415 = vmatprep.subr.mxu0 0.0
  %10416 = vmatpush1.msra.mxu0 %v9046
  %10417 = vmatprep.subr.mxu0 0.0
  %10418 = vmatpush1.msra.mxu0 %v9047
  %10419 = vmatprep.subr.mxu0 0.0
  %10420 = vmatpush1.msra.mxu0 %v9048
  %10421 = vmatprep.subr.mxu0 0.0
  %10422 = vmatpush1.msra.mxu0 %v9049
  %10423 = vmatprep.subr.mxu0 0.0
  %10424 = vmatpush1.msra.mxu0 %v9050
  %10425 = vmatprep.subr.mxu0 0.0
  %10426 = vmatpush1.msra.mxu0 %v9051
  %10427 = vmatprep.subr.mxu0 0.0
  %10428 = vmatpush1.msra.mxu0 %v9052
  %10429 = vmatprep.subr.mxu0 0.0
  %10430 = vmatpush1.msra.mxu0 %v9053
  %10431 = vmatprep.subr.mxu0 0.0
  %10432 = vmatpush1.msra.mxu0 %v9054
  %10433 = vmatprep.subr.mxu0 0.0
  %10434 = vmatpush1.msra.mxu0 %v9055
  %10435 = vmatprep.subr.mxu0 0.0
  %10436 = vmatpush1.msra.mxu0 %v9056
  %10437 = vmatprep.subr.mxu0 0.0
  %10438 = vmatpush1.msra.mxu0 %v9057
  %10439 = vmatprep.mubr.f32.mxu0 %v8805
  %10440 = vmatmul.mubr.f32.gmra.mrb[0].mxu0 %v8804
  %v10441 = vpop.f32.mrb[0].mxu0
  %v10442 = vadd.f32 %v10372, %v10441
  %v10443 = vpop.f32.mrb[0].mxu0
  %10444 = vdwg.mxu0
  %10445 = vmatprep.subr.mxu0 0.0
  %10446 = vmatpush1.msra.mxu0 %v9058
  %10447 = vmatprep.subr.mxu0 0.0
  %10448 = vmatpush1.msra.mxu0 %v9059
  %10449 = vmatprep.subr.mxu0 0.0
  %10450 = vmatpush1.msra.mxu0 %v9060
  %10451 = vmatprep.subr.mxu0 0.0
  %10452 = vmatpush1.msra.mxu0 %v9061
  %10453 = vmatprep.subr.mxu0 0.0
  %10454 = vmatpush1.msra.mxu0 %v9062
  %10455 = vmatprep.subr.mxu0 0.0
  %10456 = vmatpush1.msra.mxu0 %v9063
  %10457 = vmatprep.subr.mxu0 0.0
  %10458 = vmatpush1.msra.mxu0 %v9064
  %10459 = vmatprep.subr.mxu0 0.0
  %10460 = vmatpush1.msra.mxu0 %v9065
  %10461 = vmatprep.subr.mxu0 0.0
  %10462 = vmatpush1.msra.mxu0 %v9066
  %10463 = vmatprep.subr.mxu0 0.0
  %10464 = vmatpush1.msra.mxu0 %v9067
  %10465 = vmatprep.subr.mxu0 0.0
  %10466 = vmatpush1.msra.mxu0 %v9068
  %10467 = vmatprep.subr.mxu0 0.0
  %10468 = vmatpush1.msra.mxu0 %v9069
  %10469 = vmatprep.subr.mxu0 0.0
  %10470 = vmatpush1.msra.mxu0 %v9070
  %10471 = vmatprep.subr.mxu0 0.0
  %10472 = vmatpush1.msra.mxu0 %v9071
  %10473 = vmatprep.subr.mxu0 0.0
  %10474 = vmatpush1.msra.mxu0 %v9072
  %10475 = vmatprep.subr.mxu0 0.0
  %10476 = vmatpush1.msra.mxu0 %v9073
  %10477 = vmatprep.subr.mxu0 0.0
  %10478 = vmatpush1.msra.mxu0 %v9074
  %10479 = vmatprep.subr.mxu0 0.0
  %10480 = vmatpush1.msra.mxu0 %v9075
  %10481 = vmatprep.subr.mxu0 0.0
  %10482 = vmatpush1.msra.mxu0 %v9076
  %10483 = vmatprep.subr.mxu0 0.0
  %10484 = vmatpush1.msra.mxu0 %v9077
  %10485 = vmatprep.subr.mxu0 0.0
  %10486 = vmatpush1.msra.mxu0 %v9078
  %10487 = vmatprep.subr.mxu0 0.0
  %10488 = vmatpush1.msra.mxu0 %v9079
  %10489 = vmatprep.subr.mxu0 0.0
  %10490 = vmatpush1.msra.mxu0 %v9080
  %10491 = vmatprep.subr.mxu0 0.0
  %10492 = vmatpush1.msra.mxu0 %v9081
  %10493 = vmatprep.subr.mxu0 0.0
  %10494 = vmatpush1.msra.mxu0 %v9082
  %10495 = vmatprep.subr.mxu0 0.0
  %10496 = vmatpush1.msra.mxu0 %v9083
  %10497 = vmatprep.subr.mxu0 0.0
  %10498 = vmatpush1.msra.mxu0 %v9084
  %10499 = vmatprep.subr.mxu0 0.0
  %10500 = vmatpush1.msra.mxu0 %v9085
  %10501 = vmatprep.subr.mxu0 0.0
  %10502 = vmatpush1.msra.mxu0 %v9086
  %10503 = vmatprep.subr.mxu0 0.0
  %10504 = vmatpush1.msra.mxu0 %v9087
  %10505 = vmatprep.subr.mxu0 0.0
  %10506 = vmatpush1.msra.mxu0 %v9088
  %10507 = vmatprep.subr.mxu0 0.0
  %10508 = vmatpush1.msra.mxu0 %v9089
  %10509 = vmatprep.mubr.f32.mxu0 %v8807
  %10510 = vmatmul.mubr.f32.gmra.mrb[0].mxu0 %v8806
  %v10511 = vpop.f32.mrb[0].mxu0
  %v10512 = vadd.f32 %v10442, %v10511
  %v10513 = vpop.f32.mrb[0].mxu0
  %10514 = vdwg.mxu0
  %10515 = vmatprep.subr.mxu0 0.0
  %10516 = vmatpush1.msra.mxu0 %v9090
  %10517 = vmatprep.subr.mxu0 0.0
  %10518 = vmatpush1.msra.mxu0 %v9091
  %10519 = vmatprep.subr.mxu0 0.0
  %10520 = vmatpush1.msra.mxu0 %v9092
  %10521 = vmatprep.subr.mxu0 0.0
  %10522 = vmatpush1.msra.mxu0 %v9093
  %10523 = vmatprep.subr.mxu0 0.0
  %10524 = vmatpush1.msra.mxu0 %v9094
  %10525 = vmatprep.subr.mxu0 0.0
  %10526 = vmatpush1.msra.mxu0 %v9095
  %10527 = vmatprep.subr.mxu0 0.0
  %10528 = vmatpush1.msra.mxu0 %v9096
  %10529 = vmatprep.subr.mxu0 0.0
  %10530 = vmatpush1.msra.mxu0 %v9097
  %10531 = vmatprep.subr.mxu0 0.0
  %10532 = vmatpush1.msra.mxu0 %v9098
  %10533 = vmatprep.subr.mxu0 0.0
  %10534 = vmatpush1.msra.mxu0 %v9099
  %10535 = vmatprep.subr.mxu0 0.0
  %10536 = vmatpush1.msra.mxu0 %v9100
  %10537 = vmatprep.subr.mxu0 0.0
  %10538 = vmatpush1.msra.mxu0 %v9101
  %10539 = vmatprep.subr.mxu0 0.0
  %10540 = vmatpush1.msra.mxu0 %v9102
  %10541 = vmatprep.subr.mxu0 0.0
  %10542 = vmatpush1.msra.mxu0 %v9103
  %10543 = vmatprep.subr.mxu0 0.0
  %10544 = vmatpush1.msra.mxu0 %v9104
  %10545 = vmatprep.subr.mxu0 0.0
  %10546 = vmatpush1.msra.mxu0 %v9105
  %10547 = vmatprep.subr.mxu0 0.0
  %10548 = vmatpush1.msra.mxu0 %v9106
  %10549 = vmatprep.subr.mxu0 0.0
  %10550 = vmatpush1.msra.mxu0 %v9107
  %10551 = vmatprep.subr.mxu0 0.0
  %10552 = vmatpush1.msra.mxu0 %v9108
  %10553 = vmatprep.subr.mxu0 0.0
  %10554 = vmatpush1.msra.mxu0 %v9109
  %10555 = vmatprep.subr.mxu0 0.0
  %10556 = vmatpush1.msra.mxu0 %v9110
  %10557 = vmatprep.subr.mxu0 0.0
  %10558 = vmatpush1.msra.mxu0 %v9111
  %10559 = vmatprep.subr.mxu0 0.0
  %10560 = vmatpush1.msra.mxu0 %v9112
  %10561 = vmatprep.subr.mxu0 0.0
  %10562 = vmatpush1.msra.mxu0 %v9113
  %10563 = vmatprep.subr.mxu0 0.0
  %10564 = vmatpush1.msra.mxu0 %v9114
  %10565 = vmatprep.subr.mxu0 0.0
  %10566 = vmatpush1.msra.mxu0 %v9115
  %10567 = vmatprep.subr.mxu0 0.0
  %10568 = vmatpush1.msra.mxu0 %v9116
  %10569 = vmatprep.subr.mxu0 0.0
  %10570 = vmatpush1.msra.mxu0 %v9117
  %10571 = vmatprep.subr.mxu0 0.0
  %10572 = vmatpush1.msra.mxu0 %v9118
  %10573 = vmatprep.subr.mxu0 0.0
  %10574 = vmatpush1.msra.mxu0 %v9119
  %10575 = vmatprep.subr.mxu0 0.0
  %10576 = vmatpush1.msra.mxu0 %v9120
  %10577 = vmatprep.subr.mxu0 0.0
  %10578 = vmatpush1.msra.mxu0 %v9121
  %10579 = vmatprep.mubr.f32.mxu0 %v8809
  %10580 = vmatmul.mubr.f32.gmra.mrb[0].mxu0 %v8808
  %v10581 = vpop.f32.mrb[0].mxu0
  %v10582 = vadd.f32 %v10512, %v10581
  %v10583 = vpop.f32.mrb[0].mxu0
  %10584 = vdwg.mxu0
  %10585 = vmatprep.subr.mxu0 0.0
  %10586 = vmatpush1.msra.mxu0 %v9122
  %10587 = vmatprep.subr.mxu0 0.0
  %10588 = vmatpush1.msra.mxu0 %v9123
  %10589 = vmatprep.subr.mxu0 0.0
  %10590 = vmatpush1.msra.mxu0 %v9124
  %10591 = vmatprep.subr.mxu0 0.0
  %10592 = vmatpush1.msra.mxu0 %v9125
  %10593 = vmatprep.subr.mxu0 0.0
  %10594 = vmatpush1.msra.mxu0 %v9126
  %10595 = vmatprep.subr.mxu0 0.0
  %10596 = vmatpush1.msra.mxu0 %v9127
  %10597 = vmatprep.subr.mxu0 0.0
  %10598 = vmatpush1.msra.mxu0 %v9128
  %10599 = vmatprep.subr.mxu0 0.0
  %10600 = vmatpush1.msra.mxu0 %v9129
  %10601 = vmatprep.subr.mxu0 0.0
  %10602 = vmatpush1.msra.mxu0 %v9130
  %10603 = vmatprep.subr.mxu0 0.0
  %10604 = vmatpush1.msra.mxu0 %v9131
  %10605 = vmatprep.subr.mxu0 0.0
  %10606 = vmatpush1.msra.mxu0 %v9132
  %10607 = vmatprep.subr.mxu0 0.0
  %10608 = vmatpush1.msra.mxu0 %v9133
  %10609 = vmatprep.subr.mxu0 0.0
  %10610 = vmatpush1.msra.mxu0 %v9134
  %10611 = vmatprep.subr.mxu0 0.0
  %10612 = vmatpush1.msra.mxu0 %v9135
  %10613 = vmatprep.subr.mxu0 0.0
  %10614 = vmatpush1.msra.mxu0 %v9136
  %10615 = vmatprep.subr.mxu0 0.0
  %10616 = vmatpush1.msra.mxu0 %v9137
  %10617 = vmatprep.subr.mxu0 0.0
  %10618 = vmatpush1.msra.mxu0 %v9138
  %10619 = vmatprep.subr.mxu0 0.0
  %10620 = vmatpush1.msra.mxu0 %v9139
  %10621 = vmatprep.subr.mxu0 0.0
  %10622 = vmatpush1.msra.mxu0 %v9140
  %10623 = vmatprep.subr.mxu0 0.0
  %10624 = vmatpush1.msra.mxu0 %v9141
  %10625 = vmatprep.subr.mxu0 0.0
  %10626 = vmatpush1.msra.mxu0 %v9142
  %10627 = vmatprep.subr.mxu0 0.0
  %10628 = vmatpush1.msra.mxu0 %v9143
  %10629 = vmatprep.subr.mxu0 0.0
  %10630 = vmatpush1.msra.mxu0 %v9144
  %10631 = vmatprep.subr.mxu0 0.0
  %10632 = vmatpush1.msra.mxu0 %v9145
  %10633 = vmatprep.subr.mxu0 0.0
  %10634 = vmatpush1.msra.mxu0 %v9146
  %10635 = vmatprep.subr.mxu0 0.0
  %10636 = vmatpush1.msra.mxu0 %v9147
  %10637 = vmatprep.subr.mxu0 0.0
  %10638 = vmatpush1.msra.mxu0 %v9148
  %10639 = vmatprep.subr.mxu0 0.0
  %10640 = vmatpush1.msra.mxu0 %v9149
  %10641 = vmatprep.subr.mxu0 0.0
  %10642 = vmatpush1.msra.mxu0 %v9150
  %10643 = vmatprep.subr.mxu0 0.0
  %10644 = vmatpush1.msra.mxu0 %v9151
  %10645 = vmatprep.subr.mxu0 0.0
  %10646 = vmatpush1.msra.mxu0 %v9152
  %10647 = vmatprep.subr.mxu0 0.0
  %10648 = vmatpush1.msra.mxu0 %v9153
  %10649 = vmatprep.mubr.f32.mxu0 %v8811
  %10650 = vmatmul.mubr.f32.gmra.mrb[0].mxu0 %v8810
  %v10651 = vpop.f32.mrb[0].mxu0
  %v10652 = vadd.f32 %v10582, %v10651
  %v10653 = vpop.f32.mrb[0].mxu0
  %10654 = vdwg.mxu0
  %10655 = vmatprep.subr.mxu0 0.0
  %10656 = vmatpush1.msra.mxu0 %v9154
  %10657 = vmatprep.subr.mxu0 0.0
  %10658 = vmatpush1.msra.mxu0 %v9155
  %10659 = vmatprep.subr.mxu0 0.0
  %10660 = vmatpush1.msra.mxu0 %v9156
  %10661 = vmatprep.subr.mxu0 0.0
  %10662 = vmatpush1.msra.mxu0 %v9157
  %10663 = vmatprep.subr.mxu0 0.0
  %10664 = vmatpush1.msra.mxu0 %v9158
  %10665 = vmatprep.subr.mxu0 0.0
  %10666 = vmatpush1.msra.mxu0 %v9159
  %10667 = vmatprep.subr.mxu0 0.0
  %10668 = vmatpush1.msra.mxu0 %v9160
  %10669 = vmatprep.subr.mxu0 0.0
  %10670 = vmatpush1.msra.mxu0 %v9161
  %10671 = vmatprep.subr.mxu0 0.0
  %10672 = vmatpush1.msra.mxu0 %v9162
  %10673 = vmatprep.subr.mxu0 0.0
  %10674 = vmatpush1.msra.mxu0 %v9163
  %10675 = vmatprep.subr.mxu0 0.0
  %10676 = vmatpush1.msra.mxu0 %v9164
  %10677 = vmatprep.subr.mxu0 0.0
  %10678 = vmatpush1.msra.mxu0 %v9165
  %10679 = vmatprep.subr.mxu0 0.0
  %10680 = vmatpush1.msra.mxu0 %v9166
  %10681 = vmatprep.subr.mxu0 0.0
  %10682 = vmatpush1.msra.mxu0 %v9167
  %10683 = vmatprep.subr.mxu0 0.0
  %10684 = vmatpush1.msra.mxu0 %v9168
  %10685 = vmatprep.subr.mxu0 0.0
  %10686 = vmatpush1.msra.mxu0 %v9169
  %10687 = vmatprep.subr.mxu0 0.0
  %10688 = vmatpush1.msra.mxu0 %v9170
  %10689 = vmatprep.subr.mxu0 0.0
  %10690 = vmatpush1.msra.mxu0 %v9171
  %10691 = vmatprep.subr.mxu0 0.0
  %10692 = vmatpush1.msra.mxu0 %v9172
  %10693 = vmatprep.subr.mxu0 0.0
  %10694 = vmatpush1.msra.mxu0 %v9173
  %10695 = vmatprep.subr.mxu0 0.0
  %10696 = vmatpush1.msra.mxu0 %v9174
  %10697 = vmatprep.subr.mxu0 0.0
  %10698 = vmatpush1.msra.mxu0 %v9175
  %10699 = vmatprep.subr.mxu0 0.0
  %10700 = vmatpush1.msra.mxu0 %v9176
  %10701 = vmatprep.subr.mxu0 0.0
  %10702 = vmatpush1.msra.mxu0 %v9177
  %10703 = vmatprep.subr.mxu0 0.0
  %10704 = vmatpush1.msra.mxu0 %v9178
  %10705 = vmatprep.subr.mxu0 0.0
  %10706 = vmatpush1.msra.mxu0 %v9179
  %10707 = vmatprep.subr.mxu0 0.0
  %10708 = vmatpush1.msra.mxu0 %v9180
  %10709 = vmatprep.subr.mxu0 0.0
  %10710 = vmatpush1.msra.mxu0 %v9181
  %10711 = vmatprep.subr.mxu0 0.0
  %10712 = vmatpush1.msra.mxu0 %v9182
  %10713 = vmatprep.subr.mxu0 0.0
  %10714 = vmatpush1.msra.mxu0 %v9183
  %10715 = vmatprep.subr.mxu0 0.0
  %10716 = vmatpush1.msra.mxu0 %v9184
  %10717 = vmatprep.subr.mxu0 0.0
  %10718 = vmatpush1.msra.mxu0 %v9185
  %10719 = vmatprep.mubr.f32.mxu0 %v8813
  %10720 = vmatmul.mubr.f32.gmra.mrb[0].mxu0 %v8812
  %v10721 = vpop.f32.mrb[0].mxu0
  %v10722 = vadd.f32 %v10652, %v10721
  %v10723 = vpop.f32.mrb[0].mxu0
  %10724 = vdwg.mxu0
  %10725 = vmatprep.subr.mxu0 0.0
  %10726 = vmatpush1.msra.mxu0 %v9186
  %10727 = vmatprep.subr.mxu0 0.0
  %10728 = vmatpush1.msra.mxu0 %v9187
  %10729 = vmatprep.subr.mxu0 0.0
  %10730 = vmatpush1.msra.mxu0 %v9188
  %10731 = vmatprep.subr.mxu0 0.0
  %10732 = vmatpush1.msra.mxu0 %v9189
  %10733 = vmatprep.subr.mxu0 0.0
  %10734 = vmatpush1.msra.mxu0 %v9190
  %10735 = vmatprep.subr.mxu0 0.0
  %10736 = vmatpush1.msra.mxu0 %v9191
  %10737 = vmatprep.subr.mxu0 0.0
  %10738 = vmatpush1.msra.mxu0 %v9192
  %10739 = vmatprep.subr.mxu0 0.0
  %10740 = vmatpush1.msra.mxu0 %v9193
  %10741 = vmatprep.subr.mxu0 0.0
  %10742 = vmatpush1.msra.mxu0 %v9194
  %10743 = vmatprep.subr.mxu0 0.0
  %10744 = vmatpush1.msra.mxu0 %v9195
  %10745 = vmatprep.subr.mxu0 0.0
  %10746 = vmatpush1.msra.mxu0 %v9196
  %10747 = vmatprep.subr.mxu0 0.0
  %10748 = vmatpush1.msra.mxu0 %v9197
  %10749 = vmatprep.subr.mxu0 0.0
  %10750 = vmatpush1.msra.mxu0 %v9198
  %10751 = vmatprep.subr.mxu0 0.0
  %10752 = vmatpush1.msra.mxu0 %v9199
  %10753 = vmatprep.subr.mxu0 0.0
  %10754 = vmatpush1.msra.mxu0 %v9200
  %10755 = vmatprep.subr.mxu0 0.0
  %10756 = vmatpush1.msra.mxu0 %v9201
  %10757 = vmatprep.subr.mxu0 0.0
  %10758 = vmatpush1.msra.mxu0 %v9202
  %10759 = vmatprep.subr.mxu0 0.0
  %10760 = vmatpush1.msra.mxu0 %v9203
  %10761 = vmatprep.subr.mxu0 0.0
  %10762 = vmatpush1.msra.mxu0 %v9204
  %10763 = vmatprep.subr.mxu0 0.0
  %10764 = vmatpush1.msra.mxu0 %v9205
  %10765 = vmatprep.subr.mxu0 0.0
  %10766 = vmatpush1.msra.mxu0 %v9206
  %10767 = vmatprep.subr.mxu0 0.0
  %10768 = vmatpush1.msra.mxu0 %v9207
  %10769 = vmatprep.subr.mxu0 0.0
  %10770 = vmatpush1.msra.mxu0 %v9208
  %10771 = vmatprep.subr.mxu0 0.0
  %10772 = vmatpush1.msra.mxu0 %v9209
  %10773 = vmatprep.subr.mxu0 0.0
  %10774 = vmatpush1.msra.mxu0 %v9210
  %10775 = vmatprep.subr.mxu0 0.0
  %10776 = vmatpush1.msra.mxu0 %v9211
  %10777 = vmatprep.subr.mxu0 0.0
  %10778 = vmatpush1.msra.mxu0 %v9212
  %10779 = vmatprep.subr.mxu0 0.0
  %10780 = vmatpush1.msra.mxu0 %v9213
  %10781 = vmatprep.subr.mxu0 0.0
  %10782 = vmatpush1.msra.mxu0 %v9214
  %10783 = vmatprep.subr.mxu0 0.0
  %10784 = vmatpush1.msra.mxu0 %v9215
  %10785 = vmatprep.subr.mxu0 0.0
  %10786 = vmatpush1.msra.mxu0 %v9216
  %10787 = vmatprep.subr.mxu0 0.0
  %10788 = vmatpush1.msra.mxu0 %v9217
  %10789 = vmatprep.mubr.f32.mxu0 %v8815
  %10790 = vmatmul.mubr.f32.gmra.mrb[0].mxu0 %v8814
  %v10791 = vpop.f32.mrb[0].mxu0
  %v10792 = vadd.f32 %v10722, %v10791
  %v10793 = vpop.f32.mrb[0].mxu0
  %10794 = vdwg.mxu0
  %10795 = vmatprep.subr.mxu0 0.0
  %10796 = vmatpush1.msra.mxu0 %v9218
  %10797 = vmatprep.subr.mxu0 0.0
  %10798 = vmatpush1.msra.mxu0 %v9219
  %10799 = vmatprep.subr.mxu0 0.0
  %10800 = vmatpush1.msra.mxu0 %v9220
  %10801 = vmatprep.subr.mxu0 0.0
  %10802 = vmatpush1.msra.mxu0 %v9221
  %10803 = vmatprep.subr.mxu0 0.0
  %10804 = vmatpush1.msra.mxu0 %v9222
  %10805 = vmatprep.subr.mxu0 0.0
  %10806 = vmatpush1.msra.mxu0 %v9223
  %10807 = vmatprep.subr.mxu0 0.0
  %10808 = vmatpush1.msra.mxu0 %v9224
  %10809 = vmatprep.subr.mxu0 0.0
  %10810 = vmatpush1.msra.mxu0 %v9225
  %10811 = vmatprep.subr.mxu0 0.0
  %10812 = vmatpush1.msra.mxu0 %v9226
  %10813 = vmatprep.subr.mxu0 0.0
  %10814 = vmatpush1.msra.mxu0 %v9227
  %10815 = vmatprep.subr.mxu0 0.0
  %10816 = vmatpush1.msra.mxu0 %v9228
  %10817 = vmatprep.subr.mxu0 0.0
  %10818 = vmatpush1.msra.mxu0 %v9229
  %10819 = vmatprep.subr.mxu0 0.0
  %10820 = vmatpush1.msra.mxu0 %v9230
  %10821 = vmatprep.subr.mxu0 0.0
  %10822 = vmatpush1.msra.mxu0 %v9231
  %10823 = vmatprep.subr.mxu0 0.0
  %10824 = vmatpush1.msra.mxu0 %v9232
  %10825 = vmatprep.subr.mxu0 0.0
  %10826 = vmatpush1.msra.mxu0 %v9233
  %10827 = vmatprep.subr.mxu0 0.0
  %10828 = vmatpush1.msra.mxu0 %v9234
  %10829 = vmatprep.subr.mxu0 0.0
  %10830 = vmatpush1.msra.mxu0 %v9235
  %10831 = vmatprep.subr.mxu0 0.0
  %10832 = vmatpush1.msra.mxu0 %v9236
  %10833 = vmatprep.subr.mxu0 0.0
  %10834 = vmatpush1.msra.mxu0 %v9237
  %10835 = vmatprep.subr.mxu0 0.0
  %10836 = vmatpush1.msra.mxu0 %v9238
  %10837 = vmatprep.subr.mxu0 0.0
  %10838 = vmatpush1.msra.mxu0 %v9239
  %10839 = vmatprep.subr.mxu0 0.0
  %10840 = vmatpush1.msra.mxu0 %v9240
  %10841 = vmatprep.subr.mxu0 0.0
  %10842 = vmatpush1.msra.mxu0 %v9241
  %10843 = vmatprep.subr.mxu0 0.0
  %10844 = vmatpush1.msra.mxu0 %v9242
  %10845 = vmatprep.subr.mxu0 0.0
  %10846 = vmatpush1.msra.mxu0 %v9243
  %10847 = vmatprep.subr.mxu0 0.0
  %10848 = vmatpush1.msra.mxu0 %v9244
  %10849 = vmatprep.subr.mxu0 0.0
  %10850 = vmatpush1.msra.mxu0 %v9245
  %10851 = vmatprep.subr.mxu0 0.0
  %10852 = vmatpush1.msra.mxu0 %v9246
  %10853 = vmatprep.subr.mxu0 0.0
  %10854 = vmatpush1.msra.mxu0 %v9247
  %10855 = vmatprep.subr.mxu0 0.0
  %10856 = vmatpush1.msra.mxu0 %v9248
  %10857 = vmatprep.subr.mxu0 0.0
  %10858 = vmatpush1.msra.mxu0 %v9249
  %10859 = vmatprep.mubr.f32.mxu0 %v8817
  %10860 = vmatmul.mubr.f32.gmra.mrb[0].mxu0 %v8816
  %v10861 = vpop.f32.mrb[0].mxu0
  %v10862 = vadd.f32 %v10792, %v10861
  %v10863 = vpop.f32.mrb[0].mxu0
  %10864 = vdwg.mxu0
  %10865 = vmatprep.subr.mxu0 0.0
  %10866 = vmatpush1.msra.mxu0 %v9250
  %10867 = vmatprep.subr.mxu0 0.0
  %10868 = vmatpush1.msra.mxu0 %v9251
  %10869 = vmatprep.subr.mxu0 0.0
  %10870 = vmatpush1.msra.mxu0 %v9252
  %10871 = vmatprep.subr.mxu0 0.0
  %10872 = vmatpush1.msra.mxu0 %v9253
  %10873 = vmatprep.subr.mxu0 0.0
  %10874 = vmatpush1.msra.mxu0 %v9254
  %10875 = vmatprep.subr.mxu0 0.0
  %10876 = vmatpush1.msra.mxu0 %v9255
  %10877 = vmatprep.subr.mxu0 0.0
  %10878 = vmatpush1.msra.mxu0 %v9256
  %10879 = vmatprep.subr.mxu0 0.0
  %10880 = vmatpush1.msra.mxu0 %v9257
  %10881 = vmatprep.subr.mxu0 0.0
  %10882 = vmatpush1.msra.mxu0 %v9258
  %10883 = vmatprep.subr.mxu0 0.0
  %10884 = vmatpush1.msra.mxu0 %v9259
  %10885 = vmatprep.subr.mxu0 0.0
  %10886 = vmatpush1.msra.mxu0 %v9260
  %10887 = vmatprep.subr.mxu0 0.0
  %10888 = vmatpush1.msra.mxu0 %v9261
  %10889 = vmatprep.subr.mxu0 0.0
  %10890 = vmatpush1.msra.mxu0 %v9262
  %10891 = vmatprep.subr.mxu0 0.0
  %10892 = vmatpush1.msra.mxu0 %v9263
  %10893 = vmatprep.subr.mxu0 0.0
  %10894 = vmatpush1.msra.mxu0 %v9264
  %10895 = vmatprep.subr.mxu0 0.0
  %10896 = vmatpush1.msra.mxu0 %v9265
  %10897 = vmatprep.subr.mxu0 0.0
  %10898 = vmatpush1.msra.mxu0 %v9266
  %10899 = vmatprep.subr.mxu0 0.0
  %10900 = vmatpush1.msra.mxu0 %v9267
  %10901 = vmatprep.subr.mxu0 0.0
  %10902 = vmatpush1.msra.mxu0 %v9268
  %10903 = vmatprep.subr.mxu0 0.0
  %10904 = vmatpush1.msra.mxu0 %v9269
  %10905 = vmatprep.subr.mxu0 0.0
  %10906 = vmatpush1.msra.mxu0 %v9270
  %10907 = vmatprep.subr.mxu0 0.0
  %10908 = vmatpush1.msra.mxu0 %v9271
  %10909 = vmatprep.subr.mxu0 0.0
  %10910 = vmatpush1.msra.mxu0 %v9272
  %10911 = vmatprep.subr.mxu0 0.0
  %10912 = vmatpush1.msra.mxu0 %v9273
  %10913 = vmatprep.subr.mxu0 0.0
  %10914 = vmatpush1.msra.mxu0 %v9274
  %10915 = vmatprep.subr.mxu0 0.0
  %10916 = vmatpush1.msra.mxu0 %v9275
  %10917 = vmatprep.subr.mxu0 0.0
  %10918 = vmatpush1.msra.mxu0 %v9276
  %10919 = vmatprep.subr.mxu0 0.0
  %10920 = vmatpush1.msra.mxu0 %v9277
  %10921 = vmatprep.subr.mxu0 0.0
  %10922 = vmatpush1.msra.mxu0 %v9278
  %10923 = vmatprep.subr.mxu0 0.0
  %10924 = vmatpush1.msra.mxu0 %v9279
  %10925 = vmatprep.subr.mxu0 0.0
  %10926 = vmatpush1.msra.mxu0 %v9280
  %10927 = vmatprep.subr.mxu0 0.0
  %10928 = vmatpush1.msra.mxu0 %v9281
  %10929 = vmatprep.mubr.f32.mxu0 %v8819
  %10930 = vmatmul.mubr.f32.gmra.mrb[0].mxu0 %v8818
  %v10931 = vpop.f32.mrb[0].mxu0
  %v10932 = vadd.f32 %v10862, %v10931
  %v10933 = vpop.f32.mrb[0].mxu0
  %10934 = vdwg.mxu0
  %10935 = vmatprep.subr.mxu0 0.0
  %10936 = vmatpush1.msra.mxu0 %v9282
  %10937 = vmatprep.subr.mxu0 0.0
  %10938 = vmatpush1.msra.mxu0 %v9283
  %10939 = vmatprep.subr.mxu0 0.0
  %10940 = vmatpush1.msra.mxu0 %v9284
  %10941 = vmatprep.subr.mxu0 0.0
  %10942 = vmatpush1.msra.mxu0 %v9285
  %10943 = vmatprep.subr.mxu0 0.0
  %10944 = vmatpush1.msra.mxu0 %v9286
  %10945 = vmatprep.subr.mxu0 0.0
  %10946 = vmatpush1.msra.mxu0 %v9287
  %10947 = vmatprep.subr.mxu0 0.0
  %10948 = vmatpush1.msra.mxu0 %v9288
  %10949 = vmatprep.subr.mxu0 0.0
  %10950 = vmatpush1.msra.mxu0 %v9289
  %10951 = vmatprep.subr.mxu0 0.0
  %10952 = vmatpush1.msra.mxu0 %v9290
  %10953 = vmatprep.subr.mxu0 0.0
  %10954 = vmatpush1.msra.mxu0 %v9291
  %10955 = vmatprep.subr.mxu0 0.0
  %10956 = vmatpush1.msra.mxu0 %v9292
  %10957 = vmatprep.subr.mxu0 0.0
  %10958 = vmatpush1.msra.mxu0 %v9293
  %10959 = vmatprep.subr.mxu0 0.0
  %10960 = vmatpush1.msra.mxu0 %v9294
  %10961 = vmatprep.subr.mxu0 0.0
  %10962 = vmatpush1.msra.mxu0 %v9295
  %10963 = vmatprep.subr.mxu0 0.0
  %10964 = vmatpush1.msra.mxu0 %v9296
  %10965 = vmatprep.subr.mxu0 0.0
  %10966 = vmatpush1.msra.mxu0 %v9297
  %10967 = vmatprep.subr.mxu0 0.0
  %10968 = vmatpush1.msra.mxu0 %v9298
  %10969 = vmatprep.subr.mxu0 0.0
  %10970 = vmatpush1.msra.mxu0 %v9299
  %10971 = vmatprep.subr.mxu0 0.0
  %10972 = vmatpush1.msra.mxu0 %v9300
  %10973 = vmatprep.subr.mxu0 0.0
  %10974 = vmatpush1.msra.mxu0 %v9301
  %10975 = vmatprep.subr.mxu0 0.0
  %10976 = vmatpush1.msra.mxu0 %v9302
  %10977 = vmatprep.subr.mxu0 0.0
  %10978 = vmatpush1.msra.mxu0 %v9303
  %10979 = vmatprep.subr.mxu0 0.0
  %10980 = vmatpush1.msra.mxu0 %v9304
  %10981 = vmatprep.subr.mxu0 0.0
  %10982 = vmatpush1.msra.mxu0 %v9305
  %10983 = vmatprep.subr.mxu0 0.0
  %10984 = vmatpush1.msra.mxu0 %v9306
  %10985 = vmatprep.subr.mxu0 0.0
  %10986 = vmatpush1.msra.mxu0 %v9307
  %10987 = vmatprep.subr.mxu0 0.0
  %10988 = vmatpush1.msra.mxu0 %v9308
  %10989 = vmatprep.subr.mxu0 0.0
  %10990 = vmatpush1.msra.mxu0 %v9309
  %10991 = vmatprep.subr.mxu0 0.0
  %10992 = vmatpush1.msra.mxu0 %v9310
  %10993 = vmatprep.subr.mxu0 0.0
  %10994 = vmatpush1.msra.mxu0 %v9311
  %10995 = vmatprep.subr.mxu0 0.0
  %10996 = vmatpush1.msra.mxu0 %v9312
  %10997 = vmatprep.subr.mxu0 0.0
  %10998 = vmatpush1.msra.mxu0 %v9313
  %10999 = vmatprep.mubr.f32.mxu0 %v8821
  %11000 = vmatmul.mubr.f32.gmra.mrb[0].mxu0 %v8820
  %v11001 = vpop.f32.mrb[0].mxu0
  %v11002 = vadd.f32 %v10932, %v11001
  %v11003 = vpop.f32.mrb[0].mxu0
  %11004 = vdwg.mxu0
  %11005 = vmatprep.subr.mxu0 0.0
  %11006 = vmatpush1.msra.mxu0 %v9314
  %11007 = vmatprep.subr.mxu0 0.0
  %11008 = vmatpush1.msra.mxu0 %v9315
  %11009 = vmatprep.subr.mxu0 0.0
  %11010 = vmatpush1.msra.mxu0 %v9316
  %11011 = vmatprep.subr.mxu0 0.0
  %11012 = vmatpush1.msra.mxu0 %v9317
  %11013 = vmatprep.subr.mxu0 0.0
  %11014 = vmatpush1.msra.mxu0 %v9318
  %11015 = vmatprep.subr.mxu0 0.0
  %11016 = vmatpush1.msra.mxu0 %v9319
  %11017 = vmatprep.subr.mxu0 0.0
  %11018 = vmatpush1.msra.mxu0 %v9320
  %11019 = vmatprep.subr.mxu0 0.0
  %11020 = vmatpush1.msra.mxu0 %v9321
  %11021 = vmatprep.subr.mxu0 0.0
  %11022 = vmatpush1.msra.mxu0 %v9322
  %11023 = vmatprep.subr.mxu0 0.0
  %11024 = vmatpush1.msra.mxu0 %v9323
  %11025 = vmatprep.subr.mxu0 0.0
  %11026 = vmatpush1.msra.mxu0 %v9324
  %11027 = vmatprep.subr.mxu0 0.0
  %11028 = vmatpush1.msra.mxu0 %v9325
  %11029 = vmatprep.subr.mxu0 0.0
  %11030 = vmatpush1.msra.mxu0 %v9326
  %11031 = vmatprep.subr.mxu0 0.0
  %11032 = vmatpush1.msra.mxu0 %v9327
  %11033 = vmatprep.subr.mxu0 0.0
  %11034 = vmatpush1.msra.mxu0 %v9328
  %11035 = vmatprep.subr.mxu0 0.0
  %11036 = vmatpush1.msra.mxu0 %v9329
  %11037 = vmatprep.subr.mxu0 0.0
  %11038 = vmatpush1.msra.mxu0 %v9330
  %11039 = vmatprep.subr.mxu0 0.0
  %11040 = vmatpush1.msra.mxu0 %v9331
  %11041 = vmatprep.subr.mxu0 0.0
  %11042 = vmatpush1.msra.mxu0 %v9332
  %11043 = vmatprep.subr.mxu0 0.0
  %11044 = vmatpush1.msra.mxu0 %v9333
  %11045 = vmatprep.subr.mxu0 0.0
  %11046 = vmatpush1.msra.mxu0 %v9334
  %11047 = vmatprep.subr.mxu0 0.0
  %11048 = vmatpush1.msra.mxu0 %v9335
  %11049 = vmatprep.subr.mxu0 0.0
  %11050 = vmatpush1.msra.mxu0 %v9336
  %11051 = vmatprep.subr.mxu0 0.0
  %11052 = vmatpush1.msra.mxu0 %v9337
  %11053 = vmatprep.subr.mxu0 0.0
  %11054 = vmatpush1.msra.mxu0 %v9338
  %11055 = vmatprep.subr.mxu0 0.0
  %11056 = vmatpush1.msra.mxu0 %v9339
  %11057 = vmatprep.subr.mxu0 0.0
  %11058 = vmatpush1.msra.mxu0 %v9340
  %11059 = vmatprep.subr.mxu0 0.0
  %11060 = vmatpush1.msra.mxu0 %v9341
  %11061 = vmatprep.subr.mxu0 0.0
  %11062 = vmatpush1.msra.mxu0 %v9342
  %11063 = vmatprep.subr.mxu0 0.0
  %11064 = vmatpush1.msra.mxu0 %v9343
  %11065 = vmatprep.subr.mxu0 0.0
  %11066 = vmatpush1.msra.mxu0 %v9344
  %11067 = vmatprep.subr.mxu0 0.0
  %11068 = vmatpush1.msra.mxu0 %v9345
  %11069 = vmatprep.mubr.f32.mxu0 %v8823
  %11070 = vmatmul.mubr.f32.gmra.mrb[0].mxu0 %v8822
  %v11071 = vpop.f32.mrb[0].mxu0
  %v11072 = vadd.f32 %v11002, %v11071
  %v11073 = vpop.f32.mrb[0].mxu0
  %11074 = vdwg.mxu0
  %11075 = vmatprep.subr.mxu0 0.0
  %11076 = vmatpush1.msra.mxu0 %v9346
  %11077 = vmatprep.subr.mxu0 0.0
  %11078 = vmatpush1.msra.mxu0 %v9347
  %11079 = vmatprep.subr.mxu0 0.0
  %11080 = vmatpush1.msra.mxu0 %v9348
  %11081 = vmatprep.subr.mxu0 0.0
  %11082 = vmatpush1.msra.mxu0 %v9349
  %11083 = vmatprep.subr.mxu0 0.0
  %11084 = vmatpush1.msra.mxu0 %v9350
  %11085 = vmatprep.subr.mxu0 0.0
  %11086 = vmatpush1.msra.mxu0 %v9351
  %11087 = vmatprep.subr.mxu0 0.0
  %11088 = vmatpush1.msra.mxu0 %v9352
  %11089 = vmatprep.subr.mxu0 0.0
  %11090 = vmatpush1.msra.mxu0 %v9353
  %11091 = vmatprep.subr.mxu0 0.0
  %11092 = vmatpush1.msra.mxu0 %v9354
  %11093 = vmatprep.subr.mxu0 0.0
  %11094 = vmatpush1.msra.mxu0 %v9355
  %11095 = vmatprep.subr.mxu0 0.0
  %11096 = vmatpush1.msra.mxu0 %v9356
  %11097 = vmatprep.subr.mxu0 0.0
  %11098 = vmatpush1.msra.mxu0 %v9357
  %11099 = vmatprep.subr.mxu0 0.0
  %11100 = vmatpush1.msra.mxu0 %v9358
  %11101 = vmatprep.subr.mxu0 0.0
  %11102 = vmatpush1.msra.mxu0 %v9359
  %11103 = vmatprep.subr.mxu0 0.0
  %11104 = vmatpush1.msra.mxu0 %v9360
  %11105 = vmatprep.subr.mxu0 0.0
  %11106 = vmatpush1.msra.mxu0 %v9361
  %11107 = vmatprep.subr.mxu0 0.0
  %11108 = vmatpush1.msra.mxu0 %v9362
  %11109 = vmatprep.subr.mxu0 0.0
  %11110 = vmatpush1.msra.mxu0 %v9363
  %11111 = vmatprep.subr.mxu0 0.0
  %11112 = vmatpush1.msra.mxu0 %v9364
  %11113 = vmatprep.subr.mxu0 0.0
  %11114 = vmatpush1.msra.mxu0 %v9365
  %11115 = vmatprep.subr.mxu0 0.0
  %11116 = vmatpush1.msra.mxu0 %v9366
  %11117 = vmatprep.subr.mxu0 0.0
  %11118 = vmatpush1.msra.mxu0 %v9367
  %11119 = vmatprep.subr.mxu0 0.0
  %11120 = vmatpush1.msra.mxu0 %v9368
  %11121 = vmatprep.subr.mxu0 0.0
  %11122 = vmatpush1.msra.mxu0 %v9369
  %11123 = vmatprep.subr.mxu0 0.0
  %11124 = vmatpush1.msra.mxu0 %v9370
  %11125 = vmatprep.subr.mxu0 0.0
  %11126 = vmatpush1.msra.mxu0 %v9371
  %11127 = vmatprep.subr.mxu0 0.0
  %11128 = vmatpush1.msra.mxu0 %v9372
  %11129 = vmatprep.subr.mxu0 0.0
  %11130 = vmatpush1.msra.mxu0 %v9373
  %11131 = vmatprep.subr.mxu0 0.0
  %11132 = vmatpush1.msra.mxu0 %v9374
  %11133 = vmatprep.subr.mxu0 0.0
  %11134 = vmatpush1.msra.mxu0 %v9375
  %11135 = vmatprep.subr.mxu0 0.0
  %11136 = vmatpush1.msra.mxu0 %v9376
  %11137 = vmatprep.subr.mxu0 0.0
  %11138 = vmatpush1.msra.mxu0 %v9377
  %11139 = vmatprep.mubr.f32.mxu0 %v8825
  %11140 = vmatmul.mubr.f32.gmra.mrb[0].mxu0 %v8824
  %v11141 = vpop.f32.mrb[0].mxu0
  %v11142 = vadd.f32 %v11072, %v11141
  %v11143 = vpop.f32.mrb[0].mxu0
  %11144 = vdwg.mxu0
  %11145 = vmatprep.subr.mxu0 0.0
  %11146 = vmatpush1.msra.mxu0 %v9378
  %11147 = vmatprep.subr.mxu0 0.0
  %11148 = vmatpush1.msra.mxu0 %v9379
  %11149 = vmatprep.subr.mxu0 0.0
  %11150 = vmatpush1.msra.mxu0 %v9380
  %11151 = vmatprep.subr.mxu0 0.0
  %11152 = vmatpush1.msra.mxu0 %v9381
  %11153 = vmatprep.subr.mxu0 0.0
  %11154 = vmatpush1.msra.mxu0 %v9382
  %11155 = vmatprep.subr.mxu0 0.0
  %11156 = vmatpush1.msra.mxu0 %v9383
  %11157 = vmatprep.subr.mxu0 0.0
  %11158 = vmatpush1.msra.mxu0 %v9384
  %11159 = vmatprep.subr.mxu0 0.0
  %11160 = vmatpush1.msra.mxu0 %v9385
  %11161 = vmatprep.subr.mxu0 0.0
  %11162 = vmatpush1.msra.mxu0 %v9386
  %11163 = vmatprep.subr.mxu0 0.0
  %11164 = vmatpush1.msra.mxu0 %v9387
  %11165 = vmatprep.subr.mxu0 0.0
  %11166 = vmatpush1.msra.mxu0 %v9388
  %11167 = vmatprep.subr.mxu0 0.0
  %11168 = vmatpush1.msra.mxu0 %v9389
  %11169 = vmatprep.subr.mxu0 0.0
  %11170 = vmatpush1.msra.mxu0 %v9390
  %11171 = vmatprep.subr.mxu0 0.0
  %11172 = vmatpush1.msra.mxu0 %v9391
  %11173 = vmatprep.subr.mxu0 0.0
  %11174 = vmatpush1.msra.mxu0 %v9392
  %11175 = vmatprep.subr.mxu0 0.0
  %11176 = vmatpush1.msra.mxu0 %v9393
  %11177 = vmatprep.subr.mxu0 0.0
  %11178 = vmatpush1.msra.mxu0 %v9394
  %11179 = vmatprep.subr.mxu0 0.0
  %11180 = vmatpush1.msra.mxu0 %v9395
  %11181 = vmatprep.subr.mxu0 0.0
  %11182 = vmatpush1.msra.mxu0 %v9396
  %11183 = vmatprep.subr.mxu0 0.0
  %11184 = vmatpush1.msra.mxu0 %v9397
  %11185 = vmatprep.subr.mxu0 0.0
  %11186 = vmatpush1.msra.mxu0 %v9398
  %11187 = vmatprep.subr.mxu0 0.0
  %11188 = vmatpush1.msra.mxu0 %v9399
  %11189 = vmatprep.subr.mxu0 0.0
  %11190 = vmatpush1.msra.mxu0 %v9400
  %11191 = vmatprep.subr.mxu0 0.0
  %11192 = vmatpush1.msra.mxu0 %v9401
  %11193 = vmatprep.subr.mxu0 0.0
  %11194 = vmatpush1.msra.mxu0 %v9402
  %11195 = vmatprep.subr.mxu0 0.0
  %11196 = vmatpush1.msra.mxu0 %v9403
  %11197 = vmatprep.subr.mxu0 0.0
  %11198 = vmatpush1.msra.mxu0 %v9404
  %11199 = vmatprep.subr.mxu0 0.0
  %11200 = vmatpush1.msra.mxu0 %v9405
  %11201 = vmatprep.subr.mxu0 0.0
  %11202 = vmatpush1.msra.mxu0 %v9406
  %11203 = vmatprep.subr.mxu0 0.0
  %11204 = vmatpush1.msra.mxu0 %v9407
  %11205 = vmatprep.subr.mxu0 0.0
  %11206 = vmatpush1.msra.mxu0 %v9408
  %11207 = vmatprep.subr.mxu0 0.0
  %11208 = vmatpush1.msra.mxu0 %v9409
  %11209 = vmatprep.mubr.f32.mxu0 %v8827
  %11210 = vmatmul.mubr.f32.gmra.mrb[0].mxu0 %v8826
  %v11211 = vpop.f32.mrb[0].mxu0
  %v11212 = vadd.f32 %v11142, %v11211
  %v11213 = vpop.f32.mrb[0].mxu0
  %11214 = vdwg.mxu0
  %11215 = vmatprep.subr.mxu0 0.0
  %11216 = vmatpush1.msra.mxu0 %v9410
  %11217 = vmatprep.subr.mxu0 0.0
  %11218 = vmatpush1.msra.mxu0 %v9411
  %11219 = vmatprep.subr.mxu0 0.0
  %11220 = vmatpush1.msra.mxu0 %v9412
  %11221 = vmatprep.subr.mxu0 0.0
  %11222 = vmatpush1.msra.mxu0 %v9413
  %11223 = vmatprep.subr.mxu0 0.0
  %11224 = vmatpush1.msra.mxu0 %v9414
  %11225 = vmatprep.subr.mxu0 0.0
  %11226 = vmatpush1.msra.mxu0 %v9415
  %11227 = vmatprep.subr.mxu0 0.0
  %11228 = vmatpush1.msra.mxu0 %v9416
  %11229 = vmatprep.subr.mxu0 0.0
  %11230 = vmatpush1.msra.mxu0 %v9417
  %11231 = vmatprep.subr.mxu0 0.0
  %11232 = vmatpush1.msra.mxu0 %v9418
  %11233 = vmatprep.subr.mxu0 0.0
  %11234 = vmatpush1.msra.mxu0 %v9419
  %11235 = vmatprep.subr.mxu0 0.0
  %11236 = vmatpush1.msra.mxu0 %v9420
  %11237 = vmatprep.subr.mxu0 0.0
  %11238 = vmatpush1.msra.mxu0 %v9421
  %11239 = vmatprep.subr.mxu0 0.0
  %11240 = vmatpush1.msra.mxu0 %v9422
  %11241 = vmatprep.subr.mxu0 0.0
  %11242 = vmatpush1.msra.mxu0 %v9423
  %11243 = vmatprep.subr.mxu0 0.0
  %11244 = vmatpush1.msra.mxu0 %v9424
  %11245 = vmatprep.subr.mxu0 0.0
  %11246 = vmatpush1.msra.mxu0 %v9425
  %11247 = vmatprep.subr.mxu0 0.0
  %11248 = vmatpush1.msra.mxu0 %v9426
  %11249 = vmatprep.subr.mxu0 0.0
  %11250 = vmatpush1.msra.mxu0 %v9427
  %11251 = vmatprep.subr.mxu0 0.0
  %11252 = vmatpush1.msra.mxu0 %v9428
  %11253 = vmatprep.subr.mxu0 0.0
  %11254 = vmatpush1.msra.mxu0 %v9429
  %11255 = vmatprep.subr.mxu0 0.0
  %11256 = vmatpush1.msra.mxu0 %v9430
  %11257 = vmatprep.subr.mxu0 0.0
  %11258 = vmatpush1.msra.mxu0 %v9431
  %11259 = vmatprep.subr.mxu0 0.0
  %11260 = vmatpush1.msra.mxu0 %v9432
  %11261 = vmatprep.subr.mxu0 0.0
  %11262 = vmatpush1.msra.mxu0 %v9433
  %11263 = vmatprep.subr.mxu0 0.0
  %11264 = vmatpush1.msra.mxu0 %v9434
  %11265 = vmatprep.subr.mxu0 0.0
  %11266 = vmatpush1.msra.mxu0 %v9435
  %11267 = vmatprep.subr.mxu0 0.0
  %11268 = vmatpush1.msra.mxu0 %v9436
  %11269 = vmatprep.subr.mxu0 0.0
  %11270 = vmatpush1.msra.mxu0 %v9437
  %11271 = vmatprep.subr.mxu0 0.0
  %11272 = vmatpush1.msra.mxu0 %v9438
  %11273 = vmatprep.subr.mxu0 0.0
  %11274 = vmatpush1.msra.mxu0 %v9439
  %11275 = vmatprep.subr.mxu0 0.0
  %11276 = vmatpush1.msra.mxu0 %v9440
  %11277 = vmatprep.subr.mxu0 0.0
  %11278 = vmatpush1.msra.mxu0 %v9441
  %11279 = vmatprep.mubr.f32.mxu0 %v8829
  %11280 = vmatmul.mubr.f32.gmra.mrb[0].mxu0 %v8828
  %v11281 = vpop.f32.mrb[0].mxu0
  %v11282 = vadd.f32 %v11212, %v11281
  %v11283 = vpop.f32.mrb[0].mxu0
  %11284 = vdwg.mxu0
  %11285 = vmatprep.subr.mxu0 0.0
  %11286 = vmatpush1.msra.mxu0 %v9442
  %11287 = vmatprep.subr.mxu0 0.0
  %11288 = vmatpush1.msra.mxu0 %v9443
  %11289 = vmatprep.subr.mxu0 0.0
  %11290 = vmatpush1.msra.mxu0 %v9444
  %11291 = vmatprep.subr.mxu0 0.0
  %11292 = vmatpush1.msra.mxu0 %v9445
  %11293 = vmatprep.subr.mxu0 0.0
  %11294 = vmatpush1.msra.mxu0 %v9446
  %11295 = vmatprep.subr.mxu0 0.0
  %11296 = vmatpush1.msra.mxu0 %v9447
  %11297 = vmatprep.subr.mxu0 0.0
  %11298 = vmatpush1.msra.mxu0 %v9448
  %11299 = vmatprep.subr.mxu0 0.0
  %11300 = vmatpush1.msra.mxu0 %v9449
  %11301 = vmatprep.subr.mxu0 0.0
  %11302 = vmatpush1.msra.mxu0 %v9450
  %11303 = vmatprep.subr.mxu0 0.0
  %11304 = vmatpush1.msra.mxu0 %v9451
  %11305 = vmatprep.subr.mxu0 0.0
  %11306 = vmatpush1.msra.mxu0 %v9452
  %11307 = vmatprep.subr.mxu0 0.0
  %11308 = vmatpush1.msra.mxu0 %v9453
  %11309 = vmatprep.subr.mxu0 0.0
  %11310 = vmatpush1.msra.mxu0 %v9454
  %11311 = vmatprep.subr.mxu0 0.0
  %11312 = vmatpush1.msra.mxu0 %v9455
  %11313 = vmatprep.subr.mxu0 0.0
  %11314 = vmatpush1.msra.mxu0 %v9456
  %11315 = vmatprep.subr.mxu0 0.0
  %11316 = vmatpush1.msra.mxu0 %v9457
  %11317 = vmatprep.subr.mxu0 0.0
  %11318 = vmatpush1.msra.mxu0 %v9458
  %11319 = vmatprep.subr.mxu0 0.0
  %11320 = vmatpush1.msra.mxu0 %v9459
  %11321 = vmatprep.subr.mxu0 0.0
  %11322 = vmatpush1.msra.mxu0 %v9460
  %11323 = vmatprep.subr.mxu0 0.0
  %11324 = vmatpush1.msra.mxu0 %v9461
  %11325 = vmatprep.subr.mxu0 0.0
  %11326 = vmatpush1.msra.mxu0 %v9462
  %11327 = vmatprep.subr.mxu0 0.0
  %11328 = vmatpush1.msra.mxu0 %v9463
  %11329 = vmatprep.subr.mxu0 0.0
  %11330 = vmatpush1.msra.mxu0 %v9464
  %11331 = vmatprep.subr.mxu0 0.0
  %11332 = vmatpush1.msra.mxu0 %v9465
  %11333 = vmatprep.subr.mxu0 0.0
  %11334 = vmatpush1.msra.mxu0 %v9466
  %11335 = vmatprep.subr.mxu0 0.0
  %11336 = vmatpush1.msra.mxu0 %v9467
  %11337 = vmatprep.subr.mxu0 0.0
  %11338 = vmatpush1.msra.mxu0 %v9468
  %11339 = vmatprep.subr.mxu0 0.0
  %11340 = vmatpush1.msra.mxu0 %v9469
  %11341 = vmatprep.subr.mxu0 0.0
  %11342 = vmatpush1.msra.mxu0 %v9470
  %11343 = vmatprep.subr.mxu0 0.0
  %11344 = vmatpush1.msra.mxu0 %v9471
  %11345 = vmatprep.subr.mxu0 0.0
  %11346 = vmatpush1.msra.mxu0 %v9472
  %11347 = vmatprep.subr.mxu0 0.0
  %11348 = vmatpush1.msra.mxu0 %v9473
  %11349 = vmatprep.mubr.f32.mxu0 %v8831
  %11350 = vmatmul.mubr.f32.gmra.mrb[0].mxu0 %v8830
  %v11351 = vpop.f32.mrb[0].mxu0
  %v11352 = vadd.f32 %v11282, %v11351
  %v11353 = vpop.f32.mrb[0].mxu0
  %11354 = vdwg.mxu0
  %11355 = vmatprep.subr.mxu0 0.0
  %11356 = vmatpush1.msra.mxu0 %v9474
  %11357 = vmatprep.subr.mxu0 0.0
  %11358 = vmatpush1.msra.mxu0 %v9475
  %11359 = vmatprep.subr.mxu0 0.0
  %11360 = vmatpush1.msra.mxu0 %v9476
  %11361 = vmatprep.subr.mxu0 0.0
  %11362 = vmatpush1.msra.mxu0 %v9477
  %11363 = vmatprep.subr.mxu0 0.0
  %11364 = vmatpush1.msra.mxu0 %v9478
  %11365 = vmatprep.subr.mxu0 0.0
  %11366 = vmatpush1.msra.mxu0 %v9479
  %11367 = vmatprep.subr.mxu0 0.0
  %11368 = vmatpush1.msra.mxu0 %v9480
  %11369 = vmatprep.subr.mxu0 0.0
  %11370 = vmatpush1.msra.mxu0 %v9481
  %11371 = vmatprep.subr.mxu0 0.0
  %11372 = vmatpush1.msra.mxu0 %v9482
  %11373 = vmatprep.subr.mxu0 0.0
  %11374 = vmatpush1.msra.mxu0 %v9483
  %11375 = vmatprep.subr.mxu0 0.0
  %11376 = vmatpush1.msra.mxu0 %v9484
  %11377 = vmatprep.subr.mxu0 0.0
  %11378 = vmatpush1.msra.mxu0 %v9485
  %11379 = vmatprep.subr.mxu0 0.0
  %11380 = vmatpush1.msra.mxu0 %v9486
  %11381 = vmatprep.subr.mxu0 0.0
  %11382 = vmatpush1.msra.mxu0 %v9487
  %11383 = vmatprep.subr.mxu0 0.0
  %11384 = vmatpush1.msra.mxu0 %v9488
  %11385 = vmatprep.subr.mxu0 0.0
  %11386 = vmatpush1.msra.mxu0 %v9489
  %11387 = vmatprep.subr.mxu0 0.0
  %11388 = vmatpush1.msra.mxu0 %v9490
  %11389 = vmatprep.subr.mxu0 0.0
  %11390 = vmatpush1.msra.mxu0 %v9491
  %11391 = vmatprep.subr.mxu0 0.0
  %11392 = vmatpush1.msra.mxu0 %v9492
  %11393 = vmatprep.subr.mxu0 0.0
  %11394 = vmatpush1.msra.mxu0 %v9493
  %11395 = vmatprep.subr.mxu0 0.0
  %11396 = vmatpush1.msra.mxu0 %v9494
  %11397 = vmatprep.subr.mxu0 0.0
  %11398 = vmatpush1.msra.mxu0 %v9495
  %11399 = vmatprep.subr.mxu0 0.0
  %11400 = vmatpush1.msra.mxu0 %v9496
  %11401 = vmatprep.subr.mxu0 0.0
  %11402 = vmatpush1.msra.mxu0 %v9497
  %11403 = vmatprep.subr.mxu0 0.0
  %11404 = vmatpush1.msra.mxu0 %v9498
  %11405 = vmatprep.subr.mxu0 0.0
  %11406 = vmatpush1.msra.mxu0 %v9499
  %11407 = vmatprep.subr.mxu0 0.0
  %11408 = vmatpush1.msra.mxu0 %v9500
  %11409 = vmatprep.subr.mxu0 0.0
  %11410 = vmatpush1.msra.mxu0 %v9501
  %11411 = vmatprep.subr.mxu0 0.0
  %11412 = vmatpush1.msra.mxu0 %v9502
  %11413 = vmatprep.subr.mxu0 0.0
  %11414 = vmatpush1.msra.mxu0 %v9503
  %11415 = vmatprep.subr.mxu0 0.0
  %11416 = vmatpush1.msra.mxu0 %v9504
  %11417 = vmatprep.subr.mxu0 0.0
  %11418 = vmatpush1.msra.mxu0 %v9505
  %11419 = vmatprep.mubr.f32.mxu0 %v8833
  %11420 = vmatmul.mubr.f32.gmra.mrb[0].mxu0 %v8832
  %v11421 = vpop.f32.mrb[0].mxu0
  %v11422 = vadd.f32 %v11352, %v11421
  %v11423 = vpop.f32.mrb[0].mxu0
  %11424 = vdwg.mxu0
  %11425 = vmatprep.subr.mxu0 0.0
  %11426 = vmatpush1.msra.mxu0 %v9506
  %11427 = vmatprep.subr.mxu0 0.0
  %11428 = vmatpush1.msra.mxu0 %v9507
  %11429 = vmatprep.subr.mxu0 0.0
  %11430 = vmatpush1.msra.mxu0 %v9508
  %11431 = vmatprep.subr.mxu0 0.0
  %11432 = vmatpush1.msra.mxu0 %v9509
  %11433 = vmatprep.subr.mxu0 0.0
  %11434 = vmatpush1.msra.mxu0 %v9510
  %11435 = vmatprep.subr.mxu0 0.0
  %11436 = vmatpush1.msra.mxu0 %v9511
  %11437 = vmatprep.subr.mxu0 0.0
  %11438 = vmatpush1.msra.mxu0 %v9512
  %11439 = vmatprep.subr.mxu0 0.0
  %11440 = vmatpush1.msra.mxu0 %v9513
  %11441 = vmatprep.subr.mxu0 0.0
  %11442 = vmatpush1.msra.mxu0 %v9514
  %11443 = vmatprep.subr.mxu0 0.0
  %11444 = vmatpush1.msra.mxu0 %v9515
  %11445 = vmatprep.subr.mxu0 0.0
  %11446 = vmatpush1.msra.mxu0 %v9516
  %11447 = vmatprep.subr.mxu0 0.0
  %11448 = vmatpush1.msra.mxu0 %v9517
  %11449 = vmatprep.subr.mxu0 0.0
  %11450 = vmatpush1.msra.mxu0 %v9518
  %11451 = vmatprep.subr.mxu0 0.0
  %11452 = vmatpush1.msra.mxu0 %v9519
  %11453 = vmatprep.subr.mxu0 0.0
  %11454 = vmatpush1.msra.mxu0 %v9520
  %11455 = vmatprep.subr.mxu0 0.0
  %11456 = vmatpush1.msra.mxu0 %v9521
  %11457 = vmatprep.subr.mxu0 0.0
  %11458 = vmatpush1.msra.mxu0 %v9522
  %11459 = vmatprep.subr.mxu0 0.0
  %11460 = vmatpush1.msra.mxu0 %v9523
  %11461 = vmatprep.subr.mxu0 0.0
  %11462 = vmatpush1.msra.mxu0 %v9524
  %11463 = vmatprep.subr.mxu0 0.0
  %11464 = vmatpush1.msra.mxu0 %v9525
  %11465 = vmatprep.subr.mxu0 0.0
  %11466 = vmatpush1.msra.mxu0 %v9526
  %11467 = vmatprep.subr.mxu0 0.0
  %11468 = vmatpush1.msra.mxu0 %v9527
  %11469 = vmatprep.subr.mxu0 0.0
  %11470 = vmatpush1.msra.mxu0 %v9528
  %11471 = vmatprep.subr.mxu0 0.0
  %11472 = vmatpush1.msra.mxu0 %v9529
  %11473 = vmatprep.subr.mxu0 0.0
  %11474 = vmatpush1.msra.mxu0 %v9530
  %11475 = vmatprep.subr.mxu0 0.0
  %11476 = vmatpush1.msra.mxu0 %v9531
  %11477 = vmatprep.subr.mxu0 0.0
  %11478 = vmatpush1.msra.mxu0 %v9532
  %11479 = vmatprep.subr.mxu0 0.0
  %11480 = vmatpush1.msra.mxu0 %v9533
  %11481 = vmatprep.subr.mxu0 0.0
  %11482 = vmatpush1.msra.mxu0 %v9534
  %11483 = vmatprep.subr.mxu0 0.0
  %11484 = vmatpush1.msra.mxu0 %v9535
  %11485 = vmatprep.subr.mxu0 0.0
  %11486 = vmatpush1.msra.mxu0 %v9536
  %11487 = vmatprep.subr.mxu0 0.0
  %11488 = vmatpush1.msra.mxu0 %v9537
  %11489 = vmatprep.mubr.f32.mxu0 %v8835
  %11490 = vmatmul.mubr.f32.gmra.mrb[0].mxu0 %v8834
  %v11491 = vpop.f32.mrb[0].mxu0
  %v11492 = vadd.f32 %v11422, %v11491
  %v11493 = vpop.f32.mrb[0].mxu0
  %11494 = vdwg.mxu0
  %11495 = vmatprep.subr.mxu0 0.0
  %11496 = vmatpush1.msra.mxu0 %v9538
  %11497 = vmatprep.subr.mxu0 0.0
  %11498 = vmatpush1.msra.mxu0 %v9539
  %11499 = vmatprep.subr.mxu0 0.0
  %11500 = vmatpush1.msra.mxu0 %v9540
  %11501 = vmatprep.subr.mxu0 0.0
  %11502 = vmatpush1.msra.mxu0 %v9541
  %11503 = vmatprep.subr.mxu0 0.0
  %11504 = vmatpush1.msra.mxu0 %v9542
  %11505 = vmatprep.subr.mxu0 0.0
  %11506 = vmatpush1.msra.mxu0 %v9543
  %11507 = vmatprep.subr.mxu0 0.0
  %11508 = vmatpush1.msra.mxu0 %v9544
  %11509 = vmatprep.subr.mxu0 0.0
  %11510 = vmatpush1.msra.mxu0 %v9545
  %11511 = vmatprep.subr.mxu0 0.0
  %11512 = vmatpush1.msra.mxu0 %v9546
  %11513 = vmatprep.subr.mxu0 0.0
  %11514 = vmatpush1.msra.mxu0 %v9547
  %11515 = vmatprep.subr.mxu0 0.0
  %11516 = vmatpush1.msra.mxu0 %v9548
  %11517 = vmatprep.subr.mxu0 0.0
  %11518 = vmatpush1.msra.mxu0 %v9549
  %11519 = vmatprep.subr.mxu0 0.0
  %11520 = vmatpush1.msra.mxu0 %v9550
  %11521 = vmatprep.subr.mxu0 0.0
  %11522 = vmatpush1.msra.mxu0 %v9551
  %11523 = vmatprep.subr.mxu0 0.0
  %11524 = vmatpush1.msra.mxu0 %v9552
  %11525 = vmatprep.subr.mxu0 0.0
  %11526 = vmatpush1.msra.mxu0 %v9553
  %11527 = vmatprep.subr.mxu0 0.0
  %11528 = vmatpush1.msra.mxu0 %v9554
  %11529 = vmatprep.subr.mxu0 0.0
  %11530 = vmatpush1.msra.mxu0 %v9555
  %11531 = vmatprep.subr.mxu0 0.0
  %11532 = vmatpush1.msra.mxu0 %v9556
  %11533 = vmatprep.subr.mxu0 0.0
  %11534 = vmatpush1.msra.mxu0 %v9557
  %11535 = vmatprep.subr.mxu0 0.0
  %11536 = vmatpush1.msra.mxu0 %v9558
  %11537 = vmatprep.subr.mxu0 0.0
  %11538 = vmatpush1.msra.mxu0 %v9559
  %11539 = vmatprep.subr.mxu0 0.0
  %11540 = vmatpush1.msra.mxu0 %v9560
  %11541 = vmatprep.subr.mxu0 0.0
  %11542 = vmatpush1.msra.mxu0 %v9561
  %11543 = vmatprep.subr.mxu0 0.0
  %11544 = vmatpush1.msra.mxu0 %v9562
  %11545 = vmatprep.subr.mxu0 0.0
  %11546 = vmatpush1.msra.mxu0 %v9563
  %11547 = vmatprep.subr.mxu0 0.0
  %11548 = vmatpush1.msra.mxu0 %v9564
  %11549 = vmatprep.subr.mxu0 0.0
  %11550 = vmatpush1.msra.mxu0 %v9565
  %11551 = vmatprep.subr.mxu0 0.0
  %11552 = vmatpush1.msra.mxu0 %v9566
  %11553 = vmatprep.subr.mxu0 0.0
  %11554 = vmatpush1.msra.mxu0 %v9567
  %11555 = vmatprep.subr.mxu0 0.0
  %11556 = vmatpush1.msra.mxu0 %v9568
  %11557 = vmatprep.subr.mxu0 0.0
  %11558 = vmatpush1.msra.mxu0 %v9569
  %11559 = vmatprep.mubr.f32.mxu0 %v8837
  %11560 = vmatmul.mubr.f32.gmra.mrb[0].mxu0 %v8836
  %v11561 = vpop.f32.mrb[0].mxu0
  %v11562 = vadd.f32 %v11492, %v11561
  %v11563 = vpop.f32.mrb[0].mxu0
  %11564 = vdwg.mxu0
  %11565 = vmatprep.subr.mxu0 0.0
  %11566 = vmatpush1.msra.mxu0 %v9570
  %11567 = vmatprep.subr.mxu0 0.0
  %11568 = vmatpush1.msra.mxu0 %v9571
  %11569 = vmatprep.subr.mxu0 0.0
  %11570 = vmatpush1.msra.mxu0 %v9572
  %11571 = vmatprep.subr.mxu0 0.0
  %11572 = vmatpush1.msra.mxu0 %v9573
  %11573 = vmatprep.subr.mxu0 0.0
  %11574 = vmatpush1.msra.mxu0 %v9574
  %11575 = vmatprep.subr.mxu0 0.0
  %11576 = vmatpush1.msra.mxu0 %v9575
  %11577 = vmatprep.subr.mxu0 0.0
  %11578 = vmatpush1.msra.mxu0 %v9576
  %11579 = vmatprep.subr.mxu0 0.0
  %11580 = vmatpush1.msra.mxu0 %v9577
  %11581 = vmatprep.subr.mxu0 0.0
  %11582 = vmatpush1.msra.mxu0 %v9578
  %11583 = vmatprep.subr.mxu0 0.0
  %11584 = vmatpush1.msra.mxu0 %v9579
  %11585 = vmatprep.subr.mxu0 0.0
  %11586 = vmatpush1.msra.mxu0 %v9580
  %11587 = vmatprep.subr.mxu0 0.0
  %11588 = vmatpush1.msra.mxu0 %v9581
  %11589 = vmatprep.subr.mxu0 0.0
  %11590 = vmatpush1.msra.mxu0 %v9582
  %11591 = vmatprep.subr.mxu0 0.0
  %11592 = vmatpush1.msra.mxu0 %v9583
  %11593 = vmatprep.subr.mxu0 0.0
  %11594 = vmatpush1.msra.mxu0 %v9584
  %11595 = vmatprep.subr.mxu0 0.0
  %11596 = vmatpush1.msra.mxu0 %v9585
  %11597 = vmatprep.subr.mxu0 0.0
  %11598 = vmatpush1.msra.mxu0 %v9586
  %11599 = vmatprep.subr.mxu0 0.0
  %11600 = vmatpush1.msra.mxu0 %v9587
  %11601 = vmatprep.subr.mxu0 0.0
  %11602 = vmatpush1.msra.mxu0 %v9588
  %11603 = vmatprep.subr.mxu0 0.0
  %11604 = vmatpush1.msra.mxu0 %v9589
  %11605 = vmatprep.subr.mxu0 0.0
  %11606 = vmatpush1.msra.mxu0 %v9590
  %11607 = vmatprep.subr.mxu0 0.0
  %11608 = vmatpush1.msra.mxu0 %v9591
  %11609 = vmatprep.subr.mxu0 0.0
  %11610 = vmatpush1.msra.mxu0 %v9592
  %11611 = vmatprep.subr.mxu0 0.0
  %11612 = vmatpush1.msra.mxu0 %v9593
  %11613 = vmatprep.subr.mxu0 0.0
  %11614 = vmatpush1.msra.mxu0 %v9594
  %11615 = vmatprep.subr.mxu0 0.0
  %11616 = vmatpush1.msra.mxu0 %v9595
  %11617 = vmatprep.subr.mxu0 0.0
  %11618 = vmatpush1.msra.mxu0 %v9596
  %11619 = vmatprep.subr.mxu0 0.0
  %11620 = vmatpush1.msra.mxu0 %v9597
  %11621 = vmatprep.subr.mxu0 0.0
  %11622 = vmatpush1.msra.mxu0 %v9598
  %11623 = vmatprep.subr.mxu0 0.0
  %11624 = vmatpush1.msra.mxu0 %v9599
  %11625 = vmatprep.subr.mxu0 0.0
  %11626 = vmatpush1.msra.mxu0 %v9600
  %11627 = vmatprep.subr.mxu0 0.0
  %11628 = vmatpush1.msra.mxu0 %v9601
  %11629 = vmatprep.mubr.f32.mxu0 %v8839
  %11630 = vmatmul.mubr.f32.gmra.mrb[0].mxu0 %v8838
  %v11631 = vpop.f32.mrb[0].mxu0
  %v11632 = vadd.f32 %v11562, %v11631
  %v11633 = vpop.f32.mrb[0].mxu0
  %11634 = vdwg.mxu0
  %11635 = vmatprep.subr.mxu0 0.0
  %11636 = vmatpush1.msra.mxu0 %v9602
  %11637 = vmatprep.subr.mxu0 0.0
  %11638 = vmatpush1.msra.mxu0 %v9603
  %11639 = vmatprep.subr.mxu0 0.0
  %11640 = vmatpush1.msra.mxu0 %v9604
  %11641 = vmatprep.subr.mxu0 0.0
  %11642 = vmatpush1.msra.mxu0 %v9605
  %11643 = vmatprep.subr.mxu0 0.0
  %11644 = vmatpush1.msra.mxu0 %v9606
  %11645 = vmatprep.subr.mxu0 0.0
  %11646 = vmatpush1.msra.mxu0 %v9607
  %11647 = vmatprep.subr.mxu0 0.0
  %11648 = vmatpush1.msra.mxu0 %v9608
  %11649 = vmatprep.subr.mxu0 0.0
  %11650 = vmatpush1.msra.mxu0 %v9609
  %11651 = vmatprep.subr.mxu0 0.0
  %11652 = vmatpush1.msra.mxu0 %v9610
  %11653 = vmatprep.subr.mxu0 0.0
  %11654 = vmatpush1.msra.mxu0 %v9611
  %11655 = vmatprep.subr.mxu0 0.0
  %11656 = vmatpush1.msra.mxu0 %v9612
  %11657 = vmatprep.subr.mxu0 0.0
  %11658 = vmatpush1.msra.mxu0 %v9613
  %11659 = vmatprep.subr.mxu0 0.0
  %11660 = vmatpush1.msra.mxu0 %v9614
  %11661 = vmatprep.subr.mxu0 0.0
  %11662 = vmatpush1.msra.mxu0 %v9615
  %11663 = vmatprep.subr.mxu0 0.0
  %11664 = vmatpush1.msra.mxu0 %v9616
  %11665 = vmatprep.subr.mxu0 0.0
  %11666 = vmatpush1.msra.mxu0 %v9617
  %11667 = vmatprep.subr.mxu0 0.0
  %11668 = vmatpush1.msra.mxu0 %v9618
  %11669 = vmatprep.subr.mxu0 0.0
  %11670 = vmatpush1.msra.mxu0 %v9619
  %11671 = vmatprep.subr.mxu0 0.0
  %11672 = vmatpush1.msra.mxu0 %v9620
  %11673 = vmatprep.subr.mxu0 0.0
  %11674 = vmatpush1.msra.mxu0 %v9621
  %11675 = vmatprep.subr.mxu0 0.0
  %11676 = vmatpush1.msra.mxu0 %v9622
  %11677 = vmatprep.subr.mxu0 0.0
  %11678 = vmatpush1.msra.mxu0 %v9623
  %11679 = vmatprep.subr.mxu0 0.0
  %11680 = vmatpush1.msra.mxu0 %v9624
  %11681 = vmatprep.subr.mxu0 0.0
  %11682 = vmatpush1.msra.mxu0 %v9625
  %11683 = vmatprep.subr.mxu0 0.0
  %11684 = vmatpush1.msra.mxu0 %v9626
  %11685 = vmatprep.subr.mxu0 0.0
  %11686 = vmatpush1.msra.mxu0 %v9627
  %11687 = vmatprep.subr.mxu0 0.0
  %11688 = vmatpush1.msra.mxu0 %v9628
  %11689 = vmatprep.subr.mxu0 0.0
  %11690 = vmatpush1.msra.mxu0 %v9629
  %11691 = vmatprep.subr.mxu0 0.0
  %11692 = vmatpush1.msra.mxu0 %v9630
  %11693 = vmatprep.subr.mxu0 0.0
  %11694 = vmatpush1.msra.mxu0 %v9631
  %11695 = vmatprep.subr.mxu0 0.0
  %11696 = vmatpush1.msra.mxu0 %v9632
  %11697 = vmatprep.subr.mxu0 0.0
  %11698 = vmatpush1.msra.mxu0 %v9633
  %11699 = vmatprep.mubr.f32.mxu0 %v8841
  %11700 = vmatmul.mubr.f32.gmra.mrb[0].mxu0 %v8840
  %v11701 = vpop.f32.mrb[0].mxu0
  %v11702 = vadd.f32 %v11632, %v11701
  %v11703 = vpop.f32.mrb[0].mxu0
  %11704 = vdwg.mxu0
  %11705 = vmatprep.subr.mxu0 0.0
  %11706 = vmatpush1.msra.mxu0 %v9634
  %11707 = vmatprep.subr.mxu0 0.0
  %11708 = vmatpush1.msra.mxu0 %v9635
  %11709 = vmatprep.subr.mxu0 0.0
  %11710 = vmatpush1.msra.mxu0 %v9636
  %11711 = vmatprep.subr.mxu0 0.0
  %11712 = vmatpush1.msra.mxu0 %v9637
  %11713 = vmatprep.subr.mxu0 0.0
  %11714 = vmatpush1.msra.mxu0 %v9638
  %11715 = vmatprep.subr.mxu0 0.0
  %11716 = vmatpush1.msra.mxu0 %v9639
  %11717 = vmatprep.subr.mxu0 0.0
  %11718 = vmatpush1.msra.mxu0 %v9640
  %11719 = vmatprep.subr.mxu0 0.0
  %11720 = vmatpush1.msra.mxu0 %v9641
  %11721 = vmatprep.subr.mxu0 0.0
  %11722 = vmatpush1.msra.mxu0 %v9642
  %11723 = vmatprep.subr.mxu0 0.0
  %11724 = vmatpush1.msra.mxu0 %v9643
  %11725 = vmatprep.subr.mxu0 0.0
  %11726 = vmatpush1.msra.mxu0 %v9644
  %11727 = vmatprep.subr.mxu0 0.0
  %11728 = vmatpush1.msra.mxu0 %v9645
  %11729 = vmatprep.subr.mxu0 0.0
  %11730 = vmatpush1.msra.mxu0 %v9646
  %11731 = vmatprep.subr.mxu0 0.0
  %11732 = vmatpush1.msra.mxu0 %v9647
  %11733 = vmatprep.subr.mxu0 0.0
  %11734 = vmatpush1.msra.mxu0 %v9648
  %11735 = vmatprep.subr.mxu0 0.0
  %11736 = vmatpush1.msra.mxu0 %v9649
  %11737 = vmatprep.subr.mxu0 0.0
  %11738 = vmatpush1.msra.mxu0 %v9650
  %11739 = vmatprep.subr.mxu0 0.0
  %11740 = vmatpush1.msra.mxu0 %v9651
  %11741 = vmatprep.subr.mxu0 0.0
  %11742 = vmatpush1.msra.mxu0 %v9652
  %11743 = vmatprep.subr.mxu0 0.0
  %11744 = vmatpush1.msra.mxu0 %v9653
  %11745 = vmatprep.subr.mxu0 0.0
  %11746 = vmatpush1.msra.mxu0 %v9654
  %11747 = vmatprep.subr.mxu0 0.0
  %11748 = vmatpush1.msra.mxu0 %v9655
  %11749 = vmatprep.subr.mxu0 0.0
  %11750 = vmatpush1.msra.mxu0 %v9656
  %11751 = vmatprep.subr.mxu0 0.0
  %11752 = vmatpush1.msra.mxu0 %v9657
  %11753 = vmatprep.subr.mxu0 0.0
  %11754 = vmatpush1.msra.mxu0 %v9658
  %11755 = vmatprep.subr.mxu0 0.0
  %11756 = vmatpush1.msra.mxu0 %v9659
  %11757 = vmatprep.subr.mxu0 0.0
  %11758 = vmatpush1.msra.mxu0 %v9660
  %11759 = vmatprep.subr.mxu0 0.0
  %11760 = vmatpush1.msra.mxu0 %v9661
  %11761 = vmatprep.subr.mxu0 0.0
  %11762 = vmatpush1.msra.mxu0 %v9662
  %11763 = vmatprep.subr.mxu0 0.0
  %11764 = vmatpush1.msra.mxu0 %v9663
  %11765 = vmatprep.subr.mxu0 0.0
  %11766 = vmatpush1.msra.mxu0 %v9664
  %11767 = vmatprep.subr.mxu0 0.0
  %11768 = vmatpush1.msra.mxu0 %v9665
  %11769 = vmatprep.mubr.f32.mxu0 %v8843
  %11770 = vmatmul.mubr.f32.gmra.mrb[0].mxu0 %v8842
  %v11771 = vpop.f32.mrb[0].mxu0
  %v11772 = vadd.f32 %v11702, %v11771
  %v11773 = vpop.f32.mrb[0].mxu0
  %11774 = vdwg.mxu0
  %11775 = vmatprep.subr.mxu0 0.0
  %11776 = vmatpush1.msra.mxu0 %v9666
  %11777 = vmatprep.subr.mxu0 0.0
  %11778 = vmatpush1.msra.mxu0 %v9667
  %11779 = vmatprep.subr.mxu0 0.0
  %11780 = vmatpush1.msra.mxu0 %v9668
  %11781 = vmatprep.subr.mxu0 0.0
  %11782 = vmatpush1.msra.mxu0 %v9669
  %11783 = vmatprep.subr.mxu0 0.0
  %11784 = vmatpush1.msra.mxu0 %v9670
  %11785 = vmatprep.subr.mxu0 0.0
  %11786 = vmatpush1.msra.mxu0 %v9671
  %11787 = vmatprep.subr.mxu0 0.0
  %11788 = vmatpush1.msra.mxu0 %v9672
  %11789 = vmatprep.subr.mxu0 0.0
  %11790 = vmatpush1.msra.mxu0 %v9673
  %11791 = vmatprep.subr.mxu0 0.0
  %11792 = vmatpush1.msra.mxu0 %v9674
  %11793 = vmatprep.subr.mxu0 0.0
  %11794 = vmatpush1.msra.mxu0 %v9675
  %11795 = vmatprep.subr.mxu0 0.0
  %11796 = vmatpush1.msra.mxu0 %v9676
  %11797 = vmatprep.subr.mxu0 0.0
  %11798 = vmatpush1.msra.mxu0 %v9677
  %11799 = vmatprep.subr.mxu0 0.0
  %11800 = vmatpush1.msra.mxu0 %v9678
  %11801 = vmatprep.subr.mxu0 0.0
  %11802 = vmatpush1.msra.mxu0 %v9679
  %11803 = vmatprep.subr.mxu0 0.0
  %11804 = vmatpush1.msra.mxu0 %v9680
  %11805 = vmatprep.subr.mxu0 0.0
  %11806 = vmatpush1.msra.mxu0 %v9681
  %11807 = vmatprep.subr.mxu0 0.0
  %11808 = vmatpush1.msra.mxu0 %v9682
  %11809 = vmatprep.subr.mxu0 0.0
  %11810 = vmatpush1.msra.mxu0 %v9683
  %11811 = vmatprep.subr.mxu0 0.0
  %11812 = vmatpush1.msra.mxu0 %v9684
  %11813 = vmatprep.subr.mxu0 0.0
  %11814 = vmatpush1.msra.mxu0 %v9685
  %11815 = vmatprep.subr.mxu0 0.0
  %11816 = vmatpush1.msra.mxu0 %v9686
  %11817 = vmatprep.subr.mxu0 0.0
  %11818 = vmatpush1.msra.mxu0 %v9687
  %11819 = vmatprep.subr.mxu0 0.0
  %11820 = vmatpush1.msra.mxu0 %v9688
  %11821 = vmatprep.subr.mxu0 0.0
  %11822 = vmatpush1.msra.mxu0 %v9689
  %11823 = vmatprep.subr.mxu0 0.0
  %11824 = vmatpush1.msra.mxu0 %v9690
  %11825 = vmatprep.subr.mxu0 0.0
  %11826 = vmatpush1.msra.mxu0 %v9691
  %11827 = vmatprep.subr.mxu0 0.0
  %11828 = vmatpush1.msra.mxu0 %v9692
  %11829 = vmatprep.subr.mxu0 0.0
  %11830 = vmatpush1.msra.mxu0 %v9693
  %11831 = vmatprep.subr.mxu0 0.0
  %11832 = vmatpush1.msra.mxu0 %v9694
  %11833 = vmatprep.subr.mxu0 0.0
  %11834 = vmatpush1.msra.mxu0 %v9695
  %11835 = vmatprep.subr.mxu0 0.0
  %11836 = vmatpush1.msra.mxu0 %v9696
  %11837 = vmatprep.subr.mxu0 0.0
  %11838 = vmatpush1.msra.mxu0 %v9697
  %11839 = vmatprep.mubr.f32.mxu0 %v8845
  %11840 = vmatmul.mubr.f32.gmra.mrb[0].mxu0 %v8844
  %v11841 = vpop.f32.mrb[0].mxu0
  %v11842 = vadd.f32 %v11772, %v11841
  %v11843 = vpop.f32.mrb[0].mxu0
  %11844 = vdwg.mxu0
  %11845 = vmatprep.subr.mxu0 0.0
  %11846 = vmatpush1.msra.mxu0 %v9698
  %11847 = vmatprep.subr.mxu0 0.0
  %11848 = vmatpush1.msra.mxu0 %v9699
  %11849 = vmatprep.subr.mxu0 0.0
  %11850 = vmatpush1.msra.mxu0 %v9700
  %11851 = vmatprep.subr.mxu0 0.0
  %11852 = vmatpush1.msra.mxu0 %v9701
  %11853 = vmatprep.subr.mxu0 0.0
  %11854 = vmatpush1.msra.mxu0 %v9702
  %11855 = vmatprep.subr.mxu0 0.0
  %11856 = vmatpush1.msra.mxu0 %v9703
  %11857 = vmatprep.subr.mxu0 0.0
  %11858 = vmatpush1.msra.mxu0 %v9704
  %11859 = vmatprep.subr.mxu0 0.0
  %11860 = vmatpush1.msra.mxu0 %v9705
  %11861 = vmatprep.subr.mxu0 0.0
  %11862 = vmatpush1.msra.mxu0 %v9706
  %11863 = vmatprep.subr.mxu0 0.0
  %11864 = vmatpush1.msra.mxu0 %v9707
  %11865 = vmatprep.subr.mxu0 0.0
  %11866 = vmatpush1.msra.mxu0 %v9708
  %11867 = vmatprep.subr.mxu0 0.0
  %11868 = vmatpush1.msra.mxu0 %v9709
  %11869 = vmatprep.subr.mxu0 0.0
  %11870 = vmatpush1.msra.mxu0 %v9710
  %11871 = vmatprep.subr.mxu0 0.0
  %11872 = vmatpush1.msra.mxu0 %v9711
  %11873 = vmatprep.subr.mxu0 0.0
  %11874 = vmatpush1.msra.mxu0 %v9712
  %11875 = vmatprep.subr.mxu0 0.0
  %11876 = vmatpush1.msra.mxu0 %v9713
  %11877 = vmatprep.subr.mxu0 0.0
  %11878 = vmatpush1.msra.mxu0 %v9714
  %11879 = vmatprep.subr.mxu0 0.0
  %11880 = vmatpush1.msra.mxu0 %v9715
  %11881 = vmatprep.subr.mxu0 0.0
  %11882 = vmatpush1.msra.mxu0 %v9716
  %11883 = vmatprep.subr.mxu0 0.0
  %11884 = vmatpush1.msra.mxu0 %v9717
  %11885 = vmatprep.subr.mxu0 0.0
  %11886 = vmatpush1.msra.mxu0 %v9718
  %11887 = vmatprep.subr.mxu0 0.0
  %11888 = vmatpush1.msra.mxu0 %v9719
  %11889 = vmatprep.subr.mxu0 0.0
  %11890 = vmatpush1.msra.mxu0 %v9720
  %11891 = vmatprep.subr.mxu0 0.0
  %11892 = vmatpush1.msra.mxu0 %v9721
  %11893 = vmatprep.subr.mxu0 0.0
  %11894 = vmatpush1.msra.mxu0 %v9722
  %11895 = vmatprep.subr.mxu0 0.0
  %11896 = vmatpush1.msra.mxu0 %v9723
  %11897 = vmatprep.subr.mxu0 0.0
  %11898 = vmatpush1.msra.mxu0 %v9724
  %11899 = vmatprep.subr.mxu0 0.0
  %11900 = vmatpush1.msra.mxu0 %v9725
  %11901 = vmatprep.subr.mxu0 0.0
  %11902 = vmatpush1.msra.mxu0 %v9726
  %11903 = vmatprep.subr.mxu0 0.0
  %11904 = vmatpush1.msra.mxu0 %v9727
  %11905 = vmatprep.subr.mxu0 0.0
  %11906 = vmatpush1.msra.mxu0 %v9728
  %11907 = vmatprep.subr.mxu0 0.0
  %11908 = vmatpush1.msra.mxu0 %v9729
  %11909 = vmatprep.mubr.f32.mxu0 %v8847
  %11910 = vmatmul.mubr.f32.gmra.mrb[0].mxu0 %v8846
  %v11911 = vpop.f32.mrb[0].mxu0
  %v11912 = vadd.f32 %v11842, %v11911
  %v11913 = vpop.f32.mrb[0].mxu0
  %11914 = vdwg.mxu0
  %11915 = vmatprep.subr.mxu0 0.0
  %11916 = vmatpush1.msra.mxu0 %v9730
  %11917 = vmatprep.subr.mxu0 0.0
  %11918 = vmatpush1.msra.mxu0 %v9731
  %11919 = vmatprep.subr.mxu0 0.0
  %11920 = vmatpush1.msra.mxu0 %v9732
  %11921 = vmatprep.subr.mxu0 0.0
  %11922 = vmatpush1.msra.mxu0 %v9733
  %11923 = vmatprep.subr.mxu0 0.0
  %11924 = vmatpush1.msra.mxu0 %v9734
  %11925 = vmatprep.subr.mxu0 0.0
  %11926 = vmatpush1.msra.mxu0 %v9735
  %11927 = vmatprep.subr.mxu0 0.0
  %11928 = vmatpush1.msra.mxu0 %v9736
  %11929 = vmatprep.subr.mxu0 0.0
  %11930 = vmatpush1.msra.mxu0 %v9737
  %11931 = vmatprep.subr.mxu0 0.0
  %11932 = vmatpush1.msra.mxu0 %v9738
  %11933 = vmatprep.subr.mxu0 0.0
  %11934 = vmatpush1.msra.mxu0 %v9739
  %11935 = vmatprep.subr.mxu0 0.0
  %11936 = vmatpush1.msra.mxu0 %v9740
  %11937 = vmatprep.subr.mxu0 0.0
  %11938 = vmatpush1.msra.mxu0 %v9741
  %11939 = vmatprep.subr.mxu0 0.0
  %11940 = vmatpush1.msra.mxu0 %v9742
  %11941 = vmatprep.subr.mxu0 0.0
  %11942 = vmatpush1.msra.mxu0 %v9743
  %11943 = vmatprep.subr.mxu0 0.0
  %11944 = vmatpush1.msra.mxu0 %v9744
  %11945 = vmatprep.subr.mxu0 0.0
  %11946 = vmatpush1.msra.mxu0 %v9745
  %11947 = vmatprep.subr.mxu0 0.0
  %11948 = vmatpush1.msra.mxu0 %v9746
  %11949 = vmatprep.subr.mxu0 0.0
  %11950 = vmatpush1.msra.mxu0 %v9747
  %11951 = vmatprep.subr.mxu0 0.0
  %11952 = vmatpush1.msra.mxu0 %v9748
  %11953 = vmatprep.subr.mxu0 0.0
  %11954 = vmatpush1.msra.mxu0 %v9749
  %11955 = vmatprep.subr.mxu0 0.0
  %11956 = vmatpush1.msra.mxu0 %v9750
  %11957 = vmatprep.subr.mxu0 0.0
  %11958 = vmatpush1.msra.mxu0 %v9751
  %11959 = vmatprep.subr.mxu0 0.0
  %11960 = vmatpush1.msra.mxu0 %v9752
  %11961 = vmatprep.subr.mxu0 0.0
  %11962 = vmatpush1.msra.mxu0 %v9753
  %11963 = vmatprep.subr.mxu0 0.0
  %11964 = vmatpush1.msra.mxu0 %v9754
  %11965 = vmatprep.subr.mxu0 0.0
  %11966 = vmatpush1.msra.mxu0 %v9755
  %11967 = vmatprep.subr.mxu0 0.0
  %11968 = vmatpush1.msra.mxu0 %v9756
  %11969 = vmatprep.subr.mxu0 0.0
  %11970 = vmatpush1.msra.mxu0 %v9757
  %11971 = vmatprep.subr.mxu0 0.0
  %11972 = vmatpush1.msra.mxu0 %v9758
  %11973 = vmatprep.subr.mxu0 0.0
  %11974 = vmatpush1.msra.mxu0 %v9759
  %11975 = vmatprep.subr.mxu0 0.0
  %11976 = vmatpush1.msra.mxu0 %v9760
  %11977 = vmatprep.subr.mxu0 0.0
  %11978 = vmatpush1.msra.mxu0 %v9761
  %11979 = vmatprep.mubr.f32.mxu0 %v8849
  %11980 = vmatmul.mubr.f32.gmra.mrb[0].mxu0 %v8848
  %v11981 = vpop.f32.mrb[0].mxu0
  %v11982 = vadd.f32 %v11912, %v11981
  %v11983 = vpop.f32.mrb[0].mxu0
  %11984 = vdwg.mxu0
  %11985 = vmatprep.subr.mxu0 0.0
  %11986 = vmatpush1.msra.mxu0 %v9762
  %11987 = vmatprep.subr.mxu0 0.0
  %11988 = vmatpush1.msra.mxu0 %v9763
  %11989 = vmatprep.subr.mxu0 0.0
  %11990 = vmatpush1.msra.mxu0 %v9764
  %11991 = vmatprep.subr.mxu0 0.0
  %11992 = vmatpush1.msra.mxu0 %v9765
  %11993 = vmatprep.subr.mxu0 0.0
  %11994 = vmatpush1.msra.mxu0 %v9766
  %11995 = vmatprep.subr.mxu0 0.0
  %11996 = vmatpush1.msra.mxu0 %v9767
  %11997 = vmatprep.subr.mxu0 0.0
  %11998 = vmatpush1.msra.mxu0 %v9768
  %11999 = vmatprep.subr.mxu0 0.0
  %12000 = vmatpush1.msra.mxu0 %v9769
  %12001 = vmatprep.subr.mxu0 0.0
  %12002 = vmatpush1.msra.mxu0 %v9770
  %12003 = vmatprep.subr.mxu0 0.0
  %12004 = vmatpush1.msra.mxu0 %v9771
  %12005 = vmatprep.subr.mxu0 0.0
  %12006 = vmatpush1.msra.mxu0 %v9772
  %12007 = vmatprep.subr.mxu0 0.0
  %12008 = vmatpush1.msra.mxu0 %v9773
  %12009 = vmatprep.subr.mxu0 0.0
  %12010 = vmatpush1.msra.mxu0 %v9774
  %12011 = vmatprep.subr.mxu0 0.0
  %12012 = vmatpush1.msra.mxu0 %v9775
  %12013 = vmatprep.subr.mxu0 0.0
  %12014 = vmatpush1.msra.mxu0 %v9776
  %12015 = vmatprep.subr.mxu0 0.0
  %12016 = vmatpush1.msra.mxu0 %v9777
  %12017 = vmatprep.subr.mxu0 0.0
  %12018 = vmatpush1.msra.mxu0 %v9778
  %12019 = vmatprep.subr.mxu0 0.0
  %12020 = vmatpush1.msra.mxu0 %v9779
  %12021 = vmatprep.subr.mxu0 0.0
  %12022 = vmatpush1.msra.mxu0 %v9780
  %12023 = vmatprep.subr.mxu0 0.0
  %12024 = vmatpush1.msra.mxu0 %v9781
  %12025 = vmatprep.subr.mxu0 0.0
  %12026 = vmatpush1.msra.mxu0 %v9782
  %12027 = vmatprep.subr.mxu0 0.0
  %12028 = vmatpush1.msra.mxu0 %v9783
  %12029 = vmatprep.subr.mxu0 0.0
  %12030 = vmatpush1.msra.mxu0 %v9784
  %12031 = vmatprep.subr.mxu0 0.0
  %12032 = vmatpush1.msra.mxu0 %v9785
  %12033 = vmatprep.subr.mxu0 0.0
  %12034 = vmatpush1.msra.mxu0 %v9786
  %12035 = vmatprep.subr.mxu0 0.0
  %12036 = vmatpush1.msra.mxu0 %v9787
  %12037 = vmatprep.subr.mxu0 0.0
  %12038 = vmatpush1.msra.mxu0 %v9788
  %12039 = vmatprep.subr.mxu0 0.0
  %12040 = vmatpush1.msra.mxu0 %v9789
  %12041 = vmatprep.subr.mxu0 0.0
  %12042 = vmatpush1.msra.mxu0 %v9790
  %12043 = vmatprep.subr.mxu0 0.0
  %12044 = vmatpush1.msra.mxu0 %v9791
  %12045 = vmatprep.subr.mxu0 0.0
  %12046 = vmatpush1.msra.mxu0 %v9792
  %12047 = vmatprep.subr.mxu0 0.0
  %12048 = vmatpush1.msra.mxu0 %v9793
  %12049 = vmatprep.mubr.f32.mxu0 %v8851
  %12050 = vmatmul.mubr.f32.gmra.mrb[0].mxu0 %v8850
  %v12051 = vpop.f32.mrb[0].mxu0
  %v12052 = vadd.f32 %v11982, %v12051
  %v12053 = vpop.f32.mrb[0].mxu0
  %12054 = vdwg.mxu0
  %12055 = vmatprep.subr.mxu0 0.0
  %12056 = vmatpush1.msra.mxu0 %v9794
  %12057 = vmatprep.subr.mxu0 0.0
  %12058 = vmatpush1.msra.mxu0 %v9795
  %12059 = vmatprep.subr.mxu0 0.0
  %12060 = vmatpush1.msra.mxu0 %v9796
  %12061 = vmatprep.subr.mxu0 0.0
  %12062 = vmatpush1.msra.mxu0 %v9797
  %12063 = vmatprep.subr.mxu0 0.0
  %12064 = vmatpush1.msra.mxu0 %v9798
  %12065 = vmatprep.subr.mxu0 0.0
  %12066 = vmatpush1.msra.mxu0 %v9799
  %12067 = vmatprep.subr.mxu0 0.0
  %12068 = vmatpush1.msra.mxu0 %v9800
  %12069 = vmatprep.subr.mxu0 0.0
  %12070 = vmatpush1.msra.mxu0 %v9801
  %12071 = vmatprep.subr.mxu0 0.0
  %12072 = vmatpush1.msra.mxu0 %v9802
  %12073 = vmatprep.subr.mxu0 0.0
  %12074 = vmatpush1.msra.mxu0 %v9803
  %12075 = vmatprep.subr.mxu0 0.0
  %12076 = vmatpush1.msra.mxu0 %v9804
  %12077 = vmatprep.subr.mxu0 0.0
  %12078 = vmatpush1.msra.mxu0 %v9805
  %12079 = vmatprep.subr.mxu0 0.0
  %12080 = vmatpush1.msra.mxu0 %v9806
  %12081 = vmatprep.subr.mxu0 0.0
  %12082 = vmatpush1.msra.mxu0 %v9807
  %12083 = vmatprep.subr.mxu0 0.0
  %12084 = vmatpush1.msra.mxu0 %v9808
  %12085 = vmatprep.subr.mxu0 0.0
  %12086 = vmatpush1.msra.mxu0 %v9809
  %12087 = vmatprep.subr.mxu0 0.0
  %12088 = vmatpush1.msra.mxu0 %v9810
  %12089 = vmatprep.subr.mxu0 0.0
  %12090 = vmatpush1.msra.mxu0 %v9811
  %12091 = vmatprep.subr.mxu0 0.0
  %12092 = vmatpush1.msra.mxu0 %v9812
  %12093 = vmatprep.subr.mxu0 0.0
  %12094 = vmatpush1.msra.mxu0 %v9813
  %12095 = vmatprep.subr.mxu0 0.0
  %12096 = vmatpush1.msra.mxu0 %v9814
  %12097 = vmatprep.subr.mxu0 0.0
  %12098 = vmatpush1.msra.mxu0 %v9815
  %12099 = vmatprep.subr.mxu0 0.0
  %12100 = vmatpush1.msra.mxu0 %v9816
  %12101 = vmatprep.subr.mxu0 0.0
  %12102 = vmatpush1.msra.mxu0 %v9817
  %12103 = vmatprep.subr.mxu0 0.0
  %12104 = vmatpush1.msra.mxu0 %v9818
  %12105 = vmatprep.subr.mxu0 0.0
  %12106 = vmatpush1.msra.mxu0 %v9819
  %12107 = vmatprep.subr.mxu0 0.0
  %12108 = vmatpush1.msra.mxu0 %v9820
  %12109 = vmatprep.subr.mxu0 0.0
  %12110 = vmatpush1.msra.mxu0 %v9821
  %12111 = vmatprep.subr.mxu0 0.0
  %12112 = vmatpush1.msra.mxu0 %v9822
  %12113 = vmatprep.subr.mxu0 0.0
  %12114 = vmatpush1.msra.mxu0 %v9823
  %12115 = vmatprep.subr.mxu0 0.0
  %12116 = vmatpush1.msra.mxu0 %v9824
  %12117 = vmatprep.subr.mxu0 0.0
  %12118 = vmatpush1.msra.mxu0 %v9825
  %12119 = vmatprep.mubr.f32.mxu0 %v8853
  %12120 = vmatmul.mubr.f32.gmra.mrb[0].mxu0 %v8852
  %v12121 = vpop.f32.mrb[0].mxu0
  %v12122 = vadd.f32 %v12052, %v12121
  %v12123 = vpop.f32.mrb[0].mxu0
  %12124 = vdwg.mxu0
  %12125 = vmatprep.subr.mxu0 0.0
  %12126 = vmatpush1.msra.mxu0 %v9826
  %12127 = vmatprep.subr.mxu0 0.0
  %12128 = vmatpush1.msra.mxu0 %v9827
  %12129 = vmatprep.subr.mxu0 0.0
  %12130 = vmatpush1.msra.mxu0 %v9828
  %12131 = vmatprep.subr.mxu0 0.0
  %12132 = vmatpush1.msra.mxu0 %v9829
  %12133 = vmatprep.subr.mxu0 0.0
  %12134 = vmatpush1.msra.mxu0 %v9830
  %12135 = vmatprep.subr.mxu0 0.0
  %12136 = vmatpush1.msra.mxu0 %v9831
  %12137 = vmatprep.subr.mxu0 0.0
  %12138 = vmatpush1.msra.mxu0 %v9832
  %12139 = vmatprep.subr.mxu0 0.0
  %12140 = vmatpush1.msra.mxu0 %v9833
  %12141 = vmatprep.subr.mxu0 0.0
  %12142 = vmatpush1.msra.mxu0 %v9834
  %12143 = vmatprep.subr.mxu0 0.0
  %12144 = vmatpush1.msra.mxu0 %v9835
  %12145 = vmatprep.subr.mxu0 0.0
  %12146 = vmatpush1.msra.mxu0 %v9836
  %12147 = vmatprep.subr.mxu0 0.0
  %12148 = vmatpush1.msra.mxu0 %v9837
  %12149 = vmatprep.subr.mxu0 0.0
  %12150 = vmatpush1.msra.mxu0 %v9838
  %12151 = vmatprep.subr.mxu0 0.0
  %12152 = vmatpush1.msra.mxu0 %v9839
  %12153 = vmatprep.subr.mxu0 0.0
  %12154 = vmatpush1.msra.mxu0 %v9840
  %12155 = vmatprep.subr.mxu0 0.0
  %12156 = vmatpush1.msra.mxu0 %v9841
  %12157 = vmatprep.subr.mxu0 0.0
  %12158 = vmatpush1.msra.mxu0 %v9842
  %12159 = vmatprep.subr.mxu0 0.0
  %12160 = vmatpush1.msra.mxu0 %v9843
  %12161 = vmatprep.subr.mxu0 0.0
  %12162 = vmatpush1.msra.mxu0 %v9844
  %12163 = vmatprep.subr.mxu0 0.0
  %12164 = vmatpush1.msra.mxu0 %v9845
  %12165 = vmatprep.subr.mxu0 0.0
  %12166 = vmatpush1.msra.mxu0 %v9846
  %12167 = vmatprep.subr.mxu0 0.0
  %12168 = vmatpush1.msra.mxu0 %v9847
  %12169 = vmatprep.subr.mxu0 0.0
  %12170 = vmatpush1.msra.mxu0 %v9848
  %12171 = vmatprep.subr.mxu0 0.0
  %12172 = vmatpush1.msra.mxu0 %v9849
  %12173 = vmatprep.subr.mxu0 0.0
  %12174 = vmatpush1.msra.mxu0 %v9850
  %12175 = vmatprep.subr.mxu0 0.0
  %12176 = vmatpush1.msra.mxu0 %v9851
  %12177 = vmatprep.subr.mxu0 0.0
  %12178 = vmatpush1.msra.mxu0 %v9852
  %12179 = vmatprep.subr.mxu0 0.0
  %12180 = vmatpush1.msra.mxu0 %v9853
  %12181 = vmatprep.subr.mxu0 0.0
  %12182 = vmatpush1.msra.mxu0 %v9854
  %12183 = vmatprep.subr.mxu0 0.0
  %12184 = vmatpush1.msra.mxu0 %v9855
  %12185 = vmatprep.subr.mxu0 0.0
  %12186 = vmatpush1.msra.mxu0 %v9856
  %12187 = vmatprep.subr.mxu0 0.0
  %12188 = vmatpush1.msra.mxu0 %v9857
  %12189 = vmatprep.mubr.f32.mxu0 %v8855
  %12190 = vmatmul.mubr.f32.gmra.mrb[0].mxu0 %v8854
  %v12191 = vpop.f32.mrb[0].mxu0
  %v12192 = vadd.f32 %v12122, %v12191
  %v12193 = vpop.f32.mrb[0].mxu0
  %12194 = vdwg.mxu0
  %12195 = vmatprep.subr.mxu0 0.0
  %12196 = vmatpush1.msra.mxu0 %v9858
  %12197 = vmatprep.subr.mxu0 0.0
  %12198 = vmatpush1.msra.mxu0 %v9859
  %12199 = vmatprep.subr.mxu0 0.0
  %12200 = vmatpush1.msra.mxu0 %v9860
  %12201 = vmatprep.subr.mxu0 0.0
  %12202 = vmatpush1.msra.mxu0 %v9861
  %12203 = vmatprep.subr.mxu0 0.0
  %12204 = vmatpush1.msra.mxu0 %v9862
  %12205 = vmatprep.subr.mxu0 0.0
  %12206 = vmatpush1.msra.mxu0 %v9863
  %12207 = vmatprep.subr.mxu0 0.0
  %12208 = vmatpush1.msra.mxu0 %v9864
  %12209 = vmatprep.subr.mxu0 0.0
  %12210 = vmatpush1.msra.mxu0 %v9865
  %12211 = vmatprep.subr.mxu0 0.0
  %12212 = vmatpush1.msra.mxu0 %v9866
  %12213 = vmatprep.subr.mxu0 0.0
  %12214 = vmatpush1.msra.mxu0 %v9867
  %12215 = vmatprep.subr.mxu0 0.0
  %12216 = vmatpush1.msra.mxu0 %v9868
  %12217 = vmatprep.subr.mxu0 0.0
  %12218 = vmatpush1.msra.mxu0 %v9869
  %12219 = vmatprep.subr.mxu0 0.0
  %12220 = vmatpush1.msra.mxu0 %v9870
  %12221 = vmatprep.subr.mxu0 0.0
  %12222 = vmatpush1.msra.mxu0 %v9871
  %12223 = vmatprep.subr.mxu0 0.0
  %12224 = vmatpush1.msra.mxu0 %v9872
  %12225 = vmatprep.subr.mxu0 0.0
  %12226 = vmatpush1.msra.mxu0 %v9873
  %12227 = vmatprep.subr.mxu0 0.0
  %12228 = vmatpush1.msra.mxu0 %v9874
  %12229 = vmatprep.subr.mxu0 0.0
  %12230 = vmatpush1.msra.mxu0 %v9875
  %12231 = vmatprep.subr.mxu0 0.0
  %12232 = vmatpush1.msra.mxu0 %v9876
  %12233 = vmatprep.subr.mxu0 0.0
  %12234 = vmatpush1.msra.mxu0 %v9877
  %12235 = vmatprep.subr.mxu0 0.0
  %12236 = vmatpush1.msra.mxu0 %v9878
  %12237 = vmatprep.subr.mxu0 0.0
  %12238 = vmatpush1.msra.mxu0 %v9879
  %12239 = vmatprep.subr.mxu0 0.0
  %12240 = vmatpush1.msra.mxu0 %v9880
  %12241 = vmatprep.subr.mxu0 0.0
  %12242 = vmatpush1.msra.mxu0 %v9881
  %12243 = vmatprep.subr.mxu0 0.0
  %12244 = vmatpush1.msra.mxu0 %v9882
  %12245 = vmatprep.subr.mxu0 0.0
  %12246 = vmatpush1.msra.mxu0 %v9883
  %12247 = vmatprep.subr.mxu0 0.0
  %12248 = vmatpush1.msra.mxu0 %v9884
  %12249 = vmatprep.subr.mxu0 0.0
  %12250 = vmatpush1.msra.mxu0 %v9885
  %12251 = vmatprep.subr.mxu0 0.0
  %12252 = vmatpush1.msra.mxu0 %v9886
  %12253 = vmatprep.subr.mxu0 0.0
  %12254 = vmatpush1.msra.mxu0 %v9887
  %12255 = vmatprep.subr.mxu0 0.0
  %12256 = vmatpush1.msra.mxu0 %v9888
  %12257 = vmatprep.subr.mxu0 0.0
  %12258 = vmatpush1.msra.mxu0 %v9889
  %12259 = vmatprep.mubr.f32.mxu0 %v8857
  %12260 = vmatmul.mubr.f32.gmra.mrb[0].mxu0 %v8856
  %v12261 = vpop.f32.mrb[0].mxu0
  %v12262 = vadd.f32 %v12192, %v12261
  %v12263 = vpop.f32.mrb[0].mxu0
  %12264 = vdwg.mxu0
  %12265 = vmatprep.subr.mxu0 0.0
  %12266 = vmatpush1.msra.mxu0 %v9890
  %12267 = vmatprep.subr.mxu0 0.0
  %12268 = vmatpush1.msra.mxu0 %v9891
  %12269 = vmatprep.subr.mxu0 0.0
  %12270 = vmatpush1.msra.mxu0 %v9892
  %12271 = vmatprep.subr.mxu0 0.0
  %12272 = vmatpush1.msra.mxu0 %v9893
  %12273 = vmatprep.subr.mxu0 0.0
  %12274 = vmatpush1.msra.mxu0 %v9894
  %12275 = vmatprep.subr.mxu0 0.0
  %12276 = vmatpush1.msra.mxu0 %v9895
  %12277 = vmatprep.subr.mxu0 0.0
  %12278 = vmatpush1.msra.mxu0 %v9896
  %12279 = vmatprep.subr.mxu0 0.0
  %12280 = vmatpush1.msra.mxu0 %v9897
  %12281 = vmatprep.subr.mxu0 0.0
  %12282 = vmatpush1.msra.mxu0 %v9898
  %12283 = vmatprep.subr.mxu0 0.0
  %12284 = vmatpush1.msra.mxu0 %v9899
  %12285 = vmatprep.subr.mxu0 0.0
  %12286 = vmatpush1.msra.mxu0 %v9900
  %12287 = vmatprep.subr.mxu0 0.0
  %12288 = vmatpush1.msra.mxu0 %v9901
  %12289 = vmatprep.subr.mxu0 0.0
  %12290 = vmatpush1.msra.mxu0 %v9902
  %12291 = vmatprep.subr.mxu0 0.0
  %12292 = vmatpush1.msra.mxu0 %v9903
  %12293 = vmatprep.subr.mxu0 0.0
  %12294 = vmatpush1.msra.mxu0 %v9904
  %12295 = vmatprep.subr.mxu0 0.0
  %12296 = vmatpush1.msra.mxu0 %v9905
  %12297 = vmatprep.subr.mxu0 0.0
  %12298 = vmatpush1.msra.mxu0 %v9906
  %12299 = vmatprep.subr.mxu0 0.0
  %12300 = vmatpush1.msra.mxu0 %v9907
  %12301 = vmatprep.subr.mxu0 0.0
  %12302 = vmatpush1.msra.mxu0 %v9908
  %12303 = vmatprep.subr.mxu0 0.0
  %12304 = vmatpush1.msra.mxu0 %v9909
  %12305 = vmatprep.subr.mxu0 0.0
  %12306 = vmatpush1.msra.mxu0 %v9910
  %12307 = vmatprep.subr.mxu0 0.0
  %12308 = vmatpush1.msra.mxu0 %v9911
  %12309 = vmatprep.subr.mxu0 0.0
  %12310 = vmatpush1.msra.mxu0 %v9912
  %12311 = vmatprep.subr.mxu0 0.0
  %12312 = vmatpush1.msra.mxu0 %v9913
  %12313 = vmatprep.subr.mxu0 0.0
  %12314 = vmatpush1.msra.mxu0 %v9914
  %12315 = vmatprep.subr.mxu0 0.0
  %12316 = vmatpush1.msra.mxu0 %v9915
  %12317 = vmatprep.subr.mxu0 0.0
  %12318 = vmatpush1.msra.mxu0 %v9916
  %12319 = vmatprep.subr.mxu0 0.0
  %12320 = vmatpush1.msra.mxu0 %v9917
  %12321 = vmatprep.subr.mxu0 0.0
  %12322 = vmatpush1.msra.mxu0 %v9918
  %12323 = vmatprep.subr.mxu0 0.0
  %12324 = vmatpush1.msra.mxu0 %v9919
  %12325 = vmatprep.subr.mxu0 0.0
  %12326 = vmatpush1.msra.mxu0 %v9920
  %12327 = vmatprep.subr.mxu0 0.0
  %12328 = vmatpush1.msra.mxu0 %v9921
  %12329 = vmatprep.mubr.f32.mxu0 %v8859
  %12330 = vmatmul.mubr.f32.gmra.mrb[0].mxu0 %v8858
  %v12331 = vpop.f32.mrb[0].mxu0
  %v12332 = vadd.f32 %v12262, %v12331
  %v12333 = vpop.f32.mrb[0].mxu0
  %12334 = vdwg.mxu0
  %12335 = vmatprep.subr.mxu0 0.0
  %12336 = vmatpush1.msra.mxu0 %v9922
  %12337 = vmatprep.subr.mxu0 0.0
  %12338 = vmatpush1.msra.mxu0 %v9923
  %12339 = vmatprep.subr.mxu0 0.0
  %12340 = vmatpush1.msra.mxu0 %v9924
  %12341 = vmatprep.subr.mxu0 0.0
  %12342 = vmatpush1.msra.mxu0 %v9925
  %12343 = vmatprep.subr.mxu0 0.0
  %12344 = vmatpush1.msra.mxu0 %v9926
  %12345 = vmatprep.subr.mxu0 0.0
  %12346 = vmatpush1.msra.mxu0 %v9927
  %12347 = vmatprep.subr.mxu0 0.0
  %12348 = vmatpush1.msra.mxu0 %v9928
  %12349 = vmatprep.subr.mxu0 0.0
  %12350 = vmatpush1.msra.mxu0 %v9929
  %12351 = vmatprep.subr.mxu0 0.0
  %12352 = vmatpush1.msra.mxu0 %v9930
  %12353 = vmatprep.subr.mxu0 0.0
  %12354 = vmatpush1.msra.mxu0 %v9931
  %12355 = vmatprep.subr.mxu0 0.0
  %12356 = vmatpush1.msra.mxu0 %v9932
  %12357 = vmatprep.subr.mxu0 0.0
  %12358 = vmatpush1.msra.mxu0 %v9933
  %12359 = vmatprep.subr.mxu0 0.0
  %12360 = vmatpush1.msra.mxu0 %v9934
  %12361 = vmatprep.subr.mxu0 0.0
  %12362 = vmatpush1.msra.mxu0 %v9935
  %12363 = vmatprep.subr.mxu0 0.0
  %12364 = vmatpush1.msra.mxu0 %v9936
  %12365 = vmatprep.subr.mxu0 0.0
  %12366 = vmatpush1.msra.mxu0 %v9937
  %12367 = vmatprep.subr.mxu0 0.0
  %12368 = vmatpush1.msra.mxu0 %v9938
  %12369 = vmatprep.subr.mxu0 0.0
  %12370 = vmatpush1.msra.mxu0 %v9939
  %12371 = vmatprep.subr.mxu0 0.0
  %12372 = vmatpush1.msra.mxu0 %v9940
  %12373 = vmatprep.subr.mxu0 0.0
  %12374 = vmatpush1.msra.mxu0 %v9941
  %12375 = vmatprep.subr.mxu0 0.0
  %12376 = vmatpush1.msra.mxu0 %v9942
  %12377 = vmatprep.subr.mxu0 0.0
  %12378 = vmatpush1.msra.mxu0 %v9943
  %12379 = vmatprep.subr.mxu0 0.0
  %12380 = vmatpush1.msra.mxu0 %v9944
  %12381 = vmatprep.subr.mxu0 0.0
  %12382 = vmatpush1.msra.mxu0 %v9945
  %12383 = vmatprep.subr.mxu0 0.0
  %12384 = vmatpush1.msra.mxu0 %v9946
  %12385 = vmatprep.subr.mxu0 0.0
  %12386 = vmatpush1.msra.mxu0 %v9947
  %12387 = vmatprep.subr.mxu0 0.0
  %12388 = vmatpush1.msra.mxu0 %v9948
  %12389 = vmatprep.subr.mxu0 0.0
  %12390 = vmatpush1.msra.mxu0 %v9949
  %12391 = vmatprep.subr.mxu0 0.0
  %12392 = vmatpush1.msra.mxu0 %v9950
  %12393 = vmatprep.subr.mxu0 0.0
  %12394 = vmatpush1.msra.mxu0 %v9951
  %12395 = vmatprep.subr.mxu0 0.0
  %12396 = vmatpush1.msra.mxu0 %v9952
  %12397 = vmatprep.subr.mxu0 0.0
  %12398 = vmatpush1.msra.mxu0 %v9953
  %12399 = vmatprep.mubr.f32.mxu0 %v8861
  %12400 = vmatmul.mubr.f32.gmra.mrb[0].mxu0 %v8860
  %v12401 = vpop.f32.mrb[0].mxu0
  %v12402 = vadd.f32 %v12332, %v12401
  %v12403 = vpop.f32.mrb[0].mxu0
  %12404 = vdwg.mxu0
  %12405 = vmatprep.subr.mxu0 0.0
  %12406 = vmatpush1.msra.mxu0 %v9954
  %12407 = vmatprep.subr.mxu0 0.0
  %12408 = vmatpush1.msra.mxu0 %v9955
  %12409 = vmatprep.subr.mxu0 0.0
  %12410 = vmatpush1.msra.mxu0 %v9956
  %12411 = vmatprep.subr.mxu0 0.0
  %12412 = vmatpush1.msra.mxu0 %v9957
  %12413 = vmatprep.subr.mxu0 0.0
  %12414 = vmatpush1.msra.mxu0 %v9958
  %12415 = vmatprep.subr.mxu0 0.0
  %12416 = vmatpush1.msra.mxu0 %v9959
  %12417 = vmatprep.subr.mxu0 0.0
  %12418 = vmatpush1.msra.mxu0 %v9960
  %12419 = vmatprep.subr.mxu0 0.0
  %12420 = vmatpush1.msra.mxu0 %v9961
  %12421 = vmatprep.subr.mxu0 0.0
  %12422 = vmatpush1.msra.mxu0 %v9962
  %12423 = vmatprep.subr.mxu0 0.0
  %12424 = vmatpush1.msra.mxu0 %v9963
  %12425 = vmatprep.subr.mxu0 0.0
  %12426 = vmatpush1.msra.mxu0 %v9964
  %12427 = vmatprep.subr.mxu0 0.0
  %12428 = vmatpush1.msra.mxu0 %v9965
  %12429 = vmatprep.subr.mxu0 0.0
  %12430 = vmatpush1.msra.mxu0 %v9966
  %12431 = vmatprep.subr.mxu0 0.0
  %12432 = vmatpush1.msra.mxu0 %v9967
  %12433 = vmatprep.subr.mxu0 0.0
  %12434 = vmatpush1.msra.mxu0 %v9968
  %12435 = vmatprep.subr.mxu0 0.0
  %12436 = vmatpush1.msra.mxu0 %v9969
  %12437 = vmatprep.subr.mxu0 0.0
  %12438 = vmatpush1.msra.mxu0 %v9970
  %12439 = vmatprep.subr.mxu0 0.0
  %12440 = vmatpush1.msra.mxu0 %v9971
  %12441 = vmatprep.subr.mxu0 0.0
  %12442 = vmatpush1.msra.mxu0 %v9972
  %12443 = vmatprep.subr.mxu0 0.0
  %12444 = vmatpush1.msra.mxu0 %v9973
  %12445 = vmatprep.subr.mxu0 0.0
  %12446 = vmatpush1.msra.mxu0 %v9974
  %12447 = vmatprep.subr.mxu0 0.0
  %12448 = vmatpush1.msra.mxu0 %v9975
  %12449 = vmatprep.subr.mxu0 0.0
  %12450 = vmatpush1.msra.mxu0 %v9976
  %12451 = vmatprep.subr.mxu0 0.0
  %12452 = vmatpush1.msra.mxu0 %v9977
  %12453 = vmatprep.subr.mxu0 0.0
  %12454 = vmatpush1.msra.mxu0 %v9978
  %12455 = vmatprep.subr.mxu0 0.0
  %12456 = vmatpush1.msra.mxu0 %v9979
  %12457 = vmatprep.subr.mxu0 0.0
  %12458 = vmatpush1.msra.mxu0 %v9980
  %12459 = vmatprep.subr.mxu0 0.0
  %12460 = vmatpush1.msra.mxu0 %v9981
  %12461 = vmatprep.subr.mxu0 0.0
  %12462 = vmatpush1.msra.mxu0 %v9982
  %12463 = vmatprep.subr.mxu0 0.0
  %12464 = vmatpush1.msra.mxu0 %v9983
  %12465 = vmatprep.subr.mxu0 0.0
  %12466 = vmatpush1.msra.mxu0 %v9984
  %12467 = vmatprep.subr.mxu0 0.0
  %12468 = vmatpush1.msra.mxu0 %v9985
  %12469 = vmatprep.mubr.f32.mxu0 %v8863
  %12470 = vmatmul.mubr.f32.gmra.mrb[0].mxu0 %v8862
  %v12471 = vpop.f32.mrb[0].mxu0
  %v12472 = vadd.f32 %v12402, %v12471
  %v12473 = vpop.f32.mrb[0].mxu0
  %12474 = vdwg.mxu0
  %12475 = vmatprep.subr.mxu0 0.0
  %12476 = vmatpush1.msra.mxu0 %v9986
  %12477 = vmatprep.subr.mxu0 0.0
  %12478 = vmatpush1.msra.mxu0 %v9987
  %12479 = vmatprep.subr.mxu0 0.0
  %12480 = vmatpush1.msra.mxu0 %v9988
  %12481 = vmatprep.subr.mxu0 0.0
  %12482 = vmatpush1.msra.mxu0 %v9989
  %12483 = vmatprep.subr.mxu0 0.0
  %12484 = vmatpush1.msra.mxu0 %v9990
  %12485 = vmatprep.subr.mxu0 0.0
  %12486 = vmatpush1.msra.mxu0 %v9991
  %12487 = vmatprep.subr.mxu0 0.0
  %12488 = vmatpush1.msra.mxu0 %v9992
  %12489 = vmatprep.subr.mxu0 0.0
  %12490 = vmatpush1.msra.mxu0 %v9993
  %12491 = vmatprep.subr.mxu0 0.0
  %12492 = vmatpush1.msra.mxu0 %v9994
  %12493 = vmatprep.subr.mxu0 0.0
  %12494 = vmatpush1.msra.mxu0 %v9995
  %12495 = vmatprep.subr.mxu0 0.0
  %12496 = vmatpush1.msra.mxu0 %v9996
  %12497 = vmatprep.subr.mxu0 0.0
  %12498 = vmatpush1.msra.mxu0 %v9997
  %12499 = vmatprep.subr.mxu0 0.0
  %12500 = vmatpush1.msra.mxu0 %v9998
  %12501 = vmatprep.subr.mxu0 0.0
  %12502 = vmatpush1.msra.mxu0 %v9999
  %12503 = vmatprep.subr.mxu0 0.0
  %12504 = vmatpush1.msra.mxu0 %v10000
  %12505 = vmatprep.subr.mxu0 0.0
  %12506 = vmatpush1.msra.mxu0 %v10001
  %12507 = vmatprep.subr.mxu0 0.0
  %12508 = vmatpush1.msra.mxu0 %v10002
  %12509 = vmatprep.subr.mxu0 0.0
  %12510 = vmatpush1.msra.mxu0 %v10003
  %12511 = vmatprep.subr.mxu0 0.0
  %12512 = vmatpush1.msra.mxu0 %v10004
  %12513 = vmatprep.subr.mxu0 0.0
  %12514 = vmatpush1.msra.mxu0 %v10005
  %12515 = vmatprep.subr.mxu0 0.0
  %12516 = vmatpush1.msra.mxu0 %v10006
  %12517 = vmatprep.subr.mxu0 0.0
  %12518 = vmatpush1.msra.mxu0 %v10007
  %12519 = vmatprep.subr.mxu0 0.0
  %12520 = vmatpush1.msra.mxu0 %v10008
  %12521 = vmatprep.subr.mxu0 0.0
  %12522 = vmatpush1.msra.mxu0 %v10009
  %12523 = vmatprep.subr.mxu0 0.0
  %12524 = vmatpush1.msra.mxu0 %v10010
  %12525 = vmatprep.subr.mxu0 0.0
  %12526 = vmatpush1.msra.mxu0 %v10011
  %12527 = vmatprep.subr.mxu0 0.0
  %12528 = vmatpush1.msra.mxu0 %v10012
  %12529 = vmatprep.subr.mxu0 0.0
  %12530 = vmatpush1.msra.mxu0 %v10013
  %12531 = vmatprep.subr.mxu0 0.0
  %12532 = vmatpush1.msra.mxu0 %v10014
  %12533 = vmatprep.subr.mxu0 0.0
  %12534 = vmatpush1.msra.mxu0 %v10015
  %12535 = vmatprep.subr.mxu0 0.0
  %12536 = vmatpush1.msra.mxu0 %v10016
  %12537 = vmatprep.subr.mxu0 0.0
  %12538 = vmatpush1.msra.mxu0 %v10017
  %12539 = vmatprep.mubr.f32.mxu0 %v8865
  %12540 = vmatmul.mubr.f32.gmra.mrb[0].mxu0 %v8864
  %v12541 = vpop.f32.mrb[0].mxu0
  %v12542 = vadd.f32 %v12472, %v12541
  %v12543 = vpop.f32.mrb[0].mxu0
  %12544 = vdwg.mxu0
  %vm12545 = vcmask 15360
  %v12546 = vsel %vm12545, %v12542, -inf
  %12547 = vmax.xlane.f32.xlu0 %v12546
  %v12548 = vpop.xlane.xlu0 %12547
  %v12549 = vsub.f32 %v12542, %v12548
  %v12550 = vmul.f32 %v12549, 1.442695
  %v12551 = vpow.pop %v12550
  %v12552 = vsel %vm12545, %v12551, 0.0
  %12553 = vadd.xlane.f32.xlu0 %v12552
  %v12554 = vpop.xlane.xlu0 %12553
  %v12555 = vrcp.pop %v12554
  %v12556 = vmul.f32 %v12551, %v12555
  %12557 = vst.msk [vmem:[%s5] sm:$0xff] %vm12545, %v12556
  // Predicated region
  $region22: #{tpu_custom_call.1} parent=0 // pred_check
    _
  $region23: #{tpu_custom_call.1} parent=0 // pred_check_branch
    %12559 = sbr.rel (0) target = $region25
  $region24: #{tpu_custom_call.1} parent=0 // pred_region
    _
  $region25: #{tpu_custom_call.1} parent=0 // pred_fallthru
    _
  // Predicated region
  $region26: #{tpu_custom_call.1} parent=0 // pred_check
    _
  $region27: #{tpu_custom_call.1} parent=0 // pred_check_branch
    %12561 = sbr.rel (0) target = $region29
  $region28: #{tpu_custom_call.1} parent=0 // pred_region
    _
  $region29: #{tpu_custom_call.1} parent=0 // pred_fallthru
    _

</llo_original>
